<compile_context>
chip_gen: v6e
topology: v6e:2x2x1
jax: 0.10.0
libtpu: 0.0.40
codegen_flags: <defaults>
</compile_context>

<pallas_src>
import jax
import jax.numpy as jnp
from jax.experimental import pallas as pl
from jax.experimental.pallas import tpu as pltpu


# ----------------------------- generation-aware VMEM budget ---------------------------

_VMEM_LIMIT = None


def _vmem_limit_bytes():
    """~96 MiB on 128-MiB VMEM parts (v5e/v6e), ~40 MiB on 64-MiB parts (v7x)."""
    global _VMEM_LIMIT
    if _VMEM_LIMIT is None:
        cap = 128 * 1024 * 1024
        try:
            info = pltpu.get_tpu_info()
            cap = int(getattr(info, "vmem_capacity_bytes", cap))
        except Exception:
            pass
        if cap >= 96 * 1024 * 1024:
            _VMEM_LIMIT = 96 * 1024 * 1024
        else:
            _VMEM_LIMIT = min(40 * 1024 * 1024, (cap * 5) // 8)
    return _VMEM_LIMIT


def _cparams(sem):
    return pltpu.CompilerParams(dimension_semantics=sem,
                                vmem_limit_bytes=_vmem_limit_bytes())


def _round_up(x, m):
    return (x + m - 1) // m * m


def _pick_tile(c, prefs=(256, 128)):
    for p in prefs:
        if c % p == 0:
            return p
    return c


# ----------------------------- tiled fused matmul (1x1 convs) ------------------------

def _make_mm_kernel(relu):
    def kernel(x_ref, w_ref, s_ref, b_ref, o_ref, acc_ref):
        @pl.when(pl.program_id(2) == 0)
        def _():
            acc_ref[...] = jnp.zeros_like(acc_ref)

        acc_ref[...] += jnp.dot(x_ref[...], w_ref[...],
                                preferred_element_type=jnp.float32)

        @pl.when(pl.program_id(2) == pl.num_programs(2) - 1)
        def _():
            y = acc_ref[...] * s_ref[...] + b_ref[...]
            if relu:
                y = jnp.maximum(y, 0.0)
            o_ref[...] = y.astype(o_ref.dtype)
    return kernel


def fused_matmul(x, w, scale, bias, *, relu=False, out_dtype=jnp.float32,
                 tm=256, tn=256, tk=512, trim_n=True):
    """y = (x @ w) * scale + bias [+ ReLU].  bf16 MXU operands, f32 accumulation.

    Operands are zero-padded up to tile multiples so even tiny output widths get
    lane-dense 128/256-wide stores.  When the caller already provides bf16 (the
    conv3x3 kernel emits bf16) the astype is a no-op.  trim_n=False keeps the
    lane-padded output width so downstream BlockSpecs can index it without a slice.
    """
    M, K = x.shape
    _, N = w.shape
    tm = min(tm, _round_up(M, 8))
    tn = min(tn, _round_up(N, 128))
    tk = min(tk, _round_up(K, 128))
    Mp, Kp, Np = _round_up(M, tm), _round_up(K, tk), _round_up(N, tn)

    xp = jnp.pad(x.astype(jnp.bfloat16), ((0, Mp - M), (0, Kp - K)))
    wp = jnp.pad(w.astype(jnp.bfloat16), ((0, Kp - K), (0, Np - N)))
    sp = jnp.pad(scale.reshape(1, N).astype(jnp.float32), ((0, 0), (0, Np - N)))
    bp = jnp.pad(bias.reshape(1, N).astype(jnp.float32), ((0, 0), (0, Np - N)))

    y = pl.pallas_call(
        _make_mm_kernel(relu),
        out_shape=jax.ShapeDtypeStruct((Mp, Np), out_dtype),
        grid=(Mp // tm, Np // tn, Kp // tk),
        in_specs=[
            pl.BlockSpec((tm, tk), lambda i, j, k: (i, k)),
            pl.BlockSpec((tk, tn), lambda i, j, k: (k, j)),
            pl.BlockSpec((1, tn), lambda i, j, k: (0, j)),
            pl.BlockSpec((1, tn), lambda i, j, k: (0, j)),
        ],
        out_specs=pl.BlockSpec((tm, tn), lambda i, j, k: (i, j)),
        scratch_shapes=[pltpu.VMEM((tm, tn), jnp.float32)],
        compiler_params=_cparams(("parallel", "parallel", "arbitrary")),
    )(xp, wp, sp, bp)
    if trim_n:
        return y[:M, :N]
    return y[:M, :]


# ----------------------------- direct 3x3 conv + BN + ReLU ---------------------------

def _conv3x3_bn_relu_kernel(x_ref, w_ref, s_ref, b_ref, o_ref, acc_ref):
    # x_ref : (1, H+2, W+2, Cin) bf16 (spatially pre-padded), resident across cout tiles
    # w_ref : (9, Cin, tco) bf16 ; s_ref/b_ref: (1, tco) f32
    # o_ref : (1, H, W, tco) bf16 ; acc_ref: (H*W, tco) f32 VMEM scratch
    H, W, tco = o_ref.shape[1], o_ref.shape[2], o_ref.shape[3]
    Cin = x_ref.shape[3]
    acc_ref[...] = jnp.zeros_like(acc_ref)
    # 3 relayout slabs (one per kw shift); kh shifts are contiguous row-range slices.
    for dw in range(3):
        slab = x_ref[0, :, dw:dw + W, :].reshape((H + 2) * W, Cin)     # ((H+2)*W, Cin) bf16
        for dh in range(3):
            win = slab[dh * W:dh * W + H * W, :]                        # contiguous rows
            acc_ref[...] += jnp.dot(win, w_ref[dh * 3 + dw],
                                    preferred_element_type=jnp.float32)
    y = jnp.maximum(acc_ref[...] * s_ref[...] + b_ref[...], 0.0)        # fused BN + ReLU
    o_ref[0] = y.reshape(H, W, tco).astype(o_ref.dtype)


def conv3x3_bn_relu(x_nhwc, w_oihw, bn_scale, bn_bias, *, tco=None):
    B, H, W, Cin = x_nhwc.shape
    Cout = w_oihw.shape[0]
    if tco is None:
        tco = _pick_tile(Cout)                 # 256 fills v6e/v7x MXU; 128 fallback
    assert Cout % tco == 0
    xp = jnp.pad(x_nhwc.astype(jnp.bfloat16), ((0, 0), (1, 1), (1, 1), (0, 0)))
    wt = jnp.transpose(w_oihw, (2, 3, 1, 0)).reshape(9, Cin, Cout).astype(jnp.bfloat16)
    scale = bn_scale.reshape(1, Cout).astype(jnp.float32)
    shift = bn_bias.reshape(1, Cout).astype(jnp.float32)
    return pl.pallas_call(
        _conv3x3_bn_relu_kernel,
        out_shape=jax.ShapeDtypeStruct((B, H, W, Cout), jnp.bfloat16),
        grid=(B, Cout // tco),
        in_specs=[
            pl.BlockSpec((1, H + 2, W + 2, Cin), lambda b, j: (b, 0, 0, 0)),
            pl.BlockSpec((9, Cin, tco), lambda b, j: (0, 0, j)),
            pl.BlockSpec((1, tco), lambda b, j: (0, j)),
            pl.BlockSpec((1, tco), lambda b, j: (0, j)),
        ],
        out_specs=pl.BlockSpec((1, H, W, tco), lambda b, j: (b, 0, 0, j)),
        scratch_shapes=[pltpu.VMEM((H * W, tco), jnp.float32)],
        compiler_params=_cparams(("parallel", "parallel")),
    )(xp, wt, scale, shift)


# ----------------------------- attention kernels -------------------------------------

def _pam_kernel(q_ref, k_ref, v_ref, x_ref, gamma_ref, o_ref):
    # Position attention for one (batch, query-row-block), (N, C) layout end-to-end:
    #   energy = q @ k^T ; attn = softmax(energy, -1) ; out = attn @ v ; gamma*out + x
    q = q_ref[0]                                              # (tq, QK) bf16
    k = k_ref[0]                                              # (N,  QK) bf16
    v = v_ref[0]                                              # (N,  C)  bf16
    energy = jax.lax.dot_general(q, k, (((1,), (1,)), ((), ())),
                                 preferred_element_type=jnp.float32)       # (tq, N)
    m = jnp.max(energy, axis=-1, keepdims=True)
    e = jnp.exp(energy - m)
    attn = e * pl.reciprocal(jnp.sum(e, axis=-1, keepdims=True), approx=True)
    out = jnp.dot(attn.astype(v.dtype), v, preferred_element_type=jnp.float32)
    y = gamma_ref[0, 0] * out + x_ref[0].astype(jnp.float32)
    o_ref[0] = y.astype(o_ref.dtype)


def pam_attention(qkv, x_res, gamma, *, c, qk, tq=128):
    """qkv is the fused-projection output laid out [v(0:c) | q(c:c+qk) | k(c+qk:c+2qk)]
    (possibly lane-padded past c+2qk); q/k/v are picked out via BlockSpec column
    indices — no wrapper slices."""
    B, N, _ = qkv.shape
    tq = min(tq, N)                     # cap query tile (bounds (tq, N) f32 live values)
    assert N % tq == 0
    assert c % qk == 0
    qb = c // qk                        # q column-block index (units of qk)
    kb = qb + 1                         # k column-block index
    return pl.pallas_call(
        _pam_kernel,
        out_shape=jax.ShapeDtypeStruct((B, N, c), jnp.bfloat16),
        grid=(B, N // tq),
        in_specs=[
            pl.BlockSpec((1, tq, qk), lambda b, i: (b, i, qb)),   # queries, row-blocked
            pl.BlockSpec((1, N, qk), lambda b, i: (b, 0, kb)),    # keys resident
            pl.BlockSpec((1, N, c), lambda b, i: (b, 0, 0)),      # values resident
            pl.BlockSpec((1, tq, c), lambda b, i: (b, i, 0)),     # residual
            pl.BlockSpec(memory_space=pltpu.MemorySpace.SMEM),
        ],
        out_specs=pl.BlockSpec((1, tq, c), lambda b, i: (b, i, 0)),
        input_output_aliases={3: 0},      # write gamma*out + x over the residual buffer
        compiler_params=_cparams(("parallel", "parallel")),
    )(qkv, qkv, qkv, x_res, gamma)


def _cam_kernel(xr_ref, xcn_ref, xnc_ref, res_ref, gamma_ref, o_ref):
    # Channel attention for one (batch, channel-row-block), output kept in (N, C):
    #   energy = Xrows @ Xcn^T ; attn = softmax(rowmax - energy) == softmax(-energy)
    #   out_nc[:, block] = x_nc @ attn_block^T ; gamma*out + x
    x_rows = xr_ref[0]                                        # (tc, N) bf16, row block
    x_all = xcn_ref[0]                                        # (C,  N) bf16, resident
    energy = jax.lax.dot_general(x_rows, x_all, (((1,), (1,)), ((), ())),
                                 preferred_element_type=jnp.float32)       # (tc, C)
    # softmax(rowmax - energy) is identical to softmax(-energy); stabilize via row min.
    mn = jnp.min(energy, axis=-1, keepdims=True)
    e = jnp.exp(mn - energy)
    attn = e * pl.reciprocal(jnp.sum(e, axis=-1, keepdims=True), approx=True)
    x_nc = xnc_ref[0]                                         # (N, C) bf16, resident
    out = jax.lax.dot_general(x_nc, attn.astype(x_nc.dtype),
                              (((1,), (1,)), ((), ())),
                              preferred_element_type=jnp.float32)          # (N, tc)
    y = gamma_ref[0, 0] * out + res_ref[0].astype(jnp.float32)
    o_ref[0] = y.astype(o_ref.dtype)


def cam_attention(x_cn, x_nc, gamma, *, tc=128):
    B, C, N = x_cn.shape
    tc = min(tc, C)
    assert C % tc == 0
    # No input/output aliasing: the resident full (N, C) input overlaps other
    # channel-blocks' output writes, unlike PAM where blocks coincide exactly.
    return pl.pallas_call(
        _cam_kernel,
        out_shape=jax.ShapeDtypeStruct((B, N, C), jnp.bfloat16),
        grid=(B, C // tc),
        in_specs=[
            pl.BlockSpec((1, tc, N), lambda b, j: (b, j, 0)),   # Gram LHS, row-blocked
            pl.BlockSpec((1, C, N), lambda b, j: (b, 0, 0)),    # Gram RHS, resident
            pl.BlockSpec((1, N, C), lambda b, j: (b, 0, 0)),    # out matmul RHS, resident
            pl.BlockSpec((1, N, tc), lambda b, j: (b, 0, j)),   # residual, col-blocked
            pl.BlockSpec(memory_space=pltpu.MemorySpace.SMEM),
        ],
        out_specs=pl.BlockSpec((1, N, tc), lambda b, j: (b, 0, j)),
        compiler_params=_cparams(("parallel", "parallel")),
    )(x_cn, x_cn, x_nc, x_nc, gamma)


# ----------------------------- parameter construction --------------------------------

def _kaiming_conv(key, cout, cin, k):
    fan_in = cin * k * k
    std = (2.0 / fan_in) ** 0.5
    return jax.random.normal(key, (cout, cin, k, k), jnp.float32) * std


def _bn_eval_affine(c, eps=1e-5):
    # __init__: BN weight=1, bias=0; eval mode with default running stats (mean=0, var=1)
    weight = jnp.ones((c,), jnp.float32)
    bias = jnp.zeros((c,), jnp.float32)
    mean = jnp.zeros((c,), jnp.float32)
    var = jnp.ones((c,), jnp.float32)
    scale = weight / jnp.sqrt(var + eps)
    return scale, bias - mean * scale


def make_params(key, inter_channel, n_classes, gamma_init=0.5):
    ks = jax.random.split(key, 16)
    C = inter_channel
    C8 = C // 8
    p = {}
    p['conv2pam_w'] = _kaiming_conv(ks[0], C, C, 3); p['conv2pam_bn'] = _bn_eval_affine(C)
    p['conv2cam_w'] = _kaiming_conv(ks[1], C, C, 3); p['conv2cam_bn'] = _bn_eval_affine(C)
    p['pam2conv_w'] = _kaiming_conv(ks[2], C, C, 3); p['pam2conv_bn'] = _bn_eval_affine(C)
    p['cam2conv_w'] = _kaiming_conv(ks[3], C, C, 3); p['cam2conv_bn'] = _bn_eval_affine(C)
    # PAM internal 1x1 convs (query/key reduce to C/8, value keeps C); biases init to 0.
    p['pam_b_w'] = _kaiming_conv(ks[4], C8, C, 1); p['pam_b_b'] = jnp.zeros((C8,), jnp.float32)
    p['pam_c_w'] = _kaiming_conv(ks[5], C8, C, 1); p['pam_c_b'] = jnp.zeros((C8,), jnp.float32)
    p['pam_d_w'] = _kaiming_conv(ks[6], C, C, 1);  p['pam_d_b'] = jnp.zeros((C,), jnp.float32)
    # gammas: canonical DANet init is 0 (attention branch inert); default 0.5 here so the
    # attention compute path actually contributes in the demo (acknowledged deviation).
    p['pam_gamma'] = jnp.full((1, 1), gamma_init, jnp.float32)
    p['cam_gamma'] = jnp.full((1, 1), gamma_init, jnp.float32)
    # output heads (1x1 conv with bias=0 per kaiming/constant init)
    p['conv_out_w'] = _kaiming_conv(ks[7], n_classes, C, 1)
    p['conv_out_b'] = jnp.zeros((n_classes,), jnp.float32)
    p['conv_pam_out_w'] = _kaiming_conv(ks[8], n_classes, C, 1)
    p['conv_pam_out_b'] = jnp.zeros((n_classes,), jnp.float32)
    p['conv_cam_out_w'] = _kaiming_conv(ks[9], n_classes, C, 1)
    p['conv_cam_out_b'] = jnp.zeros((n_classes,), jnp.float32)
    return p


# ----------------------------- DANet forward ------------------------------------------

def danet_forward(x_nchw, params):
    # boundary: NCHW f32 -> NHWC bf16 (all kernel-side intermediates are bf16 with
    # f32 MXU accumulation; final head outputs are f32).
    x = jnp.transpose(x_nchw.astype(jnp.bfloat16), (0, 2, 3, 1))

    pam_in = conv3x3_bn_relu(x, params['conv2pam_w'], *params['conv2pam_bn'])   # bf16
    cam_in = conv3x3_bn_relu(x, params['conv2cam_w'], *params['conv2cam_bn'])   # bf16

    B, H, W, C = pam_in.shape
    N = H * W
    C8 = C // 8

    # --- Position Attention Module: fused [v | q | k] projection (one read of pam_in,
    #     one matmul); q/k widths zero-padded to 128 so the energy contraction fills the
    #     MXU, and the [v|q|k] ordering lets pam_attention address q/k/v via BlockSpec
    #     column indices directly on the (lane-padded) projection output. ---
    QK = max(C8, 128)
    assert C % QK == 0, "inter_channel must be a multiple of 128 for the fused qkv layout"
    wv = params['pam_d_w'][:, :, 0, 0].T                               # (C, C)
    wq = jnp.pad(params['pam_b_w'][:, :, 0, 0].T, ((0, 0), (0, QK - C8)))
    wk = jnp.pad(params['pam_c_w'][:, :, 0, 0].T, ((0, 0), (0, QK - C8)))
    w_qkv = jnp.concatenate([wv, wq, wk], axis=1)                      # (C, C + 2*QK)
    b_qkv = jnp.concatenate([params['pam_d_b'],
                             jnp.pad(params['pam_b_b'], (0, QK - C8)),
                             jnp.pad(params['pam_c_b'], (0, QK - C8))])
    qkv = fused_matmul(pam_in.reshape(B * N, C), w_qkv,
                       jnp.ones_like(b_qkv), b_qkv,
                       relu=False, out_dtype=jnp.bfloat16,
                       trim_n=False)                                   # (B*N, padded) bf16
    qkv = qkv.reshape(B, N, qkv.shape[-1])
    pam_att = pam_attention(qkv, pam_in.reshape(B, N, C), params['pam_gamma'],
                            c=C, qk=QK)
    pam_out = conv3x3_bn_relu(pam_att.reshape(B, H, W, C),
                              params['pam2conv_w'], *params['pam2conv_bn'])

    # --- Channel Attention Module ((N, C) layout output; only the Gram-matrix operand
    #     needs a (C, N) view, built once in bf16 — no per-step in-kernel casts). ---
    x_nc = cam_in.reshape(B, N, C)                                     # bf16
    x_cn = jnp.transpose(x_nc, (0, 2, 1))                              # bf16
    cam_att = cam_attention(x_cn, x_nc, params['cam_gamma'])
    cam_out = conv3x3_bn_relu(cam_att.reshape(B, H, W, C),
                              params['cam2conv_w'], *params['cam2conv_bn'])

    # --- output heads (Dropout2d -> identity in eval mode), fused & lane-padded:
    #     heads on pam_out compute [conv_out | conv_pam_out], heads on cam_out compute
    #     [conv_out | conv_cam_out]; conv_out(feats_sum) = sum of the two first halves. ---
    ncls = params['conv_out_w'].shape[0]
    w_out = params['conv_out_w'][:, :, 0, 0].T                         # (C, ncls)
    w_pam = params['conv_pam_out_w'][:, :, 0, 0].T
    w_cam = params['conv_cam_out_w'][:, :, 0, 0].T
    wp = jnp.concatenate([w_out, w_pam], axis=1)                       # (C, 2*ncls)
    wc = jnp.concatenate([w_out, w_cam], axis=1)
    bp = jnp.concatenate([params['conv_out_b'], params['conv_pam_out_b']])
    bc = jnp.concatenate([jnp.zeros_like(params['conv_out_b']), params['conv_cam_out_b']])
    ones2 = jnp.ones((2 * ncls,), jnp.float32)
    head_p = fused_matmul(pam_out.reshape(B * N, C), wp, ones2, bp, relu=False)
    head_c = fused_matmul(cam_out.reshape(B * N, C), wc, ones2, bc, relu=False)
    out_sum = (head_p[:, :ncls] + head_c[:, :ncls]).reshape(B, H, W, ncls)
    out_pam = head_p[:, ncls:].reshape(B, H, W, ncls)
    out_cam = head_c[:, ncls:].reshape(B, H, W, ncls)

    to_nchw = lambda t: jnp.transpose(t, (0, 3, 1, 2))
    return [to_nchw(out_sum), to_nchw(out_pam), to_nchw(out_cam)]


# ----------------------------- main ---------------------------------------------------

if __name__ == "__main__":
    B, C, H, W = 2, 128, 8, 8       # C = inter_channel (small for the synthetic run)
    n_classes = 8

    key = jax.random.PRNGKey(0)
    k_x, k_p = jax.random.split(key)
    x = jax.random.normal(k_x, (B, C, H, W), jnp.float32)   # backbone feature map, NCHW
    params = make_params(k_p, C, n_classes)

    fwd = jax.jit(lambda inp: danet_forward(inp, params))
    outs = jax.block_until_ready(fwd(x))

    assert len(outs) == 3
    for o in outs:
        assert o.shape == (B, n_classes, H, W)
        assert bool(jnp.all(jnp.isfinite(o)))
    print("KERNEL_OK")
</pallas_src>

<mosaic_0001>
module attributes {stable_mosaic.version = 11 : i64} {
  func.func @_conv3x3_bn_relu_kernel(%arg0: i32, %arg1: i32, %arg2: memref<1x10x10x128xbf16, #tpu.memory_space<vmem>>, %arg3: memref<9x128x128xbf16, #tpu.memory_space<vmem>>, %arg4: memref<1x128xf32, #tpu.memory_space<vmem>>, %arg5: memref<1x128xf32, #tpu.memory_space<vmem>>, %arg6: memref<1x8x8x128xbf16, #tpu.memory_space<vmem>>, %arg7: memref<64x128xf32, #tpu.memory_space<vmem>>) attributes {dimension_semantics = [#tpu.dimension_semantics<parallel>, #tpu.dimension_semantics<parallel>], iteration_bounds = array<i64: 2, 1>, scalar_prefetch = 0 : i64, scratch_operands = 1 : i64, tpu.core_type = #tpu.core_type<tc>, window_params = [{transform_indices = @transform_0, window_bounds = array<i64: 1, 10, 10, 128>}, {transform_indices = @transform_1, window_bounds = array<i64: 9, 128, 128>}, {transform_indices = @transform_2, window_bounds = array<i64: 1, 128>}, {transform_indices = @transform_3, window_bounds = array<i64: 1, 128>}, {transform_indices = @transform_4, window_bounds = array<i64: 1, 8, 8, 128>}]} {
    %cst = arith.constant 0.000000e+00 : f32
    %0 = vector.broadcast %cst : f32 to vector<64x128xf32>
    %c0 = arith.constant 0 : index
    %c0_0 = arith.constant 0 : index
    %1 = vector.load %arg7[%c0, %c0_0] : memref<64x128xf32, #tpu.memory_space<vmem>>, vector<64x128xf32>
    tpu.vector_store %arg7[%c0, %c0_0], %0 {strides = array<i32>} : memref<64x128xf32, #tpu.memory_space<vmem>>, vector<64x128xf32>,
    %c0_1 = arith.constant 0 : index
    %c0_2 = arith.constant 0 : index
    %c0_3 = arith.constant 0 : index
    %c0_4 = arith.constant 0 : index
    %2 = vector.load %arg2[%c0_1, %c0_2, %c0_3, %c0_4] : memref<1x10x10x128xbf16, #tpu.memory_space<vmem>>, vector<1x10x8x128xbf16>
    %3 = vector.shape_cast %2 : vector<1x10x8x128xbf16> to vector<10x8x128xbf16>
    %4 = vector.shape_cast %3 : vector<10x8x128xbf16> to vector<80x128xbf16>
    %5 = vector.extract_strided_slice %4 {offsets = [0, 0], sizes = [64, 128], strides = [1, 1]} : vector<80x128xbf16> to vector<64x128xbf16>
    %c0_5 = arith.constant 0 : index
    %c0_6 = arith.constant 0 : index
    %6 = vector.load %arg7[%c0_5, %c0_6] : memref<64x128xf32, #tpu.memory_space<vmem>>, vector<64x128xf32>
    %c0_7 = arith.constant 0 : index
    %c0_8 = arith.constant 0 : index
    %c0_9 = arith.constant 0 : index
    %7 = vector.load %arg3[%c0_7, %c0_8, %c0_9] : memref<9x128x128xbf16, #tpu.memory_space<vmem>>, vector<1x128x128xbf16>
    %8 = vector.shape_cast %7 : vector<1x128x128xbf16> to vector<128x128xbf16>
    %cst_10 = arith.constant dense<0.000000e+00> : vector<64x128xf32>
    %9 = tpu.matmul %5, %8, %cst_10 {dimension_numbers = #tpu.dot_dimension_numbers<[1], [0], [0], [1], [0, 0, 1, 1], [], []>} : vector<64x128xbf16>, vector<128x128xbf16>, vector<64x128xf32> -> vector<64x128xf32>
    %10 = arith.addf %6, %9 : vector<64x128xf32>
    %c0_11 = arith.constant 0 : index
    %c0_12 = arith.constant 0 : index
    %11 = vector.load %arg7[%c0_11, %c0_12] : memref<64x128xf32, #tpu.memory_space<vmem>>, vector<64x128xf32>
    tpu.vector_store %arg7[%c0_11, %c0_12], %10 {strides = array<i32>} : memref<64x128xf32, #tpu.memory_space<vmem>>, vector<64x128xf32>,
    %12 = vector.extract_strided_slice %4 {offsets = [8, 0], sizes = [64, 128], strides = [1, 1]} : vector<80x128xbf16> to vector<64x128xbf16>
    %c0_13 = arith.constant 0 : index
    %c0_14 = arith.constant 0 : index
    %13 = vector.load %arg7[%c0_13, %c0_14] : memref<64x128xf32, #tpu.memory_space<vmem>>, vector<64x128xf32>
    %c3 = arith.constant 3 : index
    %c0_15 = arith.constant 0 : index
    %c0_16 = arith.constant 0 : index
    %14 = vector.load %arg3[%c3, %c0_15, %c0_16] : memref<9x128x128xbf16, #tpu.memory_space<vmem>>, vector<1x128x128xbf16>
    %15 = vector.shape_cast %14 : vector<1x128x128xbf16> to vector<128x128xbf16>
    %cst_17 = arith.constant dense<0.000000e+00> : vector<64x128xf32>
    %16 = tpu.matmul %12, %15, %cst_17 {dimension_numbers = #tpu.dot_dimension_numbers<[1], [0], [0], [1], [0, 0, 1, 1], [], []>} : vector<64x128xbf16>, vector<128x128xbf16>, vector<64x128xf32> -> vector<64x128xf32>
    %17 = arith.addf %13, %16 : vector<64x128xf32>
    %c0_18 = arith.constant 0 : index
    %c0_19 = arith.constant 0 : index
    %18 = vector.load %arg7[%c0_18, %c0_19] : memref<64x128xf32, #tpu.memory_space<vmem>>, vector<64x128xf32>
    tpu.vector_store %arg7[%c0_18, %c0_19], %17 {strides = array<i32>} : memref<64x128xf32, #tpu.memory_space<vmem>>, vector<64x128xf32>,
    %19 = vector.extract_strided_slice %4 {offsets = [16, 0], sizes = [64, 128], strides = [1, 1]} : vector<80x128xbf16> to vector<64x128xbf16>
    %c0_20 = arith.constant 0 : index
    %c0_21 = arith.constant 0 : index
    %20 = vector.load %arg7[%c0_20, %c0_21] : memref<64x128xf32, #tpu.memory_space<vmem>>, vector<64x128xf32>
    %c6 = arith.constant 6 : index
    %c0_22 = arith.constant 0 : index
    %c0_23 = arith.constant 0 : index
    %21 = vector.load %arg3[%c6, %c0_22, %c0_23] : memref<9x128x128xbf16, #tpu.memory_space<vmem>>, vector<1x128x128xbf16>
    %22 = vector.shape_cast %21 : vector<1x128x128xbf16> to vector<128x128xbf16>
    %cst_24 = arith.constant dense<0.000000e+00> : vector<64x128xf32>
    %23 = tpu.matmul %19, %22, %cst_24 {dimension_numbers = #tpu.dot_dimension_numbers<[1], [0], [0], [1], [0, 0, 1, 1], [], []>} : vector<64x128xbf16>, vector<128x128xbf16>, vector<64x128xf32> -> vector<64x128xf32>
    %24 = arith.addf %20, %23 : vector<64x128xf32>
    %c0_25 = arith.constant 0 : index
    %c0_26 = arith.constant 0 : index
    %25 = vector.load %arg7[%c0_25, %c0_26] : memref<64x128xf32, #tpu.memory_space<vmem>>, vector<64x128xf32>
    tpu.vector_store %arg7[%c0_25, %c0_26], %24 {strides = array<i32>} : memref<64x128xf32, #tpu.memory_space<vmem>>, vector<64x128xf32>,
    %c0_27 = arith.constant 0 : index
    %c0_28 = arith.constant 0 : index
    %c1 = arith.constant 1 : index
    %c0_29 = arith.constant 0 : index
    %26 = vector.load %arg2[%c0_27, %c0_28, %c1, %c0_29] : memref<1x10x10x128xbf16, #tpu.memory_space<vmem>>, vector<1x10x8x128xbf16>
    %27 = vector.shape_cast %26 : vector<1x10x8x128xbf16> to vector<10x8x128xbf16>
    %28 = vector.shape_cast %27 : vector<10x8x128xbf16> to vector<80x128xbf16>
    %29 = vector.extract_strided_slice %28 {offsets = [0, 0], sizes = [64, 128], strides = [1, 1]} : vector<80x128xbf16> to vector<64x128xbf16>
    %c0_30 = arith.constant 0 : index
    %c0_31 = arith.constant 0 : index
    %30 = vector.load %arg7[%c0_30, %c0_31] : memref<64x128xf32, #tpu.memory_space<vmem>>, vector<64x128xf32>
    %c1_32 = arith.constant 1 : index
    %c0_33 = arith.constant 0 : index
    %c0_34 = arith.constant 0 : index
    %31 = vector.load %arg3[%c1_32, %c0_33, %c0_34] : memref<9x128x128xbf16, #tpu.memory_space<vmem>>, vector<1x128x128xbf16>
    %32 = vector.shape_cast %31 : vector<1x128x128xbf16> to vector<128x128xbf16>
    %cst_35 = arith.constant dense<0.000000e+00> : vector<64x128xf32>
    %33 = tpu.matmul %29, %32, %cst_35 {dimension_numbers = #tpu.dot_dimension_numbers<[1], [0], [0], [1], [0, 0, 1, 1], [], []>} : vector<64x128xbf16>, vector<128x128xbf16>, vector<64x128xf32> -> vector<64x128xf32>
    %34 = arith.addf %30, %33 : vector<64x128xf32>
    %c0_36 = arith.constant 0 : index
    %c0_37 = arith.constant 0 : index
    %35 = vector.load %arg7[%c0_36, %c0_37] : memref<64x128xf32, #tpu.memory_space<vmem>>, vector<64x128xf32>
    tpu.vector_store %arg7[%c0_36, %c0_37], %34 {strides = array<i32>} : memref<64x128xf32, #tpu.memory_space<vmem>>, vector<64x128xf32>,
    %36 = vector.extract_strided_slice %28 {offsets = [8, 0], sizes = [64, 128], strides = [1, 1]} : vector<80x128xbf16> to vector<64x128xbf16>
    %c0_38 = arith.constant 0 : index
    %c0_39 = arith.constant 0 : index
    %37 = vector.load %arg7[%c0_38, %c0_39] : memref<64x128xf32, #tpu.memory_space<vmem>>, vector<64x128xf32>
    %c4 = arith.constant 4 : index
    %c0_40 = arith.constant 0 : index
    %c0_41 = arith.constant 0 : index
    %38 = vector.load %arg3[%c4, %c0_40, %c0_41] : memref<9x128x128xbf16, #tpu.memory_space<vmem>>, vector<1x128x128xbf16>
    %39 = vector.shape_cast %38 : vector<1x128x128xbf16> to vector<128x128xbf16>
    %cst_42 = arith.constant dense<0.000000e+00> : vector<64x128xf32>
    %40 = tpu.matmul %36, %39, %cst_42 {dimension_numbers = #tpu.dot_dimension_numbers<[1], [0], [0], [1], [0, 0, 1, 1], [], []>} : vector<64x128xbf16>, vector<128x128xbf16>, vector<64x128xf32> -> vector<64x128xf32>
    %41 = arith.addf %37, %40 : vector<64x128xf32>
    %c0_43 = arith.constant 0 : index
    %c0_44 = arith.constant 0 : index
    %42 = vector.load %arg7[%c0_43, %c0_44] : memref<64x128xf32, #tpu.memory_space<vmem>>, vector<64x128xf32>
    tpu.vector_store %arg7[%c0_43, %c0_44], %41 {strides = array<i32>} : memref<64x128xf32, #tpu.memory_space<vmem>>, vector<64x128xf32>,
    %43 = vector.extract_strided_slice %28 {offsets = [16, 0], sizes = [64, 128], strides = [1, 1]} : vector<80x128xbf16> to vector<64x128xbf16>
    %c0_45 = arith.constant 0 : index
    %c0_46 = arith.constant 0 : index
    %44 = vector.load %arg7[%c0_45, %c0_46] : memref<64x128xf32, #tpu.memory_space<vmem>>, vector<64x128xf32>
    %c7 = arith.constant 7 : index
    %c0_47 = arith.constant 0 : index
    %c0_48 = arith.constant 0 : index
    %45 = vector.load %arg3[%c7, %c0_47, %c0_48] : memref<9x128x128xbf16, #tpu.memory_space<vmem>>, vector<1x128x128xbf16>
    %46 = vector.shape_cast %45 : vector<1x128x128xbf16> to vector<128x128xbf16>
    %cst_49 = arith.constant dense<0.000000e+00> : vector<64x128xf32>
    %47 = tpu.matmul %43, %46, %cst_49 {dimension_numbers = #tpu.dot_dimension_numbers<[1], [0], [0], [1], [0, 0, 1, 1], [], []>} : vector<64x128xbf16>, vector<128x128xbf16>, vector<64x128xf32> -> vector<64x128xf32>
    %48 = arith.addf %44, %47 : vector<64x128xf32>
    %c0_50 = arith.constant 0 : index
    %c0_51 = arith.constant 0 : index
    %49 = vector.load %arg7[%c0_50, %c0_51] : memref<64x128xf32, #tpu.memory_space<vmem>>, vector<64x128xf32>
    tpu.vector_store %arg7[%c0_50, %c0_51], %48 {strides = array<i32>} : memref<64x128xf32, #tpu.memory_space<vmem>>, vector<64x128xf32>,
    %c0_52 = arith.constant 0 : index
    %c0_53 = arith.constant 0 : index
    %c2 = arith.constant 2 : index
    %c0_54 = arith.constant 0 : index
    %50 = vector.load %arg2[%c0_52, %c0_53, %c2, %c0_54] : memref<1x10x10x128xbf16, #tpu.memory_space<vmem>>, vector<1x10x8x128xbf16>
    %51 = vector.shape_cast %50 : vector<1x10x8x128xbf16> to vector<10x8x128xbf16>
    %52 = vector.shape_cast %51 : vector<10x8x128xbf16> to vector<80x128xbf16>
    %53 = vector.extract_strided_slice %52 {offsets = [0, 0], sizes = [64, 128], strides = [1, 1]} : vector<80x128xbf16> to vector<64x128xbf16>
    %c0_55 = arith.constant 0 : index
    %c0_56 = arith.constant 0 : index
    %54 = vector.load %arg7[%c0_55, %c0_56] : memref<64x128xf32, #tpu.memory_space<vmem>>, vector<64x128xf32>
    %c2_57 = arith.constant 2 : index
    %c0_58 = arith.constant 0 : index
    %c0_59 = arith.constant 0 : index
    %55 = vector.load %arg3[%c2_57, %c0_58, %c0_59] : memref<9x128x128xbf16, #tpu.memory_space<vmem>>, vector<1x128x128xbf16>
    %56 = vector.shape_cast %55 : vector<1x128x128xbf16> to vector<128x128xbf16>
    %cst_60 = arith.constant dense<0.000000e+00> : vector<64x128xf32>
    %57 = tpu.matmul %53, %56, %cst_60 {dimension_numbers = #tpu.dot_dimension_numbers<[1], [0], [0], [1], [0, 0, 1, 1], [], []>} : vector<64x128xbf16>, vector<128x128xbf16>, vector<64x128xf32> -> vector<64x128xf32>
    %58 = arith.addf %54, %57 : vector<64x128xf32>
    %c0_61 = arith.constant 0 : index
    %c0_62 = arith.constant 0 : index
    %59 = vector.load %arg7[%c0_61, %c0_62] : memref<64x128xf32, #tpu.memory_space<vmem>>, vector<64x128xf32>
    tpu.vector_store %arg7[%c0_61, %c0_62], %58 {strides = array<i32>} : memref<64x128xf32, #tpu.memory_space<vmem>>, vector<64x128xf32>,
    %60 = vector.extract_strided_slice %52 {offsets = [8, 0], sizes = [64, 128], strides = [1, 1]} : vector<80x128xbf16> to vector<64x128xbf16>
    %c0_63 = arith.constant 0 : index
    %c0_64 = arith.constant 0 : index
    %61 = vector.load %arg7[%c0_63, %c0_64] : memref<64x128xf32, #tpu.memory_space<vmem>>, vector<64x128xf32>
    %c5 = arith.constant 5 : index
    %c0_65 = arith.constant 0 : index
    %c0_66 = arith.constant 0 : index
    %62 = vector.load %arg3[%c5, %c0_65, %c0_66] : memref<9x128x128xbf16, #tpu.memory_space<vmem>>, vector<1x128x128xbf16>
    %63 = vector.shape_cast %62 : vector<1x128x128xbf16> to vector<128x128xbf16>
    %cst_67 = arith.constant dense<0.000000e+00> : vector<64x128xf32>
    %64 = tpu.matmul %60, %63, %cst_67 {dimension_numbers = #tpu.dot_dimension_numbers<[1], [0], [0], [1], [0, 0, 1, 1], [], []>} : vector<64x128xbf16>, vector<128x128xbf16>, vector<64x128xf32> -> vector<64x128xf32>
    %65 = arith.addf %61, %64 : vector<64x128xf32>
    %c0_68 = arith.constant 0 : index
    %c0_69 = arith.constant 0 : index
    %66 = vector.load %arg7[%c0_68, %c0_69] : memref<64x128xf32, #tpu.memory_space<vmem>>, vector<64x128xf32>
    tpu.vector_store %arg7[%c0_68, %c0_69], %65 {strides = array<i32>} : memref<64x128xf32, #tpu.memory_space<vmem>>, vector<64x128xf32>,
    %67 = vector.extract_strided_slice %52 {offsets = [16, 0], sizes = [64, 128], strides = [1, 1]} : vector<80x128xbf16> to vector<64x128xbf16>
    %c0_70 = arith.constant 0 : index
    %c0_71 = arith.constant 0 : index
    %68 = vector.load %arg7[%c0_70, %c0_71] : memref<64x128xf32, #tpu.memory_space<vmem>>, vector<64x128xf32>
    %c8 = arith.constant 8 : index
    %c0_72 = arith.constant 0 : index
    %c0_73 = arith.constant 0 : index
    %69 = vector.load %arg3[%c8, %c0_72, %c0_73] : memref<9x128x128xbf16, #tpu.memory_space<vmem>>, vector<1x128x128xbf16>
    %70 = vector.shape_cast %69 : vector<1x128x128xbf16> to vector<128x128xbf16>
    %cst_74 = arith.constant dense<0.000000e+00> : vector<64x128xf32>
    %71 = tpu.matmul %67, %70, %cst_74 {dimension_numbers = #tpu.dot_dimension_numbers<[1], [0], [0], [1], [0, 0, 1, 1], [], []>} : vector<64x128xbf16>, vector<128x128xbf16>, vector<64x128xf32> -> vector<64x128xf32>
    %72 = arith.addf %68, %71 : vector<64x128xf32>
    %c0_75 = arith.constant 0 : index
    %c0_76 = arith.constant 0 : index
    %73 = vector.load %arg7[%c0_75, %c0_76] : memref<64x128xf32, #tpu.memory_space<vmem>>, vector<64x128xf32>
    tpu.vector_store %arg7[%c0_75, %c0_76], %72 {strides = array<i32>} : memref<64x128xf32, #tpu.memory_space<vmem>>, vector<64x128xf32>,
    %c0_77 = arith.constant 0 : index
    %c0_78 = arith.constant 0 : index
    %74 = vector.load %arg7[%c0_77, %c0_78] : memref<64x128xf32, #tpu.memory_space<vmem>>, vector<64x128xf32>
    %c0_79 = arith.constant 0 : index
    %c0_80 = arith.constant 0 : index
    %75 = vector.load %arg4[%c0_79, %c0_80] : memref<1x128xf32, #tpu.memory_space<vmem>>, vector<1x128xf32>
    %76 = vector.broadcast %75 : vector<1x128xf32> to vector<64x128xf32>
    %77 = arith.mulf %74, %76 : vector<64x128xf32>
    %c0_81 = arith.constant 0 : index
    %c0_82 = arith.constant 0 : index
    %78 = vector.load %arg5[%c0_81, %c0_82] : memref<1x128xf32, #tpu.memory_space<vmem>>, vector<1x128xf32>
    %79 = vector.broadcast %78 : vector<1x128xf32> to vector<64x128xf32>
    %80 = arith.addf %77, %79 : vector<64x128xf32>
    %cst_83 = arith.constant 0.000000e+00 : f32
    %81 = vector.broadcast %cst_83 : f32 to vector<64x128xf32>
    %82 = arith.maximumf %80, %81 : vector<64x128xf32>
    %83 = vector.shape_cast %82 : vector<64x128xf32> to vector<8x8x128xf32>
    %84 = arith.truncf %83 : vector<8x8x128xf32> to vector<8x8x128xbf16>
    %c0_84 = arith.constant 0 : index
    %c0_85 = arith.constant 0 : index
    %c0_86 = arith.constant 0 : index
    %c0_87 = arith.constant 0 : index
    %85 = vector.load %arg6[%c0_84, %c0_85, %c0_86, %c0_87] : memref<1x8x8x128xbf16, #tpu.memory_space<vmem>>, vector<1x8x8x128xbf16>
    %86 = vector.shape_cast %85 : vector<1x8x8x128xbf16> to vector<8x8x128xbf16>
    %87 = vector.shape_cast %84 : vector<8x8x128xbf16> to vector<1x8x8x128xbf16>
    tpu.vector_store %arg6[%c0_84, %c0_85, %c0_86, %c0_87], %87 {strides = array<i32>} : memref<1x8x8x128xbf16, #tpu.memory_space<vmem>>, vector<1x8x8x128xbf16>,
    return
  }
  func.func @transform_0(%arg0: i32, %arg1: i32) -> (i32, i32, i32, i32) {
    %c0_i32 = arith.constant 0 : i32
    %c0_i32_0 = arith.constant 0 : i32
    %c0_i32_1 = arith.constant 0 : i32
    %c0_i32_2 = arith.constant 0 : i32
    return %arg0, %c0_i32, %c0_i32_0, %c0_i32_1 : i32, i32, i32, i32
  }
  func.func @transform_1(%arg0: i32, %arg1: i32) -> (i32, i32, i32) {
    %c0_i32 = arith.constant 0 : i32
    %c0_i32_0 = arith.constant 0 : i32
    %c0_i32_1 = arith.constant 0 : i32
    return %c0_i32, %c0_i32_0, %arg1 : i32, i32, i32
  }
  func.func @transform_2(%arg0: i32, %arg1: i32) -> (i32, i32) {
    %c0_i32 = arith.constant 0 : i32
    %c0_i32_0 = arith.constant 0 : i32
    return %c0_i32, %arg1 : i32, i32
  }
  func.func @transform_3(%arg0: i32, %arg1: i32) -> (i32, i32) {
    %c0_i32 = arith.constant 0 : i32
    %c0_i32_0 = arith.constant 0 : i32
    return %c0_i32, %arg1 : i32, i32
  }
  func.func @transform_4(%arg0: i32, %arg1: i32) -> (i32, i32, i32, i32) {
    %c0_i32 = arith.constant 0 : i32
    %c0_i32_0 = arith.constant 0 : i32
    %c0_i32_1 = arith.constant 0 : i32
    return %arg0, %c0_i32, %c0_i32_0, %arg1 : i32, i32, i32, i32
  }
}

module attributes {stable_mosaic.version = 11 : i64} {
  func.func @_conv3x3_bn_relu_kernel(%arg0: i32, %arg1: i32, %arg2: memref<1x10x10x128xbf16, #tpu.memory_space<vmem>>, %arg3: memref<9x128x128xbf16, #tpu.memory_space<vmem>>, %arg4: memref<1x128xf32, #tpu.memory_space<vmem>>, %arg5: memref<1x128xf32, #tpu.memory_space<vmem>>, %arg6: memref<1x8x8x128xbf16, #tpu.memory_space<vmem>>, %arg7: memref<64x128xf32, #tpu.memory_space<vmem>>) attributes {dimension_semantics = [#tpu.dimension_semantics<parallel>, #tpu.dimension_semantics<parallel>], iteration_bounds = array<i64: 2, 1>, scalar_prefetch = 0 : i64, scratch_operands = 1 : i64, tpu.core_type = #tpu.core_type<tc>, window_params = [{transform_indices = @transform_0, window_bounds = array<i64: 1, 10, 10, 128>}, {transform_indices = @transform_1, window_bounds = array<i64: 9, 128, 128>}, {transform_indices = @transform_2, window_bounds = array<i64: 1, 128>}, {transform_indices = @transform_3, window_bounds = array<i64: 1, 128>}, {transform_indices = @transform_4, window_bounds = array<i64: 1, 8, 8, 128>}]} {
    %cst = arith.constant 0.000000e+00 : f32
    %0 = vector.broadcast %cst : f32 to vector<64x128xf32>
    %c0 = arith.constant 0 : index
    %c0_0 = arith.constant 0 : index
    %1 = vector.load %arg7[%c0, %c0_0] : memref<64x128xf32, #tpu.memory_space<vmem>>, vector<64x128xf32>
    tpu.vector_store %arg7[%c0, %c0_0], %0 {strides = array<i32>} : memref<64x128xf32, #tpu.memory_space<vmem>>, vector<64x128xf32>,
    %c0_1 = arith.constant 0 : index
    %c0_2 = arith.constant 0 : index
    %c0_3 = arith.constant 0 : index
    %c0_4 = arith.constant 0 : index
    %2 = vector.load %arg2[%c0_1, %c0_2, %c0_3, %c0_4] : memref<1x10x10x128xbf16, #tpu.memory_space<vmem>>, vector<1x10x8x128xbf16>
    %3 = vector.shape_cast %2 : vector<1x10x8x128xbf16> to vector<10x8x128xbf16>
    %4 = vector.shape_cast %3 : vector<10x8x128xbf16> to vector<80x128xbf16>
    %5 = vector.extract_strided_slice %4 {offsets = [0, 0], sizes = [64, 128], strides = [1, 1]} : vector<80x128xbf16> to vector<64x128xbf16>
    %c0_5 = arith.constant 0 : index
    %c0_6 = arith.constant 0 : index
    %6 = vector.load %arg7[%c0_5, %c0_6] : memref<64x128xf32, #tpu.memory_space<vmem>>, vector<64x128xf32>
    %c0_7 = arith.constant 0 : index
    %c0_8 = arith.constant 0 : index
    %c0_9 = arith.constant 0 : index
    %7 = vector.load %arg3[%c0_7, %c0_8, %c0_9] : memref<9x128x128xbf16, #tpu.memory_space<vmem>>, vector<1x128x128xbf16>
    %8 = vector.shape_cast %7 : vector<1x128x128xbf16> to vector<128x128xbf16>
    %cst_10 = arith.constant dense<0.000000e+00> : vector<64x128xf32>
    %9 = tpu.matmul %5, %8, %cst_10 {dimension_numbers = #tpu.dot_dimension_numbers<[1], [0], [0], [1], [0, 0, 1, 1], [], []>} : vector<64x128xbf16>, vector<128x128xbf16>, vector<64x128xf32> -> vector<64x128xf32>
    %10 = arith.addf %6, %9 : vector<64x128xf32>
    %c0_11 = arith.constant 0 : index
    %c0_12 = arith.constant 0 : index
    %11 = vector.load %arg7[%c0_11, %c0_12] : memref<64x128xf32, #tpu.memory_space<vmem>>, vector<64x128xf32>
    tpu.vector_store %arg7[%c0_11, %c0_12], %10 {strides = array<i32>} : memref<64x128xf32, #tpu.memory_space<vmem>>, vector<64x128xf32>,
    %12 = vector.extract_strided_slice %4 {offsets = [8, 0], sizes = [64, 128], strides = [1, 1]} : vector<80x128xbf16> to vector<64x128xbf16>
    %c0_13 = arith.constant 0 : index
    %c0_14 = arith.constant 0 : index
    %13 = vector.load %arg7[%c0_13, %c0_14] : memref<64x128xf32, #tpu.memory_space<vmem>>, vector<64x128xf32>
    %c3 = arith.constant 3 : index
    %c0_15 = arith.constant 0 : index
    %c0_16 = arith.constant 0 : index
    %14 = vector.load %arg3[%c3, %c0_15, %c0_16] : memref<9x128x128xbf16, #tpu.memory_space<vmem>>, vector<1x128x128xbf16>
    %15 = vector.shape_cast %14 : vector<1x128x128xbf16> to vector<128x128xbf16>
    %cst_17 = arith.constant dense<0.000000e+00> : vector<64x128xf32>
    %16 = tpu.matmul %12, %15, %cst_17 {dimension_numbers = #tpu.dot_dimension_numbers<[1], [0], [0], [1], [0, 0, 1, 1], [], []>} : vector<64x128xbf16>, vector<128x128xbf16>, vector<64x128xf32> -> vector<64x128xf32>
    %17 = arith.addf %13, %16 : vector<64x128xf32>
    %c0_18 = arith.constant 0 : index
    %c0_19 = arith.constant 0 : index
    %18 = vector.load %arg7[%c0_18, %c0_19] : memref<64x128xf32, #tpu.memory_space<vmem>>, vector<64x128xf32>
    tpu.vector_store %arg7[%c0_18, %c0_19], %17 {strides = array<i32>} : memref<64x128xf32, #tpu.memory_space<vmem>>, vector<64x128xf32>,
    %19 = vector.extract_strided_slice %4 {offsets = [16, 0], sizes = [64, 128], strides = [1, 1]} : vector<80x128xbf16> to vector<64x128xbf16>
    %c0_20 = arith.constant 0 : index
    %c0_21 = arith.constant 0 : index
    %20 = vector.load %arg7[%c0_20, %c0_21] : memref<64x128xf32, #tpu.memory_space<vmem>>, vector<64x128xf32>
    %c6 = arith.constant 6 : index
    %c0_22 = arith.constant 0 : index
    %c0_23 = arith.constant 0 : index
    %21 = vector.load %arg3[%c6, %c0_22, %c0_23] : memref<9x128x128xbf16, #tpu.memory_space<vmem>>, vector<1x128x128xbf16>
    %22 = vector.shape_cast %21 : vector<1x128x128xbf16> to vector<128x128xbf16>
    %cst_24 = arith.constant dense<0.000000e+00> : vector<64x128xf32>
    %23 = tpu.matmul %19, %22, %cst_24 {dimension_numbers = #tpu.dot_dimension_numbers<[1], [0], [0], [1], [0, 0, 1, 1], [], []>} : vector<64x128xbf16>, vector<128x128xbf16>, vector<64x128xf32> -> vector<64x128xf32>
    %24 = arith.addf %20, %23 : vector<64x128xf32>
    %c0_25 = arith.constant 0 : index
    %c0_26 = arith.constant 0 : index
    %25 = vector.load %arg7[%c0_25, %c0_26] : memref<64x128xf32, #tpu.memory_space<vmem>>, vector<64x128xf32>
    tpu.vector_store %arg7[%c0_25, %c0_26], %24 {strides = array<i32>} : memref<64x128xf32, #tpu.memory_space<vmem>>, vector<64x128xf32>,
    %c0_27 = arith.constant 0 : index
    %c0_28 = arith.constant 0 : index
    %c1 = arith.constant 1 : index
    %c0_29 = arith.constant 0 : index
    %26 = vector.load %arg2[%c0_27, %c0_28, %c1, %c0_29] : memref<1x10x10x128xbf16, #tpu.memory_space<vmem>>, vector<1x10x8x128xbf16>
    %27 = vector.shape_cast %26 : vector<1x10x8x128xbf16> to vector<10x8x128xbf16>
    %28 = vector.shape_cast %27 : vector<10x8x128xbf16> to vector<80x128xbf16>
    %29 = vector.extract_strided_slice %28 {offsets = [0, 0], sizes = [64, 128], strides = [1, 1]} : vector<80x128xbf16> to vector<64x128xbf16>
    %c0_30 = arith.constant 0 : index
    %c0_31 = arith.constant 0 : index
    %30 = vector.load %arg7[%c0_30, %c0_31] : memref<64x128xf32, #tpu.memory_space<vmem>>, vector<64x128xf32>
    %c1_32 = arith.constant 1 : index
    %c0_33 = arith.constant 0 : index
    %c0_34 = arith.constant 0 : index
    %31 = vector.load %arg3[%c1_32, %c0_33, %c0_34] : memref<9x128x128xbf16, #tpu.memory_space<vmem>>, vector<1x128x128xbf16>
    %32 = vector.shape_cast %31 : vector<1x128x128xbf16> to vector<128x128xbf16>
    %cst_35 = arith.constant dense<0.000000e+00> : vector<64x128xf32>
    %33 = tpu.matmul %29, %32, %cst_35 {dimension_numbers = #tpu.dot_dimension_numbers<[1], [0], [0], [1], [0, 0, 1, 1], [], []>} : vector<64x128xbf16>, vector<128x128xbf16>, vector<64x128xf32> -> vector<64x128xf32>
    %34 = arith.addf %30, %33 : vector<64x128xf32>
    %c0_36 = arith.constant 0 : index
    %c0_37 = arith.constant 0 : index
    %35 = vector.load %arg7[%c0_36, %c0_37] : memref<64x128xf32, #tpu.memory_space<vmem>>, vector<64x128xf32>
    tpu.vector_store %arg7[%c0_36, %c0_37], %34 {strides = array<i32>} : memref<64x128xf32, #tpu.memory_space<vmem>>, vector<64x128xf32>,
    %36 = vector.extract_strided_slice %28 {offsets = [8, 0], sizes = [64, 128], strides = [1, 1]} : vector<80x128xbf16> to vector<64x128xbf16>
    %c0_38 = arith.constant 0 : index
    %c0_39 = arith.constant 0 : index
    %37 = vector.load %arg7[%c0_38, %c0_39] : memref<64x128xf32, #tpu.memory_space<vmem>>, vector<64x128xf32>
    %c4 = arith.constant 4 : index
    %c0_40 = arith.constant 0 : index
    %c0_41 = arith.constant 0 : index
    %38 = vector.load %arg3[%c4, %c0_40, %c0_41] : memref<9x128x128xbf16, #tpu.memory_space<vmem>>, vector<1x128x128xbf16>
    %39 = vector.shape_cast %38 : vector<1x128x128xbf16> to vector<128x128xbf16>
    %cst_42 = arith.constant dense<0.000000e+00> : vector<64x128xf32>
    %40 = tpu.matmul %36, %39, %cst_42 {dimension_numbers = #tpu.dot_dimension_numbers<[1], [0], [0], [1], [0, 0, 1, 1], [], []>} : vector<64x128xbf16>, vector<128x128xbf16>, vector<64x128xf32> -> vector<64x128xf32>
    %41 = arith.addf %37, %40 : vector<64x128xf32>
    %c0_43 = arith.constant 0 : index
    %c0_44 = arith.constant 0 : index
    %42 = vector.load %arg7[%c0_43, %c0_44] : memref<64x128xf32, #tpu.memory_space<vmem>>, vector<64x128xf32>
    tpu.vector_store %arg7[%c0_43, %c0_44], %41 {strides = array<i32>} : memref<64x128xf32, #tpu.memory_space<vmem>>, vector<64x128xf32>,
    %43 = vector.extract_strided_slice %28 {offsets = [16, 0], sizes = [64, 128], strides = [1, 1]} : vector<80x128xbf16> to vector<64x128xbf16>
    %c0_45 = arith.constant 0 : index
    %c0_46 = arith.constant 0 : index
    %44 = vector.load %arg7[%c0_45, %c0_46] : memref<64x128xf32, #tpu.memory_space<vmem>>, vector<64x128xf32>
    %c7 = arith.constant 7 : index
    %c0_47 = arith.constant 0 : index
    %c0_48 = arith.constant 0 : index
    %45 = vector.load %arg3[%c7, %c0_47, %c0_48] : memref<9x128x128xbf16, #tpu.memory_space<vmem>>, vector<1x128x128xbf16>
    %46 = vector.shape_cast %45 : vector<1x128x128xbf16> to vector<128x128xbf16>
    %cst_49 = arith.constant dense<0.000000e+00> : vector<64x128xf32>
    %47 = tpu.matmul %43, %46, %cst_49 {dimension_numbers = #tpu.dot_dimension_numbers<[1], [0], [0], [1], [0, 0, 1, 1], [], []>} : vector<64x128xbf16>, vector<128x128xbf16>, vector<64x128xf32> -> vector<64x128xf32>
    %48 = arith.addf %44, %47 : vector<64x128xf32>
    %c0_50 = arith.constant 0 : index
    %c0_51 = arith.constant 0 : index
    %49 = vector.load %arg7[%c0_50, %c0_51] : memref<64x128xf32, #tpu.memory_space<vmem>>, vector<64x128xf32>
    tpu.vector_store %arg7[%c0_50, %c0_51], %48 {strides = array<i32>} : memref<64x128xf32, #tpu.memory_space<vmem>>, vector<64x128xf32>,
    %c0_52 = arith.constant 0 : index
    %c0_53 = arith.constant 0 : index
    %c2 = arith.constant 2 : index
    %c0_54 = arith.constant 0 : index
    %50 = vector.load %arg2[%c0_52, %c0_53, %c2, %c0_54] : memref<1x10x10x128xbf16, #tpu.memory_space<vmem>>, vector<1x10x8x128xbf16>
    %51 = vector.shape_cast %50 : vector<1x10x8x128xbf16> to vector<10x8x128xbf16>
    %52 = vector.shape_cast %51 : vector<10x8x128xbf16> to vector<80x128xbf16>
    %53 = vector.extract_strided_slice %52 {offsets = [0, 0], sizes = [64, 128], strides = [1, 1]} : vector<80x128xbf16> to vector<64x128xbf16>
    %c0_55 = arith.constant 0 : index
    %c0_56 = arith.constant 0 : index
    %54 = vector.load %arg7[%c0_55, %c0_56] : memref<64x128xf32, #tpu.memory_space<vmem>>, vector<64x128xf32>
    %c2_57 = arith.constant 2 : index
    %c0_58 = arith.constant 0 : index
    %c0_59 = arith.constant 0 : index
    %55 = vector.load %arg3[%c2_57, %c0_58, %c0_59] : memref<9x128x128xbf16, #tpu.memory_space<vmem>>, vector<1x128x128xbf16>
    %56 = vector.shape_cast %55 : vector<1x128x128xbf16> to vector<128x128xbf16>
    %cst_60 = arith.constant dense<0.000000e+00> : vector<64x128xf32>
    %57 = tpu.matmul %53, %56, %cst_60 {dimension_numbers = #tpu.dot_dimension_numbers<[1], [0], [0], [1], [0, 0, 1, 1], [], []>} : vector<64x128xbf16>, vector<128x128xbf16>, vector<64x128xf32> -> vector<64x128xf32>
    %58 = arith.addf %54, %57 : vector<64x128xf32>
    %c0_61 = arith.constant 0 : index
    %c0_62 = arith.constant 0 : index
    %59 = vector.load %arg7[%c0_61, %c0_62] : memref<64x128xf32, #tpu.memory_space<vmem>>, vector<64x128xf32>
    tpu.vector_store %arg7[%c0_61, %c0_62], %58 {strides = array<i32>} : memref<64x128xf32, #tpu.memory_space<vmem>>, vector<64x128xf32>,
    %60 = vector.extract_strided_slice %52 {offsets = [8, 0], sizes = [64, 128], strides = [1, 1]} : vector<80x128xbf16> to vector<64x128xbf16>
    %c0_63 = arith.constant 0 : index
    %c0_64 = arith.constant 0 : index
    %61 = vector.load %arg7[%c0_63, %c0_64] : memref<64x128xf32, #tpu.memory_space<vmem>>, vector<64x128xf32>
    %c5 = arith.constant 5 : index
    %c0_65 = arith.constant 0 : index
    %c0_66 = arith.constant 0 : index
    %62 = vector.load %arg3[%c5, %c0_65, %c0_66] : memref<9x128x128xbf16, #tpu.memory_space<vmem>>, vector<1x128x128xbf16>
    %63 = vector.shape_cast %62 : vector<1x128x128xbf16> to vector<128x128xbf16>
    %cst_67 = arith.constant dense<0.000000e+00> : vector<64x128xf32>
    %64 = tpu.matmul %60, %63, %cst_67 {dimension_numbers = #tpu.dot_dimension_numbers<[1], [0], [0], [1], [0, 0, 1, 1], [], []>} : vector<64x128xbf16>, vector<128x128xbf16>, vector<64x128xf32> -> vector<64x128xf32>
    %65 = arith.addf %61, %64 : vector<64x128xf32>
    %c0_68 = arith.constant 0 : index
    %c0_69 = arith.constant 0 : index
    %66 = vector.load %arg7[%c0_68, %c0_69] : memref<64x128xf32, #tpu.memory_space<vmem>>, vector<64x128xf32>
    tpu.vector_store %arg7[%c0_68, %c0_69], %65 {strides = array<i32>} : memref<64x128xf32, #tpu.memory_space<vmem>>, vector<64x128xf32>,
    %67 = vector.extract_strided_slice %52 {offsets = [16, 0], sizes = [64, 128], strides = [1, 1]} : vector<80x128xbf16> to vector<64x128xbf16>
    %c0_70 = arith.constant 0 : index
    %c0_71 = arith.constant 0 : index
    %68 = vector.load %arg7[%c0_70, %c0_71] : memref<64x128xf32, #tpu.memory_space<vmem>>, vector<64x128xf32>
    %c8 = arith.constant 8 : index
    %c0_72 = arith.constant 0 : index
    %c0_73 = arith.constant 0 : index
    %69 = vector.load %arg3[%c8, %c0_72, %c0_73] : memref<9x128x128xbf16, #tpu.memory_space<vmem>>, vector<1x128x128xbf16>
    %70 = vector.shape_cast %69 : vector<1x128x128xbf16> to vector<128x128xbf16>
    %cst_74 = arith.constant dense<0.000000e+00> : vector<64x128xf32>
    %71 = tpu.matmul %67, %70, %cst_74 {dimension_numbers = #tpu.dot_dimension_numbers<[1], [0], [0], [1], [0, 0, 1, 1], [], []>} : vector<64x128xbf16>, vector<128x128xbf16>, vector<64x128xf32> -> vector<64x128xf32>
    %72 = arith.addf %68, %71 : vector<64x128xf32>
    %c0_75 = arith.constant 0 : index
    %c0_76 = arith.constant 0 : index
    %73 = vector.load %arg7[%c0_75, %c0_76] : memref<64x128xf32, #tpu.memory_space<vmem>>, vector<64x128xf32>
    tpu.vector_store %arg7[%c0_75, %c0_76], %72 {strides = array<i32>} : memref<64x128xf32, #tpu.memory_space<vmem>>, vector<64x128xf32>,
    %c0_77 = arith.constant 0 : index
    %c0_78 = arith.constant 0 : index
    %74 = vector.load %arg7[%c0_77, %c0_78] : memref<64x128xf32, #tpu.memory_space<vmem>>, vector<64x128xf32>
    %c0_79 = arith.constant 0 : index
    %c0_80 = arith.constant 0 : index
    %75 = vector.load %arg4[%c0_79, %c0_80] : memref<1x128xf32, #tpu.memory_space<vmem>>, vector<1x128xf32>
    %76 = vector.broadcast %75 : vector<1x128xf32> to vector<64x128xf32>
    %77 = arith.mulf %74, %76 : vector<64x128xf32>
    %c0_81 = arith.constant 0 : index
    %c0_82 = arith.constant 0 : index
    %78 = vector.load %arg5[%c0_81, %c0_82] : memref<1x128xf32, #tpu.memory_space<vmem>>, vector<1x128xf32>
    %79 = vector.broadcast %78 : vector<1x128xf32> to vector<64x128xf32>
    %80 = arith.addf %77, %79 : vector<64x128xf32>
    %cst_83 = arith.constant 0.000000e+00 : f32
    %81 = vector.broadcast %cst_83 : f32 to vector<64x128xf32>
    %82 = arith.maximumf %80, %81 : vector<64x128xf32>
    %83 = vector.shape_cast %82 : vector<64x128xf32> to vector<8x8x128xf32>
    %84 = arith.truncf %83 : vector<8x8x128xf32> to vector<8x8x128xbf16>
    %c0_84 = arith.constant 0 : index
    %c0_85 = arith.constant 0 : index
    %c0_86 = arith.constant 0 : index
    %c0_87 = arith.constant 0 : index
    %85 = vector.load %arg6[%c0_84, %c0_85, %c0_86, %c0_87] : memref<1x8x8x128xbf16, #tpu.memory_space<vmem>>, vector<1x8x8x128xbf16>
    %86 = vector.shape_cast %85 : vector<1x8x8x128xbf16> to vector<8x8x128xbf16>
    %87 = vector.shape_cast %84 : vector<8x8x128xbf16> to vector<1x8x8x128xbf16>
    tpu.vector_store %arg6[%c0_84, %c0_85, %c0_86, %c0_87], %87 {strides = array<i32>} : memref<1x8x8x128xbf16, #tpu.memory_space<vmem>>, vector<1x8x8x128xbf16>,
    return
  }
  func.func @transform_0(%arg0: i32, %arg1: i32) -> (i32, i32, i32, i32) {
    %c0_i32 = arith.constant 0 : i32
    %c0_i32_0 = arith.constant 0 : i32
    %c0_i32_1 = arith.constant 0 : i32
    %c0_i32_2 = arith.constant 0 : i32
    return %arg0, %c0_i32, %c0_i32_0, %c0_i32_1 : i32, i32, i32, i32
  }
  func.func @transform_1(%arg0: i32, %arg1: i32) -> (i32, i32, i32) {
    %c0_i32 = arith.constant 0 : i32
    %c0_i32_0 = arith.constant 0 : i32
    %c0_i32_1 = arith.constant 0 : i32
    return %c0_i32, %c0_i32_0, %arg1 : i32, i32, i32
  }
  func.func @transform_2(%arg0: i32, %arg1: i32) -> (i32, i32) {
    %c0_i32 = arith.constant 0 : i32
    %c0_i32_0 = arith.constant 0 : i32
    return %c0_i32, %arg1 : i32, i32
  }
  func.func @transform_3(%arg0: i32, %arg1: i32) -> (i32, i32) {
    %c0_i32 = arith.constant 0 : i32
    %c0_i32_0 = arith.constant 0 : i32
    return %c0_i32, %arg1 : i32, i32
  }
  func.func @transform_4(%arg0: i32, %arg1: i32) -> (i32, i32, i32, i32) {
    %c0_i32 = arith.constant 0 : i32
    %c0_i32_0 = arith.constant 0 : i32
    %c0_i32_1 = arith.constant 0 : i32
    return %arg0, %c0_i32, %c0_i32_0, %arg1 : i32, i32, i32, i32
  }
}

module attributes {stable_mosaic.version = 11 : i64} {
  func.func @_cam_kernel(%arg0: i32, %arg1: i32, %arg2: memref<1x128x64xbf16, #tpu.memory_space<vmem>>, %arg3: memref<1x128x64xbf16, #tpu.memory_space<vmem>>, %arg4: memref<1x64x128xbf16, #tpu.memory_space<vmem>>, %arg5: memref<1x64x128xbf16, #tpu.memory_space<vmem>>, %arg6: memref<1x1xf32, #tpu.memory_space<smem>>, %arg7: memref<1x64x128xbf16, #tpu.memory_space<vmem>>) attributes {dimension_semantics = [#tpu.dimension_semantics<parallel>, #tpu.dimension_semantics<parallel>], iteration_bounds = array<i64: 2, 1>, scalar_prefetch = 0 : i64, scratch_operands = 0 : i64, tpu.core_type = #tpu.core_type<tc>, window_params = [{transform_indices = @transform_0, window_bounds = array<i64: 1, 128, 64>}, {transform_indices = @transform_1, window_bounds = array<i64: 1, 128, 64>}, {transform_indices = @transform_2, window_bounds = array<i64: 1, 64, 128>}, {transform_indices = @transform_3, window_bounds = array<i64: 1, 64, 128>}, {transform_indices = @transform_4, window_bounds = array<i64: 1, 1>}, {transform_indices = @transform_5, window_bounds = array<i64: 1, 64, 128>}]} {
    %c0 = arith.constant 0 : index
    %c0_0 = arith.constant 0 : index
    %c0_1 = arith.constant 0 : index
    %0 = vector.load %arg2[%c0, %c0_0, %c0_1] : memref<1x128x64xbf16, #tpu.memory_space<vmem>>, vector<1x128x64xbf16>
    %1 = vector.shape_cast %0 : vector<1x128x64xbf16> to vector<128x64xbf16>
    %c0_2 = arith.constant 0 : index
    %c0_3 = arith.constant 0 : index
    %c0_4 = arith.constant 0 : index
    %2 = vector.load %arg3[%c0_2, %c0_3, %c0_4] : memref<1x128x64xbf16, #tpu.memory_space<vmem>>, vector<1x128x64xbf16>
    %3 = vector.shape_cast %2 : vector<1x128x64xbf16> to vector<128x64xbf16>
    %cst = arith.constant dense<0.000000e+00> : vector<128x128xf32>
    %4 = tpu.matmul %1, %3, %cst {dimension_numbers = #tpu.dot_dimension_numbers<[1], [1], [0], [0], [0, 0, 1, 0], [], []>} : vector<128x64xbf16>, vector<128x64xbf16>, vector<128x128xf32> -> vector<128x128xf32>
    %cst_5 = arith.constant dense<0x7F800000> : vector<128xf32>
    %5 = vector.multi_reduction <minimumf>, %4, %cst_5 [1] : vector<128x128xf32> to vector<128xf32>
    %6 = vector.shape_cast %5 : vector<128xf32> to vector<128x1xf32>
    %7 = vector.broadcast %6 : vector<128x1xf32> to vector<128x128xf32>
    %8 = arith.subf %7, %4 : vector<128x128xf32>
    %9 = math.exp %8 : vector<128x128xf32>
    %cst_6 = arith.constant dense<0.000000e+00> : vector<128xf32>
    %10 = vector.multi_reduction <add>, %9, %cst_6 [1] : vector<128x128xf32> to vector<128xf32>
    %11 = vector.shape_cast %10 : vector<128xf32> to vector<128x1xf32>
    %12 = tpu.reciprocal %11 {approx = true} : vector<128x1xf32> -> vector<128x1xf32>
    %13 = vector.broadcast %12 : vector<128x1xf32> to vector<128x128xf32>
    %14 = arith.mulf %9, %13 : vector<128x128xf32>
    %c0_7 = arith.constant 0 : index
    %c0_8 = arith.constant 0 : index
    %c0_9 = arith.constant 0 : index
    %15 = vector.load %arg4[%c0_7, %c0_8, %c0_9] : memref<1x64x128xbf16, #tpu.memory_space<vmem>>, vector<1x64x128xbf16>
    %16 = vector.shape_cast %15 : vector<1x64x128xbf16> to vector<64x128xbf16>
    %17 = arith.truncf %14 : vector<128x128xf32> to vector<128x128xbf16>
    %cst_10 = arith.constant dense<0.000000e+00> : vector<64x128xf32>
    %18 = tpu.matmul %16, %17, %cst_10 {dimension_numbers = #tpu.dot_dimension_numbers<[1], [1], [0], [0], [0, 0, 1, 0], [], []>} : vector<64x128xbf16>, vector<128x128xbf16>, vector<64x128xf32> -> vector<64x128xf32>
    %c0_11 = arith.constant 0 : index
    %c0_12 = arith.constant 0 : index
    %19 = memref.load %arg6[%c0_11, %c0_12] : memref<1x1xf32, #tpu.memory_space<smem>>
    %20 = vector.broadcast %19 : f32 to vector<64x128xf32>
    %21 = arith.mulf %20, %18 : vector<64x128xf32>
    %c0_13 = arith.constant 0 : index
    %c0_14 = arith.constant 0 : index
    %c0_15 = arith.constant 0 : index
    %22 = vector.load %arg5[%c0_13, %c0_14, %c0_15] : memref<1x64x128xbf16, #tpu.memory_space<vmem>>, vector<1x64x128xbf16>
    %23 = vector.shape_cast %22 : vector<1x64x128xbf16> to vector<64x128xbf16>
    %24 = arith.extf %23 : vector<64x128xbf16> to vector<64x128xf32>
    %25 = arith.addf %21, %24 : vector<64x128xf32>
    %26 = arith.truncf %25 : vector<64x128xf32> to vector<64x128xbf16>
    %c0_16 = arith.constant 0 : index
    %c0_17 = arith.constant 0 : index
    %c0_18 = arith.constant 0 : index
    %27 = vector.load %arg7[%c0_16, %c0_17, %c0_18] : memref<1x64x128xbf16, #tpu.memory_space<vmem>>, vector<1x64x128xbf16>
    %28 = vector.shape_cast %27 : vector<1x64x128xbf16> to vector<64x128xbf16>
    %29 = vector.shape_cast %26 : vector<64x128xbf16> to vector<1x64x128xbf16>
    tpu.vector_store %arg7[%c0_16, %c0_17, %c0_18], %29 {strides = array<i32>} : memref<1x64x128xbf16, #tpu.memory_space<vmem>>, vector<1x64x128xbf16>,
    return
  }
  func.func @transform_0(%arg0: i32, %arg1: i32) -> (i32, i32, i32) {
    %c0_i32 = arith.constant 0 : i32
    %c0_i32_0 = arith.constant 0 : i32
    return %arg0, %arg1, %c0_i32 : i32, i32, i32
  }
  func.func @transform_1(%arg0: i32, %arg1: i32) -> (i32, i32, i32) {
    %c0_i32 = arith.constant 0 : i32
    %c0_i32_0 = arith.constant 0 : i32
    %c0_i32_1 = arith.constant 0 : i32
    return %arg0, %c0_i32, %c0_i32_0 : i32, i32, i32
  }
  func.func @transform_2(%arg0: i32, %arg1: i32) -> (i32, i32, i32) {
    %c0_i32 = arith.constant 0 : i32
    %c0_i32_0 = arith.constant 0 : i32
    %c0_i32_1 = arith.constant 0 : i32
    return %arg0, %c0_i32, %c0_i32_0 : i32, i32, i32
  }
  func.func @transform_3(%arg0: i32, %arg1: i32) -> (i32, i32, i32) {
    %c0_i32 = arith.constant 0 : i32
    %c0_i32_0 = arith.constant 0 : i32
    return %arg0, %c0_i32, %arg1 : i32, i32, i32
  }
  func.func @transform_4(%arg0: i32, %arg1: i32) -> (i32, i32) {
    %c0_i32 = arith.constant 0 : i32
    %c0_i32_0 = arith.constant 0 : i32
    %c0_i32_1 = arith.constant 0 : i32
    return %c0_i32, %c0_i32_0 : i32, i32
  }
  func.func @transform_5(%arg0: i32, %arg1: i32) -> (i32, i32, i32) {
    %c0_i32 = arith.constant 0 : i32
    %c0_i32_0 = arith.constant 0 : i32
    return %arg0, %c0_i32, %arg1 : i32, i32, i32
  }
}

module attributes {stable_mosaic.version = 11 : i64} {
  func.func @kernel(%arg0: i32, %arg1: i32, %arg2: i32, %arg3: memref<128x128xbf16, #tpu.memory_space<vmem>>, %arg4: memref<128x128xbf16, #tpu.memory_space<vmem>>, %arg5: memref<1x128xf32, #tpu.memory_space<vmem>>, %arg6: memref<1x128xf32, #tpu.memory_space<vmem>>, %arg7: memref<128x128xf32, #tpu.memory_space<vmem>>, %arg8: memref<128x128xf32, #tpu.memory_space<vmem>>) attributes {dimension_semantics = [#tpu.dimension_semantics<parallel>, #tpu.dimension_semantics<parallel>, #tpu.dimension_semantics<arbitrary>], iteration_bounds = array<i64: 1, 1, 1>, scalar_prefetch = 0 : i64, scratch_operands = 1 : i64, tpu.core_type = #tpu.core_type<tc>, window_params = [{transform_indices = @transform_0, window_bounds = array<i64: 128, 128>}, {transform_indices = @transform_1, window_bounds = array<i64: 128, 128>}, {transform_indices = @transform_2, window_bounds = array<i64: 1, 128>}, {transform_indices = @transform_3, window_bounds = array<i64: 1, 128>}, {transform_indices = @transform_4, window_bounds = array<i64: 128, 128>}]} {
    %c0_i32 = arith.constant 0 : i32
    %0 = arith.cmpi eq, %arg2, %c0_i32 : i32
    %1 = arith.extui %0 : i1 to i32
    %c0_i32_0 = arith.constant 0 : i32
    %2 = arith.cmpi ne, %1, %c0_i32_0 : i32
    scf.if %2 {
      %cst_10 = arith.constant 0.000000e+00 : f32
      %12 = vector.broadcast %cst_10 : f32 to vector<128x128xf32>
      %c0_11 = arith.constant 0 : index
      %c0_12 = arith.constant 0 : index
      %13 = vector.load %arg8[%c0_11, %c0_12] : memref<128x128xf32, #tpu.memory_space<vmem>>, vector<128x128xf32>
      tpu.vector_store %arg8[%c0_11, %c0_12], %12 {strides = array<i32>} : memref<128x128xf32, #tpu.memory_space<vmem>>, vector<128x128xf32>,
    } else {
    }
    %c0 = arith.constant 0 : index
    %c0_1 = arith.constant 0 : index
    %3 = vector.load %arg8[%c0, %c0_1] : memref<128x128xf32, #tpu.memory_space<vmem>>, vector<128x128xf32>
    %c0_2 = arith.constant 0 : index
    %c0_3 = arith.constant 0 : index
    %4 = vector.load %arg3[%c0_2, %c0_3] : memref<128x128xbf16, #tpu.memory_space<vmem>>, vector<128x128xbf16>
    %c0_4 = arith.constant 0 : index
    %c0_5 = arith.constant 0 : index
    %5 = vector.load %arg4[%c0_4, %c0_5] : memref<128x128xbf16, #tpu.memory_space<vmem>>, vector<128x128xbf16>
    %cst = arith.constant dense<0.000000e+00> : vector<128x128xf32>
    %6 = tpu.matmul %4, %5, %cst {dimension_numbers = #tpu.dot_dimension_numbers<[1], [0], [0], [1], [0, 0, 1, 1], [], []>} : vector<128x128xbf16>, vector<128x128xbf16>, vector<128x128xf32> -> vector<128x128xf32>
    %7 = arith.addf %3, %6 : vector<128x128xf32>
    %c0_6 = arith.constant 0 : index
    %c0_7 = arith.constant 0 : index
    %8 = vector.load %arg8[%c0_6, %c0_7] : memref<128x128xf32, #tpu.memory_space<vmem>>, vector<128x128xf32>
    tpu.vector_store %arg8[%c0_6, %c0_7], %7 {strides = array<i32>} : memref<128x128xf32, #tpu.memory_space<vmem>>, vector<128x128xf32>,
    %c0_i32_8 = arith.constant 0 : i32
    %9 = arith.cmpi eq, %arg2, %c0_i32_8 : i32
    %10 = arith.extui %9 : i1 to i32
    %c0_i32_9 = arith.constant 0 : i32
    %11 = arith.cmpi ne, %10, %c0_i32_9 : i32
    scf.if %11 {
      %c0_10 = arith.constant 0 : index
      %c0_11 = arith.constant 0 : index
      %12 = vector.load %arg8[%c0_10, %c0_11] : memref<128x128xf32, #tpu.memory_space<vmem>>, vector<128x128xf32>
      %c0_12 = arith.constant 0 : index
      %c0_13 = arith.constant 0 : index
      %13 = vector.load %arg5[%c0_12, %c0_13] : memref<1x128xf32, #tpu.memory_space<vmem>>, vector<1x128xf32>
      %14 = vector.broadcast %13 : vector<1x128xf32> to vector<128x128xf32>
      %15 = arith.mulf %12, %14 : vector<128x128xf32>
      %c0_14 = arith.constant 0 : index
      %c0_15 = arith.constant 0 : index
      %16 = vector.load %arg6[%c0_14, %c0_15] : memref<1x128xf32, #tpu.memory_space<vmem>>, vector<1x128xf32>
      %17 = vector.broadcast %16 : vector<1x128xf32> to vector<128x128xf32>
      %18 = arith.addf %15, %17 : vector<128x128xf32>
      %c0_16 = arith.constant 0 : index
      %c0_17 = arith.constant 0 : index
      %19 = vector.load %arg7[%c0_16, %c0_17] : memref<128x128xf32, #tpu.memory_space<vmem>>, vector<128x128xf32>
      tpu.vector_store %arg7[%c0_16, %c0_17], %18 {strides = array<i32>} : memref<128x128xf32, #tpu.memory_space<vmem>>, vector<128x128xf32>,
    } else {
    }
    return
  }
  func.func @transform_0(%arg0: i32, %arg1: i32, %arg2: i32) -> (i32, i32) {
    %c0_i32 = arith.constant 0 : i32
    return %arg0, %arg2 : i32, i32
  }
  func.func @transform_1(%arg0: i32, %arg1: i32, %arg2: i32) -> (i32, i32) {
    %c0_i32 = arith.constant 0 : i32
    return %arg2, %arg1 : i32, i32
  }
  func.func @transform_2(%arg0: i32, %arg1: i32, %arg2: i32) -> (i32, i32) {
    %c0_i32 = arith.constant 0 : i32
    %c0_i32_0 = arith.constant 0 : i32
    return %c0_i32, %arg1 : i32, i32
  }
  func.func @transform_3(%arg0: i32, %arg1: i32, %arg2: i32) -> (i32, i32) {
    %c0_i32 = arith.constant 0 : i32
    %c0_i32_0 = arith.constant 0 : i32
    return %c0_i32, %arg1 : i32, i32
  }
  func.func @transform_4(%arg0: i32, %arg1: i32, %arg2: i32) -> (i32, i32) {
    %c0_i32 = arith.constant 0 : i32
    return %arg0, %arg1 : i32, i32
  }
}

module attributes {stable_mosaic.version = 11 : i64} {
  func.func @kernel(%arg0: i32, %arg1: i32, %arg2: i32, %arg3: memref<128x128xbf16, #tpu.memory_space<vmem>>, %arg4: memref<128x256xbf16, #tpu.memory_space<vmem>>, %arg5: memref<1x256xf32, #tpu.memory_space<vmem>>, %arg6: memref<1x256xf32, #tpu.memory_space<vmem>>, %arg7: memref<128x256xbf16, #tpu.memory_space<vmem>>, %arg8: memref<128x256xf32, #tpu.memory_space<vmem>>) attributes {dimension_semantics = [#tpu.dimension_semantics<parallel>, #tpu.dimension_semantics<parallel>, #tpu.dimension_semantics<arbitrary>], iteration_bounds = array<i64: 1, 2, 1>, scalar_prefetch = 0 : i64, scratch_operands = 1 : i64, tpu.core_type = #tpu.core_type<tc>, window_params = [{transform_indices = @transform_0, window_bounds = array<i64: 128, 128>}, {transform_indices = @transform_1, window_bounds = array<i64: 128, 256>}, {transform_indices = @transform_2, window_bounds = array<i64: 1, 256>}, {transform_indices = @transform_3, window_bounds = array<i64: 1, 256>}, {transform_indices = @transform_4, window_bounds = array<i64: 128, 256>}]} {
    %c0_i32 = arith.constant 0 : i32
    %0 = arith.cmpi eq, %arg2, %c0_i32 : i32
    %1 = arith.extui %0 : i1 to i32
    %c0_i32_0 = arith.constant 0 : i32
    %2 = arith.cmpi ne, %1, %c0_i32_0 : i32
    scf.if %2 {
      %cst_10 = arith.constant 0.000000e+00 : f32
      %12 = vector.broadcast %cst_10 : f32 to vector<128x256xf32>
      %c0_11 = arith.constant 0 : index
      %c0_12 = arith.constant 0 : index
      %13 = vector.load %arg8[%c0_11, %c0_12] : memref<128x256xf32, #tpu.memory_space<vmem>>, vector<128x256xf32>
      tpu.vector_store %arg8[%c0_11, %c0_12], %12 {strides = array<i32>} : memref<128x256xf32, #tpu.memory_space<vmem>>, vector<128x256xf32>,
    } else {
    }
    %c0 = arith.constant 0 : index
    %c0_1 = arith.constant 0 : index
    %3 = vector.load %arg8[%c0, %c0_1] : memref<128x256xf32, #tpu.memory_space<vmem>>, vector<128x256xf32>
    %c0_2 = arith.constant 0 : index
    %c0_3 = arith.constant 0 : index
    %4 = vector.load %arg3[%c0_2, %c0_3] : memref<128x128xbf16, #tpu.memory_space<vmem>>, vector<128x128xbf16>
    %c0_4 = arith.constant 0 : index
    %c0_5 = arith.constant 0 : index
    %5 = vector.load %arg4[%c0_4, %c0_5] : memref<128x256xbf16, #tpu.memory_space<vmem>>, vector<128x256xbf16>
    %cst = arith.constant dense<0.000000e+00> : vector<128x256xf32>
    %6 = tpu.matmul %4, %5, %cst {dimension_numbers = #tpu.dot_dimension_numbers<[1], [0], [0], [1], [0, 0, 1, 1], [], []>} : vector<128x128xbf16>, vector<128x256xbf16>, vector<128x256xf32> -> vector<128x256xf32>
    %7 = arith.addf %3, %6 : vector<128x256xf32>
    %c0_6 = arith.constant 0 : index
    %c0_7 = arith.constant 0 : index
    %8 = vector.load %arg8[%c0_6, %c0_7] : memref<128x256xf32, #tpu.memory_space<vmem>>, vector<128x256xf32>
    tpu.vector_store %arg8[%c0_6, %c0_7], %7 {strides = array<i32>} : memref<128x256xf32, #tpu.memory_space<vmem>>, vector<128x256xf32>,
    %c0_i32_8 = arith.constant 0 : i32
    %9 = arith.cmpi eq, %arg2, %c0_i32_8 : i32
    %10 = arith.extui %9 : i1 to i32
    %c0_i32_9 = arith.constant 0 : i32
    %11 = arith.cmpi ne, %10, %c0_i32_9 : i32
    scf.if %11 {
      %c0_10 = arith.constant 0 : index
      %c0_11 = arith.constant 0 : index
      %12 = vector.load %arg8[%c0_10, %c0_11] : memref<128x256xf32, #tpu.memory_space<vmem>>, vector<128x256xf32>
      %c0_12 = arith.constant 0 : index
      %c0_13 = arith.constant 0 : index
      %13 = vector.load %arg5[%c0_12, %c0_13] : memref<1x256xf32, #tpu.memory_space<vmem>>, vector<1x256xf32>
      %14 = vector.broadcast %13 : vector<1x256xf32> to vector<128x256xf32>
      %15 = arith.mulf %12, %14 : vector<128x256xf32>
      %c0_14 = arith.constant 0 : index
      %c0_15 = arith.constant 0 : index
      %16 = vector.load %arg6[%c0_14, %c0_15] : memref<1x256xf32, #tpu.memory_space<vmem>>, vector<1x256xf32>
      %17 = vector.broadcast %16 : vector<1x256xf32> to vector<128x256xf32>
      %18 = arith.addf %15, %17 : vector<128x256xf32>
      %19 = arith.truncf %18 : vector<128x256xf32> to vector<128x256xbf16>
      %c0_16 = arith.constant 0 : index
      %c0_17 = arith.constant 0 : index
      %20 = vector.load %arg7[%c0_16, %c0_17] : memref<128x256xbf16, #tpu.memory_space<vmem>>, vector<128x256xbf16>
      tpu.vector_store %arg7[%c0_16, %c0_17], %19 {strides = array<i32>} : memref<128x256xbf16, #tpu.memory_space<vmem>>, vector<128x256xbf16>,
    } else {
    }
    return
  }
  func.func @transform_0(%arg0: i32, %arg1: i32, %arg2: i32) -> (i32, i32) {
    %c0_i32 = arith.constant 0 : i32
    return %arg0, %arg2 : i32, i32
  }
  func.func @transform_1(%arg0: i32, %arg1: i32, %arg2: i32) -> (i32, i32) {
    %c0_i32 = arith.constant 0 : i32
    return %arg2, %arg1 : i32, i32
  }
  func.func @transform_2(%arg0: i32, %arg1: i32, %arg2: i32) -> (i32, i32) {
    %c0_i32 = arith.constant 0 : i32
    %c0_i32_0 = arith.constant 0 : i32
    return %c0_i32, %arg1 : i32, i32
  }
  func.func @transform_3(%arg0: i32, %arg1: i32, %arg2: i32) -> (i32, i32) {
    %c0_i32 = arith.constant 0 : i32
    %c0_i32_0 = arith.constant 0 : i32
    return %c0_i32, %arg1 : i32, i32
  }
  func.func @transform_4(%arg0: i32, %arg1: i32, %arg2: i32) -> (i32, i32) {
    %c0_i32 = arith.constant 0 : i32
    return %arg0, %arg1 : i32, i32
  }
}

module attributes {stable_mosaic.version = 11 : i64} {
  func.func @_pam_kernel(%arg0: i32, %arg1: i32, %arg2: memref<1x64x128xbf16, #tpu.memory_space<vmem>>, %arg3: memref<1x64x128xbf16, #tpu.memory_space<vmem>>, %arg4: memref<1x64x128xbf16, #tpu.memory_space<vmem>>, %arg5: memref<1x64x128xbf16, #tpu.memory_space<vmem>>, %arg6: memref<1x1xf32, #tpu.memory_space<smem>>, %arg7: memref<1x64x128xbf16, #tpu.memory_space<vmem>>) attributes {dimension_semantics = [#tpu.dimension_semantics<parallel>, #tpu.dimension_semantics<parallel>], iteration_bounds = array<i64: 2, 1>, scalar_prefetch = 0 : i64, scratch_operands = 0 : i64, tpu.core_type = #tpu.core_type<tc>, window_params = [{transform_indices = @transform_0, window_bounds = array<i64: 1, 64, 128>}, {transform_indices = @transform_1, window_bounds = array<i64: 1, 64, 128>}, {transform_indices = @transform_2, window_bounds = array<i64: 1, 64, 128>}, {transform_indices = @transform_3, window_bounds = array<i64: 1, 64, 128>}, {transform_indices = @transform_4, window_bounds = array<i64: 1, 1>}, {transform_indices = @transform_5, window_bounds = array<i64: 1, 64, 128>}]} {
    %c0 = arith.constant 0 : index
    %c0_0 = arith.constant 0 : index
    %c0_1 = arith.constant 0 : index
    %0 = vector.load %arg2[%c0, %c0_0, %c0_1] : memref<1x64x128xbf16, #tpu.memory_space<vmem>>, vector<1x64x128xbf16>
    %1 = vector.shape_cast %0 : vector<1x64x128xbf16> to vector<64x128xbf16>
    %c0_2 = arith.constant 0 : index
    %c0_3 = arith.constant 0 : index
    %c0_4 = arith.constant 0 : index
    %2 = vector.load %arg3[%c0_2, %c0_3, %c0_4] : memref<1x64x128xbf16, #tpu.memory_space<vmem>>, vector<1x64x128xbf16>
    %3 = vector.shape_cast %2 : vector<1x64x128xbf16> to vector<64x128xbf16>
    %c0_5 = arith.constant 0 : index
    %c0_6 = arith.constant 0 : index
    %c0_7 = arith.constant 0 : index
    %4 = vector.load %arg4[%c0_5, %c0_6, %c0_7] : memref<1x64x128xbf16, #tpu.memory_space<vmem>>, vector<1x64x128xbf16>
    %5 = vector.shape_cast %4 : vector<1x64x128xbf16> to vector<64x128xbf16>
    %cst = arith.constant dense<0.000000e+00> : vector<64x64xf32>
    %6 = tpu.matmul %1, %3, %cst {dimension_numbers = #tpu.dot_dimension_numbers<[1], [1], [0], [0], [0, 0, 1, 0], [], []>} : vector<64x128xbf16>, vector<64x128xbf16>, vector<64x64xf32> -> vector<64x64xf32>
    %cst_8 = arith.constant dense<0xFF800000> : vector<64xf32>
    %7 = vector.multi_reduction <maximumf>, %6, %cst_8 [1] : vector<64x64xf32> to vector<64xf32>
    %8 = vector.shape_cast %7 : vector<64xf32> to vector<64x1xf32>
    %9 = vector.broadcast %8 : vector<64x1xf32> to vector<64x64xf32>
    %10 = arith.subf %6, %9 : vector<64x64xf32>
    %11 = math.exp %10 : vector<64x64xf32>
    %cst_9 = arith.constant dense<0.000000e+00> : vector<64xf32>
    %12 = vector.multi_reduction <add>, %11, %cst_9 [1] : vector<64x64xf32> to vector<64xf32>
    %13 = vector.shape_cast %12 : vector<64xf32> to vector<64x1xf32>
    %14 = tpu.reciprocal %13 {approx = true} : vector<64x1xf32> -> vector<64x1xf32>
    %15 = vector.broadcast %14 : vector<64x1xf32> to vector<64x64xf32>
    %16 = arith.mulf %11, %15 : vector<64x64xf32>
    %17 = arith.truncf %16 : vector<64x64xf32> to vector<64x64xbf16>
    %cst_10 = arith.constant dense<0.000000e+00> : vector<64x128xf32>
    %18 = tpu.matmul %17, %5, %cst_10 {dimension_numbers = #tpu.dot_dimension_numbers<[1], [0], [0], [1], [0, 0, 1, 1], [], []>} : vector<64x64xbf16>, vector<64x128xbf16>, vector<64x128xf32> -> vector<64x128xf32>
    %c0_11 = arith.constant 0 : index
    %c0_12 = arith.constant 0 : index
    %19 = memref.load %arg6[%c0_11, %c0_12] : memref<1x1xf32, #tpu.memory_space<smem>>
    %20 = vector.broadcast %19 : f32 to vector<64x128xf32>
    %21 = arith.mulf %20, %18 : vector<64x128xf32>
    %c0_13 = arith.constant 0 : index
    %c0_14 = arith.constant 0 : index
    %c0_15 = arith.constant 0 : index
    %22 = vector.load %arg5[%c0_13, %c0_14, %c0_15] : memref<1x64x128xbf16, #tpu.memory_space<vmem>>, vector<1x64x128xbf16>
    %23 = vector.shape_cast %22 : vector<1x64x128xbf16> to vector<64x128xbf16>
    %24 = arith.extf %23 : vector<64x128xbf16> to vector<64x128xf32>
    %25 = arith.addf %21, %24 : vector<64x128xf32>
    %26 = arith.truncf %25 : vector<64x128xf32> to vector<64x128xbf16>
    %c0_16 = arith.constant 0 : index
    %c0_17 = arith.constant 0 : index
    %c0_18 = arith.constant 0 : index
    %27 = vector.load %arg7[%c0_16, %c0_17, %c0_18] : memref<1x64x128xbf16, #tpu.memory_space<vmem>>, vector<1x64x128xbf16>
    %28 = vector.shape_cast %27 : vector<1x64x128xbf16> to vector<64x128xbf16>
    %29 = vector.shape_cast %26 : vector<64x128xbf16> to vector<1x64x128xbf16>
    tpu.vector_store %arg7[%c0_16, %c0_17, %c0_18], %29 {strides = array<i32>} : memref<1x64x128xbf16, #tpu.memory_space<vmem>>, vector<1x64x128xbf16>,
    return
  }
  func.func @transform_0(%arg0: i32, %arg1: i32) -> (i32, i32, i32) {
    %c1_i32 = arith.constant 1 : i32
    %c0_i32 = arith.constant 0 : i32
    return %arg0, %arg1, %c1_i32 : i32, i32, i32
  }
  func.func @transform_1(%arg0: i32, %arg1: i32) -> (i32, i32, i32) {
    %c0_i32 = arith.constant 0 : i32
    %c2_i32 = arith.constant 2 : i32
    %c0_i32_0 = arith.constant 0 : i32
    return %arg0, %c0_i32, %c2_i32 : i32, i32, i32
  }
  func.func @transform_2(%arg0: i32, %arg1: i32) -> (i32, i32, i32) {
    %c0_i32 = arith.constant 0 : i32
    %c0_i32_0 = arith.constant 0 : i32
    %c0_i32_1 = arith.constant 0 : i32
    return %arg0, %c0_i32, %c0_i32_0 : i32, i32, i32
  }
  func.func @transform_3(%arg0: i32, %arg1: i32) -> (i32, i32, i32) {
    %c0_i32 = arith.constant 0 : i32
    %c0_i32_0 = arith.constant 0 : i32
    return %arg0, %arg1, %c0_i32 : i32, i32, i32
  }
  func.func @transform_4(%arg0: i32, %arg1: i32) -> (i32, i32) {
    %c0_i32 = arith.constant 0 : i32
    %c0_i32_0 = arith.constant 0 : i32
    %c0_i32_1 = arith.constant 0 : i32
    return %c0_i32, %c0_i32_0 : i32, i32
  }
  func.func @transform_5(%arg0: i32, %arg1: i32) -> (i32, i32, i32) {
    %c0_i32 = arith.constant 0 : i32
    %c0_i32_0 = arith.constant 0 : i32
    return %arg0, %arg1, %c0_i32 : i32, i32, i32
  }
}

</mosaic_0001>

<llo_original>
// kernel: _lambda_.14
$region0: #{_lambda_.14}
  #allocation0 [shape = 'u32[]', space=smem, size = 0x4, offset = 0x4, fixed_abs, tag = 'smem constant byte address 0x4 - core index']
  #allocation1 [shape = 'u32[144,128]{1,0:T(1,128)}', space=vmem, size = 0x12000, scoped, tag = 'internal scratch']
  #allocation2 [shape = 'f32[1,1]{1,0:T(1,128)S(6)}', space=smem, size = 0x200, scoped, tag = 'scoped memory for _lambda_.14']
  %s0 = inlined_call_operand.vmem [shape: bf16[2,128,64], index: 0, kind: input, shape index: {}, may-alias: {0,1}]
  %s1 = inlined_call_operand.vmem [shape: bf16[2,128,64], index: 1, kind: input, shape index: {}, may-alias: {0,1}]
  %s2 = inlined_call_operand.vmem [shape: bf16[2,64,128], index: 2, kind: input, shape index: {}, may-alias: {2,3}]
  %s3 = inlined_call_operand.vmem [shape: bf16[2,64,128], index: 3, kind: input, shape index: {}, may-alias: {2,3}]
  %s4 = inlined_call_operand.<no memory space> [shape: f32[1,1], index: 4, kind: input, shape index: {}]
  %s5 = inlined_call_operand.vmem [shape: bf16[2,64,128], index: 5, kind: output, shape index: {}]
  %s6 = sld [smem:[#allocation0]]
  $region53: #{_lambda_.14} parent=0
    _
  %s8 = ssub.s32 1, %s6
  %s9 = scalar_select 0, %s8, %s6
  %10 = sst [smem:[#allocation2]] %s4
  loop: start=0, step=1, limit=4
  $region2: #{_lambda_.14} parent=0 // loop_pre_header
    _
  $region3: #{_lambda_.14} parent=0 // loop_header
    %s12 = sphi 0, %s16
    %p13 = scmp.ge.s32.totalorder %s12, 4
    %s19 = sphi 0, %s31
    %s20 = sphi 0, %s27
    %s21 = sphi 0, %s19
    %s22 = sphi 0, %s20
    %s23 = sphi 0, %s21
    %s24 = sphi 0, %s22
    %s36 = sphi 0, %s38
    %s39 = sphi 0, %s36
    %s40 = sphi 0, %s39
    %s56 = sphi 0, %s40
    %s62 = sphi 0, %s64
    %s65 = sphi 0, %s62
    %s66 = sphi 0, %s65
    %s82 = sphi 0, %s66
    %s88 = sphi 0, %s90
    %s91 = sphi 0, %s88
    %s92 = sphi 0, %s91
    %s108 = sphi 0, %s92
    %s116 = sphi 0, %s118
    %s119 = sphi 0, %s116
    %s120 = sphi 0, %s119
    %s136 = sphi 0, %s120
    %s140 = sphi 0, %s140
    %s142 = sphi 0, %s140
    %s143 = sphi 0, %s142
    %s157 = sphi 0, %s143
    %s165 = sphi 0, %s167
    %s168 = sphi 0, %s165
    %s169 = sphi 0, %s168
    %s185 = sphi 0, %s169
  $region4: #{_lambda_.14} parent=0 // loop_header_branch
    %15 = sbr.rel (%p13) target = $region8
  $region5: #{_lambda_.14} parent=0 // loop_body
    %s17 = ssub.s32 %s12, 1
    %s18 = ssub.s32 %s12, 2
    %s25 = sadd.s32 1, %s20
    %p26 = scmp.ge.s32.totalorder %s25, 1
    %s27 = scalar_select %p26, 0, %s25
    %s28 = sadd.s32 1, %s19
    %s29 = scalar_select %p26, %s28, %s19
    %p30 = scmp.ge.s32.totalorder %s29, 2
    %s31 = scalar_select %p30, 0, %s29
    %s32 = ssub.s32 %s19, %s31
    %s33 = ssub.s32 %s20, %s27
    %s34 = sor.u32 %s32, %s33
    %p35 = scmp.eq.s32.totalorder %s34, 0
    %s37 = sadd.s32 %s36, 1
    %s38 = scalar_select %p35, %s36, %s37
    %p41 = pneg %p35
    %p42 = scmp.eq.s32.totalorder %s12, 1
    %p43 = por %p41, %p42
    %p44 = scmp.ne.s32.totalorder %s36, %s39
    %p45 = scmp.eq.s32.totalorder %s12, 0
    %p46 = por %p44, %p45
    %p47 = scmp.ne.s32.totalorder %s36, %s39
    %p48 = scmp.eq.s32.totalorder %s17, 1
    %p49 = por %p47, %p48
    %p50 = scmp.ne.s32.totalorder %s39, %s40
    %p51 = scmp.eq.s32.totalorder %s17, 0
    %p52 = por %p50, %p51
    %p53 = scmp.ne.s32.totalorder %s39, %s40
    %p54 = scmp.eq.s32.totalorder %s18, 1
    %p55 = por %p53, %p54
    %p57 = scmp.ne.s32.totalorder %s40, %s56
    %p58 = scmp.eq.s32.totalorder %s18, 0
    %p59 = por %p57, %p58
    %s60 = ssub.s32 %s19, %s31
    %p61 = scmp.eq.s32.totalorder %s60, 0
    %s63 = sadd.s32 %s62, 1
    %s64 = scalar_select %p61, %s62, %s63
    %p67 = pneg %p61
    %p68 = scmp.eq.s32.totalorder %s12, 1
    %p69 = por %p67, %p68
    %p70 = scmp.ne.s32.totalorder %s62, %s65
    %p71 = scmp.eq.s32.totalorder %s12, 0
    %p72 = por %p70, %p71
    %p73 = scmp.ne.s32.totalorder %s62, %s65
    %p74 = scmp.eq.s32.totalorder %s17, 1
    %p75 = por %p73, %p74
    %p76 = scmp.ne.s32.totalorder %s65, %s66
    %p77 = scmp.eq.s32.totalorder %s17, 0
    %p78 = por %p76, %p77
    %p79 = scmp.ne.s32.totalorder %s65, %s66
    %p80 = scmp.eq.s32.totalorder %s18, 1
    %p81 = por %p79, %p80
    %p83 = scmp.ne.s32.totalorder %s66, %s82
    %p84 = scmp.eq.s32.totalorder %s18, 0
    %p85 = por %p83, %p84
    %s86 = ssub.s32 %s19, %s31
    %p87 = scmp.eq.s32.totalorder %s86, 0
    %s89 = sadd.s32 %s88, 1
    %s90 = scalar_select %p87, %s88, %s89
    %p93 = pneg %p87
    %p94 = scmp.eq.s32.totalorder %s12, 1
    %p95 = por %p93, %p94
    %p96 = scmp.ne.s32.totalorder %s88, %s91
    %p97 = scmp.eq.s32.totalorder %s12, 0
    %p98 = por %p96, %p97
    %p99 = scmp.ne.s32.totalorder %s88, %s91
    %p100 = scmp.eq.s32.totalorder %s17, 1
    %p101 = por %p99, %p100
    %p102 = scmp.ne.s32.totalorder %s91, %s92
    %p103 = scmp.eq.s32.totalorder %s17, 0
    %p104 = por %p102, %p103
    %p105 = scmp.ne.s32.totalorder %s91, %s92
    %p106 = scmp.eq.s32.totalorder %s18, 1
    %p107 = por %p105, %p106
    %p109 = scmp.ne.s32.totalorder %s92, %s108
    %p110 = scmp.eq.s32.totalorder %s18, 0
    %p111 = por %p109, %p110
    %s112 = ssub.s32 %s19, %s31
    %s113 = ssub.s32 %s20, %s27
    %s114 = sor.u32 %s112, %s113
    %p115 = scmp.eq.s32.totalorder %s114, 0
    %s117 = sadd.s32 %s116, 1
    %s118 = scalar_select %p115, %s116, %s117
    %p121 = pneg %p115
    %p122 = scmp.eq.s32.totalorder %s12, 1
    %p123 = por %p121, %p122
    %p124 = scmp.ne.s32.totalorder %s116, %s119
    %p125 = scmp.eq.s32.totalorder %s12, 0
    %p126 = por %p124, %p125
    %p127 = scmp.ne.s32.totalorder %s116, %s119
    %p128 = scmp.eq.s32.totalorder %s17, 1
    %p129 = por %p127, %p128
    %p130 = scmp.ne.s32.totalorder %s119, %s120
    %p131 = scmp.eq.s32.totalorder %s17, 0
    %p132 = por %p130, %p131
    %p133 = scmp.ne.s32.totalorder %s119, %s120
    %p134 = scmp.eq.s32.totalorder %s18, 1
    %p135 = por %p133, %p134
    %p137 = scmp.ne.s32.totalorder %s120, %s136
    %p138 = scmp.eq.s32.totalorder %s18, 0
    %p139 = por %p137, %p138
    %s141 = sadd.s32 %s140, 1
    %p144 = scmp.eq.s32.totalorder %s12, 1
    %p145 = scmp.ne.s32.totalorder %s140, %s142
    %p146 = scmp.eq.s32.totalorder %s12, 0
    %p147 = por %p145, %p146
    %p148 = scmp.ne.s32.totalorder %s140, %s142
    %p149 = scmp.eq.s32.totalorder %s17, 1
    %p150 = por %p148, %p149
    %p151 = scmp.ne.s32.totalorder %s142, %s143
    %p152 = scmp.eq.s32.totalorder %s17, 0
    %p153 = por %p151, %p152
    %p154 = scmp.ne.s32.totalorder %s142, %s143
    %p155 = scmp.eq.s32.totalorder %s18, 1
    %p156 = por %p154, %p155
    %p158 = scmp.ne.s32.totalorder %s143, %s157
    %p159 = scmp.eq.s32.totalorder %s18, 0
    %p160 = por %p158, %p159
    %s161 = ssub.s32 %s19, %s31
    %s162 = ssub.s32 %s20, %s27
    %s163 = sor.u32 %s161, %s162
    %p164 = scmp.eq.s32.totalorder %s163, 0
    %s166 = sadd.s32 %s165, 1
    %s167 = scalar_select %p164, %s165, %s166
    %p170 = pneg %p164
    %p171 = scmp.eq.s32.totalorder %s12, 1
    %p172 = por %p170, %p171
    %p173 = scmp.ne.s32.totalorder %s165, %s168
    %p174 = scmp.eq.s32.totalorder %s12, 0
    %p175 = por %p173, %p174
    %p176 = scmp.ne.s32.totalorder %s165, %s168
    %p177 = scmp.eq.s32.totalorder %s17, 1
    %p178 = por %p176, %p177
    %p179 = scmp.ne.s32.totalorder %s168, %s169
    %p180 = scmp.eq.s32.totalorder %s17, 0
    %p181 = por %p179, %p180
    %p182 = scmp.ne.s32.totalorder %s168, %s169
    %p183 = scmp.eq.s32.totalorder %s18, 1
    %p184 = por %p182, %p183
    %p186 = scmp.ne.s32.totalorder %s169, %s185
    %p187 = scmp.eq.s32.totalorder %s18, 0
    %p188 = por %p186, %p187
    %p189 = scmp.le.s32.totalorder 1, %s12
    %p190 = scmp.lt.s32.totalorder %s12, 3
    %p191 = pnand %p189, %p190
    %p192 = pneg %p191
    // Predicated region
    $region9: #{_lambda_.14} parent=5 // pred_check
      _
    $region10: #{_lambda_.14} parent=5 // pred_check_branch
      %194 = sbr.rel (%p191) target = $region12
    $region11: #{_lambda_.14} parent=5 // pred_region
      %s195 = ssub.s32 %s12, 1
      // Predicated region
      $region13: #{_lambda_.14} parent=11 // pred_check
        %p196 = pneg %p153
      $region14: #{_lambda_.14} parent=11 // pred_check_branch
        %198 = sbr.rel (%p196) target = $region16
      $region15: #{_lambda_.14} parent=11 // pred_region
        _
      $region16: #{_lambda_.14} parent=11 // pred_fallthru
        _
    $region12: #{_lambda_.14} parent=5 // pred_fallthru
      _
    %p199 = scmp.lt.s32.totalorder %s12, 2
    // Predicated region
    $region17: #{_lambda_.14} parent=5 // pred_check
      %p200 = pneg %p199
    $region18: #{_lambda_.14} parent=5 // pred_check_branch
      %202 = sbr.rel (%p200) target = $region20
    $region19: #{_lambda_.14} parent=5 // pred_region
      // Predicated region
      $region21: #{_lambda_.14} parent=19 // pred_check
        %p203 = pneg %p46
      $region22: #{_lambda_.14} parent=19 // pred_check_branch
        %205 = sbr.rel (%p203) target = $region24
      $region23: #{_lambda_.14} parent=19 // pred_region
        %s206 = smul.u32 16, %s20
        %p207 = scmp.lt.s32.totalorder %s19, 1
        %s208 = scalar_select %p207, %s19, 1
        %p209 = scmp.lt.s32.totalorder %s206, 15
        %s210 = scalar_select %p209, %s206, 15
        %s211 = smul.addr %s208, 16
        %s212 = sadd.s32 %s210, %s211
        %s213 = smul.addr %s212, 4
        %s214 = scalar_lea.vmem %s0, %s213
        %s215 = smul.u32 16, %s20
      $region24: #{_lambda_.14} parent=19 // pred_fallthru
        _
      // Predicated region
      $region25: #{_lambda_.14} parent=19 // pred_check
        %p216 = pneg %p72
      $region26: #{_lambda_.14} parent=19 // pred_check_branch
        %218 = sbr.rel (%p216) target = $region28
      $region27: #{_lambda_.14} parent=19 // pred_region
        %p219 = scmp.lt.s32.totalorder %s19, 1
        %s220 = scalar_select %p219, %s19, 1
        %s221 = smul.addr %s220, 16
        %s222 = smul.addr %s221, 4
        %s223 = scalar_lea.vmem %s1, %s222
      $region28: #{_lambda_.14} parent=19 // pred_fallthru
        _
      // Predicated region
      $region29: #{_lambda_.14} parent=19 // pred_check
        %p224 = pneg %p98
      $region30: #{_lambda_.14} parent=19 // pred_check_branch
        %226 = sbr.rel (%p224) target = $region32
      $region31: #{_lambda_.14} parent=19 // pred_region
        %p227 = scmp.lt.s32.totalorder %s19, 1
        %s228 = scalar_select %p227, %s19, 1
        %s229 = smul.addr %s228, 8
        %s230 = smul.addr %s229, 4
        %s231 = scalar_lea.vmem %s2, %s230
      $region32: #{_lambda_.14} parent=19 // pred_fallthru
        _
      // Predicated region
      $region33: #{_lambda_.14} parent=19 // pred_check
        %p232 = pneg %p126
      $region34: #{_lambda_.14} parent=19 // pred_check_branch
        %234 = sbr.rel (%p232) target = $region36
      $region35: #{_lambda_.14} parent=19 // pred_region
        %p235 = scmp.lt.s32.totalorder %s19, 1
        %s236 = scalar_select %p235, %s19, 1
        %p237 = scmp.lt.s32.totalorder %s20, 0
        %s238 = scalar_select %p237, %s20, 0
        %s239 = smul.addr %s236, 8
        %s240 = sadd.s32 %s238, %s239
        %s241 = smul.addr %s240, 4
        %s242 = scalar_lea.vmem %s3, %s241
      $region36: #{_lambda_.14} parent=19 // pred_fallthru
        _
    $region20: #{_lambda_.14} parent=5 // pred_fallthru
      _
    %p243 = scmp.le.s32.totalorder 1, %s12
    %p244 = scmp.lt.s32.totalorder %s12, 3
    %p245 = pnand %p243, %p244
    %p246 = pneg %p245
    // Predicated region
    $region37: #{_lambda_.14} parent=5 // pred_check
      _
    $region38: #{_lambda_.14} parent=5 // pred_check_branch
      %248 = sbr.rel (%p245) target = $region40
    $region39: #{_lambda_.14} parent=5 // pred_region
      %s249 = ssub.s32 %s12, 1
      %s250 = smul.u32 16, %s22
      %p251 = scmp.lt.s32.totalorder %s21, 1
      %s252 = scalar_select %p251, %s21, 1
      %p253 = scmp.lt.s32.totalorder %s250, 15
      %s254 = scalar_select %p253, %s250, 15
      %s255 = smul.addr %s252, 16
      %s256 = sadd.s32 %s254, %s255
      %s257 = smul.addr %s256, 4
      %s258 = scalar_lea.vmem %s0, %s257
      %p259 = pneg %p52
      %p260 = pneg %p49
      %p261 = scmp.lt.s32.totalorder %s21, 1
      %s262 = scalar_select %p261, %s21, 1
      %s263 = smul.addr %s262, 16
      %s264 = smul.addr %s263, 4
      %s265 = scalar_lea.vmem %s1, %s264
      %p266 = pneg %p78
      %p267 = pneg %p75
      %p268 = scmp.lt.s32.totalorder %s21, 1
      %s269 = scalar_select %p268, %s21, 1
      %s270 = smul.addr %s269, 8
      %s271 = smul.addr %s270, 4
      %s272 = scalar_lea.vmem %s2, %s271
      %p273 = pneg %p104
      %p274 = pneg %p101
      %p275 = scmp.lt.s32.totalorder %s21, 1
      %s276 = scalar_select %p275, %s21, 1
      %p277 = scmp.lt.s32.totalorder %s22, 0
      %s278 = scalar_select %p277, %s22, 0
      %s279 = smul.addr %s276, 8
      %s280 = sadd.s32 %s278, %s279
      %s281 = smul.addr %s280, 4
      %s282 = scalar_lea.vmem %s3, %s281
      %p283 = pneg %p132
      %p284 = pneg %p129
      %p285 = pneg %p153
      %p286 = pneg %p150
      %p287 = pneg %p181
      %p288 = pneg %p178
      %p289 = scmp.lt.s32.totalorder %s21, 1
      %s290 = scalar_select %p289, %s21, 1
      %p291 = scmp.lt.s32.totalorder %s22, 0
      %s292 = scalar_select %p291, %s22, 0
      %s293 = smul.addr %s290, 8
      %s294 = sadd.s32 %s292, %s293
      %s295 = smul.addr %s294, 4
      %s296 = scalar_lea.vmem %s5, %s295
      %s297 = smul.u32 16, %s22
      %p298 = scmp.lt.s32.totalorder %s21, 1
      %s299 = scalar_select %p298, %s21, 1
      %p300 = scmp.lt.s32.totalorder %s297, 15
      %s301 = scalar_select %p300, %s297, 15
      %s302 = smul.addr %s299, 16
      %s303 = sadd.s32 %s301, %s302
      %s304 = smul.addr %s303, 4
      %s305 = scalar_lea.vmem %s0, %s304
      %s306 = smul.u32 16, %s22
      %p307 = scmp.lt.s32.totalorder %s21, 1
      %s308 = scalar_select %p307, %s21, 1
      %s309 = smul.addr %s308, 16
      %s310 = smul.addr %s309, 4
      %s311 = scalar_lea.vmem %s1, %s310
      %p312 = scmp.lt.s32.totalorder %s21, 1
      %s313 = scalar_select %p312, %s21, 1
      %s314 = smul.addr %s313, 8
      %s315 = smul.addr %s314, 4
      %s316 = scalar_lea.vmem %s2, %s315
      %p317 = scmp.lt.s32.totalorder %s21, 1
      %s318 = scalar_select %p317, %s21, 1
      %p319 = scmp.lt.s32.totalorder %s22, 0
      %s320 = scalar_select %p319, %s22, 0
      %s321 = smul.addr %s318, 8
      %s322 = sadd.s32 %s320, %s321
      %s323 = smul.addr %s322, 4
      %s324 = scalar_lea.vmem %s3, %s323
      %p325 = scmp.lt.s32.totalorder %s21, 1
      %s326 = scalar_select %p325, %s21, 1
      %p327 = scmp.lt.s32.totalorder %s22, 0
      %s328 = scalar_select %p327, %s22, 0
      %s329 = smul.addr %s326, 8
      %s330 = sadd.s32 %s328, %s329
      %s331 = smul.addr %s330, 4
      %s332 = scalar_lea.vmem %s5, %s331
      %v334 = vld [vmem:[%s305] sm:$0xf]
      %v335 = vld [vmem:[%s305 + $0x4] sm:$0xf]
      %v336 = vld [vmem:[%s305 + $0x8] sm:$0xf]
      %v337 = vld [vmem:[%s305 + $0xc] sm:$0xf]
      %v338 = vld [vmem:[%s305 + $0x10] sm:$0xf]
      %v339 = vld [vmem:[%s305 + $0x14] sm:$0xf]
      %v340 = vld [vmem:[%s305 + $0x18] sm:$0xf]
      %v341 = vld [vmem:[%s305 + $0x1c] sm:$0xf]
      %v342 = vld [vmem:[%s305 + $0x20] sm:$0xf]
      %v343 = vld [vmem:[%s305 + $0x24] sm:$0xf]
      %v344 = vld [vmem:[%s305 + $0x28] sm:$0xf]
      %v345 = vld [vmem:[%s305 + $0x2c] sm:$0xf]
      %v346 = vld [vmem:[%s305 + $0x30] sm:$0xf]
      %v347 = vld [vmem:[%s305 + $0x34] sm:$0xf]
      %v348 = vld [vmem:[%s305 + $0x38] sm:$0xf]
      %v349 = vld [vmem:[%s305 + $0x3c] sm:$0xf]
      %v350 = vld [vmem:[%s311] sm:$0xf]
      %v351 = vld [vmem:[%s311 + $0x4] sm:$0xf]
      %v352 = vld [vmem:[%s311 + $0x8] sm:$0xf]
      %v353 = vld [vmem:[%s311 + $0xc] sm:$0xf]
      %v354 = vld [vmem:[%s311 + $0x10] sm:$0xf]
      %v355 = vld [vmem:[%s311 + $0x14] sm:$0xf]
      %v356 = vld [vmem:[%s311 + $0x18] sm:$0xf]
      %v357 = vld [vmem:[%s311 + $0x1c] sm:$0xf]
      %v358 = vld [vmem:[%s311 + $0x20] sm:$0xf]
      %v359 = vld [vmem:[%s311 + $0x24] sm:$0xf]
      %v360 = vld [vmem:[%s311 + $0x28] sm:$0xf]
      %v361 = vld [vmem:[%s311 + $0x2c] sm:$0xf]
      %v362 = vld [vmem:[%s311 + $0x30] sm:$0xf]
      %v363 = vld [vmem:[%s311 + $0x34] sm:$0xf]
      %v364 = vld [vmem:[%s311 + $0x38] sm:$0xf]
      %v365 = vld [vmem:[%s311 + $0x3c] sm:$0xf]
      %v382 = vunpack.c.l.b16 %v334
      %v383 = vunpack.c.l.b16 %v335
      %v384 = vunpack.c.l.b16 %v336
      %v385 = vunpack.c.l.b16 %v337
      %v386 = vunpack.c.l.b16 %v338
      %v387 = vunpack.c.l.b16 %v339
      %v388 = vunpack.c.l.b16 %v340
      %v389 = vunpack.c.l.b16 %v341
      %v390 = vunpack.c.l.b16 %v342
      %v391 = vunpack.c.l.b16 %v343
      %v392 = vunpack.c.l.b16 %v344
      %v393 = vunpack.c.l.b16 %v345
      %v394 = vunpack.c.l.b16 %v346
      %v395 = vunpack.c.l.b16 %v347
      %v396 = vunpack.c.l.b16 %v348
      %v397 = vunpack.c.l.b16 %v349
      %v398 = vpack.c.b16 %v383, %v382
      %v399 = vpack.c.b16 %v385, %v384
      %v400 = vpack.c.b16 %v387, %v386
      %v401 = vpack.c.b16 %v389, %v388
      %v402 = vpack.c.b16 %v391, %v390
      %v403 = vpack.c.b16 %v393, %v392
      %v404 = vpack.c.b16 %v395, %v394
      %v405 = vpack.c.b16 %v397, %v396
      %v422 = vunpack.c.l.b16 %v350
      %v423 = vunpack.c.l.b16 %v351
      %v424 = vunpack.c.l.b16 %v352
      %v425 = vunpack.c.l.b16 %v353
      %v426 = vunpack.c.l.b16 %v354
      %v427 = vunpack.c.l.b16 %v355
      %v428 = vunpack.c.l.b16 %v356
      %v429 = vunpack.c.l.b16 %v357
      %v430 = vunpack.c.l.b16 %v358
      %v431 = vunpack.c.l.b16 %v359
      %v432 = vunpack.c.l.b16 %v360
      %v433 = vunpack.c.l.b16 %v361
      %v434 = vunpack.c.l.b16 %v362
      %v435 = vunpack.c.l.b16 %v363
      %v436 = vunpack.c.l.b16 %v364
      %v437 = vunpack.c.l.b16 %v365
      %v438 = vpack.c.b16 %v423, %v422
      %v439 = vpack.c.b16 %v425, %v424
      %v440 = vpack.c.b16 %v427, %v426
      %v441 = vpack.c.b16 %v429, %v428
      %v442 = vpack.c.b16 %v431, %v430
      %v443 = vpack.c.b16 %v433, %v432
      %v444 = vpack.c.b16 %v435, %v434
      %v445 = vpack.c.b16 %v437, %v436
      %vm446 = vcmask 523264
      %v448 = vsel %vm446, %v398, 0
      %v451 = vsel %vm446, %v399, 0
      %v454 = vsel %vm446, %v400, 0
      %v457 = vsel %vm446, %v401, 0
      %v460 = vsel %vm446, %v402, 0
      %v463 = vsel %vm446, %v403, 0
      %v466 = vsel %vm446, %v404, 0
      %v469 = vsel %vm446, %v405, 0
      %v472 = vsel %vm446, %v438, 0
      %v475 = vsel %vm446, %v439, 0
      %v478 = vsel %vm446, %v440, 0
      %v481 = vsel %vm446, %v441, 0
      %v484 = vsel %vm446, %v442, 0
      %v487 = vsel %vm446, %v443, 0
      %v490 = vsel %vm446, %v444, 0
      %v493 = vsel %vm446, %v445, 0
      %495 = vmatprep.subr.bf16.mxu0 0
      %496 = vmatpush1.bf16.xpose.msra.mxu0 %v493
      %497 = vmatprep.subr.bf16.mxu0 0
      %498 = vmatpush1.bf16.xpose.msra.mxu0 %v490
      %499 = vmatprep.subr.bf16.mxu0 0
      %500 = vmatpush1.bf16.xpose.msra.mxu0 %v487
      %501 = vmatprep.subr.bf16.mxu0 0
      %502 = vmatpush1.bf16.xpose.msra.mxu0 %v484
      %503 = vmatprep.subr.bf16.mxu0 0
      %504 = vmatpush1.bf16.xpose.msra.mxu0 %v481
      %505 = vmatprep.subr.bf16.mxu0 0
      %506 = vmatpush1.bf16.xpose.msra.mxu0 %v478
      %507 = vmatprep.subr.bf16.mxu0 0
      %508 = vmatpush1.bf16.xpose.msra.mxu0 %v475
      %509 = vmatprep.subr.bf16.mxu0 0
      %510 = vmatpush1.bf16.xpose.msra.mxu0 %v472
      %511 = vmatprep.subr.bf16.mxu0 0
      %512 = vmatpush2.bf16.xpose.msra.mxu0 0
      %513 = vmatprep.subr.bf16.mxu0 0
      %514 = vmatpush2.bf16.xpose.msra.mxu0 0
      %515 = vmatprep.subr.bf16.mxu0 0
      %516 = vmatpush2.bf16.xpose.msra.mxu0 0
      %517 = vmatprep.subr.bf16.mxu0 0
      %518 = vmatpush2.bf16.xpose.msra.mxu0 0
      %519 = vmatprep.subr.bf16.mxu0 0
      %520 = vmatpush2.bf16.xpose.msra.mxu0 0
      %521 = vmatprep.subr.bf16.mxu0 0
      %522 = vmatpush2.bf16.xpose.msra.mxu0 0
      %523 = vmatprep.subr.bf16.mxu0 0
      %524 = vmatpush2.bf16.xpose.msra.mxu0 0
      %525 = vmatprep.subr.bf16.mxu0 0
      %526 = vmatpush2.bf16.xpose.msra.mxu0 0
      %527 = vmatprep.mubr.bf16.mxu0 0
      %528 = vmatmul.mubr.bf16.gmra.mxu0 %v448
      %v529 = vpop.f32.mrf.mxu0
      %v530 = vadd.f32 0.0, %v529
      %v531 = vpop.f32.mrf.mxu0
      %v532 = vpop.f32.mrf.mxu0
      %v533 = vadd.f32 0.0, %v532
      %v534 = vpop.f32.mrf.mxu0
      %535 = vmatprep.mubr.bf16.mxu0 0
      %536 = vmatmul.mubr.bf16.gmra.mxu0 %v451
      %v537 = vpop.f32.mrf.mxu0
      %v538 = vadd.f32 0.0, %v537
      %v539 = vpop.f32.mrf.mxu0
      %v540 = vpop.f32.mrf.mxu0
      %v541 = vadd.f32 0.0, %v540
      %v542 = vpop.f32.mrf.mxu0
      %543 = vmatprep.mubr.bf16.mxu0 0
      %544 = vmatmul.mubr.bf16.gmra.mxu0 %v454
      %v545 = vpop.f32.mrf.mxu0
      %v546 = vadd.f32 0.0, %v545
      %v547 = vpop.f32.mrf.mxu0
      %v548 = vpop.f32.mrf.mxu0
      %v549 = vadd.f32 0.0, %v548
      %v550 = vpop.f32.mrf.mxu0
      %551 = vmatprep.mubr.bf16.mxu0 0
      %552 = vmatmul.mubr.bf16.gmra.mxu0 %v457
      %v553 = vpop.f32.mrf.mxu0
      %v554 = vadd.f32 0.0, %v553
      %v555 = vpop.f32.mrf.mxu0
      %v556 = vpop.f32.mrf.mxu0
      %v557 = vadd.f32 0.0, %v556
      %v558 = vpop.f32.mrf.mxu0
      %559 = vmatprep.mubr.bf16.mxu0 0
      %560 = vmatmul.mubr.bf16.gmra.mxu0 %v460
      %v561 = vpop.f32.mrf.mxu0
      %v562 = vadd.f32 0.0, %v561
      %v563 = vpop.f32.mrf.mxu0
      %v564 = vpop.f32.mrf.mxu0
      %v565 = vadd.f32 0.0, %v564
      %v566 = vpop.f32.mrf.mxu0
      %567 = vmatprep.mubr.bf16.mxu0 0
      %568 = vmatmul.mubr.bf16.gmra.mxu0 %v463
      %v569 = vpop.f32.mrf.mxu0
      %v570 = vadd.f32 0.0, %v569
      %v571 = vpop.f32.mrf.mxu0
      %v572 = vpop.f32.mrf.mxu0
      %v573 = vadd.f32 0.0, %v572
      %v574 = vpop.f32.mrf.mxu0
      %575 = vmatprep.mubr.bf16.mxu0 0
      %576 = vmatmul.mubr.bf16.gmra.mxu0 %v466
      %v577 = vpop.f32.mrf.mxu0
      %v578 = vadd.f32 0.0, %v577
      %v579 = vpop.f32.mrf.mxu0
      %v580 = vpop.f32.mrf.mxu0
      %v581 = vadd.f32 0.0, %v580
      %v582 = vpop.f32.mrf.mxu0
      %583 = vmatprep.mubr.bf16.mxu0 0
      %584 = vmatmul.mubr.bf16.gmra.mxu0 %v469
      %v585 = vpop.f32.mrf.mxu0
      %v586 = vadd.f32 0.0, %v585
      %v587 = vpop.f32.mrf.mxu0
      %v588 = vpop.f32.mrf.mxu0
      %v589 = vadd.f32 0.0, %v588
      %v590 = vpop.f32.mrf.mxu0
      %591 = vdwg.mxu0
      %592 = vmin.xlane.f32.xlu0 %v530
      %v593 = vpop.xlane.xlu0 %592
      %594 = vmin.xlane.f32.xlu0 %v533
      %v595 = vpop.xlane.xlu0 %594
      %596 = vmin.xlane.f32.xlu0 %v538
      %v597 = vpop.xlane.xlu0 %596
      %598 = vmin.xlane.f32.xlu0 %v541
      %v599 = vpop.xlane.xlu0 %598
      %600 = vmin.xlane.f32.xlu0 %v546
      %v601 = vpop.xlane.xlu0 %600
      %602 = vmin.xlane.f32.xlu0 %v549
      %v603 = vpop.xlane.xlu0 %602
      %604 = vmin.xlane.f32.xlu0 %v554
      %v605 = vpop.xlane.xlu0 %604
      %606 = vmin.xlane.f32.xlu0 %v557
      %v607 = vpop.xlane.xlu0 %606
      %608 = vmin.xlane.f32.xlu0 %v562
      %v609 = vpop.xlane.xlu0 %608
      %610 = vmin.xlane.f32.xlu0 %v565
      %v611 = vpop.xlane.xlu0 %610
      %612 = vmin.xlane.f32.xlu0 %v570
      %v613 = vpop.xlane.xlu0 %612
      %614 = vmin.xlane.f32.xlu0 %v573
      %v615 = vpop.xlane.xlu0 %614
      %616 = vmin.xlane.f32.xlu0 %v578
      %v617 = vpop.xlane.xlu0 %616
      %618 = vmin.xlane.f32.xlu0 %v581
      %v619 = vpop.xlane.xlu0 %618
      %620 = vmin.xlane.f32.xlu0 %v586
      %v621 = vpop.xlane.xlu0 %620
      %622 = vmin.xlane.f32.xlu0 %v589
      %v623 = vpop.xlane.xlu0 %622
      %v624 = vsub.f32 %v593, %v530
      %v625 = vsub.f32 %v595, %v533
      %v626 = vsub.f32 %v597, %v538
      %v627 = vsub.f32 %v599, %v541
      %v628 = vsub.f32 %v601, %v546
      %v629 = vsub.f32 %v603, %v549
      %v630 = vsub.f32 %v605, %v554
      %v631 = vsub.f32 %v607, %v557
      %v632 = vsub.f32 %v609, %v562
      %v633 = vsub.f32 %v611, %v565
      %v634 = vsub.f32 %v613, %v570
      %v635 = vsub.f32 %v615, %v573
      %v636 = vsub.f32 %v617, %v578
      %v637 = vsub.f32 %v619, %v581
      %v638 = vsub.f32 %v621, %v586
      %v639 = vsub.f32 %v623, %v589
      %v640 = vmul.f32 %v624, 1.442695
      %v641 = vpow.pop %v640
      %v642 = vmul.f32 %v625, 1.442695
      %v643 = vpow.pop %v642
      %v644 = vmul.f32 %v626, 1.442695
      %v645 = vpow.pop %v644
      %v646 = vmul.f32 %v627, 1.442695
      %v647 = vpow.pop %v646
      %v648 = vmul.f32 %v628, 1.442695
      %v649 = vpow.pop %v648
      %v650 = vmul.f32 %v629, 1.442695
      %v651 = vpow.pop %v650
      %v652 = vmul.f32 %v630, 1.442695
      %v653 = vpow.pop %v652
      %v654 = vmul.f32 %v631, 1.442695
      %v655 = vpow.pop %v654
      %v656 = vmul.f32 %v632, 1.442695
      %v657 = vpow.pop %v656
      %v658 = vmul.f32 %v633, 1.442695
      %v659 = vpow.pop %v658
      %v660 = vmul.f32 %v634, 1.442695
      %v661 = vpow.pop %v660
      %v662 = vmul.f32 %v635, 1.442695
      %v663 = vpow.pop %v662
      %v664 = vmul.f32 %v636, 1.442695
      %v665 = vpow.pop %v664
      %v666 = vmul.f32 %v637, 1.442695
      %v667 = vpow.pop %v666
      %v668 = vmul.f32 %v638, 1.442695
      %v669 = vpow.pop %v668
      %v670 = vmul.f32 %v639, 1.442695
      %v671 = vpow.pop %v670
      %672 = vadd.xlane.f32.xlu0 %v641
      %v673 = vpop.xlane.xlu0 %672
      %674 = vadd.xlane.f32.xlu0 %v643
      %v675 = vpop.xlane.xlu0 %674
      %676 = vadd.xlane.f32.xlu0 %v645
      %v677 = vpop.xlane.xlu0 %676
      %678 = vadd.xlane.f32.xlu0 %v647
      %v679 = vpop.xlane.xlu0 %678
      %680 = vadd.xlane.f32.xlu0 %v649
      %v681 = vpop.xlane.xlu0 %680
      %682 = vadd.xlane.f32.xlu0 %v651
      %v683 = vpop.xlane.xlu0 %682
      %684 = vadd.xlane.f32.xlu0 %v653
      %v685 = vpop.xlane.xlu0 %684
      %686 = vadd.xlane.f32.xlu0 %v655
      %v687 = vpop.xlane.xlu0 %686
      %688 = vadd.xlane.f32.xlu0 %v657
      %v689 = vpop.xlane.xlu0 %688
      %690 = vadd.xlane.f32.xlu0 %v659
      %v691 = vpop.xlane.xlu0 %690
      %692 = vadd.xlane.f32.xlu0 %v661
      %v693 = vpop.xlane.xlu0 %692
      %694 = vadd.xlane.f32.xlu0 %v663
      %v695 = vpop.xlane.xlu0 %694
      %696 = vadd.xlane.f32.xlu0 %v665
      %v697 = vpop.xlane.xlu0 %696
      %698 = vadd.xlane.f32.xlu0 %v667
      %v699 = vpop.xlane.xlu0 %698
      %700 = vadd.xlane.f32.xlu0 %v669
      %v701 = vpop.xlane.xlu0 %700
      %702 = vadd.xlane.f32.xlu0 %v671
      %v703 = vpop.xlane.xlu0 %702
      %v704 = vrcp.pop %v673
      %v705 = vrcp.pop %v675
      %v706 = vrcp.pop %v677
      %v707 = vrcp.pop %v679
      %v708 = vrcp.pop %v681
      %v709 = vrcp.pop %v683
      %v710 = vrcp.pop %v685
      %v711 = vrcp.pop %v687
      %v712 = vrcp.pop %v689
      %v713 = vrcp.pop %v691
      %v714 = vrcp.pop %v693
      %v715 = vrcp.pop %v695
      %v716 = vrcp.pop %v697
      %v717 = vrcp.pop %v699
      %v718 = vrcp.pop %v701
      %v719 = vrcp.pop %v703
      %v720 = vmul.f32 %v641, %v704
      %v721 = vmul.f32 %v643, %v705
      %v722 = vmul.f32 %v645, %v706
      %v723 = vmul.f32 %v647, %v707
      %v724 = vmul.f32 %v649, %v708
      %v725 = vmul.f32 %v651, %v709
      %v726 = vmul.f32 %v653, %v710
      %v727 = vmul.f32 %v655, %v711
      %v728 = vmul.f32 %v657, %v712
      %v729 = vmul.f32 %v659, %v713
      %v730 = vmul.f32 %v661, %v714
      %v731 = vmul.f32 %v663, %v715
      %v732 = vmul.f32 %v665, %v716
      %v733 = vmul.f32 %v667, %v717
      %v734 = vmul.f32 %v669, %v718
      %v735 = vmul.f32 %v671, %v719
      %v736 = vld [vmem:[%s316] sm:$0xf]
      %v737 = vld [vmem:[%s316 + $0x4] sm:$0xf]
      %v738 = vld [vmem:[%s316 + $0x8] sm:$0xf]
      %v739 = vld [vmem:[%s316 + $0xc] sm:$0xf]
      %v740 = vld [vmem:[%s316 + $0x10] sm:$0xf]
      %v741 = vld [vmem:[%s316 + $0x14] sm:$0xf]
      %v742 = vld [vmem:[%s316 + $0x18] sm:$0xf]
      %v743 = vld [vmem:[%s316 + $0x1c] sm:$0xf]
      %v744 = vpack.c.bf16 %v721, %v720
      %v745 = vpack.c.bf16 %v723, %v722
      %v746 = vpack.c.bf16 %v725, %v724
      %v747 = vpack.c.bf16 %v727, %v726
      %v748 = vpack.c.bf16 %v729, %v728
      %v749 = vpack.c.bf16 %v731, %v730
      %v750 = vpack.c.bf16 %v733, %v732
      %v751 = vpack.c.bf16 %v735, %v734
      %v760 = vunpack.c.l.b16 %v736
      %v761 = vunpack.c.l.b16 %v737
      %v762 = vunpack.c.l.b16 %v738
      %v763 = vunpack.c.l.b16 %v739
      %v764 = vunpack.c.l.b16 %v740
      %v765 = vunpack.c.l.b16 %v741
      %v766 = vunpack.c.l.b16 %v742
      %v767 = vunpack.c.l.b16 %v743
      %v768 = vpack.c.b16 %v761, %v760
      %v769 = vpack.c.b16 %v763, %v762
      %v770 = vpack.c.b16 %v765, %v764
      %v771 = vpack.c.b16 %v767, %v766
      %776 = vmatprep.subr.bf16.mxu0 0
      %777 = vmatpush1.bf16.xpose.msra.mxu0 %v751
      %778 = vmatprep.subr.bf16.mxu0 0
      %779 = vmatpush1.bf16.xpose.msra.mxu0 %v750
      %780 = vmatprep.subr.bf16.mxu0 0
      %781 = vmatpush1.bf16.xpose.msra.mxu0 %v749
      %782 = vmatprep.subr.bf16.mxu0 0
      %783 = vmatpush1.bf16.xpose.msra.mxu0 %v748
      %784 = vmatprep.subr.bf16.mxu0 0
      %785 = vmatpush1.bf16.xpose.msra.mxu0 %v747
      %786 = vmatprep.subr.bf16.mxu0 0
      %787 = vmatpush1.bf16.xpose.msra.mxu0 %v746
      %788 = vmatprep.subr.bf16.mxu0 0
      %789 = vmatpush1.bf16.xpose.msra.mxu0 %v745
      %790 = vmatprep.subr.bf16.mxu0 0
      %791 = vmatpush1.bf16.xpose.msra.mxu0 %v744
      %792 = vmatprep.subr.bf16.mxu0 0
      %793 = vmatpush2.bf16.xpose.msra.mxu0 0
      %794 = vmatprep.subr.bf16.mxu0 0
      %795 = vmatpush2.bf16.xpose.msra.mxu0 0
      %796 = vmatprep.subr.bf16.mxu0 0
      %797 = vmatpush2.bf16.xpose.msra.mxu0 0
      %798 = vmatprep.subr.bf16.mxu0 0
      %799 = vmatpush2.bf16.xpose.msra.mxu0 0
      %800 = vmatprep.subr.bf16.mxu0 0
      %801 = vmatpush2.bf16.xpose.msra.mxu0 0
      %802 = vmatprep.subr.bf16.mxu0 0
      %803 = vmatpush2.bf16.xpose.msra.mxu0 0
      %804 = vmatprep.subr.bf16.mxu0 0
      %805 = vmatpush2.bf16.xpose.msra.mxu0 0
      %806 = vmatprep.subr.bf16.mxu0 0
      %807 = vmatpush2.bf16.xpose.msra.mxu0 0
      %808 = vmatprep.mubr.bf16.mxu0 0
      %809 = vmatmul.mubr.bf16.gmra.mxu0 %v768
      %v810 = vpop.f32.mrf.mxu0
      %v811 = vadd.f32 0.0, %v810
      %v812 = vpop.f32.mrf.mxu0
      %v813 = vpop.f32.mrf.mxu0
      %v814 = vadd.f32 0.0, %v813
      %v815 = vpop.f32.mrf.mxu0
      %816 = vmatprep.mubr.bf16.mxu0 0
      %817 = vmatmul.mubr.bf16.gmra.mxu0 %v769
      %v818 = vpop.f32.mrf.mxu0
      %v819 = vadd.f32 0.0, %v818
      %v820 = vpop.f32.mrf.mxu0
      %v821 = vpop.f32.mrf.mxu0
      %v822 = vadd.f32 0.0, %v821
      %v823 = vpop.f32.mrf.mxu0
      %824 = vmatprep.mubr.bf16.mxu0 0
      %825 = vmatmul.mubr.bf16.gmra.mxu0 %v770
      %v826 = vpop.f32.mrf.mxu0
      %v827 = vadd.f32 0.0, %v826
      %v828 = vpop.f32.mrf.mxu0
      %v829 = vpop.f32.mrf.mxu0
      %v830 = vadd.f32 0.0, %v829
      %v831 = vpop.f32.mrf.mxu0
      %832 = vmatprep.mubr.bf16.mxu0 0
      %833 = vmatmul.mubr.bf16.gmra.mxu0 %v771
      %v834 = vpop.f32.mrf.mxu0
      %v835 = vadd.f32 0.0, %v834
      %v836 = vpop.f32.mrf.mxu0
      %v837 = vpop.f32.mrf.mxu0
      %v838 = vadd.f32 0.0, %v837
      %v839 = vpop.f32.mrf.mxu0
      %840 = vdwg.mxu0
      %s841 = sld [smem:[#allocation2]]
      %v842 = vstv %s841
      %v843 = vmul.f32 %v842, %v811
      %v844 = vmul.f32 %v842, %v814
      %v845 = vmul.f32 %v842, %v819
      %v846 = vmul.f32 %v842, %v822
      %v847 = vmul.f32 %v842, %v827
      %v848 = vmul.f32 %v842, %v830
      %v849 = vmul.f32 %v842, %v835
      %v850 = vmul.f32 %v842, %v838
      %v851 = vld [vmem:[%s324] sm:$0xf]
      %v852 = vld [vmem:[%s324 + $0x4] sm:$0xf]
      %v853 = vld [vmem:[%s324 + $0x8] sm:$0xf]
      %v854 = vld [vmem:[%s324 + $0xc] sm:$0xf]
      %v855 = vld [vmem:[%s324 + $0x10] sm:$0xf]
      %v856 = vld [vmem:[%s324 + $0x14] sm:$0xf]
      %v857 = vld [vmem:[%s324 + $0x18] sm:$0xf]
      %v858 = vld [vmem:[%s324 + $0x1c] sm:$0xf]
      %v859 = vunpack.c.l.bf16 %v851
      %v860 = vunpack.c.l.bf16 %v852
      %v861 = vunpack.c.l.bf16 %v853
      %v862 = vunpack.c.l.bf16 %v854
      %v863 = vunpack.c.l.bf16 %v855
      %v864 = vunpack.c.l.bf16 %v856
      %v865 = vunpack.c.l.bf16 %v857
      %v866 = vunpack.c.l.bf16 %v858
      %v867 = vadd.f32 %v843, %v859
      %v868 = vadd.f32 %v844, %v860
      %v869 = vadd.f32 %v845, %v861
      %v870 = vadd.f32 %v846, %v862
      %v871 = vadd.f32 %v847, %v863
      %v872 = vadd.f32 %v848, %v864
      %v873 = vadd.f32 %v849, %v865
      %v874 = vadd.f32 %v850, %v866
      %v875 = vpack.c.bf16 %v868, %v867
      %v876 = vpack.c.bf16 %v870, %v869
      %v877 = vpack.c.bf16 %v872, %v871
      %v878 = vpack.c.bf16 %v874, %v873
      %v883 = vunpack.c.l.b16 %v875
      %v884 = vunpack.c.h.b16 %v875
      %v885 = vunpack.c.l.b16 %v876
      %v886 = vunpack.c.h.b16 %v876
      %v887 = vunpack.c.l.b16 %v877
      %v888 = vunpack.c.h.b16 %v877
      %v889 = vunpack.c.l.b16 %v878
      %v890 = vunpack.c.h.b16 %v878
      %v891 = vpack.c.b16 %v883, %v883
      %v892 = vpack.c.b16 %v884, %v884
      %v893 = vpack.c.b16 %v885, %v885
      %v894 = vpack.c.b16 %v886, %v886
      %v895 = vpack.c.b16 %v887, %v887
      %v896 = vpack.c.b16 %v888, %v888
      %v897 = vpack.c.b16 %v889, %v889
      %v898 = vpack.c.b16 %v890, %v890
      %907 = vst [vmem:[%s332] sm:$0xf] %v891
      %908 = vst [vmem:[%s332 + $0x4] sm:$0xf] %v892
      %909 = vst [vmem:[%s332 + $0x8] sm:$0xf] %v893
      %910 = vst [vmem:[%s332 + $0xc] sm:$0xf] %v894
      %911 = vst [vmem:[%s332 + $0x10] sm:$0xf] %v895
      %912 = vst [vmem:[%s332 + $0x14] sm:$0xf] %v896
      %913 = vst [vmem:[%s332 + $0x18] sm:$0xf] %v897
      %914 = vst [vmem:[%s332 + $0x1c] sm:$0xf] %v898
      %p915 = scmp.lt.s32.totalorder %s21, 1
      %s916 = scalar_select %p915, %s21, 1
      %p917 = scmp.lt.s32.totalorder %s22, 0
      %s918 = scalar_select %p917, %s22, 0
      %s919 = smul.addr %s916, 8
      %s920 = sadd.s32 %s918, %s919
      %s921 = smul.addr %s920, 4
      %s922 = scalar_lea.vmem %s5, %s921
      // Predicated region
      $region41: #{_lambda_.14} parent=39 // pred_check
        %p923 = pneg %p178
      $region42: #{_lambda_.14} parent=39 // pred_check_branch
        %925 = sbr.rel (%p923) target = $region44
      $region43: #{_lambda_.14} parent=39 // pred_region
        _
      $region44: #{_lambda_.14} parent=39 // pred_fallthru
        _
    $region40: #{_lambda_.14} parent=5 // pred_fallthru
      _
    %p926 = scmp.le.s32.totalorder 2, %s12
    // Predicated region
    $region45: #{_lambda_.14} parent=5 // pred_check
      %p927 = pneg %p926
    $region46: #{_lambda_.14} parent=5 // pred_check_branch
      %929 = sbr.rel (%p927) target = $region48
    $region47: #{_lambda_.14} parent=5 // pred_region
      %s930 = ssub.s32 %s12, 2
      // Predicated region
      $region49: #{_lambda_.14} parent=47 // pred_check
        %p931 = pneg %p184
      $region50: #{_lambda_.14} parent=47 // pred_check_branch
        %933 = sbr.rel (%p931) target = $region52
      $region51: #{_lambda_.14} parent=47 // pred_region
        %p934 = scmp.lt.s32.totalorder %s23, 1
        %s935 = scalar_select %p934, %s23, 1
        %p936 = scmp.lt.s32.totalorder %s24, 0
        %s937 = scalar_select %p936, %s24, 0
        %s938 = smul.addr %s935, 8
        %s939 = sadd.s32 %s937, %s938
        %s940 = smul.addr %s939, 4
        %s941 = scalar_lea.vmem %s5, %s940
      $region52: #{_lambda_.14} parent=47 // pred_fallthru
        _
    $region48: #{_lambda_.14} parent=5 // pred_fallthru
      _
  $region6: #{_lambda_.14} parent=0 // loop_footer
    %s16 = sadd.s32 1, %s12
  $region7: #{_lambda_.14} parent=0 // loop_footer_branch
    %11 = sbr.rel target = $region3
  $region8: #{_lambda_.14} parent=0 // loop_exit
    _

// kernel: _lambda_.17
$region0: #{_lambda_.17}
  #allocation0 [shape = 'u32[]', space=smem, size = 0x4, offset = 0x4, fixed_abs, tag = 'smem constant byte address 0x4 - core index']
  #allocation1 [shape = 'u32[144,128]{1,0:T(1,128)}', space=vmem, size = 0x12000, scoped, tag = 'internal scratch']
  #allocation2 [shape = 'f32[128,128]{1,0:T(8,128)}', space=vmem, size = 0x10000, scoped, tag = 'scratch operand']
  %s0 = inlined_call_operand.vmem [shape: bf16[128,128], index: 0, kind: input, shape index: {}]
  %s1 = inlined_call_operand.vmem [shape: bf16[128,128], index: 1, kind: input, shape index: {}]
  %s2 = inlined_call_operand.vmem [shape: f32[1,128], index: 2, kind: input, shape index: {}]
  %s3 = inlined_call_operand.vmem [shape: f32[1,128], index: 3, kind: input, shape index: {}]
  %s4 = inlined_call_operand.vmem [shape: f32[128,128], index: 4, kind: output, shape index: {}]
  %s5 = sld [smem:[#allocation0]]
  $region34: #{_lambda_.17} parent=0
    _
  %s7 = ssub.s32 1, %s5
  %s8 = scalar_select 0, %s7, %s5
  // Predicated region
  $region2: #{_lambda_.17} parent=0 // pred_check
    _
  $region3: #{_lambda_.17} parent=0 // pred_check_branch
    %10 = sbr.rel (0) target = $region5
  $region4: #{_lambda_.17} parent=0 // pred_region
    _
  $region5: #{_lambda_.17} parent=0 // pred_fallthru
    _
  // Predicated region
  $region6: #{_lambda_.17} parent=0 // pred_check
    _
  $region7: #{_lambda_.17} parent=0 // pred_check_branch
    %12 = sbr.rel (0) target = $region9
  $region8: #{_lambda_.17} parent=0 // pred_region
    _
  $region9: #{_lambda_.17} parent=0 // pred_fallthru
    _
  // Predicated region
  $region10: #{_lambda_.17} parent=0 // pred_check
    _
  $region11: #{_lambda_.17} parent=0 // pred_check_branch
    %14 = sbr.rel (0) target = $region13
  $region12: #{_lambda_.17} parent=0 // pred_region
    _
  $region13: #{_lambda_.17} parent=0 // pred_fallthru
    _
  // Predicated region
  $region14: #{_lambda_.17} parent=0 // pred_check
    _
  $region15: #{_lambda_.17} parent=0 // pred_check_branch
    %16 = sbr.rel (0) target = $region17
  $region16: #{_lambda_.17} parent=0 // pred_region
    _
  $region17: #{_lambda_.17} parent=0 // pred_fallthru
    _
  %p18 = scmp.eq.s32.totalorder 0, 0
  // Predicated region
  $region18: #{_lambda_.17} parent=0 // pred_check
    %p19 = pneg %p18
  $region19: #{_lambda_.17} parent=0 // pred_check_branch
    %21 = sbr.rel (%p19) target = $region21
  $region20: #{_lambda_.17} parent=0 // pred_region
    %22 = vst [vmem:[#allocation2] sm:$0xff] 0.0
    %23 = vst [vmem:[#allocation2 + $0x8] sm:$0xff] 0.0
    %24 = vst [vmem:[#allocation2 + $0x10] sm:$0xff] 0.0
    %25 = vst [vmem:[#allocation2 + $0x18] sm:$0xff] 0.0
    %26 = vst [vmem:[#allocation2 + $0x20] sm:$0xff] 0.0
    %27 = vst [vmem:[#allocation2 + $0x28] sm:$0xff] 0.0
    %28 = vst [vmem:[#allocation2 + $0x30] sm:$0xff] 0.0
    %29 = vst [vmem:[#allocation2 + $0x38] sm:$0xff] 0.0
    %30 = vst [vmem:[#allocation2 + $0x40] sm:$0xff] 0.0
    %31 = vst [vmem:[#allocation2 + $0x48] sm:$0xff] 0.0
    %32 = vst [vmem:[#allocation2 + $0x50] sm:$0xff] 0.0
    %33 = vst [vmem:[#allocation2 + $0x58] sm:$0xff] 0.0
    %34 = vst [vmem:[#allocation2 + $0x60] sm:$0xff] 0.0
    %35 = vst [vmem:[#allocation2 + $0x68] sm:$0xff] 0.0
    %36 = vst [vmem:[#allocation2 + $0x70] sm:$0xff] 0.0
    %37 = vst [vmem:[#allocation2 + $0x78] sm:$0xff] 0.0
  $region21: #{_lambda_.17} parent=0 // pred_fallthru
    _
  %v38 = vld [vmem:[#allocation2] sm:$0xff]
  %v39 = vld [vmem:[#allocation2 + $0x8] sm:$0xff]
  %v40 = vld [vmem:[#allocation2 + $0x10] sm:$0xff]
  %v41 = vld [vmem:[#allocation2 + $0x18] sm:$0xff]
  %v42 = vld [vmem:[#allocation2 + $0x20] sm:$0xff]
  %v43 = vld [vmem:[#allocation2 + $0x28] sm:$0xff]
  %v44 = vld [vmem:[#allocation2 + $0x30] sm:$0xff]
  %v45 = vld [vmem:[#allocation2 + $0x38] sm:$0xff]
  %v46 = vld [vmem:[#allocation2 + $0x40] sm:$0xff]
  %v47 = vld [vmem:[#allocation2 + $0x48] sm:$0xff]
  %v48 = vld [vmem:[#allocation2 + $0x50] sm:$0xff]
  %v49 = vld [vmem:[#allocation2 + $0x58] sm:$0xff]
  %v50 = vld [vmem:[#allocation2 + $0x60] sm:$0xff]
  %v51 = vld [vmem:[#allocation2 + $0x68] sm:$0xff]
  %v52 = vld [vmem:[#allocation2 + $0x70] sm:$0xff]
  %v53 = vld [vmem:[#allocation2 + $0x78] sm:$0xff]
  %v54 = vld [vmem:[%s0] sm:$0xf]
  %v55 = vld [vmem:[%s0 + $0x4] sm:$0xf]
  %v56 = vld [vmem:[%s0 + $0x8] sm:$0xf]
  %v57 = vld [vmem:[%s0 + $0xc] sm:$0xf]
  %v58 = vld [vmem:[%s0 + $0x10] sm:$0xf]
  %v59 = vld [vmem:[%s0 + $0x14] sm:$0xf]
  %v60 = vld [vmem:[%s0 + $0x18] sm:$0xf]
  %v61 = vld [vmem:[%s0 + $0x1c] sm:$0xf]
  %v62 = vld [vmem:[%s0 + $0x20] sm:$0xf]
  %v63 = vld [vmem:[%s0 + $0x24] sm:$0xf]
  %v64 = vld [vmem:[%s0 + $0x28] sm:$0xf]
  %v65 = vld [vmem:[%s0 + $0x2c] sm:$0xf]
  %v66 = vld [vmem:[%s0 + $0x30] sm:$0xf]
  %v67 = vld [vmem:[%s0 + $0x34] sm:$0xf]
  %v68 = vld [vmem:[%s0 + $0x38] sm:$0xf]
  %v69 = vld [vmem:[%s0 + $0x3c] sm:$0xf]
  %v70 = vld [vmem:[%s1] sm:$0xf]
  %v71 = vld [vmem:[%s1 + $0x4] sm:$0xf]
  %v72 = vld [vmem:[%s1 + $0x8] sm:$0xf]
  %v73 = vld [vmem:[%s1 + $0xc] sm:$0xf]
  %v74 = vld [vmem:[%s1 + $0x10] sm:$0xf]
  %v75 = vld [vmem:[%s1 + $0x14] sm:$0xf]
  %v76 = vld [vmem:[%s1 + $0x18] sm:$0xf]
  %v77 = vld [vmem:[%s1 + $0x1c] sm:$0xf]
  %v78 = vld [vmem:[%s1 + $0x20] sm:$0xf]
  %v79 = vld [vmem:[%s1 + $0x24] sm:$0xf]
  %v80 = vld [vmem:[%s1 + $0x28] sm:$0xf]
  %v81 = vld [vmem:[%s1 + $0x2c] sm:$0xf]
  %v82 = vld [vmem:[%s1 + $0x30] sm:$0xf]
  %v83 = vld [vmem:[%s1 + $0x34] sm:$0xf]
  %v84 = vld [vmem:[%s1 + $0x38] sm:$0xf]
  %v85 = vld [vmem:[%s1 + $0x3c] sm:$0xf]
  %v102 = vunpack.c.l.b16 %v54
  %v103 = vunpack.c.l.b16 %v55
  %v104 = vunpack.c.l.b16 %v56
  %v105 = vunpack.c.l.b16 %v57
  %v106 = vunpack.c.l.b16 %v58
  %v107 = vunpack.c.l.b16 %v59
  %v108 = vunpack.c.l.b16 %v60
  %v109 = vunpack.c.l.b16 %v61
  %v110 = vunpack.c.l.b16 %v62
  %v111 = vunpack.c.l.b16 %v63
  %v112 = vunpack.c.l.b16 %v64
  %v113 = vunpack.c.l.b16 %v65
  %v114 = vunpack.c.l.b16 %v66
  %v115 = vunpack.c.l.b16 %v67
  %v116 = vunpack.c.l.b16 %v68
  %v117 = vunpack.c.l.b16 %v69
  %v118 = vpack.c.b16 %v103, %v102
  %v119 = vpack.c.b16 %v105, %v104
  %v120 = vpack.c.b16 %v107, %v106
  %v121 = vpack.c.b16 %v109, %v108
  %v122 = vpack.c.b16 %v111, %v110
  %v123 = vpack.c.b16 %v113, %v112
  %v124 = vpack.c.b16 %v115, %v114
  %v125 = vpack.c.b16 %v117, %v116
  %v150 = vunpack.c.l.b16 %v70
  %v151 = vunpack.c.l.b16 %v71
  %v152 = vunpack.c.l.b16 %v72
  %v153 = vunpack.c.l.b16 %v73
  %v154 = vunpack.c.l.b16 %v74
  %v155 = vunpack.c.l.b16 %v75
  %v156 = vunpack.c.l.b16 %v76
  %v157 = vunpack.c.l.b16 %v77
  %v158 = vunpack.c.l.b16 %v78
  %v159 = vunpack.c.l.b16 %v79
  %v160 = vunpack.c.l.b16 %v80
  %v161 = vunpack.c.l.b16 %v81
  %v162 = vunpack.c.l.b16 %v82
  %v163 = vunpack.c.l.b16 %v83
  %v164 = vunpack.c.l.b16 %v84
  %v165 = vunpack.c.l.b16 %v85
  %v166 = vpack.c.b16 %v151, %v150
  %v167 = vpack.c.b16 %v153, %v152
  %v168 = vpack.c.b16 %v155, %v154
  %v169 = vpack.c.b16 %v157, %v156
  %v170 = vpack.c.b16 %v159, %v158
  %v171 = vpack.c.b16 %v161, %v160
  %v172 = vpack.c.b16 %v163, %v162
  %v173 = vpack.c.b16 %v165, %v164
  %182 = vmatprep.subr.bf16.mxu0 0
  %183 = vmatpush1.bf16.msra.mxu0 %v173
  %184 = vmatprep.subr.bf16.mxu0 0
  %185 = vmatpush1.bf16.msra.mxu0 %v172
  %186 = vmatprep.subr.bf16.mxu0 0
  %187 = vmatpush1.bf16.msra.mxu0 %v171
  %188 = vmatprep.subr.bf16.mxu0 0
  %189 = vmatpush1.bf16.msra.mxu0 %v170
  %190 = vmatprep.subr.bf16.mxu0 0
  %191 = vmatpush1.bf16.msra.mxu0 %v169
  %192 = vmatprep.subr.bf16.mxu0 0
  %193 = vmatpush1.bf16.msra.mxu0 %v168
  %194 = vmatprep.subr.bf16.mxu0 0
  %195 = vmatpush1.bf16.msra.mxu0 %v167
  %196 = vmatprep.subr.bf16.mxu0 0
  %197 = vmatpush1.bf16.msra.mxu0 %v166
  %198 = vmatprep.subr.bf16.mxu0 0
  %199 = vmatpush2.bf16.msra.mxu0 0
  %200 = vmatprep.subr.bf16.mxu0 0
  %201 = vmatpush2.bf16.msra.mxu0 0
  %202 = vmatprep.subr.bf16.mxu0 0
  %203 = vmatpush2.bf16.msra.mxu0 0
  %204 = vmatprep.subr.bf16.mxu0 0
  %205 = vmatpush2.bf16.msra.mxu0 0
  %206 = vmatprep.subr.bf16.mxu0 0
  %207 = vmatpush2.bf16.msra.mxu0 0
  %208 = vmatprep.subr.bf16.mxu0 0
  %209 = vmatpush2.bf16.msra.mxu0 0
  %210 = vmatprep.subr.bf16.mxu0 0
  %211 = vmatpush2.bf16.msra.mxu0 0
  %212 = vmatprep.subr.bf16.mxu0 0
  %213 = vmatpush2.bf16.msra.mxu0 0
  %214 = vmatprep.mubr.bf16.mxu0 0
  %215 = vmatmul.mubr.bf16.gmra.mxu0 %v118
  %v216 = vpop.f32.mrf.mxu0
  %v217 = vadd.f32 0.0, %v216
  %v218 = vpop.f32.mrf.mxu0
  %v219 = vpop.f32.mrf.mxu0
  %v220 = vadd.f32 0.0, %v219
  %v221 = vpop.f32.mrf.mxu0
  %222 = vmatprep.mubr.bf16.mxu0 0
  %223 = vmatmul.mubr.bf16.gmra.mxu0 %v119
  %v224 = vpop.f32.mrf.mxu0
  %v225 = vadd.f32 0.0, %v224
  %v226 = vpop.f32.mrf.mxu0
  %v227 = vpop.f32.mrf.mxu0
  %v228 = vadd.f32 0.0, %v227
  %v229 = vpop.f32.mrf.mxu0
  %230 = vmatprep.mubr.bf16.mxu0 0
  %231 = vmatmul.mubr.bf16.gmra.mxu0 %v120
  %v232 = vpop.f32.mrf.mxu0
  %v233 = vadd.f32 0.0, %v232
  %v234 = vpop.f32.mrf.mxu0
  %v235 = vpop.f32.mrf.mxu0
  %v236 = vadd.f32 0.0, %v235
  %v237 = vpop.f32.mrf.mxu0
  %238 = vmatprep.mubr.bf16.mxu0 0
  %239 = vmatmul.mubr.bf16.gmra.mxu0 %v121
  %v240 = vpop.f32.mrf.mxu0
  %v241 = vadd.f32 0.0, %v240
  %v242 = vpop.f32.mrf.mxu0
  %v243 = vpop.f32.mrf.mxu0
  %v244 = vadd.f32 0.0, %v243
  %v245 = vpop.f32.mrf.mxu0
  %246 = vmatprep.mubr.bf16.mxu0 0
  %247 = vmatmul.mubr.bf16.gmra.mxu0 %v122
  %v248 = vpop.f32.mrf.mxu0
  %v249 = vadd.f32 0.0, %v248
  %v250 = vpop.f32.mrf.mxu0
  %v251 = vpop.f32.mrf.mxu0
  %v252 = vadd.f32 0.0, %v251
  %v253 = vpop.f32.mrf.mxu0
  %254 = vmatprep.mubr.bf16.mxu0 0
  %255 = vmatmul.mubr.bf16.gmra.mxu0 %v123
  %v256 = vpop.f32.mrf.mxu0
  %v257 = vadd.f32 0.0, %v256
  %v258 = vpop.f32.mrf.mxu0
  %v259 = vpop.f32.mrf.mxu0
  %v260 = vadd.f32 0.0, %v259
  %v261 = vpop.f32.mrf.mxu0
  %262 = vmatprep.mubr.bf16.mxu0 0
  %263 = vmatmul.mubr.bf16.gmra.mxu0 %v124
  %v264 = vpop.f32.mrf.mxu0
  %v265 = vadd.f32 0.0, %v264
  %v266 = vpop.f32.mrf.mxu0
  %v267 = vpop.f32.mrf.mxu0
  %v268 = vadd.f32 0.0, %v267
  %v269 = vpop.f32.mrf.mxu0
  %270 = vmatprep.mubr.bf16.mxu0 0
  %271 = vmatmul.mubr.bf16.gmra.mxu0 %v125
  %v272 = vpop.f32.mrf.mxu0
  %v273 = vadd.f32 0.0, %v272
  %v274 = vpop.f32.mrf.mxu0
  %v275 = vpop.f32.mrf.mxu0
  %v276 = vadd.f32 0.0, %v275
  %v277 = vpop.f32.mrf.mxu0
  %278 = vdwg.mxu0
  %v279 = vadd.f32 %v38, %v217
  %v280 = vadd.f32 %v39, %v220
  %v281 = vadd.f32 %v40, %v225
  %v282 = vadd.f32 %v41, %v228
  %v283 = vadd.f32 %v42, %v233
  %v284 = vadd.f32 %v43, %v236
  %v285 = vadd.f32 %v44, %v241
  %v286 = vadd.f32 %v45, %v244
  %v287 = vadd.f32 %v46, %v249
  %v288 = vadd.f32 %v47, %v252
  %v289 = vadd.f32 %v48, %v257
  %v290 = vadd.f32 %v49, %v260
  %v291 = vadd.f32 %v50, %v265
  %v292 = vadd.f32 %v51, %v268
  %v293 = vadd.f32 %v52, %v273
  %v294 = vadd.f32 %v53, %v276
  %295 = vst [vmem:[#allocation2] sm:$0xff] %v279
  %296 = vst [vmem:[#allocation2 + $0x8] sm:$0xff] %v280
  %297 = vst [vmem:[#allocation2 + $0x10] sm:$0xff] %v281
  %298 = vst [vmem:[#allocation2 + $0x18] sm:$0xff] %v282
  %299 = vst [vmem:[#allocation2 + $0x20] sm:$0xff] %v283
  %300 = vst [vmem:[#allocation2 + $0x28] sm:$0xff] %v284
  %301 = vst [vmem:[#allocation2 + $0x30] sm:$0xff] %v285
  %302 = vst [vmem:[#allocation2 + $0x38] sm:$0xff] %v286
  %303 = vst [vmem:[#allocation2 + $0x40] sm:$0xff] %v287
  %304 = vst [vmem:[#allocation2 + $0x48] sm:$0xff] %v288
  %305 = vst [vmem:[#allocation2 + $0x50] sm:$0xff] %v289
  %306 = vst [vmem:[#allocation2 + $0x58] sm:$0xff] %v290
  %307 = vst [vmem:[#allocation2 + $0x60] sm:$0xff] %v291
  %308 = vst [vmem:[#allocation2 + $0x68] sm:$0xff] %v292
  %309 = vst [vmem:[#allocation2 + $0x70] sm:$0xff] %v293
  %310 = vst [vmem:[#allocation2 + $0x78] sm:$0xff] %v294
  // Predicated region
  $region22: #{_lambda_.17} parent=0 // pred_check
    %p311 = pneg %p18
  $region23: #{_lambda_.17} parent=0 // pred_check_branch
    %313 = sbr.rel (%p311) target = $region25
  $region24: #{_lambda_.17} parent=0 // pred_region
    %v314 = vld [vmem:[#allocation2] sm:$0xff]
    %v315 = vld [vmem:[#allocation2 + $0x8] sm:$0xff]
    %v316 = vld [vmem:[#allocation2 + $0x10] sm:$0xff]
    %v317 = vld [vmem:[#allocation2 + $0x18] sm:$0xff]
    %v318 = vld [vmem:[#allocation2 + $0x20] sm:$0xff]
    %v319 = vld [vmem:[#allocation2 + $0x28] sm:$0xff]
    %v320 = vld [vmem:[#allocation2 + $0x30] sm:$0xff]
    %v321 = vld [vmem:[#allocation2 + $0x38] sm:$0xff]
    %v322 = vld [vmem:[#allocation2 + $0x40] sm:$0xff]
    %v323 = vld [vmem:[#allocation2 + $0x48] sm:$0xff]
    %v324 = vld [vmem:[#allocation2 + $0x50] sm:$0xff]
    %v325 = vld [vmem:[#allocation2 + $0x58] sm:$0xff]
    %v326 = vld [vmem:[#allocation2 + $0x60] sm:$0xff]
    %v327 = vld [vmem:[#allocation2 + $0x68] sm:$0xff]
    %v328 = vld [vmem:[#allocation2 + $0x70] sm:$0xff]
    %v329 = vld [vmem:[#allocation2 + $0x78] sm:$0xff]
    %v330 = vld [vmem:[%s2] sm:$0x1]
    %v332 = vlaneseq
    %v333 = vshrl.u32 %v332, 7
    %v334 = vsub.s32 0, %v333
    %v335 = vrot.slane %v330, %v334
    %v337 = vmul.f32 %v314, %v335
    %v338 = vmul.f32 %v315, %v335
    %v339 = vmul.f32 %v316, %v335
    %v340 = vmul.f32 %v317, %v335
    %v341 = vmul.f32 %v318, %v335
    %v342 = vmul.f32 %v319, %v335
    %v343 = vmul.f32 %v320, %v335
    %v344 = vmul.f32 %v321, %v335
    %v345 = vmul.f32 %v322, %v335
    %v346 = vmul.f32 %v323, %v335
    %v347 = vmul.f32 %v324, %v335
    %v348 = vmul.f32 %v325, %v335
    %v349 = vmul.f32 %v326, %v335
    %v350 = vmul.f32 %v327, %v335
    %v351 = vmul.f32 %v328, %v335
    %v352 = vmul.f32 %v329, %v335
    %v353 = vld [vmem:[%s3] sm:$0x1]
    %v355 = vlaneseq
    %v356 = vshrl.u32 %v355, 7
    %v357 = vsub.s32 0, %v356
    %v358 = vrot.slane %v353, %v357
    %v360 = vadd.f32 %v337, %v358
    %v361 = vadd.f32 %v338, %v358
    %v362 = vadd.f32 %v339, %v358
    %v363 = vadd.f32 %v340, %v358
    %v364 = vadd.f32 %v341, %v358
    %v365 = vadd.f32 %v342, %v358
    %v366 = vadd.f32 %v343, %v358
    %v367 = vadd.f32 %v344, %v358
    %v368 = vadd.f32 %v345, %v358
    %v369 = vadd.f32 %v346, %v358
    %v370 = vadd.f32 %v347, %v358
    %v371 = vadd.f32 %v348, %v358
    %v372 = vadd.f32 %v349, %v358
    %v373 = vadd.f32 %v350, %v358
    %v374 = vadd.f32 %v351, %v358
    %v375 = vadd.f32 %v352, %v358
    %376 = vst [vmem:[%s4] sm:$0xff] %v360
    %377 = vst [vmem:[%s4 + $0x8] sm:$0xff] %v361
    %378 = vst [vmem:[%s4 + $0x10] sm:$0xff] %v362
    %379 = vst [vmem:[%s4 + $0x18] sm:$0xff] %v363
    %380 = vst [vmem:[%s4 + $0x20] sm:$0xff] %v364
    %381 = vst [vmem:[%s4 + $0x28] sm:$0xff] %v365
    %382 = vst [vmem:[%s4 + $0x30] sm:$0xff] %v366
    %383 = vst [vmem:[%s4 + $0x38] sm:$0xff] %v367
    %384 = vst [vmem:[%s4 + $0x40] sm:$0xff] %v368
    %385 = vst [vmem:[%s4 + $0x48] sm:$0xff] %v369
    %386 = vst [vmem:[%s4 + $0x50] sm:$0xff] %v370
    %387 = vst [vmem:[%s4 + $0x58] sm:$0xff] %v371
    %388 = vst [vmem:[%s4 + $0x60] sm:$0xff] %v372
    %389 = vst [vmem:[%s4 + $0x68] sm:$0xff] %v373
    %390 = vst [vmem:[%s4 + $0x70] sm:$0xff] %v374
    %391 = vst [vmem:[%s4 + $0x78] sm:$0xff] %v375
  $region25: #{_lambda_.17} parent=0 // pred_fallthru
    _
  // Predicated region
  $region26: #{_lambda_.17} parent=0 // pred_check
    _
  $region27: #{_lambda_.17} parent=0 // pred_check_branch
    %393 = sbr.rel (0) target = $region29
  $region28: #{_lambda_.17} parent=0 // pred_region
    _
  $region29: #{_lambda_.17} parent=0 // pred_fallthru
    _
  // Predicated region
  $region30: #{_lambda_.17} parent=0 // pred_check
    _
  $region31: #{_lambda_.17} parent=0 // pred_check_branch
    %395 = sbr.rel (0) target = $region33
  $region32: #{_lambda_.17} parent=0 // pred_region
    _
  $region33: #{_lambda_.17} parent=0 // pred_fallthru
    _

// kernel: _lambda_.9
$region0: #{_lambda_.9}
  #allocation0 [shape = 'u32[]', space=smem, size = 0x4, offset = 0x4, fixed_abs, tag = 'smem constant byte address 0x4 - core index']
  #allocation1 [shape = 'u32[144,128]{1,0:T(1,128)}', space=vmem, size = 0x12000, scoped, tag = 'internal scratch']
  #allocation2 [shape = 'f32[64,128]{1,0:T(8,128)}', space=vmem, size = 0x8000, scoped, tag = 'scratch operand']
  %s0 = inlined_call_operand.vmem [shape: bf16[2,10,10,128], index: 0, kind: input, shape index: {}]
  %s1 = inlined_call_operand.vmem [shape: bf16[9,128,128], index: 1, kind: input, shape index: {}]
  %s2 = inlined_call_operand.vmem [shape: f32[1,128], index: 2, kind: input, shape index: {}]
  %s3 = inlined_call_operand.vmem [shape: f32[1,128], index: 3, kind: input, shape index: {}]
  %s4 = inlined_call_operand.vmem [shape: bf16[2,8,8,128], index: 4, kind: output, shape index: {}]
  %s5 = sld [smem:[#allocation0]]
  $region49: #{_lambda_.9} parent=0
    _
  %s7 = ssub.s32 1, %s5
  %s8 = scalar_select 0, %s7, %s5
  loop: start=0, step=1, limit=4
  $region2: #{_lambda_.9} parent=0 // loop_pre_header
    _
  $region3: #{_lambda_.9} parent=0 // loop_header
    %s10 = sphi 0, %s14
    %p11 = scmp.ge.s32.totalorder %s10, 4
    %s17 = sphi 0, %s29
    %s18 = sphi 0, %s25
    %s19 = sphi 0, %s17
    %s20 = sphi 0, %s18
    %s21 = sphi 0, %s19
    %s22 = sphi 0, %s20
    %s32 = sphi 0, %s34
    %s35 = sphi 0, %s32
    %s36 = sphi 0, %s35
    %s52 = sphi 0, %s36
    %s58 = sphi 0, %s60
    %s61 = sphi 0, %s58
    %s62 = sphi 0, %s61
    %s78 = sphi 0, %s62
    %s84 = sphi 0, %s86
    %s87 = sphi 0, %s84
    %s88 = sphi 0, %s87
    %s104 = sphi 0, %s88
    %s110 = sphi 0, %s112
    %s113 = sphi 0, %s110
    %s114 = sphi 0, %s113
    %s130 = sphi 0, %s114
    %s138 = sphi 0, %s140
    %s141 = sphi 0, %s138
    %s142 = sphi 0, %s141
    %s158 = sphi 0, %s142
  $region4: #{_lambda_.9} parent=0 // loop_header_branch
    %13 = sbr.rel (%p11) target = $region8
  $region5: #{_lambda_.9} parent=0 // loop_body
    %s15 = ssub.s32 %s10, 1
    %s16 = ssub.s32 %s10, 2
    %s23 = sadd.s32 1, %s18
    %p24 = scmp.ge.s32.totalorder %s23, 1
    %s25 = scalar_select %p24, 0, %s23
    %s26 = sadd.s32 1, %s17
    %s27 = scalar_select %p24, %s26, %s17
    %p28 = scmp.ge.s32.totalorder %s27, 2
    %s29 = scalar_select %p28, 0, %s27
    %s30 = ssub.s32 %s17, %s29
    %p31 = scmp.eq.s32.totalorder %s30, 0
    %s33 = sadd.s32 %s32, 1
    %s34 = scalar_select %p31, %s32, %s33
    %p37 = pneg %p31
    %p38 = scmp.eq.s32.totalorder %s10, 1
    %p39 = por %p37, %p38
    %p40 = scmp.ne.s32.totalorder %s32, %s35
    %p41 = scmp.eq.s32.totalorder %s10, 0
    %p42 = por %p40, %p41
    %p43 = scmp.ne.s32.totalorder %s32, %s35
    %p44 = scmp.eq.s32.totalorder %s15, 1
    %p45 = por %p43, %p44
    %p46 = scmp.ne.s32.totalorder %s35, %s36
    %p47 = scmp.eq.s32.totalorder %s15, 0
    %p48 = por %p46, %p47
    %p49 = scmp.ne.s32.totalorder %s35, %s36
    %p50 = scmp.eq.s32.totalorder %s16, 1
    %p51 = por %p49, %p50
    %p53 = scmp.ne.s32.totalorder %s36, %s52
    %p54 = scmp.eq.s32.totalorder %s16, 0
    %p55 = por %p53, %p54
    %s56 = ssub.s32 %s18, %s25
    %p57 = scmp.eq.s32.totalorder %s56, 0
    %s59 = sadd.s32 %s58, 1
    %s60 = scalar_select %p57, %s58, %s59
    %p63 = pneg %p57
    %p64 = scmp.eq.s32.totalorder %s10, 1
    %p65 = por %p63, %p64
    %p66 = scmp.ne.s32.totalorder %s58, %s61
    %p67 = scmp.eq.s32.totalorder %s10, 0
    %p68 = por %p66, %p67
    %p69 = scmp.ne.s32.totalorder %s58, %s61
    %p70 = scmp.eq.s32.totalorder %s15, 1
    %p71 = por %p69, %p70
    %p72 = scmp.ne.s32.totalorder %s61, %s62
    %p73 = scmp.eq.s32.totalorder %s15, 0
    %p74 = por %p72, %p73
    %p75 = scmp.ne.s32.totalorder %s61, %s62
    %p76 = scmp.eq.s32.totalorder %s16, 1
    %p77 = por %p75, %p76
    %p79 = scmp.ne.s32.totalorder %s62, %s78
    %p80 = scmp.eq.s32.totalorder %s16, 0
    %p81 = por %p79, %p80
    %s82 = ssub.s32 %s18, %s25
    %p83 = scmp.eq.s32.totalorder %s82, 0
    %s85 = sadd.s32 %s84, 1
    %s86 = scalar_select %p83, %s84, %s85
    %p89 = pneg %p83
    %p90 = scmp.eq.s32.totalorder %s10, 1
    %p91 = por %p89, %p90
    %p92 = scmp.ne.s32.totalorder %s84, %s87
    %p93 = scmp.eq.s32.totalorder %s10, 0
    %p94 = por %p92, %p93
    %p95 = scmp.ne.s32.totalorder %s84, %s87
    %p96 = scmp.eq.s32.totalorder %s15, 1
    %p97 = por %p95, %p96
    %p98 = scmp.ne.s32.totalorder %s87, %s88
    %p99 = scmp.eq.s32.totalorder %s15, 0
    %p100 = por %p98, %p99
    %p101 = scmp.ne.s32.totalorder %s87, %s88
    %p102 = scmp.eq.s32.totalorder %s16, 1
    %p103 = por %p101, %p102
    %p105 = scmp.ne.s32.totalorder %s88, %s104
    %p106 = scmp.eq.s32.totalorder %s16, 0
    %p107 = por %p105, %p106
    %s108 = ssub.s32 %s18, %s25
    %p109 = scmp.eq.s32.totalorder %s108, 0
    %s111 = sadd.s32 %s110, 1
    %s112 = scalar_select %p109, %s110, %s111
    %p115 = pneg %p109
    %p116 = scmp.eq.s32.totalorder %s10, 1
    %p117 = por %p115, %p116
    %p118 = scmp.ne.s32.totalorder %s110, %s113
    %p119 = scmp.eq.s32.totalorder %s10, 0
    %p120 = por %p118, %p119
    %p121 = scmp.ne.s32.totalorder %s110, %s113
    %p122 = scmp.eq.s32.totalorder %s15, 1
    %p123 = por %p121, %p122
    %p124 = scmp.ne.s32.totalorder %s113, %s114
    %p125 = scmp.eq.s32.totalorder %s15, 0
    %p126 = por %p124, %p125
    %p127 = scmp.ne.s32.totalorder %s113, %s114
    %p128 = scmp.eq.s32.totalorder %s16, 1
    %p129 = por %p127, %p128
    %p131 = scmp.ne.s32.totalorder %s114, %s130
    %p132 = scmp.eq.s32.totalorder %s16, 0
    %p133 = por %p131, %p132
    %s134 = ssub.s32 %s17, %s29
    %s135 = ssub.s32 %s18, %s25
    %s136 = sor.u32 %s134, %s135
    %p137 = scmp.eq.s32.totalorder %s136, 0
    %s139 = sadd.s32 %s138, 1
    %s140 = scalar_select %p137, %s138, %s139
    %p143 = pneg %p137
    %p144 = scmp.eq.s32.totalorder %s10, 1
    %p145 = por %p143, %p144
    %p146 = scmp.ne.s32.totalorder %s138, %s141
    %p147 = scmp.eq.s32.totalorder %s10, 0
    %p148 = por %p146, %p147
    %p149 = scmp.ne.s32.totalorder %s138, %s141
    %p150 = scmp.eq.s32.totalorder %s15, 1
    %p151 = por %p149, %p150
    %p152 = scmp.ne.s32.totalorder %s141, %s142
    %p153 = scmp.eq.s32.totalorder %s15, 0
    %p154 = por %p152, %p153
    %p155 = scmp.ne.s32.totalorder %s141, %s142
    %p156 = scmp.eq.s32.totalorder %s16, 1
    %p157 = por %p155, %p156
    %p159 = scmp.ne.s32.totalorder %s142, %s158
    %p160 = scmp.eq.s32.totalorder %s16, 0
    %p161 = por %p159, %p160
    %p162 = scmp.le.s32.totalorder 1, %s10
    %p163 = scmp.lt.s32.totalorder %s10, 3
    %p164 = pnand %p162, %p163
    %p165 = pneg %p164
    // Predicated region
    $region9: #{_lambda_.9} parent=5 // pred_check
      _
    $region10: #{_lambda_.9} parent=5 // pred_check_branch
      %167 = sbr.rel (%p164) target = $region12
    $region11: #{_lambda_.9} parent=5 // pred_region
      %s168 = ssub.s32 %s10, 1
      // Predicated region
      $region13: #{_lambda_.9} parent=11 // pred_check
        %p169 = pneg %p74
      $region14: #{_lambda_.9} parent=11 // pred_check_branch
        %171 = sbr.rel (%p169) target = $region16
      $region15: #{_lambda_.9} parent=11 // pred_region
        %p172 = scmp.lt.s32.totalorder %s20, 0
        %s173 = scalar_select %p172, %s20, 0
        %s174 = smul.addr %s173, 4
        %s175 = scalar_lea.vmem %s1, %s174
      $region16: #{_lambda_.9} parent=11 // pred_fallthru
        _
      // Predicated region
      $region17: #{_lambda_.9} parent=11 // pred_check
        %p176 = pneg %p100
      $region18: #{_lambda_.9} parent=11 // pred_check_branch
        %178 = sbr.rel (%p176) target = $region20
      $region19: #{_lambda_.9} parent=11 // pred_region
        %p179 = scmp.lt.s32.totalorder %s20, 0
        %s180 = scalar_select %p179, %s20, 0
        %s181 = scalar_lea.vmem %s2, %s180
      $region20: #{_lambda_.9} parent=11 // pred_fallthru
        _
      // Predicated region
      $region21: #{_lambda_.9} parent=11 // pred_check
        %p182 = pneg %p126
      $region22: #{_lambda_.9} parent=11 // pred_check_branch
        %184 = sbr.rel (%p182) target = $region24
      $region23: #{_lambda_.9} parent=11 // pred_region
        %p185 = scmp.lt.s32.totalorder %s20, 0
        %s186 = scalar_select %p185, %s20, 0
        %s187 = scalar_lea.vmem %s3, %s186
      $region24: #{_lambda_.9} parent=11 // pred_fallthru
        _
    $region12: #{_lambda_.9} parent=5 // pred_fallthru
      _
    %p188 = scmp.lt.s32.totalorder %s10, 2
    // Predicated region
    $region25: #{_lambda_.9} parent=5 // pred_check
      %p189 = pneg %p188
    $region26: #{_lambda_.9} parent=5 // pred_check_branch
      %191 = sbr.rel (%p189) target = $region28
    $region27: #{_lambda_.9} parent=5 // pred_region
      // Predicated region
      $region29: #{_lambda_.9} parent=27 // pred_check
        %p192 = pneg %p42
      $region30: #{_lambda_.9} parent=27 // pred_check_branch
        %194 = sbr.rel (%p192) target = $region32
      $region31: #{_lambda_.9} parent=27 // pred_region
        %p195 = scmp.lt.s32.totalorder %s17, 1
        %s196 = scalar_select %p195, %s17, 1
        %s197 = smul.addr %s196, 20
        %s198 = smul.addr %s197, 4
        %s199 = scalar_lea.vmem %s0, %s198
      $region32: #{_lambda_.9} parent=27 // pred_fallthru
        _
    $region28: #{_lambda_.9} parent=5 // pred_fallthru
      _
    %p200 = scmp.le.s32.totalorder 1, %s10
    %p201 = scmp.lt.s32.totalorder %s10, 3
    %p202 = pnand %p200, %p201
    %p203 = pneg %p202
    // Predicated region
    $region33: #{_lambda_.9} parent=5 // pred_check
      _
    $region34: #{_lambda_.9} parent=5 // pred_check_branch
      %205 = sbr.rel (%p202) target = $region36
    $region35: #{_lambda_.9} parent=5 // pred_region
      %s206 = ssub.s32 %s10, 1
      %p207 = scmp.lt.s32.totalorder %s19, 1
      %s208 = scalar_select %p207, %s19, 1
      %s209 = smul.addr %s208, 20
      %s210 = smul.addr %s209, 4
      %s211 = scalar_lea.vmem %s0, %s210
      %p212 = pneg %p48
      %p213 = pneg %p45
      %p214 = scmp.lt.s32.totalorder %s20, 0
      %s215 = scalar_select %p214, %s20, 0
      %s216 = smul.addr %s215, 4
      %s217 = scalar_lea.vmem %s1, %s216
      %p218 = pneg %p74
      %p219 = pneg %p71
      %p220 = scmp.lt.s32.totalorder %s20, 0
      %s221 = scalar_select %p220, %s20, 0
      %s222 = scalar_lea.vmem %s2, %s221
      %p223 = pneg %p100
      %p224 = pneg %p97
      %p225 = scmp.lt.s32.totalorder %s20, 0
      %s226 = scalar_select %p225, %s20, 0
      %s227 = scalar_lea.vmem %s3, %s226
      %p228 = pneg %p126
      %p229 = pneg %p123
      %p230 = pneg %p154
      %p231 = pneg %p151
      %p232 = scmp.lt.s32.totalorder %s19, 1
      %s233 = scalar_select %p232, %s19, 1
      %p234 = scmp.lt.s32.totalorder %s20, 0
      %s235 = scalar_select %p234, %s20, 0
      %s236 = smul.addr %s233, 8
      %s237 = sadd.s32 %s235, %s236
      %s238 = smul.addr %s237, 4
      %s239 = scalar_lea.vmem %s4, %s238
      %p240 = scmp.lt.s32.totalorder %s19, 1
      %s241 = scalar_select %p240, %s19, 1
      %s242 = smul.addr %s241, 20
      %s243 = smul.addr %s242, 4
      %s244 = scalar_lea.vmem %s0, %s243
      %p245 = scmp.lt.s32.totalorder %s20, 0
      %s246 = scalar_select %p245, %s20, 0
      %s247 = smul.addr %s246, 4
      %s248 = scalar_lea.vmem %s1, %s247
      %p249 = scmp.lt.s32.totalorder %s20, 0
      %s250 = scalar_select %p249, %s20, 0
      %s251 = scalar_lea.vmem %s2, %s250
      %p252 = scmp.lt.s32.totalorder %s20, 0
      %s253 = scalar_select %p252, %s20, 0
      %s254 = scalar_lea.vmem %s3, %s253
      %p255 = scmp.lt.s32.totalorder %s19, 1
      %s256 = scalar_select %p255, %s19, 1
      %p257 = scmp.lt.s32.totalorder %s20, 0
      %s258 = scalar_select %p257, %s20, 0
      %s259 = smul.addr %s256, 8
      %s260 = sadd.s32 %s258, %s259
      %s261 = smul.addr %s260, 4
      %s262 = scalar_lea.vmem %s4, %s261
      %264 = vst [vmem:[#allocation2] sm:$0xff] 0.0
      %265 = vst [vmem:[#allocation2 + $0x8] sm:$0xff] 0.0
      %266 = vst [vmem:[#allocation2 + $0x10] sm:$0xff] 0.0
      %267 = vst [vmem:[#allocation2 + $0x18] sm:$0xff] 0.0
      %268 = vst [vmem:[#allocation2 + $0x20] sm:$0xff] 0.0
      %269 = vst [vmem:[#allocation2 + $0x28] sm:$0xff] 0.0
      %270 = vst [vmem:[#allocation2 + $0x30] sm:$0xff] 0.0
      %271 = vst [vmem:[#allocation2 + $0x38] sm:$0xff] 0.0
      %v272 = vld [vmem:[%s244] sm:$0xf]
      %v273 = vld [vmem:[%s244 + $0x8] sm:$0xf]
      %v274 = vld [vmem:[%s244 + $0x10] sm:$0xf]
      %v275 = vld [vmem:[%s244 + $0x18] sm:$0xf]
      %v276 = vld [vmem:[%s244 + $0x20] sm:$0xf]
      %v277 = vld [vmem:[%s244 + $0x28] sm:$0xf]
      %v278 = vld [vmem:[%s244 + $0x30] sm:$0xf]
      %v279 = vld [vmem:[%s244 + $0x38] sm:$0xf]
      %v280 = vld [vmem:[%s244 + $0x40] sm:$0xf]
      %v281 = vld [vmem:[%s244 + $0x48] sm:$0xf]
      %v282 = vld [vmem:[#allocation2] sm:$0xff]
      %v283 = vld [vmem:[#allocation2 + $0x8] sm:$0xff]
      %v284 = vld [vmem:[#allocation2 + $0x10] sm:$0xff]
      %v285 = vld [vmem:[#allocation2 + $0x18] sm:$0xff]
      %v286 = vld [vmem:[#allocation2 + $0x20] sm:$0xff]
      %v287 = vld [vmem:[#allocation2 + $0x28] sm:$0xff]
      %v288 = vld [vmem:[#allocation2 + $0x30] sm:$0xff]
      %v289 = vld [vmem:[#allocation2 + $0x38] sm:$0xff]
      %v290 = vld [vmem:[%s248] sm:$0xf]
      %v291 = vld [vmem:[%s248 + $0x4] sm:$0xf]
      %v292 = vld [vmem:[%s248 + $0x8] sm:$0xf]
      %v293 = vld [vmem:[%s248 + $0xc] sm:$0xf]
      %v294 = vld [vmem:[%s248 + $0x10] sm:$0xf]
      %v295 = vld [vmem:[%s248 + $0x14] sm:$0xf]
      %v296 = vld [vmem:[%s248 + $0x18] sm:$0xf]
      %v297 = vld [vmem:[%s248 + $0x1c] sm:$0xf]
      %v298 = vld [vmem:[%s248 + $0x20] sm:$0xf]
      %v299 = vld [vmem:[%s248 + $0x24] sm:$0xf]
      %v300 = vld [vmem:[%s248 + $0x28] sm:$0xf]
      %v301 = vld [vmem:[%s248 + $0x2c] sm:$0xf]
      %v302 = vld [vmem:[%s248 + $0x30] sm:$0xf]
      %v303 = vld [vmem:[%s248 + $0x34] sm:$0xf]
      %v304 = vld [vmem:[%s248 + $0x38] sm:$0xf]
      %v305 = vld [vmem:[%s248 + $0x3c] sm:$0xf]
      %v314 = vunpack.c.l.b16 %v272
      %v315 = vunpack.c.l.b16 %v273
      %v316 = vunpack.c.l.b16 %v274
      %v317 = vunpack.c.l.b16 %v275
      %v318 = vunpack.c.l.b16 %v276
      %v319 = vunpack.c.l.b16 %v277
      %v320 = vunpack.c.l.b16 %v278
      %v321 = vunpack.c.l.b16 %v279
      %v322 = vpack.c.b16 %v315, %v314
      %v323 = vpack.c.b16 %v317, %v316
      %v324 = vpack.c.b16 %v319, %v318
      %v325 = vpack.c.b16 %v321, %v320
      %v346 = vunpack.c.l.b16 %v290
      %v347 = vunpack.c.l.b16 %v291
      %v348 = vunpack.c.l.b16 %v292
      %v349 = vunpack.c.l.b16 %v293
      %v350 = vunpack.c.l.b16 %v294
      %v351 = vunpack.c.l.b16 %v295
      %v352 = vunpack.c.l.b16 %v296
      %v353 = vunpack.c.l.b16 %v297
      %v354 = vunpack.c.l.b16 %v298
      %v355 = vunpack.c.l.b16 %v299
      %v356 = vunpack.c.l.b16 %v300
      %v357 = vunpack.c.l.b16 %v301
      %v358 = vunpack.c.l.b16 %v302
      %v359 = vunpack.c.l.b16 %v303
      %v360 = vunpack.c.l.b16 %v304
      %v361 = vunpack.c.l.b16 %v305
      %v362 = vpack.c.b16 %v347, %v346
      %v363 = vpack.c.b16 %v349, %v348
      %v364 = vpack.c.b16 %v351, %v350
      %v365 = vpack.c.b16 %v353, %v352
      %v366 = vpack.c.b16 %v355, %v354
      %v367 = vpack.c.b16 %v357, %v356
      %v368 = vpack.c.b16 %v359, %v358
      %v369 = vpack.c.b16 %v361, %v360
      %378 = vmatprep.subr.bf16.mxu0 0
      %379 = vmatpush1.bf16.msra.mxu0 %v369
      %380 = vmatprep.subr.bf16.mxu0 0
      %381 = vmatpush1.bf16.msra.mxu0 %v368
      %382 = vmatprep.subr.bf16.mxu0 0
      %383 = vmatpush1.bf16.msra.mxu0 %v367
      %384 = vmatprep.subr.bf16.mxu0 0
      %385 = vmatpush1.bf16.msra.mxu0 %v366
      %386 = vmatprep.subr.bf16.mxu0 0
      %387 = vmatpush1.bf16.msra.mxu0 %v365
      %388 = vmatprep.subr.bf16.mxu0 0
      %389 = vmatpush1.bf16.msra.mxu0 %v364
      %390 = vmatprep.subr.bf16.mxu0 0
      %391 = vmatpush1.bf16.msra.mxu0 %v363
      %392 = vmatprep.subr.bf16.mxu0 0
      %393 = vmatpush1.bf16.msra.mxu0 %v362
      %394 = vmatprep.subr.bf16.mxu0 0
      %395 = vmatpush2.bf16.msra.mxu0 0
      %396 = vmatprep.subr.bf16.mxu0 0
      %397 = vmatpush2.bf16.msra.mxu0 0
      %398 = vmatprep.subr.bf16.mxu0 0
      %399 = vmatpush2.bf16.msra.mxu0 0
      %400 = vmatprep.subr.bf16.mxu0 0
      %401 = vmatpush2.bf16.msra.mxu0 0
      %402 = vmatprep.subr.bf16.mxu0 0
      %403 = vmatpush2.bf16.msra.mxu0 0
      %404 = vmatprep.subr.bf16.mxu0 0
      %405 = vmatpush2.bf16.msra.mxu0 0
      %406 = vmatprep.subr.bf16.mxu0 0
      %407 = vmatpush2.bf16.msra.mxu0 0
      %408 = vmatprep.subr.bf16.mxu0 0
      %409 = vmatpush2.bf16.msra.mxu0 0
      %410 = vmatprep.mubr.bf16.mxu0 0
      %411 = vmatmul.mubr.bf16.gmra.mxu0 %v322
      %v412 = vpop.f32.mrf.mxu0
      %v413 = vadd.f32 0.0, %v412
      %v414 = vpop.f32.mrf.mxu0
      %v415 = vpop.f32.mrf.mxu0
      %v416 = vadd.f32 0.0, %v415
      %v417 = vpop.f32.mrf.mxu0
      %418 = vmatprep.mubr.bf16.mxu0 0
      %419 = vmatmul.mubr.bf16.gmra.mxu0 %v323
      %v420 = vpop.f32.mrf.mxu0
      %v421 = vadd.f32 0.0, %v420
      %v422 = vpop.f32.mrf.mxu0
      %v423 = vpop.f32.mrf.mxu0
      %v424 = vadd.f32 0.0, %v423
      %v425 = vpop.f32.mrf.mxu0
      %426 = vmatprep.mubr.bf16.mxu0 0
      %427 = vmatmul.mubr.bf16.gmra.mxu0 %v324
      %v428 = vpop.f32.mrf.mxu0
      %v429 = vadd.f32 0.0, %v428
      %v430 = vpop.f32.mrf.mxu0
      %v431 = vpop.f32.mrf.mxu0
      %v432 = vadd.f32 0.0, %v431
      %v433 = vpop.f32.mrf.mxu0
      %434 = vmatprep.mubr.bf16.mxu0 0
      %435 = vmatmul.mubr.bf16.gmra.mxu0 %v325
      %v436 = vpop.f32.mrf.mxu0
      %v437 = vadd.f32 0.0, %v436
      %v438 = vpop.f32.mrf.mxu0
      %v439 = vpop.f32.mrf.mxu0
      %v440 = vadd.f32 0.0, %v439
      %v441 = vpop.f32.mrf.mxu0
      %442 = vdwg.mxu0
      %v443 = vadd.f32 %v282, %v413
      %v444 = vadd.f32 %v283, %v416
      %v445 = vadd.f32 %v284, %v421
      %v446 = vadd.f32 %v285, %v424
      %v447 = vadd.f32 %v286, %v429
      %v448 = vadd.f32 %v287, %v432
      %v449 = vadd.f32 %v288, %v437
      %v450 = vadd.f32 %v289, %v440
      %451 = vst [vmem:[#allocation2] sm:$0xff] %v443
      %452 = vst [vmem:[#allocation2 + $0x8] sm:$0xff] %v444
      %453 = vst [vmem:[#allocation2 + $0x10] sm:$0xff] %v445
      %454 = vst [vmem:[#allocation2 + $0x18] sm:$0xff] %v446
      %455 = vst [vmem:[#allocation2 + $0x20] sm:$0xff] %v447
      %456 = vst [vmem:[#allocation2 + $0x28] sm:$0xff] %v448
      %457 = vst [vmem:[#allocation2 + $0x30] sm:$0xff] %v449
      %458 = vst [vmem:[#allocation2 + $0x38] sm:$0xff] %v450
      %v459 = vld [vmem:[#allocation2] sm:$0xff]
      %v460 = vld [vmem:[#allocation2 + $0x8] sm:$0xff]
      %v461 = vld [vmem:[#allocation2 + $0x10] sm:$0xff]
      %v462 = vld [vmem:[#allocation2 + $0x18] sm:$0xff]
      %v463 = vld [vmem:[#allocation2 + $0x20] sm:$0xff]
      %v464 = vld [vmem:[#allocation2 + $0x28] sm:$0xff]
      %v465 = vld [vmem:[#allocation2 + $0x30] sm:$0xff]
      %v466 = vld [vmem:[#allocation2 + $0x38] sm:$0xff]
      %s467 = scalar_lea.vmem %s248, 192
      %v468 = vld [vmem:[%s467] sm:$0xf]
      %v469 = vld [vmem:[%s467 + $0x4] sm:$0xf]
      %v470 = vld [vmem:[%s467 + $0x8] sm:$0xf]
      %v471 = vld [vmem:[%s467 + $0xc] sm:$0xf]
      %v472 = vld [vmem:[%s467 + $0x10] sm:$0xf]
      %v473 = vld [vmem:[%s467 + $0x14] sm:$0xf]
      %v474 = vld [vmem:[%s467 + $0x18] sm:$0xf]
      %v475 = vld [vmem:[%s467 + $0x1c] sm:$0xf]
      %v476 = vld [vmem:[%s467 + $0x20] sm:$0xf]
      %v477 = vld [vmem:[%s467 + $0x24] sm:$0xf]
      %v478 = vld [vmem:[%s467 + $0x28] sm:$0xf]
      %v479 = vld [vmem:[%s467 + $0x2c] sm:$0xf]
      %v480 = vld [vmem:[%s467 + $0x30] sm:$0xf]
      %v481 = vld [vmem:[%s467 + $0x34] sm:$0xf]
      %v482 = vld [vmem:[%s467 + $0x38] sm:$0xf]
      %v483 = vld [vmem:[%s467 + $0x3c] sm:$0xf]
      %v485 = vunpack.c.l.b16 %v280
      %v486 = vpack.c.b16 %v316, %v315
      %v487 = vpack.c.b16 %v318, %v317
      %v488 = vpack.c.b16 %v320, %v319
      %v489 = vpack.c.b16 %v485, %v321
      %v510 = vunpack.c.l.b16 %v468
      %v511 = vunpack.c.l.b16 %v469
      %v512 = vunpack.c.l.b16 %v470
      %v513 = vunpack.c.l.b16 %v471
      %v514 = vunpack.c.l.b16 %v472
      %v515 = vunpack.c.l.b16 %v473
      %v516 = vunpack.c.l.b16 %v474
      %v517 = vunpack.c.l.b16 %v475
      %v518 = vunpack.c.l.b16 %v476
      %v519 = vunpack.c.l.b16 %v477
      %v520 = vunpack.c.l.b16 %v478
      %v521 = vunpack.c.l.b16 %v479
      %v522 = vunpack.c.l.b16 %v480
      %v523 = vunpack.c.l.b16 %v481
      %v524 = vunpack.c.l.b16 %v482
      %v525 = vunpack.c.l.b16 %v483
      %v526 = vpack.c.b16 %v511, %v510
      %v527 = vpack.c.b16 %v513, %v512
      %v528 = vpack.c.b16 %v515, %v514
      %v529 = vpack.c.b16 %v517, %v516
      %v530 = vpack.c.b16 %v519, %v518
      %v531 = vpack.c.b16 %v521, %v520
      %v532 = vpack.c.b16 %v523, %v522
      %v533 = vpack.c.b16 %v525, %v524
      %542 = vmatprep.subr.bf16.mxu0 0
      %543 = vmatpush1.bf16.msra.mxu0 %v533
      %544 = vmatprep.subr.bf16.mxu0 0
      %545 = vmatpush1.bf16.msra.mxu0 %v532
      %546 = vmatprep.subr.bf16.mxu0 0
      %547 = vmatpush1.bf16.msra.mxu0 %v531
      %548 = vmatprep.subr.bf16.mxu0 0
      %549 = vmatpush1.bf16.msra.mxu0 %v530
      %550 = vmatprep.subr.bf16.mxu0 0
      %551 = vmatpush1.bf16.msra.mxu0 %v529
      %552 = vmatprep.subr.bf16.mxu0 0
      %553 = vmatpush1.bf16.msra.mxu0 %v528
      %554 = vmatprep.subr.bf16.mxu0 0
      %555 = vmatpush1.bf16.msra.mxu0 %v527
      %556 = vmatprep.subr.bf16.mxu0 0
      %557 = vmatpush1.bf16.msra.mxu0 %v526
      %558 = vmatprep.subr.bf16.mxu0 0
      %559 = vmatpush2.bf16.msra.mxu0 0
      %560 = vmatprep.subr.bf16.mxu0 0
      %561 = vmatpush2.bf16.msra.mxu0 0
      %562 = vmatprep.subr.bf16.mxu0 0
      %563 = vmatpush2.bf16.msra.mxu0 0
      %564 = vmatprep.subr.bf16.mxu0 0
      %565 = vmatpush2.bf16.msra.mxu0 0
      %566 = vmatprep.subr.bf16.mxu0 0
      %567 = vmatpush2.bf16.msra.mxu0 0
      %568 = vmatprep.subr.bf16.mxu0 0
      %569 = vmatpush2.bf16.msra.mxu0 0
      %570 = vmatprep.subr.bf16.mxu0 0
      %571 = vmatpush2.bf16.msra.mxu0 0
      %572 = vmatprep.subr.bf16.mxu0 0
      %573 = vmatpush2.bf16.msra.mxu0 0
      %574 = vmatprep.mubr.bf16.mxu0 0
      %575 = vmatmul.mubr.bf16.gmra.mxu0 %v486
      %v576 = vpop.f32.mrf.mxu0
      %v577 = vadd.f32 0.0, %v576
      %v578 = vpop.f32.mrf.mxu0
      %v579 = vpop.f32.mrf.mxu0
      %v580 = vadd.f32 0.0, %v579
      %v581 = vpop.f32.mrf.mxu0
      %582 = vmatprep.mubr.bf16.mxu0 0
      %583 = vmatmul.mubr.bf16.gmra.mxu0 %v487
      %v584 = vpop.f32.mrf.mxu0
      %v585 = vadd.f32 0.0, %v584
      %v586 = vpop.f32.mrf.mxu0
      %v587 = vpop.f32.mrf.mxu0
      %v588 = vadd.f32 0.0, %v587
      %v589 = vpop.f32.mrf.mxu0
      %590 = vmatprep.mubr.bf16.mxu0 0
      %591 = vmatmul.mubr.bf16.gmra.mxu0 %v488
      %v592 = vpop.f32.mrf.mxu0
      %v593 = vadd.f32 0.0, %v592
      %v594 = vpop.f32.mrf.mxu0
      %v595 = vpop.f32.mrf.mxu0
      %v596 = vadd.f32 0.0, %v595
      %v597 = vpop.f32.mrf.mxu0
      %598 = vmatprep.mubr.bf16.mxu0 0
      %599 = vmatmul.mubr.bf16.gmra.mxu0 %v489
      %v600 = vpop.f32.mrf.mxu0
      %v601 = vadd.f32 0.0, %v600
      %v602 = vpop.f32.mrf.mxu0
      %v603 = vpop.f32.mrf.mxu0
      %v604 = vadd.f32 0.0, %v603
      %v605 = vpop.f32.mrf.mxu0
      %606 = vdwg.mxu0
      %v607 = vadd.f32 %v459, %v577
      %v608 = vadd.f32 %v460, %v580
      %v609 = vadd.f32 %v461, %v585
      %v610 = vadd.f32 %v462, %v588
      %v611 = vadd.f32 %v463, %v593
      %v612 = vadd.f32 %v464, %v596
      %v613 = vadd.f32 %v465, %v601
      %v614 = vadd.f32 %v466, %v604
      %615 = vst [vmem:[#allocation2] sm:$0xff] %v607
      %616 = vst [vmem:[#allocation2 + $0x8] sm:$0xff] %v608
      %617 = vst [vmem:[#allocation2 + $0x10] sm:$0xff] %v609
      %618 = vst [vmem:[#allocation2 + $0x18] sm:$0xff] %v610
      %619 = vst [vmem:[#allocation2 + $0x20] sm:$0xff] %v611
      %620 = vst [vmem:[#allocation2 + $0x28] sm:$0xff] %v612
      %621 = vst [vmem:[#allocation2 + $0x30] sm:$0xff] %v613
      %622 = vst [vmem:[#allocation2 + $0x38] sm:$0xff] %v614
      %v623 = vld [vmem:[#allocation2] sm:$0xff]
      %v624 = vld [vmem:[#allocation2 + $0x8] sm:$0xff]
      %v625 = vld [vmem:[#allocation2 + $0x10] sm:$0xff]
      %v626 = vld [vmem:[#allocation2 + $0x18] sm:$0xff]
      %v627 = vld [vmem:[#allocation2 + $0x20] sm:$0xff]
      %v628 = vld [vmem:[#allocation2 + $0x28] sm:$0xff]
      %v629 = vld [vmem:[#allocation2 + $0x30] sm:$0xff]
      %v630 = vld [vmem:[#allocation2 + $0x38] sm:$0xff]
      %s631 = scalar_lea.vmem %s248, 384
      %v632 = vld [vmem:[%s631] sm:$0xf]
      %v633 = vld [vmem:[%s631 + $0x4] sm:$0xf]
      %v634 = vld [vmem:[%s631 + $0x8] sm:$0xf]
      %v635 = vld [vmem:[%s631 + $0xc] sm:$0xf]
      %v636 = vld [vmem:[%s631 + $0x10] sm:$0xf]
      %v637 = vld [vmem:[%s631 + $0x14] sm:$0xf]
      %v638 = vld [vmem:[%s631 + $0x18] sm:$0xf]
      %v639 = vld [vmem:[%s631 + $0x1c] sm:$0xf]
      %v640 = vld [vmem:[%s631 + $0x20] sm:$0xf]
      %v641 = vld [vmem:[%s631 + $0x24] sm:$0xf]
      %v642 = vld [vmem:[%s631 + $0x28] sm:$0xf]
      %v643 = vld [vmem:[%s631 + $0x2c] sm:$0xf]
      %v644 = vld [vmem:[%s631 + $0x30] sm:$0xf]
      %v645 = vld [vmem:[%s631 + $0x34] sm:$0xf]
      %v646 = vld [vmem:[%s631 + $0x38] sm:$0xf]
      %v647 = vld [vmem:[%s631 + $0x3c] sm:$0xf]
      %v649 = vunpack.c.l.b16 %v281
      %v650 = vpack.c.b16 %v649, %v485
      %v668 = vunpack.c.l.b16 %v632
      %v669 = vunpack.c.l.b16 %v633
      %v670 = vunpack.c.l.b16 %v634
      %v671 = vunpack.c.l.b16 %v635
      %v672 = vunpack.c.l.b16 %v636
      %v673 = vunpack.c.l.b16 %v637
      %v674 = vunpack.c.l.b16 %v638
      %v675 = vunpack.c.l.b16 %v639
      %v676 = vunpack.c.l.b16 %v640
      %v677 = vunpack.c.l.b16 %v641
      %v678 = vunpack.c.l.b16 %v642
      %v679 = vunpack.c.l.b16 %v643
      %v680 = vunpack.c.l.b16 %v644
      %v681 = vunpack.c.l.b16 %v645
      %v682 = vunpack.c.l.b16 %v646
      %v683 = vunpack.c.l.b16 %v647
      %v684 = vpack.c.b16 %v669, %v668
      %v685 = vpack.c.b16 %v671, %v670
      %v686 = vpack.c.b16 %v673, %v672
      %v687 = vpack.c.b16 %v675, %v674
      %v688 = vpack.c.b16 %v677, %v676
      %v689 = vpack.c.b16 %v679, %v678
      %v690 = vpack.c.b16 %v681, %v680
      %v691 = vpack.c.b16 %v683, %v682
      %700 = vmatprep.subr.bf16.mxu0 0
      %701 = vmatpush1.bf16.msra.mxu0 %v691
      %702 = vmatprep.subr.bf16.mxu0 0
      %703 = vmatpush1.bf16.msra.mxu0 %v690
      %704 = vmatprep.subr.bf16.mxu0 0
      %705 = vmatpush1.bf16.msra.mxu0 %v689
      %706 = vmatprep.subr.bf16.mxu0 0
      %707 = vmatpush1.bf16.msra.mxu0 %v688
      %708 = vmatprep.subr.bf16.mxu0 0
      %709 = vmatpush1.bf16.msra.mxu0 %v687
      %710 = vmatprep.subr.bf16.mxu0 0
      %711 = vmatpush1.bf16.msra.mxu0 %v686
      %712 = vmatprep.subr.bf16.mxu0 0
      %713 = vmatpush1.bf16.msra.mxu0 %v685
      %714 = vmatprep.subr.bf16.mxu0 0
      %715 = vmatpush1.bf16.msra.mxu0 %v684
      %716 = vmatprep.subr.bf16.mxu0 0
      %717 = vmatpush2.bf16.msra.mxu0 0
      %718 = vmatprep.subr.bf16.mxu0 0
      %719 = vmatpush2.bf16.msra.mxu0 0
      %720 = vmatprep.subr.bf16.mxu0 0
      %721 = vmatpush2.bf16.msra.mxu0 0
      %722 = vmatprep.subr.bf16.mxu0 0
      %723 = vmatpush2.bf16.msra.mxu0 0
      %724 = vmatprep.subr.bf16.mxu0 0
      %725 = vmatpush2.bf16.msra.mxu0 0
      %726 = vmatprep.subr.bf16.mxu0 0
      %727 = vmatpush2.bf16.msra.mxu0 0
      %728 = vmatprep.subr.bf16.mxu0 0
      %729 = vmatpush2.bf16.msra.mxu0 0
      %730 = vmatprep.subr.bf16.mxu0 0
      %731 = vmatpush2.bf16.msra.mxu0 0
      %732 = vmatprep.mubr.bf16.mxu0 0
      %733 = vmatmul.mubr.bf16.gmra.mxu0 %v323
      %v734 = vpop.f32.mrf.mxu0
      %v735 = vadd.f32 0.0, %v734
      %v736 = vpop.f32.mrf.mxu0
      %v737 = vpop.f32.mrf.mxu0
      %v738 = vadd.f32 0.0, %v737
      %v739 = vpop.f32.mrf.mxu0
      %740 = vmatprep.mubr.bf16.mxu0 0
      %741 = vmatmul.mubr.bf16.gmra.mxu0 %v324
      %v742 = vpop.f32.mrf.mxu0
      %v743 = vadd.f32 0.0, %v742
      %v744 = vpop.f32.mrf.mxu0
      %v745 = vpop.f32.mrf.mxu0
      %v746 = vadd.f32 0.0, %v745
      %v747 = vpop.f32.mrf.mxu0
      %748 = vmatprep.mubr.bf16.mxu0 0
      %749 = vmatmul.mubr.bf16.gmra.mxu0 %v325
      %v750 = vpop.f32.mrf.mxu0
      %v751 = vadd.f32 0.0, %v750
      %v752 = vpop.f32.mrf.mxu0
      %v753 = vpop.f32.mrf.mxu0
      %v754 = vadd.f32 0.0, %v753
      %v755 = vpop.f32.mrf.mxu0
      %756 = vmatprep.mubr.bf16.mxu0 0
      %757 = vmatmul.mubr.bf16.gmra.mxu0 %v650
      %v758 = vpop.f32.mrf.mxu0
      %v759 = vadd.f32 0.0, %v758
      %v760 = vpop.f32.mrf.mxu0
      %v761 = vpop.f32.mrf.mxu0
      %v762 = vadd.f32 0.0, %v761
      %v763 = vpop.f32.mrf.mxu0
      %764 = vdwg.mxu0
      %v765 = vadd.f32 %v623, %v735
      %v766 = vadd.f32 %v624, %v738
      %v767 = vadd.f32 %v625, %v743
      %v768 = vadd.f32 %v626, %v746
      %v769 = vadd.f32 %v627, %v751
      %v770 = vadd.f32 %v628, %v754
      %v771 = vadd.f32 %v629, %v759
      %v772 = vadd.f32 %v630, %v762
      %773 = vst [vmem:[#allocation2] sm:$0xff] %v765
      %774 = vst [vmem:[#allocation2 + $0x8] sm:$0xff] %v766
      %775 = vst [vmem:[#allocation2 + $0x10] sm:$0xff] %v767
      %776 = vst [vmem:[#allocation2 + $0x18] sm:$0xff] %v768
      %777 = vst [vmem:[#allocation2 + $0x20] sm:$0xff] %v769
      %778 = vst [vmem:[#allocation2 + $0x28] sm:$0xff] %v770
      %779 = vst [vmem:[#allocation2 + $0x30] sm:$0xff] %v771
      %780 = vst [vmem:[#allocation2 + $0x38] sm:$0xff] %v772
      %v781 = vld [vmem:[%s244] sm:$0xf]
      %v782 = vld [vmem:[%s244 + $0x4] sm:$0x1]
      %v783 = vld [vmem:[%s244 + $0x8] sm:$0xf]
      %v784 = vld [vmem:[%s244 + $0xc] sm:$0x1]
      %v785 = vld [vmem:[%s244 + $0x10] sm:$0xf]
      %v786 = vld [vmem:[%s244 + $0x14] sm:$0x1]
      %v787 = vld [vmem:[%s244 + $0x18] sm:$0xf]
      %v788 = vld [vmem:[%s244 + $0x1c] sm:$0x1]
      %v789 = vld [vmem:[%s244 + $0x20] sm:$0xf]
      %v790 = vld [vmem:[%s244 + $0x24] sm:$0x1]
      %v791 = vld [vmem:[%s244 + $0x28] sm:$0xf]
      %v792 = vld [vmem:[%s244 + $0x2c] sm:$0x1]
      %v793 = vld [vmem:[%s244 + $0x30] sm:$0xf]
      %v794 = vld [vmem:[%s244 + $0x34] sm:$0x1]
      %v795 = vld [vmem:[%s244 + $0x38] sm:$0xf]
      %v796 = vld [vmem:[%s244 + $0x3c] sm:$0x1]
      %v797 = vld [vmem:[%s244 + $0x40] sm:$0xf]
      %v798 = vld [vmem:[%s244 + $0x44] sm:$0x1]
      %v799 = vld [vmem:[%s244 + $0x48] sm:$0xf]
      %v800 = vld [vmem:[%s244 + $0x4c] sm:$0x1]
      %vm801 = vsmask.f32 3328
      %vm802 = vsmask.f32 7440
      %vm803 = vmor %vm801, %vm802
      %v805 = vshrl.u32 %v781, 16
      %v807 = vrot.slane %v805, 4
      %v808 = vshll.u32 %v781, 16
      %v810 = vrot.slane %v808, 5
      %v811 = vor.u32 %v807, %v810
      %v812 = vrot.slane %v811, 4
      %v814 = vshll.u32 %v782, 16
      %v816 = vrot.slane %v814, 5
      %v817 = vsel %vm803, %v812, %v816
      %v819 = vshrl.u32 %v783, 16
      %v821 = vrot.slane %v819, 4
      %v822 = vshll.u32 %v783, 16
      %v824 = vrot.slane %v822, 5
      %v825 = vor.u32 %v821, %v824
      %v826 = vrot.slane %v825, 4
      %v828 = vshll.u32 %v784, 16
      %v830 = vrot.slane %v828, 5
      %v831 = vsel %vm803, %v826, %v830
      %v833 = vshrl.u32 %v785, 16
      %v835 = vrot.slane %v833, 4
      %v836 = vshll.u32 %v785, 16
      %v838 = vrot.slane %v836, 5
      %v839 = vor.u32 %v835, %v838
      %v840 = vrot.slane %v839, 4
      %v842 = vshll.u32 %v786, 16
      %v844 = vrot.slane %v842, 5
      %v845 = vsel %vm803, %v840, %v844
      %v847 = vshrl.u32 %v787, 16
      %v849 = vrot.slane %v847, 4
      %v850 = vshll.u32 %v787, 16
      %v852 = vrot.slane %v850, 5
      %v853 = vor.u32 %v849, %v852
      %v854 = vrot.slane %v853, 4
      %v856 = vshll.u32 %v788, 16
      %v858 = vrot.slane %v856, 5
      %v859 = vsel %vm803, %v854, %v858
      %v861 = vshrl.u32 %v789, 16
      %v863 = vrot.slane %v861, 4
      %v864 = vshll.u32 %v789, 16
      %v866 = vrot.slane %v864, 5
      %v867 = vor.u32 %v863, %v866
      %v868 = vrot.slane %v867, 4
      %v870 = vshll.u32 %v790, 16
      %v872 = vrot.slane %v870, 5
      %v873 = vsel %vm803, %v868, %v872
      %v875 = vshrl.u32 %v791, 16
      %v877 = vrot.slane %v875, 4
      %v878 = vshll.u32 %v791, 16
      %v880 = vrot.slane %v878, 5
      %v881 = vor.u32 %v877, %v880
      %v882 = vrot.slane %v881, 4
      %v884 = vshll.u32 %v792, 16
      %v886 = vrot.slane %v884, 5
      %v887 = vsel %vm803, %v882, %v886
      %v889 = vshrl.u32 %v793, 16
      %v891 = vrot.slane %v889, 4
      %v892 = vshll.u32 %v793, 16
      %v894 = vrot.slane %v892, 5
      %v895 = vor.u32 %v891, %v894
      %v896 = vrot.slane %v895, 4
      %v898 = vshll.u32 %v794, 16
      %v900 = vrot.slane %v898, 5
      %v901 = vsel %vm803, %v896, %v900
      %v903 = vshrl.u32 %v795, 16
      %v905 = vrot.slane %v903, 4
      %v906 = vshll.u32 %v795, 16
      %v908 = vrot.slane %v906, 5
      %v909 = vor.u32 %v905, %v908
      %v910 = vrot.slane %v909, 4
      %v912 = vshll.u32 %v796, 16
      %v914 = vrot.slane %v912, 5
      %v915 = vsel %vm803, %v910, %v914
      %v917 = vshrl.u32 %v797, 16
      %v919 = vrot.slane %v917, 4
      %v920 = vshll.u32 %v797, 16
      %v922 = vrot.slane %v920, 5
      %v923 = vor.u32 %v919, %v922
      %v924 = vrot.slane %v923, 4
      %v926 = vshll.u32 %v798, 16
      %v928 = vrot.slane %v926, 5
      %v929 = vsel %vm803, %v924, %v928
      %v931 = vshrl.u32 %v799, 16
      %v933 = vrot.slane %v931, 4
      %v934 = vshll.u32 %v799, 16
      %v936 = vrot.slane %v934, 5
      %v937 = vor.u32 %v933, %v936
      %v938 = vrot.slane %v937, 4
      %v940 = vshll.u32 %v800, 16
      %v942 = vrot.slane %v940, 5
      %v943 = vsel %vm803, %v938, %v942
      %v944 = vld [vmem:[#allocation2] sm:$0xff]
      %v945 = vld [vmem:[#allocation2 + $0x8] sm:$0xff]
      %v946 = vld [vmem:[#allocation2 + $0x10] sm:$0xff]
      %v947 = vld [vmem:[#allocation2 + $0x18] sm:$0xff]
      %v948 = vld [vmem:[#allocation2 + $0x20] sm:$0xff]
      %v949 = vld [vmem:[#allocation2 + $0x28] sm:$0xff]
      %v950 = vld [vmem:[#allocation2 + $0x30] sm:$0xff]
      %v951 = vld [vmem:[#allocation2 + $0x38] sm:$0xff]
      %s952 = scalar_lea.vmem %s248, 64
      %v953 = vld [vmem:[%s952] sm:$0xf]
      %v954 = vld [vmem:[%s952 + $0x4] sm:$0xf]
      %v955 = vld [vmem:[%s952 + $0x8] sm:$0xf]
      %v956 = vld [vmem:[%s952 + $0xc] sm:$0xf]
      %v957 = vld [vmem:[%s952 + $0x10] sm:$0xf]
      %v958 = vld [vmem:[%s952 + $0x14] sm:$0xf]
      %v959 = vld [vmem:[%s952 + $0x18] sm:$0xf]
      %v960 = vld [vmem:[%s952 + $0x1c] sm:$0xf]
      %v961 = vld [vmem:[%s952 + $0x20] sm:$0xf]
      %v962 = vld [vmem:[%s952 + $0x24] sm:$0xf]
      %v963 = vld [vmem:[%s952 + $0x28] sm:$0xf]
      %v964 = vld [vmem:[%s952 + $0x2c] sm:$0xf]
      %v965 = vld [vmem:[%s952 + $0x30] sm:$0xf]
      %v966 = vld [vmem:[%s952 + $0x34] sm:$0xf]
      %v967 = vld [vmem:[%s952 + $0x38] sm:$0xf]
      %v968 = vld [vmem:[%s952 + $0x3c] sm:$0xf]
      %v969 = vunpack.c.l.b16 %v817
      %v970 = vunpack.c.l.b16 %v831
      %v971 = vunpack.c.l.b16 %v845
      %v972 = vunpack.c.l.b16 %v859
      %v973 = vunpack.c.l.b16 %v873
      %v974 = vunpack.c.l.b16 %v887
      %v975 = vunpack.c.l.b16 %v901
      %v976 = vunpack.c.l.b16 %v915
      %v977 = vpack.c.b16 %v970, %v969
      %v978 = vpack.c.b16 %v972, %v971
      %v979 = vpack.c.b16 %v974, %v973
      %v980 = vpack.c.b16 %v976, %v975
      %v1001 = vunpack.c.l.b16 %v953
      %v1002 = vunpack.c.l.b16 %v954
      %v1003 = vunpack.c.l.b16 %v955
      %v1004 = vunpack.c.l.b16 %v956
      %v1005 = vunpack.c.l.b16 %v957
      %v1006 = vunpack.c.l.b16 %v958
      %v1007 = vunpack.c.l.b16 %v959
      %v1008 = vunpack.c.l.b16 %v960
      %v1009 = vunpack.c.l.b16 %v961
      %v1010 = vunpack.c.l.b16 %v962
      %v1011 = vunpack.c.l.b16 %v963
      %v1012 = vunpack.c.l.b16 %v964
      %v1013 = vunpack.c.l.b16 %v965
      %v1014 = vunpack.c.l.b16 %v966
      %v1015 = vunpack.c.l.b16 %v967
      %v1016 = vunpack.c.l.b16 %v968
      %v1017 = vpack.c.b16 %v1002, %v1001
      %v1018 = vpack.c.b16 %v1004, %v1003
      %v1019 = vpack.c.b16 %v1006, %v1005
      %v1020 = vpack.c.b16 %v1008, %v1007
      %v1021 = vpack.c.b16 %v1010, %v1009
      %v1022 = vpack.c.b16 %v1012, %v1011
      %v1023 = vpack.c.b16 %v1014, %v1013
      %v1024 = vpack.c.b16 %v1016, %v1015
      %1033 = vmatprep.subr.bf16.mxu0 0
      %1034 = vmatpush1.bf16.msra.mxu0 %v1024
      %1035 = vmatprep.subr.bf16.mxu0 0
      %1036 = vmatpush1.bf16.msra.mxu0 %v1023
      %1037 = vmatprep.subr.bf16.mxu0 0
      %1038 = vmatpush1.bf16.msra.mxu0 %v1022
      %1039 = vmatprep.subr.bf16.mxu0 0
      %1040 = vmatpush1.bf16.msra.mxu0 %v1021
      %1041 = vmatprep.subr.bf16.mxu0 0
      %1042 = vmatpush1.bf16.msra.mxu0 %v1020
      %1043 = vmatprep.subr.bf16.mxu0 0
      %1044 = vmatpush1.bf16.msra.mxu0 %v1019
      %1045 = vmatprep.subr.bf16.mxu0 0
      %1046 = vmatpush1.bf16.msra.mxu0 %v1018
      %1047 = vmatprep.subr.bf16.mxu0 0
      %1048 = vmatpush1.bf16.msra.mxu0 %v1017
      %1049 = vmatprep.subr.bf16.mxu0 0
      %1050 = vmatpush2.bf16.msra.mxu0 0
      %1051 = vmatprep.subr.bf16.mxu0 0
      %1052 = vmatpush2.bf16.msra.mxu0 0
      %1053 = vmatprep.subr.bf16.mxu0 0
      %1054 = vmatpush2.bf16.msra.mxu0 0
      %1055 = vmatprep.subr.bf16.mxu0 0
      %1056 = vmatpush2.bf16.msra.mxu0 0
      %1057 = vmatprep.subr.bf16.mxu0 0
      %1058 = vmatpush2.bf16.msra.mxu0 0
      %1059 = vmatprep.subr.bf16.mxu0 0
      %1060 = vmatpush2.bf16.msra.mxu0 0
      %1061 = vmatprep.subr.bf16.mxu0 0
      %1062 = vmatpush2.bf16.msra.mxu0 0
      %1063 = vmatprep.subr.bf16.mxu0 0
      %1064 = vmatpush2.bf16.msra.mxu0 0
      %1065 = vmatprep.mubr.bf16.mxu0 0
      %1066 = vmatmul.mubr.bf16.gmra.mxu0 %v977
      %v1067 = vpop.f32.mrf.mxu0
      %v1068 = vadd.f32 0.0, %v1067
      %v1069 = vpop.f32.mrf.mxu0
      %v1070 = vpop.f32.mrf.mxu0
      %v1071 = vadd.f32 0.0, %v1070
      %v1072 = vpop.f32.mrf.mxu0
      %1073 = vmatprep.mubr.bf16.mxu0 0
      %1074 = vmatmul.mubr.bf16.gmra.mxu0 %v978
      %v1075 = vpop.f32.mrf.mxu0
      %v1076 = vadd.f32 0.0, %v1075
      %v1077 = vpop.f32.mrf.mxu0
      %v1078 = vpop.f32.mrf.mxu0
      %v1079 = vadd.f32 0.0, %v1078
      %v1080 = vpop.f32.mrf.mxu0
      %1081 = vmatprep.mubr.bf16.mxu0 0
      %1082 = vmatmul.mubr.bf16.gmra.mxu0 %v979
      %v1083 = vpop.f32.mrf.mxu0
      %v1084 = vadd.f32 0.0, %v1083
      %v1085 = vpop.f32.mrf.mxu0
      %v1086 = vpop.f32.mrf.mxu0
      %v1087 = vadd.f32 0.0, %v1086
      %v1088 = vpop.f32.mrf.mxu0
      %1089 = vmatprep.mubr.bf16.mxu0 0
      %1090 = vmatmul.mubr.bf16.gmra.mxu0 %v980
      %v1091 = vpop.f32.mrf.mxu0
      %v1092 = vadd.f32 0.0, %v1091
      %v1093 = vpop.f32.mrf.mxu0
      %v1094 = vpop.f32.mrf.mxu0
      %v1095 = vadd.f32 0.0, %v1094
      %v1096 = vpop.f32.mrf.mxu0
      %1097 = vdwg.mxu0
      %v1098 = vadd.f32 %v944, %v1068
      %v1099 = vadd.f32 %v945, %v1071
      %v1100 = vadd.f32 %v946, %v1076
      %v1101 = vadd.f32 %v947, %v1079
      %v1102 = vadd.f32 %v948, %v1084
      %v1103 = vadd.f32 %v949, %v1087
      %v1104 = vadd.f32 %v950, %v1092
      %v1105 = vadd.f32 %v951, %v1095
      %1106 = vst [vmem:[#allocation2] sm:$0xff] %v1098
      %1107 = vst [vmem:[#allocation2 + $0x8] sm:$0xff] %v1099
      %1108 = vst [vmem:[#allocation2 + $0x10] sm:$0xff] %v1100
      %1109 = vst [vmem:[#allocation2 + $0x18] sm:$0xff] %v1101
      %1110 = vst [vmem:[#allocation2 + $0x20] sm:$0xff] %v1102
      %1111 = vst [vmem:[#allocation2 + $0x28] sm:$0xff] %v1103
      %1112 = vst [vmem:[#allocation2 + $0x30] sm:$0xff] %v1104
      %1113 = vst [vmem:[#allocation2 + $0x38] sm:$0xff] %v1105
      %v1114 = vld [vmem:[#allocation2] sm:$0xff]
      %v1115 = vld [vmem:[#allocation2 + $0x8] sm:$0xff]
      %v1116 = vld [vmem:[#allocation2 + $0x10] sm:$0xff]
      %v1117 = vld [vmem:[#allocation2 + $0x18] sm:$0xff]
      %v1118 = vld [vmem:[#allocation2 + $0x20] sm:$0xff]
      %v1119 = vld [vmem:[#allocation2 + $0x28] sm:$0xff]
      %v1120 = vld [vmem:[#allocation2 + $0x30] sm:$0xff]
      %v1121 = vld [vmem:[#allocation2 + $0x38] sm:$0xff]
      %s1122 = scalar_lea.vmem %s248, 256
      %v1123 = vld [vmem:[%s1122] sm:$0xf]
      %v1124 = vld [vmem:[%s1122 + $0x4] sm:$0xf]
      %v1125 = vld [vmem:[%s1122 + $0x8] sm:$0xf]
      %v1126 = vld [vmem:[%s1122 + $0xc] sm:$0xf]
      %v1127 = vld [vmem:[%s1122 + $0x10] sm:$0xf]
      %v1128 = vld [vmem:[%s1122 + $0x14] sm:$0xf]
      %v1129 = vld [vmem:[%s1122 + $0x18] sm:$0xf]
      %v1130 = vld [vmem:[%s1122 + $0x1c] sm:$0xf]
      %v1131 = vld [vmem:[%s1122 + $0x20] sm:$0xf]
      %v1132 = vld [vmem:[%s1122 + $0x24] sm:$0xf]
      %v1133 = vld [vmem:[%s1122 + $0x28] sm:$0xf]
      %v1134 = vld [vmem:[%s1122 + $0x2c] sm:$0xf]
      %v1135 = vld [vmem:[%s1122 + $0x30] sm:$0xf]
      %v1136 = vld [vmem:[%s1122 + $0x34] sm:$0xf]
      %v1137 = vld [vmem:[%s1122 + $0x38] sm:$0xf]
      %v1138 = vld [vmem:[%s1122 + $0x3c] sm:$0xf]
      %v1139 = vunpack.c.l.b16 %v929
      %v1140 = vpack.c.b16 %v971, %v970
      %v1141 = vpack.c.b16 %v973, %v972
      %v1142 = vpack.c.b16 %v975, %v974
      %v1143 = vpack.c.b16 %v1139, %v976
      %v1164 = vunpack.c.l.b16 %v1123
      %v1165 = vunpack.c.l.b16 %v1124
      %v1166 = vunpack.c.l.b16 %v1125
      %v1167 = vunpack.c.l.b16 %v1126
      %v1168 = vunpack.c.l.b16 %v1127
      %v1169 = vunpack.c.l.b16 %v1128
      %v1170 = vunpack.c.l.b16 %v1129
      %v1171 = vunpack.c.l.b16 %v1130
      %v1172 = vunpack.c.l.b16 %v1131
      %v1173 = vunpack.c.l.b16 %v1132
      %v1174 = vunpack.c.l.b16 %v1133
      %v1175 = vunpack.c.l.b16 %v1134
      %v1176 = vunpack.c.l.b16 %v1135
      %v1177 = vunpack.c.l.b16 %v1136
      %v1178 = vunpack.c.l.b16 %v1137
      %v1179 = vunpack.c.l.b16 %v1138
      %v1180 = vpack.c.b16 %v1165, %v1164
      %v1181 = vpack.c.b16 %v1167, %v1166
      %v1182 = vpack.c.b16 %v1169, %v1168
      %v1183 = vpack.c.b16 %v1171, %v1170
      %v1184 = vpack.c.b16 %v1173, %v1172
      %v1185 = vpack.c.b16 %v1175, %v1174
      %v1186 = vpack.c.b16 %v1177, %v1176
      %v1187 = vpack.c.b16 %v1179, %v1178
      %1196 = vmatprep.subr.bf16.mxu0 0
      %1197 = vmatpush1.bf16.msra.mxu0 %v1187
      %1198 = vmatprep.subr.bf16.mxu0 0
      %1199 = vmatpush1.bf16.msra.mxu0 %v1186
      %1200 = vmatprep.subr.bf16.mxu0 0
      %1201 = vmatpush1.bf16.msra.mxu0 %v1185
      %1202 = vmatprep.subr.bf16.mxu0 0
      %1203 = vmatpush1.bf16.msra.mxu0 %v1184
      %1204 = vmatprep.subr.bf16.mxu0 0
      %1205 = vmatpush1.bf16.msra.mxu0 %v1183
      %1206 = vmatprep.subr.bf16.mxu0 0
      %1207 = vmatpush1.bf16.msra.mxu0 %v1182
      %1208 = vmatprep.subr.bf16.mxu0 0
      %1209 = vmatpush1.bf16.msra.mxu0 %v1181
      %1210 = vmatprep.subr.bf16.mxu0 0
      %1211 = vmatpush1.bf16.msra.mxu0 %v1180
      %1212 = vmatprep.subr.bf16.mxu0 0
      %1213 = vmatpush2.bf16.msra.mxu0 0
      %1214 = vmatprep.subr.bf16.mxu0 0
      %1215 = vmatpush2.bf16.msra.mxu0 0
      %1216 = vmatprep.subr.bf16.mxu0 0
      %1217 = vmatpush2.bf16.msra.mxu0 0
      %1218 = vmatprep.subr.bf16.mxu0 0
      %1219 = vmatpush2.bf16.msra.mxu0 0
      %1220 = vmatprep.subr.bf16.mxu0 0
      %1221 = vmatpush2.bf16.msra.mxu0 0
      %1222 = vmatprep.subr.bf16.mxu0 0
      %1223 = vmatpush2.bf16.msra.mxu0 0
      %1224 = vmatprep.subr.bf16.mxu0 0
      %1225 = vmatpush2.bf16.msra.mxu0 0
      %1226 = vmatprep.subr.bf16.mxu0 0
      %1227 = vmatpush2.bf16.msra.mxu0 0
      %1228 = vmatprep.mubr.bf16.mxu0 0
      %1229 = vmatmul.mubr.bf16.gmra.mxu0 %v1140
      %v1230 = vpop.f32.mrf.mxu0
      %v1231 = vadd.f32 0.0, %v1230
      %v1232 = vpop.f32.mrf.mxu0
      %v1233 = vpop.f32.mrf.mxu0
      %v1234 = vadd.f32 0.0, %v1233
      %v1235 = vpop.f32.mrf.mxu0
      %1236 = vmatprep.mubr.bf16.mxu0 0
      %1237 = vmatmul.mubr.bf16.gmra.mxu0 %v1141
      %v1238 = vpop.f32.mrf.mxu0
      %v1239 = vadd.f32 0.0, %v1238
      %v1240 = vpop.f32.mrf.mxu0
      %v1241 = vpop.f32.mrf.mxu0
      %v1242 = vadd.f32 0.0, %v1241
      %v1243 = vpop.f32.mrf.mxu0
      %1244 = vmatprep.mubr.bf16.mxu0 0
      %1245 = vmatmul.mubr.bf16.gmra.mxu0 %v1142
      %v1246 = vpop.f32.mrf.mxu0
      %v1247 = vadd.f32 0.0, %v1246
      %v1248 = vpop.f32.mrf.mxu0
      %v1249 = vpop.f32.mrf.mxu0
      %v1250 = vadd.f32 0.0, %v1249
      %v1251 = vpop.f32.mrf.mxu0
      %1252 = vmatprep.mubr.bf16.mxu0 0
      %1253 = vmatmul.mubr.bf16.gmra.mxu0 %v1143
      %v1254 = vpop.f32.mrf.mxu0
      %v1255 = vadd.f32 0.0, %v1254
      %v1256 = vpop.f32.mrf.mxu0
      %v1257 = vpop.f32.mrf.mxu0
      %v1258 = vadd.f32 0.0, %v1257
      %v1259 = vpop.f32.mrf.mxu0
      %1260 = vdwg.mxu0
      %v1261 = vadd.f32 %v1114, %v1231
      %v1262 = vadd.f32 %v1115, %v1234
      %v1263 = vadd.f32 %v1116, %v1239
      %v1264 = vadd.f32 %v1117, %v1242
      %v1265 = vadd.f32 %v1118, %v1247
      %v1266 = vadd.f32 %v1119, %v1250
      %v1267 = vadd.f32 %v1120, %v1255
      %v1268 = vadd.f32 %v1121, %v1258
      %1269 = vst [vmem:[#allocation2] sm:$0xff] %v1261
      %1270 = vst [vmem:[#allocation2 + $0x8] sm:$0xff] %v1262
      %1271 = vst [vmem:[#allocation2 + $0x10] sm:$0xff] %v1263
      %1272 = vst [vmem:[#allocation2 + $0x18] sm:$0xff] %v1264
      %1273 = vst [vmem:[#allocation2 + $0x20] sm:$0xff] %v1265
      %1274 = vst [vmem:[#allocation2 + $0x28] sm:$0xff] %v1266
      %1275 = vst [vmem:[#allocation2 + $0x30] sm:$0xff] %v1267
      %1276 = vst [vmem:[#allocation2 + $0x38] sm:$0xff] %v1268
      %v1277 = vld [vmem:[#allocation2] sm:$0xff]
      %v1278 = vld [vmem:[#allocation2 + $0x8] sm:$0xff]
      %v1279 = vld [vmem:[#allocation2 + $0x10] sm:$0xff]
      %v1280 = vld [vmem:[#allocation2 + $0x18] sm:$0xff]
      %v1281 = vld [vmem:[#allocation2 + $0x20] sm:$0xff]
      %v1282 = vld [vmem:[#allocation2 + $0x28] sm:$0xff]
      %v1283 = vld [vmem:[#allocation2 + $0x30] sm:$0xff]
      %v1284 = vld [vmem:[#allocation2 + $0x38] sm:$0xff]
      %s1285 = scalar_lea.vmem %s248, 448
      %v1286 = vld [vmem:[%s1285] sm:$0xf]
      %v1287 = vld [vmem:[%s1285 + $0x4] sm:$0xf]
      %v1288 = vld [vmem:[%s1285 + $0x8] sm:$0xf]
      %v1289 = vld [vmem:[%s1285 + $0xc] sm:$0xf]
      %v1290 = vld [vmem:[%s1285 + $0x10] sm:$0xf]
      %v1291 = vld [vmem:[%s1285 + $0x14] sm:$0xf]
      %v1292 = vld [vmem:[%s1285 + $0x18] sm:$0xf]
      %v1293 = vld [vmem:[%s1285 + $0x1c] sm:$0xf]
      %v1294 = vld [vmem:[%s1285 + $0x20] sm:$0xf]
      %v1295 = vld [vmem:[%s1285 + $0x24] sm:$0xf]
      %v1296 = vld [vmem:[%s1285 + $0x28] sm:$0xf]
      %v1297 = vld [vmem:[%s1285 + $0x2c] sm:$0xf]
      %v1298 = vld [vmem:[%s1285 + $0x30] sm:$0xf]
      %v1299 = vld [vmem:[%s1285 + $0x34] sm:$0xf]
      %v1300 = vld [vmem:[%s1285 + $0x38] sm:$0xf]
      %v1301 = vld [vmem:[%s1285 + $0x3c] sm:$0xf]
      %v1302 = vunpack.c.l.b16 %v943
      %v1303 = vpack.c.b16 %v1302, %v1139
      %v1321 = vunpack.c.l.b16 %v1286
      %v1322 = vunpack.c.l.b16 %v1287
      %v1323 = vunpack.c.l.b16 %v1288
      %v1324 = vunpack.c.l.b16 %v1289
      %v1325 = vunpack.c.l.b16 %v1290
      %v1326 = vunpack.c.l.b16 %v1291
      %v1327 = vunpack.c.l.b16 %v1292
      %v1328 = vunpack.c.l.b16 %v1293
      %v1329 = vunpack.c.l.b16 %v1294
      %v1330 = vunpack.c.l.b16 %v1295
      %v1331 = vunpack.c.l.b16 %v1296
      %v1332 = vunpack.c.l.b16 %v1297
      %v1333 = vunpack.c.l.b16 %v1298
      %v1334 = vunpack.c.l.b16 %v1299
      %v1335 = vunpack.c.l.b16 %v1300
      %v1336 = vunpack.c.l.b16 %v1301
      %v1337 = vpack.c.b16 %v1322, %v1321
      %v1338 = vpack.c.b16 %v1324, %v1323
      %v1339 = vpack.c.b16 %v1326, %v1325
      %v1340 = vpack.c.b16 %v1328, %v1327
      %v1341 = vpack.c.b16 %v1330, %v1329
      %v1342 = vpack.c.b16 %v1332, %v1331
      %v1343 = vpack.c.b16 %v1334, %v1333
      %v1344 = vpack.c.b16 %v1336, %v1335
      %1353 = vmatprep.subr.bf16.mxu0 0
      %1354 = vmatpush1.bf16.msra.mxu0 %v1344
      %1355 = vmatprep.subr.bf16.mxu0 0
      %1356 = vmatpush1.bf16.msra.mxu0 %v1343
      %1357 = vmatprep.subr.bf16.mxu0 0
      %1358 = vmatpush1.bf16.msra.mxu0 %v1342
      %1359 = vmatprep.subr.bf16.mxu0 0
      %1360 = vmatpush1.bf16.msra.mxu0 %v1341
      %1361 = vmatprep.subr.bf16.mxu0 0
      %1362 = vmatpush1.bf16.msra.mxu0 %v1340
      %1363 = vmatprep.subr.bf16.mxu0 0
      %1364 = vmatpush1.bf16.msra.mxu0 %v1339
      %1365 = vmatprep.subr.bf16.mxu0 0
      %1366 = vmatpush1.bf16.msra.mxu0 %v1338
      %1367 = vmatprep.subr.bf16.mxu0 0
      %1368 = vmatpush1.bf16.msra.mxu0 %v1337
      %1369 = vmatprep.subr.bf16.mxu0 0
      %1370 = vmatpush2.bf16.msra.mxu0 0
      %1371 = vmatprep.subr.bf16.mxu0 0
      %1372 = vmatpush2.bf16.msra.mxu0 0
      %1373 = vmatprep.subr.bf16.mxu0 0
      %1374 = vmatpush2.bf16.msra.mxu0 0
      %1375 = vmatprep.subr.bf16.mxu0 0
      %1376 = vmatpush2.bf16.msra.mxu0 0
      %1377 = vmatprep.subr.bf16.mxu0 0
      %1378 = vmatpush2.bf16.msra.mxu0 0
      %1379 = vmatprep.subr.bf16.mxu0 0
      %1380 = vmatpush2.bf16.msra.mxu0 0
      %1381 = vmatprep.subr.bf16.mxu0 0
      %1382 = vmatpush2.bf16.msra.mxu0 0
      %1383 = vmatprep.subr.bf16.mxu0 0
      %1384 = vmatpush2.bf16.msra.mxu0 0
      %1385 = vmatprep.mubr.bf16.mxu0 0
      %1386 = vmatmul.mubr.bf16.gmra.mxu0 %v978
      %v1387 = vpop.f32.mrf.mxu0
      %v1388 = vadd.f32 0.0, %v1387
      %v1389 = vpop.f32.mrf.mxu0
      %v1390 = vpop.f32.mrf.mxu0
      %v1391 = vadd.f32 0.0, %v1390
      %v1392 = vpop.f32.mrf.mxu0
      %1393 = vmatprep.mubr.bf16.mxu0 0
      %1394 = vmatmul.mubr.bf16.gmra.mxu0 %v979
      %v1395 = vpop.f32.mrf.mxu0
      %v1396 = vadd.f32 0.0, %v1395
      %v1397 = vpop.f32.mrf.mxu0
      %v1398 = vpop.f32.mrf.mxu0
      %v1399 = vadd.f32 0.0, %v1398
      %v1400 = vpop.f32.mrf.mxu0
      %1401 = vmatprep.mubr.bf16.mxu0 0
      %1402 = vmatmul.mubr.bf16.gmra.mxu0 %v980
      %v1403 = vpop.f32.mrf.mxu0
      %v1404 = vadd.f32 0.0, %v1403
      %v1405 = vpop.f32.mrf.mxu0
      %v1406 = vpop.f32.mrf.mxu0
      %v1407 = vadd.f32 0.0, %v1406
      %v1408 = vpop.f32.mrf.mxu0
      %1409 = vmatprep.mubr.bf16.mxu0 0
      %1410 = vmatmul.mubr.bf16.gmra.mxu0 %v1303
      %v1411 = vpop.f32.mrf.mxu0
      %v1412 = vadd.f32 0.0, %v1411
      %v1413 = vpop.f32.mrf.mxu0
      %v1414 = vpop.f32.mrf.mxu0
      %v1415 = vadd.f32 0.0, %v1414
      %v1416 = vpop.f32.mrf.mxu0
      %1417 = vdwg.mxu0
      %v1418 = vadd.f32 %v1277, %v1388
      %v1419 = vadd.f32 %v1278, %v1391
      %v1420 = vadd.f32 %v1279, %v1396
      %v1421 = vadd.f32 %v1280, %v1399
      %v1422 = vadd.f32 %v1281, %v1404
      %v1423 = vadd.f32 %v1282, %v1407
      %v1424 = vadd.f32 %v1283, %v1412
      %v1425 = vadd.f32 %v1284, %v1415
      %1426 = vst [vmem:[#allocation2] sm:$0xff] %v1418
      %1427 = vst [vmem:[#allocation2 + $0x8] sm:$0xff] %v1419
      %1428 = vst [vmem:[#allocation2 + $0x10] sm:$0xff] %v1420
      %1429 = vst [vmem:[#allocation2 + $0x18] sm:$0xff] %v1421
      %1430 = vst [vmem:[#allocation2 + $0x20] sm:$0xff] %v1422
      %1431 = vst [vmem:[#allocation2 + $0x28] sm:$0xff] %v1423
      %1432 = vst [vmem:[#allocation2 + $0x30] sm:$0xff] %v1424
      %1433 = vst [vmem:[#allocation2 + $0x38] sm:$0xff] %v1425
      %v1434 = vld [vmem:[%s244] sm:$0xe]
      %v1435 = vld [vmem:[%s244 + $0x4] sm:$0x1]
      %v1436 = vld [vmem:[%s244 + $0x8] sm:$0xe]
      %v1437 = vld [vmem:[%s244 + $0xc] sm:$0x1]
      %v1438 = vld [vmem:[%s244 + $0x10] sm:$0xe]
      %v1439 = vld [vmem:[%s244 + $0x14] sm:$0x1]
      %v1440 = vld [vmem:[%s244 + $0x18] sm:$0xe]
      %v1441 = vld [vmem:[%s244 + $0x1c] sm:$0x1]
      %v1442 = vld [vmem:[%s244 + $0x20] sm:$0xe]
      %v1443 = vld [vmem:[%s244 + $0x24] sm:$0x1]
      %v1444 = vld [vmem:[%s244 + $0x28] sm:$0xe]
      %v1445 = vld [vmem:[%s244 + $0x2c] sm:$0x1]
      %v1446 = vld [vmem:[%s244 + $0x30] sm:$0xe]
      %v1447 = vld [vmem:[%s244 + $0x34] sm:$0x1]
      %v1448 = vld [vmem:[%s244 + $0x38] sm:$0xe]
      %v1449 = vld [vmem:[%s244 + $0x3c] sm:$0x1]
      %v1450 = vld [vmem:[%s244 + $0x40] sm:$0xe]
      %v1451 = vld [vmem:[%s244 + $0x44] sm:$0x1]
      %v1452 = vld [vmem:[%s244 + $0x48] sm:$0xe]
      %v1453 = vld [vmem:[%s244 + $0x4c] sm:$0x1]
      %vm1474 = vcmask 1042432
      %vm1475 = vcmask 1046532
      %vm1476 = vmor %vm1474, %vm1475
      %v1477 = vrot.slane %v1434, 5
      %v1478 = vrot.slane %v1477, 4
      %v1479 = vrot.slane %v1435, 5
      %v1480 = vsel %vm1476, %v1478, %v1479
      %v1481 = vrot.slane %v1436, 5
      %v1482 = vrot.slane %v1481, 4
      %v1483 = vrot.slane %v1437, 5
      %v1484 = vsel %vm1476, %v1482, %v1483
      %v1485 = vrot.slane %v1438, 5
      %v1486 = vrot.slane %v1485, 4
      %v1487 = vrot.slane %v1439, 5
      %v1488 = vsel %vm1476, %v1486, %v1487
      %v1489 = vrot.slane %v1440, 5
      %v1490 = vrot.slane %v1489, 4
      %v1491 = vrot.slane %v1441, 5
      %v1492 = vsel %vm1476, %v1490, %v1491
      %v1493 = vrot.slane %v1442, 5
      %v1494 = vrot.slane %v1493, 4
      %v1495 = vrot.slane %v1443, 5
      %v1496 = vsel %vm1476, %v1494, %v1495
      %v1497 = vrot.slane %v1444, 5
      %v1498 = vrot.slane %v1497, 4
      %v1499 = vrot.slane %v1445, 5
      %v1500 = vsel %vm1476, %v1498, %v1499
      %v1501 = vrot.slane %v1446, 5
      %v1502 = vrot.slane %v1501, 4
      %v1503 = vrot.slane %v1447, 5
      %v1504 = vsel %vm1476, %v1502, %v1503
      %v1505 = vrot.slane %v1448, 5
      %v1506 = vrot.slane %v1505, 4
      %v1507 = vrot.slane %v1449, 5
      %v1508 = vsel %vm1476, %v1506, %v1507
      %v1509 = vrot.slane %v1450, 5
      %v1510 = vrot.slane %v1509, 4
      %v1511 = vrot.slane %v1451, 5
      %v1512 = vsel %vm1476, %v1510, %v1511
      %v1513 = vrot.slane %v1452, 5
      %v1514 = vrot.slane %v1513, 4
      %v1515 = vrot.slane %v1453, 5
      %v1516 = vsel %vm1476, %v1514, %v1515
      %v1517 = vld [vmem:[#allocation2] sm:$0xff]
      %v1518 = vld [vmem:[#allocation2 + $0x8] sm:$0xff]
      %v1519 = vld [vmem:[#allocation2 + $0x10] sm:$0xff]
      %v1520 = vld [vmem:[#allocation2 + $0x18] sm:$0xff]
      %v1521 = vld [vmem:[#allocation2 + $0x20] sm:$0xff]
      %v1522 = vld [vmem:[#allocation2 + $0x28] sm:$0xff]
      %v1523 = vld [vmem:[#allocation2 + $0x30] sm:$0xff]
      %v1524 = vld [vmem:[#allocation2 + $0x38] sm:$0xff]
      %s1525 = scalar_lea.vmem %s248, 128
      %v1526 = vld [vmem:[%s1525] sm:$0xf]
      %v1527 = vld [vmem:[%s1525 + $0x4] sm:$0xf]
      %v1528 = vld [vmem:[%s1525 + $0x8] sm:$0xf]
      %v1529 = vld [vmem:[%s1525 + $0xc] sm:$0xf]
      %v1530 = vld [vmem:[%s1525 + $0x10] sm:$0xf]
      %v1531 = vld [vmem:[%s1525 + $0x14] sm:$0xf]
      %v1532 = vld [vmem:[%s1525 + $0x18] sm:$0xf]
      %v1533 = vld [vmem:[%s1525 + $0x1c] sm:$0xf]
      %v1534 = vld [vmem:[%s1525 + $0x20] sm:$0xf]
      %v1535 = vld [vmem:[%s1525 + $0x24] sm:$0xf]
      %v1536 = vld [vmem:[%s1525 + $0x28] sm:$0xf]
      %v1537 = vld [vmem:[%s1525 + $0x2c] sm:$0xf]
      %v1538 = vld [vmem:[%s1525 + $0x30] sm:$0xf]
      %v1539 = vld [vmem:[%s1525 + $0x34] sm:$0xf]
      %v1540 = vld [vmem:[%s1525 + $0x38] sm:$0xf]
      %v1541 = vld [vmem:[%s1525 + $0x3c] sm:$0xf]
      %v1542 = vunpack.c.l.b16 %v1480
      %v1543 = vunpack.c.l.b16 %v1484
      %v1544 = vunpack.c.l.b16 %v1488
      %v1545 = vunpack.c.l.b16 %v1492
      %v1546 = vunpack.c.l.b16 %v1496
      %v1547 = vunpack.c.l.b16 %v1500
      %v1548 = vunpack.c.l.b16 %v1504
      %v1549 = vunpack.c.l.b16 %v1508
      %v1550 = vpack.c.b16 %v1543, %v1542
      %v1551 = vpack.c.b16 %v1545, %v1544
      %v1552 = vpack.c.b16 %v1547, %v1546
      %v1553 = vpack.c.b16 %v1549, %v1548
      %v1574 = vunpack.c.l.b16 %v1526
      %v1575 = vunpack.c.l.b16 %v1527
      %v1576 = vunpack.c.l.b16 %v1528
      %v1577 = vunpack.c.l.b16 %v1529
      %v1578 = vunpack.c.l.b16 %v1530
      %v1579 = vunpack.c.l.b16 %v1531
      %v1580 = vunpack.c.l.b16 %v1532
      %v1581 = vunpack.c.l.b16 %v1533
      %v1582 = vunpack.c.l.b16 %v1534
      %v1583 = vunpack.c.l.b16 %v1535
      %v1584 = vunpack.c.l.b16 %v1536
      %v1585 = vunpack.c.l.b16 %v1537
      %v1586 = vunpack.c.l.b16 %v1538
      %v1587 = vunpack.c.l.b16 %v1539
      %v1588 = vunpack.c.l.b16 %v1540
      %v1589 = vunpack.c.l.b16 %v1541
      %v1590 = vpack.c.b16 %v1575, %v1574
      %v1591 = vpack.c.b16 %v1577, %v1576
      %v1592 = vpack.c.b16 %v1579, %v1578
      %v1593 = vpack.c.b16 %v1581, %v1580
      %v1594 = vpack.c.b16 %v1583, %v1582
      %v1595 = vpack.c.b16 %v1585, %v1584
      %v1596 = vpack.c.b16 %v1587, %v1586
      %v1597 = vpack.c.b16 %v1589, %v1588
      %1606 = vmatprep.subr.bf16.mxu0 0
      %1607 = vmatpush1.bf16.msra.mxu0 %v1597
      %1608 = vmatprep.subr.bf16.mxu0 0
      %1609 = vmatpush1.bf16.msra.mxu0 %v1596
      %1610 = vmatprep.subr.bf16.mxu0 0
      %1611 = vmatpush1.bf16.msra.mxu0 %v1595
      %1612 = vmatprep.subr.bf16.mxu0 0
      %1613 = vmatpush1.bf16.msra.mxu0 %v1594
      %1614 = vmatprep.subr.bf16.mxu0 0
      %1615 = vmatpush1.bf16.msra.mxu0 %v1593
      %1616 = vmatprep.subr.bf16.mxu0 0
      %1617 = vmatpush1.bf16.msra.mxu0 %v1592
      %1618 = vmatprep.subr.bf16.mxu0 0
      %1619 = vmatpush1.bf16.msra.mxu0 %v1591
      %1620 = vmatprep.subr.bf16.mxu0 0
      %1621 = vmatpush1.bf16.msra.mxu0 %v1590
      %1622 = vmatprep.subr.bf16.mxu0 0
      %1623 = vmatpush2.bf16.msra.mxu0 0
      %1624 = vmatprep.subr.bf16.mxu0 0
      %1625 = vmatpush2.bf16.msra.mxu0 0
      %1626 = vmatprep.subr.bf16.mxu0 0
      %1627 = vmatpush2.bf16.msra.mxu0 0
      %1628 = vmatprep.subr.bf16.mxu0 0
      %1629 = vmatpush2.bf16.msra.mxu0 0
      %1630 = vmatprep.subr.bf16.mxu0 0
      %1631 = vmatpush2.bf16.msra.mxu0 0
      %1632 = vmatprep.subr.bf16.mxu0 0
      %1633 = vmatpush2.bf16.msra.mxu0 0
      %1634 = vmatprep.subr.bf16.mxu0 0
      %1635 = vmatpush2.bf16.msra.mxu0 0
      %1636 = vmatprep.subr.bf16.mxu0 0
      %1637 = vmatpush2.bf16.msra.mxu0 0
      %1638 = vmatprep.mubr.bf16.mxu0 0
      %1639 = vmatmul.mubr.bf16.gmra.mxu0 %v1550
      %v1640 = vpop.f32.mrf.mxu0
      %v1641 = vadd.f32 0.0, %v1640
      %v1642 = vpop.f32.mrf.mxu0
      %v1643 = vpop.f32.mrf.mxu0
      %v1644 = vadd.f32 0.0, %v1643
      %v1645 = vpop.f32.mrf.mxu0
      %1646 = vmatprep.mubr.bf16.mxu0 0
      %1647 = vmatmul.mubr.bf16.gmra.mxu0 %v1551
      %v1648 = vpop.f32.mrf.mxu0
      %v1649 = vadd.f32 0.0, %v1648
      %v1650 = vpop.f32.mrf.mxu0
      %v1651 = vpop.f32.mrf.mxu0
      %v1652 = vadd.f32 0.0, %v1651
      %v1653 = vpop.f32.mrf.mxu0
      %1654 = vmatprep.mubr.bf16.mxu0 0
      %1655 = vmatmul.mubr.bf16.gmra.mxu0 %v1552
      %v1656 = vpop.f32.mrf.mxu0
      %v1657 = vadd.f32 0.0, %v1656
      %v1658 = vpop.f32.mrf.mxu0
      %v1659 = vpop.f32.mrf.mxu0
      %v1660 = vadd.f32 0.0, %v1659
      %v1661 = vpop.f32.mrf.mxu0
      %1662 = vmatprep.mubr.bf16.mxu0 0
      %1663 = vmatmul.mubr.bf16.gmra.mxu0 %v1553
      %v1664 = vpop.f32.mrf.mxu0
      %v1665 = vadd.f32 0.0, %v1664
      %v1666 = vpop.f32.mrf.mxu0
      %v1667 = vpop.f32.mrf.mxu0
      %v1668 = vadd.f32 0.0, %v1667
      %v1669 = vpop.f32.mrf.mxu0
      %1670 = vdwg.mxu0
      %v1671 = vadd.f32 %v1517, %v1641
      %v1672 = vadd.f32 %v1518, %v1644
      %v1673 = vadd.f32 %v1519, %v1649
      %v1674 = vadd.f32 %v1520, %v1652
      %v1675 = vadd.f32 %v1521, %v1657
      %v1676 = vadd.f32 %v1522, %v1660
      %v1677 = vadd.f32 %v1523, %v1665
      %v1678 = vadd.f32 %v1524, %v1668
      %1679 = vst [vmem:[#allocation2] sm:$0xff] %v1671
      %1680 = vst [vmem:[#allocation2 + $0x8] sm:$0xff] %v1672
      %1681 = vst [vmem:[#allocation2 + $0x10] sm:$0xff] %v1673
      %1682 = vst [vmem:[#allocation2 + $0x18] sm:$0xff] %v1674
      %1683 = vst [vmem:[#allocation2 + $0x20] sm:$0xff] %v1675
      %1684 = vst [vmem:[#allocation2 + $0x28] sm:$0xff] %v1676
      %1685 = vst [vmem:[#allocation2 + $0x30] sm:$0xff] %v1677
      %1686 = vst [vmem:[#allocation2 + $0x38] sm:$0xff] %v1678
      %v1687 = vld [vmem:[#allocation2] sm:$0xff]
      %v1688 = vld [vmem:[#allocation2 + $0x8] sm:$0xff]
      %v1689 = vld [vmem:[#allocation2 + $0x10] sm:$0xff]
      %v1690 = vld [vmem:[#allocation2 + $0x18] sm:$0xff]
      %v1691 = vld [vmem:[#allocation2 + $0x20] sm:$0xff]
      %v1692 = vld [vmem:[#allocation2 + $0x28] sm:$0xff]
      %v1693 = vld [vmem:[#allocation2 + $0x30] sm:$0xff]
      %v1694 = vld [vmem:[#allocation2 + $0x38] sm:$0xff]
      %s1695 = scalar_lea.vmem %s248, 320
      %v1696 = vld [vmem:[%s1695] sm:$0xf]
      %v1697 = vld [vmem:[%s1695 + $0x4] sm:$0xf]
      %v1698 = vld [vmem:[%s1695 + $0x8] sm:$0xf]
      %v1699 = vld [vmem:[%s1695 + $0xc] sm:$0xf]
      %v1700 = vld [vmem:[%s1695 + $0x10] sm:$0xf]
      %v1701 = vld [vmem:[%s1695 + $0x14] sm:$0xf]
      %v1702 = vld [vmem:[%s1695 + $0x18] sm:$0xf]
      %v1703 = vld [vmem:[%s1695 + $0x1c] sm:$0xf]
      %v1704 = vld [vmem:[%s1695 + $0x20] sm:$0xf]
      %v1705 = vld [vmem:[%s1695 + $0x24] sm:$0xf]
      %v1706 = vld [vmem:[%s1695 + $0x28] sm:$0xf]
      %v1707 = vld [vmem:[%s1695 + $0x2c] sm:$0xf]
      %v1708 = vld [vmem:[%s1695 + $0x30] sm:$0xf]
      %v1709 = vld [vmem:[%s1695 + $0x34] sm:$0xf]
      %v1710 = vld [vmem:[%s1695 + $0x38] sm:$0xf]
      %v1711 = vld [vmem:[%s1695 + $0x3c] sm:$0xf]
      %v1712 = vunpack.c.l.b16 %v1512
      %v1713 = vpack.c.b16 %v1544, %v1543
      %v1714 = vpack.c.b16 %v1546, %v1545
      %v1715 = vpack.c.b16 %v1548, %v1547
      %v1716 = vpack.c.b16 %v1712, %v1549
      %v1737 = vunpack.c.l.b16 %v1696
      %v1738 = vunpack.c.l.b16 %v1697
      %v1739 = vunpack.c.l.b16 %v1698
      %v1740 = vunpack.c.l.b16 %v1699
      %v1741 = vunpack.c.l.b16 %v1700
      %v1742 = vunpack.c.l.b16 %v1701
      %v1743 = vunpack.c.l.b16 %v1702
      %v1744 = vunpack.c.l.b16 %v1703
      %v1745 = vunpack.c.l.b16 %v1704
      %v1746 = vunpack.c.l.b16 %v1705
      %v1747 = vunpack.c.l.b16 %v1706
      %v1748 = vunpack.c.l.b16 %v1707
      %v1749 = vunpack.c.l.b16 %v1708
      %v1750 = vunpack.c.l.b16 %v1709
      %v1751 = vunpack.c.l.b16 %v1710
      %v1752 = vunpack.c.l.b16 %v1711
      %v1753 = vpack.c.b16 %v1738, %v1737
      %v1754 = vpack.c.b16 %v1740, %v1739
      %v1755 = vpack.c.b16 %v1742, %v1741
      %v1756 = vpack.c.b16 %v1744, %v1743
      %v1757 = vpack.c.b16 %v1746, %v1745
      %v1758 = vpack.c.b16 %v1748, %v1747
      %v1759 = vpack.c.b16 %v1750, %v1749
      %v1760 = vpack.c.b16 %v1752, %v1751
      %1769 = vmatprep.subr.bf16.mxu0 0
      %1770 = vmatpush1.bf16.msra.mxu0 %v1760
      %1771 = vmatprep.subr.bf16.mxu0 0
      %1772 = vmatpush1.bf16.msra.mxu0 %v1759
      %1773 = vmatprep.subr.bf16.mxu0 0
      %1774 = vmatpush1.bf16.msra.mxu0 %v1758
      %1775 = vmatprep.subr.bf16.mxu0 0
      %1776 = vmatpush1.bf16.msra.mxu0 %v1757
      %1777 = vmatprep.subr.bf16.mxu0 0
      %1778 = vmatpush1.bf16.msra.mxu0 %v1756
      %1779 = vmatprep.subr.bf16.mxu0 0
      %1780 = vmatpush1.bf16.msra.mxu0 %v1755
      %1781 = vmatprep.subr.bf16.mxu0 0
      %1782 = vmatpush1.bf16.msra.mxu0 %v1754
      %1783 = vmatprep.subr.bf16.mxu0 0
      %1784 = vmatpush1.bf16.msra.mxu0 %v1753
      %1785 = vmatprep.subr.bf16.mxu0 0
      %1786 = vmatpush2.bf16.msra.mxu0 0
      %1787 = vmatprep.subr.bf16.mxu0 0
      %1788 = vmatpush2.bf16.msra.mxu0 0
      %1789 = vmatprep.subr.bf16.mxu0 0
      %1790 = vmatpush2.bf16.msra.mxu0 0
      %1791 = vmatprep.subr.bf16.mxu0 0
      %1792 = vmatpush2.bf16.msra.mxu0 0
      %1793 = vmatprep.subr.bf16.mxu0 0
      %1794 = vmatpush2.bf16.msra.mxu0 0
      %1795 = vmatprep.subr.bf16.mxu0 0
      %1796 = vmatpush2.bf16.msra.mxu0 0
      %1797 = vmatprep.subr.bf16.mxu0 0
      %1798 = vmatpush2.bf16.msra.mxu0 0
      %1799 = vmatprep.subr.bf16.mxu0 0
      %1800 = vmatpush2.bf16.msra.mxu0 0
      %1801 = vmatprep.mubr.bf16.mxu0 0
      %1802 = vmatmul.mubr.bf16.gmra.mxu0 %v1713
      %v1803 = vpop.f32.mrf.mxu0
      %v1804 = vadd.f32 0.0, %v1803
      %v1805 = vpop.f32.mrf.mxu0
      %v1806 = vpop.f32.mrf.mxu0
      %v1807 = vadd.f32 0.0, %v1806
      %v1808 = vpop.f32.mrf.mxu0
      %1809 = vmatprep.mubr.bf16.mxu0 0
      %1810 = vmatmul.mubr.bf16.gmra.mxu0 %v1714
      %v1811 = vpop.f32.mrf.mxu0
      %v1812 = vadd.f32 0.0, %v1811
      %v1813 = vpop.f32.mrf.mxu0
      %v1814 = vpop.f32.mrf.mxu0
      %v1815 = vadd.f32 0.0, %v1814
      %v1816 = vpop.f32.mrf.mxu0
      %1817 = vmatprep.mubr.bf16.mxu0 0
      %1818 = vmatmul.mubr.bf16.gmra.mxu0 %v1715
      %v1819 = vpop.f32.mrf.mxu0
      %v1820 = vadd.f32 0.0, %v1819
      %v1821 = vpop.f32.mrf.mxu0
      %v1822 = vpop.f32.mrf.mxu0
      %v1823 = vadd.f32 0.0, %v1822
      %v1824 = vpop.f32.mrf.mxu0
      %1825 = vmatprep.mubr.bf16.mxu0 0
      %1826 = vmatmul.mubr.bf16.gmra.mxu0 %v1716
      %v1827 = vpop.f32.mrf.mxu0
      %v1828 = vadd.f32 0.0, %v1827
      %v1829 = vpop.f32.mrf.mxu0
      %v1830 = vpop.f32.mrf.mxu0
      %v1831 = vadd.f32 0.0, %v1830
      %v1832 = vpop.f32.mrf.mxu0
      %1833 = vdwg.mxu0
      %v1834 = vadd.f32 %v1687, %v1804
      %v1835 = vadd.f32 %v1688, %v1807
      %v1836 = vadd.f32 %v1689, %v1812
      %v1837 = vadd.f32 %v1690, %v1815
      %v1838 = vadd.f32 %v1691, %v1820
      %v1839 = vadd.f32 %v1692, %v1823
      %v1840 = vadd.f32 %v1693, %v1828
      %v1841 = vadd.f32 %v1694, %v1831
      %1842 = vst [vmem:[#allocation2] sm:$0xff] %v1834
      %1843 = vst [vmem:[#allocation2 + $0x8] sm:$0xff] %v1835
      %1844 = vst [vmem:[#allocation2 + $0x10] sm:$0xff] %v1836
      %1845 = vst [vmem:[#allocation2 + $0x18] sm:$0xff] %v1837
      %1846 = vst [vmem:[#allocation2 + $0x20] sm:$0xff] %v1838
      %1847 = vst [vmem:[#allocation2 + $0x28] sm:$0xff] %v1839
      %1848 = vst [vmem:[#allocation2 + $0x30] sm:$0xff] %v1840
      %1849 = vst [vmem:[#allocation2 + $0x38] sm:$0xff] %v1841
      %v1850 = vld [vmem:[#allocation2] sm:$0xff]
      %v1851 = vld [vmem:[#allocation2 + $0x8] sm:$0xff]
      %v1852 = vld [vmem:[#allocation2 + $0x10] sm:$0xff]
      %v1853 = vld [vmem:[#allocation2 + $0x18] sm:$0xff]
      %v1854 = vld [vmem:[#allocation2 + $0x20] sm:$0xff]
      %v1855 = vld [vmem:[#allocation2 + $0x28] sm:$0xff]
      %v1856 = vld [vmem:[#allocation2 + $0x30] sm:$0xff]
      %v1857 = vld [vmem:[#allocation2 + $0x38] sm:$0xff]
      %s1858 = scalar_lea.vmem %s248, 512
      %v1859 = vld [vmem:[%s1858] sm:$0xf]
      %v1860 = vld [vmem:[%s1858 + $0x4] sm:$0xf]
      %v1861 = vld [vmem:[%s1858 + $0x8] sm:$0xf]
      %v1862 = vld [vmem:[%s1858 + $0xc] sm:$0xf]
      %v1863 = vld [vmem:[%s1858 + $0x10] sm:$0xf]
      %v1864 = vld [vmem:[%s1858 + $0x14] sm:$0xf]
      %v1865 = vld [vmem:[%s1858 + $0x18] sm:$0xf]
      %v1866 = vld [vmem:[%s1858 + $0x1c] sm:$0xf]
      %v1867 = vld [vmem:[%s1858 + $0x20] sm:$0xf]
      %v1868 = vld [vmem:[%s1858 + $0x24] sm:$0xf]
      %v1869 = vld [vmem:[%s1858 + $0x28] sm:$0xf]
      %v1870 = vld [vmem:[%s1858 + $0x2c] sm:$0xf]
      %v1871 = vld [vmem:[%s1858 + $0x30] sm:$0xf]
      %v1872 = vld [vmem:[%s1858 + $0x34] sm:$0xf]
      %v1873 = vld [vmem:[%s1858 + $0x38] sm:$0xf]
      %v1874 = vld [vmem:[%s1858 + $0x3c] sm:$0xf]
      %v1875 = vunpack.c.l.b16 %v1516
      %v1876 = vpack.c.b16 %v1875, %v1712
      %v1894 = vunpack.c.l.b16 %v1859
      %v1895 = vunpack.c.l.b16 %v1860
      %v1896 = vunpack.c.l.b16 %v1861
      %v1897 = vunpack.c.l.b16 %v1862
      %v1898 = vunpack.c.l.b16 %v1863
      %v1899 = vunpack.c.l.b16 %v1864
      %v1900 = vunpack.c.l.b16 %v1865
      %v1901 = vunpack.c.l.b16 %v1866
      %v1902 = vunpack.c.l.b16 %v1867
      %v1903 = vunpack.c.l.b16 %v1868
      %v1904 = vunpack.c.l.b16 %v1869
      %v1905 = vunpack.c.l.b16 %v1870
      %v1906 = vunpack.c.l.b16 %v1871
      %v1907 = vunpack.c.l.b16 %v1872
      %v1908 = vunpack.c.l.b16 %v1873
      %v1909 = vunpack.c.l.b16 %v1874
      %v1910 = vpack.c.b16 %v1895, %v1894
      %v1911 = vpack.c.b16 %v1897, %v1896
      %v1912 = vpack.c.b16 %v1899, %v1898
      %v1913 = vpack.c.b16 %v1901, %v1900
      %v1914 = vpack.c.b16 %v1903, %v1902
      %v1915 = vpack.c.b16 %v1905, %v1904
      %v1916 = vpack.c.b16 %v1907, %v1906
      %v1917 = vpack.c.b16 %v1909, %v1908
      %1926 = vmatprep.subr.bf16.mxu0 0
      %1927 = vmatpush1.bf16.msra.mxu0 %v1917
      %1928 = vmatprep.subr.bf16.mxu0 0
      %1929 = vmatpush1.bf16.msra.mxu0 %v1916
      %1930 = vmatprep.subr.bf16.mxu0 0
      %1931 = vmatpush1.bf16.msra.mxu0 %v1915
      %1932 = vmatprep.subr.bf16.mxu0 0
      %1933 = vmatpush1.bf16.msra.mxu0 %v1914
      %1934 = vmatprep.subr.bf16.mxu0 0
      %1935 = vmatpush1.bf16.msra.mxu0 %v1913
      %1936 = vmatprep.subr.bf16.mxu0 0
      %1937 = vmatpush1.bf16.msra.mxu0 %v1912
      %1938 = vmatprep.subr.bf16.mxu0 0
      %1939 = vmatpush1.bf16.msra.mxu0 %v1911
      %1940 = vmatprep.subr.bf16.mxu0 0
      %1941 = vmatpush1.bf16.msra.mxu0 %v1910
      %1942 = vmatprep.subr.bf16.mxu0 0
      %1943 = vmatpush2.bf16.msra.mxu0 0
      %1944 = vmatprep.subr.bf16.mxu0 0
      %1945 = vmatpush2.bf16.msra.mxu0 0
      %1946 = vmatprep.subr.bf16.mxu0 0
      %1947 = vmatpush2.bf16.msra.mxu0 0
      %1948 = vmatprep.subr.bf16.mxu0 0
      %1949 = vmatpush2.bf16.msra.mxu0 0
      %1950 = vmatprep.subr.bf16.mxu0 0
      %1951 = vmatpush2.bf16.msra.mxu0 0
      %1952 = vmatprep.subr.bf16.mxu0 0
      %1953 = vmatpush2.bf16.msra.mxu0 0
      %1954 = vmatprep.subr.bf16.mxu0 0
      %1955 = vmatpush2.bf16.msra.mxu0 0
      %1956 = vmatprep.subr.bf16.mxu0 0
      %1957 = vmatpush2.bf16.msra.mxu0 0
      %1958 = vmatprep.mubr.bf16.mxu0 0
      %1959 = vmatmul.mubr.bf16.gmra.mxu0 %v1551
      %v1960 = vpop.f32.mrf.mxu0
      %v1961 = vadd.f32 0.0, %v1960
      %v1962 = vpop.f32.mrf.mxu0
      %v1963 = vpop.f32.mrf.mxu0
      %v1964 = vadd.f32 0.0, %v1963
      %v1965 = vpop.f32.mrf.mxu0
      %1966 = vmatprep.mubr.bf16.mxu0 0
      %1967 = vmatmul.mubr.bf16.gmra.mxu0 %v1552
      %v1968 = vpop.f32.mrf.mxu0
      %v1969 = vadd.f32 0.0, %v1968
      %v1970 = vpop.f32.mrf.mxu0
      %v1971 = vpop.f32.mrf.mxu0
      %v1972 = vadd.f32 0.0, %v1971
      %v1973 = vpop.f32.mrf.mxu0
      %1974 = vmatprep.mubr.bf16.mxu0 0
      %1975 = vmatmul.mubr.bf16.gmra.mxu0 %v1553
      %v1976 = vpop.f32.mrf.mxu0
      %v1977 = vadd.f32 0.0, %v1976
      %v1978 = vpop.f32.mrf.mxu0
      %v1979 = vpop.f32.mrf.mxu0
      %v1980 = vadd.f32 0.0, %v1979
      %v1981 = vpop.f32.mrf.mxu0
      %1982 = vmatprep.mubr.bf16.mxu0 0
      %1983 = vmatmul.mubr.bf16.gmra.mxu0 %v1876
      %v1984 = vpop.f32.mrf.mxu0
      %v1985 = vadd.f32 0.0, %v1984
      %v1986 = vpop.f32.mrf.mxu0
      %v1987 = vpop.f32.mrf.mxu0
      %v1988 = vadd.f32 0.0, %v1987
      %v1989 = vpop.f32.mrf.mxu0
      %1990 = vdwg.mxu0
      %v1991 = vadd.f32 %v1850, %v1961
      %v1992 = vadd.f32 %v1851, %v1964
      %v1993 = vadd.f32 %v1852, %v1969
      %v1994 = vadd.f32 %v1853, %v1972
      %v1995 = vadd.f32 %v1854, %v1977
      %v1996 = vadd.f32 %v1855, %v1980
      %v1997 = vadd.f32 %v1856, %v1985
      %v1998 = vadd.f32 %v1857, %v1988
      %1999 = vst [vmem:[#allocation2] sm:$0xff] %v1991
      %2000 = vst [vmem:[#allocation2 + $0x8] sm:$0xff] %v1992
      %2001 = vst [vmem:[#allocation2 + $0x10] sm:$0xff] %v1993
      %2002 = vst [vmem:[#allocation2 + $0x18] sm:$0xff] %v1994
      %2003 = vst [vmem:[#allocation2 + $0x20] sm:$0xff] %v1995
      %2004 = vst [vmem:[#allocation2 + $0x28] sm:$0xff] %v1996
      %2005 = vst [vmem:[#allocation2 + $0x30] sm:$0xff] %v1997
      %2006 = vst [vmem:[#allocation2 + $0x38] sm:$0xff] %v1998
      %v2007 = vld [vmem:[#allocation2] sm:$0xff]
      %v2008 = vld [vmem:[#allocation2 + $0x8] sm:$0xff]
      %v2009 = vld [vmem:[#allocation2 + $0x10] sm:$0xff]
      %v2010 = vld [vmem:[#allocation2 + $0x18] sm:$0xff]
      %v2011 = vld [vmem:[#allocation2 + $0x20] sm:$0xff]
      %v2012 = vld [vmem:[#allocation2 + $0x28] sm:$0xff]
      %v2013 = vld [vmem:[#allocation2 + $0x30] sm:$0xff]
      %v2014 = vld [vmem:[#allocation2 + $0x38] sm:$0xff]
      %v2015 = vld [vmem:[%s251] sm:$0x1]
      %v2017 = vlaneseq
      %v2018 = vshrl.u32 %v2017, 7
      %v2019 = vsub.s32 0, %v2018
      %v2020 = vrot.slane %v2015, %v2019
      %v2022 = vmul.f32 %v2007, %v2020
      %v2023 = vmul.f32 %v2008, %v2020
      %v2024 = vmul.f32 %v2009, %v2020
      %v2025 = vmul.f32 %v2010, %v2020
      %v2026 = vmul.f32 %v2011, %v2020
      %v2027 = vmul.f32 %v2012, %v2020
      %v2028 = vmul.f32 %v2013, %v2020
      %v2029 = vmul.f32 %v2014, %v2020
      %v2030 = vld [vmem:[%s254] sm:$0x1]
      %v2032 = vlaneseq
      %v2033 = vshrl.u32 %v2032, 7
      %v2034 = vsub.s32 0, %v2033
      %v2035 = vrot.slane %v2030, %v2034
      %v2037 = vadd.f32 %v2022, %v2035
      %v2038 = vadd.f32 %v2023, %v2035
      %v2039 = vadd.f32 %v2024, %v2035
      %v2040 = vadd.f32 %v2025, %v2035
      %v2041 = vadd.f32 %v2026, %v2035
      %v2042 = vadd.f32 %v2027, %v2035
      %v2043 = vadd.f32 %v2028, %v2035
      %v2044 = vadd.f32 %v2029, %v2035
      %v2045 = vmax.f32 %v2037, 0.0
      %v2046 = vmax.f32 %v2038, 0.0
      %v2047 = vmax.f32 %v2039, 0.0
      %v2048 = vmax.f32 %v2040, 0.0
      %v2049 = vmax.f32 %v2041, 0.0
      %v2050 = vmax.f32 %v2042, 0.0
      %v2051 = vmax.f32 %v2043, 0.0
      %v2052 = vmax.f32 %v2044, 0.0
      %v2053 = vpack.c.bf16 %v2045, %v2045
      %v2054 = vpack.c.bf16 %v2046, %v2046
      %v2055 = vpack.c.bf16 %v2047, %v2047
      %v2056 = vpack.c.bf16 %v2048, %v2048
      %v2057 = vpack.c.bf16 %v2049, %v2049
      %v2058 = vpack.c.bf16 %v2050, %v2050
      %v2059 = vpack.c.bf16 %v2051, %v2051
      %v2060 = vpack.c.bf16 %v2052, %v2052
      %2061 = vst [vmem:[%s262] sm:$0xf] %v2053
      %2062 = vst [vmem:[%s262 + $0x4] sm:$0xf] %v2054
      %2063 = vst [vmem:[%s262 + $0x8] sm:$0xf] %v2055
      %2064 = vst [vmem:[%s262 + $0xc] sm:$0xf] %v2056
      %2065 = vst [vmem:[%s262 + $0x10] sm:$0xf] %v2057
      %2066 = vst [vmem:[%s262 + $0x14] sm:$0xf] %v2058
      %2067 = vst [vmem:[%s262 + $0x18] sm:$0xf] %v2059
      %2068 = vst [vmem:[%s262 + $0x1c] sm:$0xf] %v2060
      %p2069 = scmp.lt.s32.totalorder %s19, 1
      %s2070 = scalar_select %p2069, %s19, 1
      %p2071 = scmp.lt.s32.totalorder %s20, 0
      %s2072 = scalar_select %p2071, %s20, 0
      %s2073 = smul.addr %s2070, 8
      %s2074 = sadd.s32 %s2072, %s2073
      %s2075 = smul.addr %s2074, 4
      %s2076 = scalar_lea.vmem %s4, %s2075
      // Predicated region
      $region37: #{_lambda_.9} parent=35 // pred_check
        %p2077 = pneg %p151
      $region38: #{_lambda_.9} parent=35 // pred_check_branch
        %2079 = sbr.rel (%p2077) target = $region40
      $region39: #{_lambda_.9} parent=35 // pred_region
        _
      $region40: #{_lambda_.9} parent=35 // pred_fallthru
        _
    $region36: #{_lambda_.9} parent=5 // pred_fallthru
      _
    %p2080 = scmp.le.s32.totalorder 2, %s10
    // Predicated region
    $region41: #{_lambda_.9} parent=5 // pred_check
      %p2081 = pneg %p2080
    $region42: #{_lambda_.9} parent=5 // pred_check_branch
      %2083 = sbr.rel (%p2081) target = $region44
    $region43: #{_lambda_.9} parent=5 // pred_region
      %s2084 = ssub.s32 %s10, 2
      // Predicated region
      $region45: #{_lambda_.9} parent=43 // pred_check
        %p2085 = pneg %p157
      $region46: #{_lambda_.9} parent=43 // pred_check_branch
        %2087 = sbr.rel (%p2085) target = $region48
      $region47: #{_lambda_.9} parent=43 // pred_region
        %p2088 = scmp.lt.s32.totalorder %s21, 1
        %s2089 = scalar_select %p2088, %s21, 1
        %p2090 = scmp.lt.s32.totalorder %s22, 0
        %s2091 = scalar_select %p2090, %s22, 0
        %s2092 = smul.addr %s2089, 8
        %s2093 = sadd.s32 %s2091, %s2092
        %s2094 = smul.addr %s2093, 4
        %s2095 = scalar_lea.vmem %s4, %s2094
      $region48: #{_lambda_.9} parent=43 // pred_fallthru
        _
    $region44: #{_lambda_.9} parent=5 // pred_fallthru
      _
  $region6: #{_lambda_.9} parent=0 // loop_footer
    %s14 = sadd.s32 1, %s10
  $region7: #{_lambda_.9} parent=0 // loop_footer_branch
    %9 = sbr.rel target = $region3
  $region8: #{_lambda_.9} parent=0 // loop_exit
    _

// kernel: _lambda_.10
$region0: #{_lambda_.10}
  #allocation0 [shape = 'u32[]', space=smem, size = 0x4, offset = 0x4, fixed_abs, tag = 'smem constant byte address 0x4 - core index']
  #allocation1 [shape = 'u32[144,128]{1,0:T(1,128)}', space=vmem, size = 0x12000, scoped, tag = 'internal scratch']
  #allocation2 [shape = 'f32[64,128]{1,0:T(8,128)}', space=vmem, size = 0x8000, scoped, tag = 'scratch operand']
  %s0 = inlined_call_operand.vmem [shape: bf16[2,10,10,128], index: 0, kind: input, shape index: {}]
  %s1 = inlined_call_operand.hbm [shape: bf16[9,128,128], index: 1, kind: input, shape index: {}]
  %s2 = inlined_call_operand.vmem [shape: f32[1,128], index: 2, kind: input, shape index: {}]
  %s3 = inlined_call_operand.vmem [shape: f32[1,128], index: 3, kind: input, shape index: {}]
  %s4 = inlined_call_operand.vmem [shape: bf16[2,8,8,128], index: 4, kind: output, shape index: {}]
  %s5 = sld [smem:[#allocation0]]
  $region53: #{_lambda_.10} parent=0
    _
  %s7 = ssub.s32 1, %s5
  %s8 = scalar_select 0, %s7, %s5
  $region1: #{_lambda_.10} parent=0
    #allocation3 [shape = 'u8[294912]{0}', space=vmem, size = 0x48000, scoped, tag = 'input window, operand 1, single buffered']
    #allocation4 [shape = 's32[2]{0}', space=sflag, size = 0x8, scoped, tag = 'scoped memory for _lambda_.10']
    %9 = vsyncpa [#allocation4], 0
    loop: start=0, step=1, limit=4
    $region2: #{_lambda_.10} parent=1 // loop_pre_header
      _
    $region3: #{_lambda_.10} parent=1 // loop_header
      %s11 = sphi 0, %s15
      %p12 = scmp.ge.s32.totalorder %s11, 4
      %s18 = sphi 0, %s30
      %s19 = sphi 0, %s26
      %s20 = sphi 0, %s18
      %s21 = sphi 0, %s19
      %s22 = sphi 0, %s20
      %s23 = sphi 0, %s21
      %s33 = sphi 0, %s35
      %s36 = sphi 0, %s33
      %s37 = sphi 0, %s36
      %s53 = sphi 0, %s37
      %s59 = sphi 0, %s61
      %s62 = sphi 0, %s59
      %s63 = sphi 0, %s62
      %s79 = sphi 0, %s63
      %s85 = sphi 0, %s87
      %s88 = sphi 0, %s85
      %s89 = sphi 0, %s88
      %s105 = sphi 0, %s89
      %s111 = sphi 0, %s113
      %s114 = sphi 0, %s111
      %s115 = sphi 0, %s114
      %s131 = sphi 0, %s115
      %s139 = sphi 0, %s141
      %s142 = sphi 0, %s139
      %s143 = sphi 0, %s142
      %s159 = sphi 0, %s143
    $region4: #{_lambda_.10} parent=1 // loop_header_branch
      %14 = sbr.rel (%p12) target = $region8
    $region5: #{_lambda_.10} parent=1 // loop_body
      %s16 = ssub.s32 %s11, 1
      %s17 = ssub.s32 %s11, 2
      %s24 = sadd.s32 1, %s19
      %p25 = scmp.ge.s32.totalorder %s24, 1
      %s26 = scalar_select %p25, 0, %s24
      %s27 = sadd.s32 1, %s18
      %s28 = scalar_select %p25, %s27, %s18
      %p29 = scmp.ge.s32.totalorder %s28, 2
      %s30 = scalar_select %p29, 0, %s28
      %s31 = ssub.s32 %s18, %s30
      %p32 = scmp.eq.s32.totalorder %s31, 0
      %s34 = sadd.s32 %s33, 1
      %s35 = scalar_select %p32, %s33, %s34
      %p38 = pneg %p32
      %p39 = scmp.eq.s32.totalorder %s11, 1
      %p40 = por %p38, %p39
      %p41 = scmp.ne.s32.totalorder %s33, %s36
      %p42 = scmp.eq.s32.totalorder %s11, 0
      %p43 = por %p41, %p42
      %p44 = scmp.ne.s32.totalorder %s33, %s36
      %p45 = scmp.eq.s32.totalorder %s16, 1
      %p46 = por %p44, %p45
      %p47 = scmp.ne.s32.totalorder %s36, %s37
      %p48 = scmp.eq.s32.totalorder %s16, 0
      %p49 = por %p47, %p48
      %p50 = scmp.ne.s32.totalorder %s36, %s37
      %p51 = scmp.eq.s32.totalorder %s17, 1
      %p52 = por %p50, %p51
      %p54 = scmp.ne.s32.totalorder %s37, %s53
      %p55 = scmp.eq.s32.totalorder %s17, 0
      %p56 = por %p54, %p55
      %s57 = ssub.s32 %s19, %s26
      %p58 = scmp.eq.s32.totalorder %s57, 0
      %s60 = sadd.s32 %s59, 1
      %s61 = scalar_select %p58, %s59, %s60
      %p64 = pneg %p58
      %p65 = scmp.eq.s32.totalorder %s11, 1
      %p66 = por %p64, %p65
      %p67 = scmp.ne.s32.totalorder %s59, %s62
      %p68 = scmp.eq.s32.totalorder %s11, 0
      %p69 = por %p67, %p68
      %p70 = scmp.ne.s32.totalorder %s59, %s62
      %p71 = scmp.eq.s32.totalorder %s16, 1
      %p72 = por %p70, %p71
      %p73 = scmp.ne.s32.totalorder %s62, %s63
      %p74 = scmp.eq.s32.totalorder %s16, 0
      %p75 = por %p73, %p74
      %p76 = scmp.ne.s32.totalorder %s62, %s63
      %p77 = scmp.eq.s32.totalorder %s17, 1
      %p78 = por %p76, %p77
      %p80 = scmp.ne.s32.totalorder %s63, %s79
      %p81 = scmp.eq.s32.totalorder %s17, 0
      %p82 = por %p80, %p81
      %s83 = ssub.s32 %s19, %s26
      %p84 = scmp.eq.s32.totalorder %s83, 0
      %s86 = sadd.s32 %s85, 1
      %s87 = scalar_select %p84, %s85, %s86
      %p90 = pneg %p84
      %p91 = scmp.eq.s32.totalorder %s11, 1
      %p92 = por %p90, %p91
      %p93 = scmp.ne.s32.totalorder %s85, %s88
      %p94 = scmp.eq.s32.totalorder %s11, 0
      %p95 = por %p93, %p94
      %p96 = scmp.ne.s32.totalorder %s85, %s88
      %p97 = scmp.eq.s32.totalorder %s16, 1
      %p98 = por %p96, %p97
      %p99 = scmp.ne.s32.totalorder %s88, %s89
      %p100 = scmp.eq.s32.totalorder %s16, 0
      %p101 = por %p99, %p100
      %p102 = scmp.ne.s32.totalorder %s88, %s89
      %p103 = scmp.eq.s32.totalorder %s17, 1
      %p104 = por %p102, %p103
      %p106 = scmp.ne.s32.totalorder %s89, %s105
      %p107 = scmp.eq.s32.totalorder %s17, 0
      %p108 = por %p106, %p107
      %s109 = ssub.s32 %s19, %s26
      %p110 = scmp.eq.s32.totalorder %s109, 0
      %s112 = sadd.s32 %s111, 1
      %s113 = scalar_select %p110, %s111, %s112
      %p116 = pneg %p110
      %p117 = scmp.eq.s32.totalorder %s11, 1
      %p118 = por %p116, %p117
      %p119 = scmp.ne.s32.totalorder %s111, %s114
      %p120 = scmp.eq.s32.totalorder %s11, 0
      %p121 = por %p119, %p120
      %p122 = scmp.ne.s32.totalorder %s111, %s114
      %p123 = scmp.eq.s32.totalorder %s16, 1
      %p124 = por %p122, %p123
      %p125 = scmp.ne.s32.totalorder %s114, %s115
      %p126 = scmp.eq.s32.totalorder %s16, 0
      %p127 = por %p125, %p126
      %p128 = scmp.ne.s32.totalorder %s114, %s115
      %p129 = scmp.eq.s32.totalorder %s17, 1
      %p130 = por %p128, %p129
      %p132 = scmp.ne.s32.totalorder %s115, %s131
      %p133 = scmp.eq.s32.totalorder %s17, 0
      %p134 = por %p132, %p133
      %s135 = ssub.s32 %s18, %s30
      %s136 = ssub.s32 %s19, %s26
      %s137 = sor.u32 %s135, %s136
      %p138 = scmp.eq.s32.totalorder %s137, 0
      %s140 = sadd.s32 %s139, 1
      %s141 = scalar_select %p138, %s139, %s140
      %p144 = pneg %p138
      %p145 = scmp.eq.s32.totalorder %s11, 1
      %p146 = por %p144, %p145
      %p147 = scmp.ne.s32.totalorder %s139, %s142
      %p148 = scmp.eq.s32.totalorder %s11, 0
      %p149 = por %p147, %p148
      %p150 = scmp.ne.s32.totalorder %s139, %s142
      %p151 = scmp.eq.s32.totalorder %s16, 1
      %p152 = por %p150, %p151
      %p153 = scmp.ne.s32.totalorder %s142, %s143
      %p154 = scmp.eq.s32.totalorder %s16, 0
      %p155 = por %p153, %p154
      %p156 = scmp.ne.s32.totalorder %s142, %s143
      %p157 = scmp.eq.s32.totalorder %s17, 1
      %p158 = por %p156, %p157
      %p160 = scmp.ne.s32.totalorder %s143, %s159
      %p161 = scmp.eq.s32.totalorder %s17, 0
      %p162 = por %p160, %p161
      %p163 = scmp.le.s32.totalorder 1, %s11
      %p164 = scmp.lt.s32.totalorder %s11, 3
      %p165 = pnand %p163, %p164
      %p166 = pneg %p165
      // Predicated region
      $region9: #{_lambda_.10} parent=5 // pred_check
        _
      $region10: #{_lambda_.10} parent=5 // pred_check_branch
        %168 = sbr.rel (%p165) target = $region12
      $region11: #{_lambda_.10} parent=5 // pred_region
        %s169 = ssub.s32 %s11, 1
        // Predicated region
        $region13: #{_lambda_.10} parent=11 // pred_check
          %p170 = pneg %p75
        $region14: #{_lambda_.10} parent=11 // pred_check_branch
          %172 = sbr.rel (%p170) target = $region16
        $region15: #{_lambda_.10} parent=11 // pred_region
          %s174 = ssub.s32 9216, 9216
          %175 = vsyncadd [#allocation4], %s174
          %s176 = smul.addr %s21, 64
          %s177 = scalar_lea.hbm %s1, %s176
          %s178 = sshll.u32 [#allocation3], 4
          %s179 = int_to_ptr.vmem [resolvable:$true] %s178
          %184 = dma.hbm_to_vmem [thread:$0]  %s177, 9216, %s179, [#allocation4], 64, 64, 4
        $region16: #{_lambda_.10} parent=11 // pred_fallthru
          _
        // Predicated region
        $region17: #{_lambda_.10} parent=11 // pred_check
          %p185 = pneg %p101
        $region18: #{_lambda_.10} parent=11 // pred_check_branch
          %187 = sbr.rel (%p185) target = $region20
        $region19: #{_lambda_.10} parent=11 // pred_region
          %p188 = scmp.lt.s32.totalorder %s21, 0
          %s189 = scalar_select %p188, %s21, 0
          %s190 = scalar_lea.vmem %s2, %s189
        $region20: #{_lambda_.10} parent=11 // pred_fallthru
          _
        // Predicated region
        $region21: #{_lambda_.10} parent=11 // pred_check
          %p191 = pneg %p127
        $region22: #{_lambda_.10} parent=11 // pred_check_branch
          %193 = sbr.rel (%p191) target = $region24
        $region23: #{_lambda_.10} parent=11 // pred_region
          %p194 = scmp.lt.s32.totalorder %s21, 0
          %s195 = scalar_select %p194, %s21, 0
          %s196 = scalar_lea.vmem %s3, %s195
        $region24: #{_lambda_.10} parent=11 // pred_fallthru
          _
      $region12: #{_lambda_.10} parent=5 // pred_fallthru
        _
      %p197 = scmp.lt.s32.totalorder %s11, 2
      // Predicated region
      $region25: #{_lambda_.10} parent=5 // pred_check
        %p198 = pneg %p197
      $region26: #{_lambda_.10} parent=5 // pred_check_branch
        %200 = sbr.rel (%p198) target = $region28
      $region27: #{_lambda_.10} parent=5 // pred_region
        // Predicated region
        $region29: #{_lambda_.10} parent=27 // pred_check
          %p201 = pneg %p43
        $region30: #{_lambda_.10} parent=27 // pred_check_branch
          %203 = sbr.rel (%p201) target = $region32
        $region31: #{_lambda_.10} parent=27 // pred_region
          %p204 = scmp.lt.s32.totalorder %s18, 1
          %s205 = scalar_select %p204, %s18, 1
          %s206 = smul.addr %s205, 20
          %s207 = smul.addr %s206, 4
          %s208 = scalar_lea.vmem %s0, %s207
        $region32: #{_lambda_.10} parent=27 // pred_fallthru
          _
      $region28: #{_lambda_.10} parent=5 // pred_fallthru
        _
      %p209 = scmp.le.s32.totalorder 1, %s11
      %p210 = scmp.lt.s32.totalorder %s11, 3
      %p211 = pnand %p209, %p210
      %p212 = pneg %p211
      // Predicated region
      $region33: #{_lambda_.10} parent=5 // pred_check
        _
      $region34: #{_lambda_.10} parent=5 // pred_check_branch
        %214 = sbr.rel (%p211) target = $region36
      $region35: #{_lambda_.10} parent=5 // pred_region
        %s215 = ssub.s32 %s11, 1
        // Predicated region
        $region37: #{_lambda_.10} parent=35 // pred_check
          %p216 = pneg %p75
        $region38: #{_lambda_.10} parent=35 // pred_check_branch
          %218 = sbr.rel (%p216) target = $region40
        $region39: #{_lambda_.10} parent=35 // pred_region
          %219 = dma.done [#allocation4], 9216
        $region40: #{_lambda_.10} parent=35 // pred_fallthru
          _
        %p220 = scmp.lt.s32.totalorder %s20, 1
        %s221 = scalar_select %p220, %s20, 1
        %s222 = smul.addr %s221, 20
        %s223 = smul.addr %s222, 4
        %s224 = scalar_lea.vmem %s0, %s223
        %p225 = pneg %p49
        %p226 = pneg %p46
        %p227 = pneg %p75
        %p228 = pneg %p72
        %p229 = scmp.lt.s32.totalorder %s21, 0
        %s230 = scalar_select %p229, %s21, 0
        %s231 = scalar_lea.vmem %s2, %s230
        %p232 = pneg %p101
        %p233 = pneg %p98
        %p234 = scmp.lt.s32.totalorder %s21, 0
        %s235 = scalar_select %p234, %s21, 0
        %s236 = scalar_lea.vmem %s3, %s235
        %p237 = pneg %p127
        %p238 = pneg %p124
        %p239 = pneg %p155
        %p240 = pneg %p152
        %p241 = scmp.lt.s32.totalorder %s20, 1
        %s242 = scalar_select %p241, %s20, 1
        %p243 = scmp.lt.s32.totalorder %s21, 0
        %s244 = scalar_select %p243, %s21, 0
        %s245 = smul.addr %s242, 8
        %s246 = sadd.s32 %s244, %s245
        %s247 = smul.addr %s246, 4
        %s248 = scalar_lea.vmem %s4, %s247
        %p249 = scmp.lt.s32.totalorder %s20, 1
        %s250 = scalar_select %p249, %s20, 1
        %s251 = smul.addr %s250, 20
        %s252 = smul.addr %s251, 4
        %s253 = scalar_lea.vmem %s0, %s252
        %p254 = scmp.lt.s32.totalorder %s21, 0
        %s255 = scalar_select %p254, %s21, 0
        %s256 = scalar_lea.vmem %s2, %s255
        %p257 = scmp.lt.s32.totalorder %s21, 0
        %s258 = scalar_select %p257, %s21, 0
        %s259 = scalar_lea.vmem %s3, %s258
        %p260 = scmp.lt.s32.totalorder %s20, 1
        %s261 = scalar_select %p260, %s20, 1
        %p262 = scmp.lt.s32.totalorder %s21, 0
        %s263 = scalar_select %p262, %s21, 0
        %s264 = smul.addr %s261, 8
        %s265 = sadd.s32 %s263, %s264
        %s266 = smul.addr %s265, 4
        %s267 = scalar_lea.vmem %s4, %s266
        %269 = vst [vmem:[#allocation2] sm:$0xff] 0.0
        %270 = vst [vmem:[#allocation2 + $0x8] sm:$0xff] 0.0
        %271 = vst [vmem:[#allocation2 + $0x10] sm:$0xff] 0.0
        %272 = vst [vmem:[#allocation2 + $0x18] sm:$0xff] 0.0
        %273 = vst [vmem:[#allocation2 + $0x20] sm:$0xff] 0.0
        %274 = vst [vmem:[#allocation2 + $0x28] sm:$0xff] 0.0
        %275 = vst [vmem:[#allocation2 + $0x30] sm:$0xff] 0.0
        %276 = vst [vmem:[#allocation2 + $0x38] sm:$0xff] 0.0
        %v277 = vld [vmem:[%s253] sm:$0xf]
        %v278 = vld [vmem:[%s253 + $0x8] sm:$0xf]
        %v279 = vld [vmem:[%s253 + $0x10] sm:$0xf]
        %v280 = vld [vmem:[%s253 + $0x18] sm:$0xf]
        %v281 = vld [vmem:[%s253 + $0x20] sm:$0xf]
        %v282 = vld [vmem:[%s253 + $0x28] sm:$0xf]
        %v283 = vld [vmem:[%s253 + $0x30] sm:$0xf]
        %v284 = vld [vmem:[%s253 + $0x38] sm:$0xf]
        %v285 = vld [vmem:[%s253 + $0x40] sm:$0xf]
        %v286 = vld [vmem:[%s253 + $0x48] sm:$0xf]
        %v287 = vld [vmem:[#allocation2] sm:$0xff]
        %v288 = vld [vmem:[#allocation2 + $0x8] sm:$0xff]
        %v289 = vld [vmem:[#allocation2 + $0x10] sm:$0xff]
        %v290 = vld [vmem:[#allocation2 + $0x18] sm:$0xff]
        %v291 = vld [vmem:[#allocation2 + $0x20] sm:$0xff]
        %v292 = vld [vmem:[#allocation2 + $0x28] sm:$0xff]
        %v293 = vld [vmem:[#allocation2 + $0x30] sm:$0xff]
        %v294 = vld [vmem:[#allocation2 + $0x38] sm:$0xff]
        %v295 = vld [vmem:[#allocation3] sm:$0xf]
        %v296 = vld [vmem:[#allocation3 + $0x4] sm:$0xf]
        %v297 = vld [vmem:[#allocation3 + $0x8] sm:$0xf]
        %v298 = vld [vmem:[#allocation3 + $0xc] sm:$0xf]
        %v299 = vld [vmem:[#allocation3 + $0x10] sm:$0xf]
        %v300 = vld [vmem:[#allocation3 + $0x14] sm:$0xf]
        %v301 = vld [vmem:[#allocation3 + $0x18] sm:$0xf]
        %v302 = vld [vmem:[#allocation3 + $0x1c] sm:$0xf]
        %v303 = vld [vmem:[#allocation3 + $0x20] sm:$0xf]
        %v304 = vld [vmem:[#allocation3 + $0x24] sm:$0xf]
        %v305 = vld [vmem:[#allocation3 + $0x28] sm:$0xf]
        %v306 = vld [vmem:[#allocation3 + $0x2c] sm:$0xf]
        %v307 = vld [vmem:[#allocation3 + $0x30] sm:$0xf]
        %v308 = vld [vmem:[#allocation3 + $0x34] sm:$0xf]
        %v309 = vld [vmem:[#allocation3 + $0x38] sm:$0xf]
        %v310 = vld [vmem:[#allocation3 + $0x3c] sm:$0xf]
        %v319 = vunpack.c.l.b16 %v277
        %v320 = vunpack.c.l.b16 %v278
        %v321 = vunpack.c.l.b16 %v279
        %v322 = vunpack.c.l.b16 %v280
        %v323 = vunpack.c.l.b16 %v281
        %v324 = vunpack.c.l.b16 %v282
        %v325 = vunpack.c.l.b16 %v283
        %v326 = vunpack.c.l.b16 %v284
        %v327 = vpack.c.b16 %v320, %v319
        %v328 = vpack.c.b16 %v322, %v321
        %v329 = vpack.c.b16 %v324, %v323
        %v330 = vpack.c.b16 %v326, %v325
        %v351 = vunpack.c.l.b16 %v295
        %v352 = vunpack.c.l.b16 %v296
        %v353 = vunpack.c.l.b16 %v297
        %v354 = vunpack.c.l.b16 %v298
        %v355 = vunpack.c.l.b16 %v299
        %v356 = vunpack.c.l.b16 %v300
        %v357 = vunpack.c.l.b16 %v301
        %v358 = vunpack.c.l.b16 %v302
        %v359 = vunpack.c.l.b16 %v303
        %v360 = vunpack.c.l.b16 %v304
        %v361 = vunpack.c.l.b16 %v305
        %v362 = vunpack.c.l.b16 %v306
        %v363 = vunpack.c.l.b16 %v307
        %v364 = vunpack.c.l.b16 %v308
        %v365 = vunpack.c.l.b16 %v309
        %v366 = vunpack.c.l.b16 %v310
        %v367 = vpack.c.b16 %v352, %v351
        %v368 = vpack.c.b16 %v354, %v353
        %v369 = vpack.c.b16 %v356, %v355
        %v370 = vpack.c.b16 %v358, %v357
        %v371 = vpack.c.b16 %v360, %v359
        %v372 = vpack.c.b16 %v362, %v361
        %v373 = vpack.c.b16 %v364, %v363
        %v374 = vpack.c.b16 %v366, %v365
        %383 = vmatprep.subr.bf16.mxu0 0
        %384 = vmatpush1.bf16.msra.mxu0 %v374
        %385 = vmatprep.subr.bf16.mxu0 0
        %386 = vmatpush1.bf16.msra.mxu0 %v373
        %387 = vmatprep.subr.bf16.mxu0 0
        %388 = vmatpush1.bf16.msra.mxu0 %v372
        %389 = vmatprep.subr.bf16.mxu0 0
        %390 = vmatpush1.bf16.msra.mxu0 %v371
        %391 = vmatprep.subr.bf16.mxu0 0
        %392 = vmatpush1.bf16.msra.mxu0 %v370
        %393 = vmatprep.subr.bf16.mxu0 0
        %394 = vmatpush1.bf16.msra.mxu0 %v369
        %395 = vmatprep.subr.bf16.mxu0 0
        %396 = vmatpush1.bf16.msra.mxu0 %v368
        %397 = vmatprep.subr.bf16.mxu0 0
        %398 = vmatpush1.bf16.msra.mxu0 %v367
        %399 = vmatprep.subr.bf16.mxu0 0
        %400 = vmatpush2.bf16.msra.mxu0 0
        %401 = vmatprep.subr.bf16.mxu0 0
        %402 = vmatpush2.bf16.msra.mxu0 0
        %403 = vmatprep.subr.bf16.mxu0 0
        %404 = vmatpush2.bf16.msra.mxu0 0
        %405 = vmatprep.subr.bf16.mxu0 0
        %406 = vmatpush2.bf16.msra.mxu0 0
        %407 = vmatprep.subr.bf16.mxu0 0
        %408 = vmatpush2.bf16.msra.mxu0 0
        %409 = vmatprep.subr.bf16.mxu0 0
        %410 = vmatpush2.bf16.msra.mxu0 0
        %411 = vmatprep.subr.bf16.mxu0 0
        %412 = vmatpush2.bf16.msra.mxu0 0
        %413 = vmatprep.subr.bf16.mxu0 0
        %414 = vmatpush2.bf16.msra.mxu0 0
        %415 = vmatprep.mubr.bf16.mxu0 0
        %416 = vmatmul.mubr.bf16.gmra.mxu0 %v327
        %v417 = vpop.f32.mrf.mxu0
        %v418 = vadd.f32 0.0, %v417
        %v419 = vpop.f32.mrf.mxu0
        %v420 = vpop.f32.mrf.mxu0
        %v421 = vadd.f32 0.0, %v420
        %v422 = vpop.f32.mrf.mxu0
        %423 = vmatprep.mubr.bf16.mxu0 0
        %424 = vmatmul.mubr.bf16.gmra.mxu0 %v328
        %v425 = vpop.f32.mrf.mxu0
        %v426 = vadd.f32 0.0, %v425
        %v427 = vpop.f32.mrf.mxu0
        %v428 = vpop.f32.mrf.mxu0
        %v429 = vadd.f32 0.0, %v428
        %v430 = vpop.f32.mrf.mxu0
        %431 = vmatprep.mubr.bf16.mxu0 0
        %432 = vmatmul.mubr.bf16.gmra.mxu0 %v329
        %v433 = vpop.f32.mrf.mxu0
        %v434 = vadd.f32 0.0, %v433
        %v435 = vpop.f32.mrf.mxu0
        %v436 = vpop.f32.mrf.mxu0
        %v437 = vadd.f32 0.0, %v436
        %v438 = vpop.f32.mrf.mxu0
        %439 = vmatprep.mubr.bf16.mxu0 0
        %440 = vmatmul.mubr.bf16.gmra.mxu0 %v330
        %v441 = vpop.f32.mrf.mxu0
        %v442 = vadd.f32 0.0, %v441
        %v443 = vpop.f32.mrf.mxu0
        %v444 = vpop.f32.mrf.mxu0
        %v445 = vadd.f32 0.0, %v444
        %v446 = vpop.f32.mrf.mxu0
        %447 = vdwg.mxu0
        %v448 = vadd.f32 %v287, %v418
        %v449 = vadd.f32 %v288, %v421
        %v450 = vadd.f32 %v289, %v426
        %v451 = vadd.f32 %v290, %v429
        %v452 = vadd.f32 %v291, %v434
        %v453 = vadd.f32 %v292, %v437
        %v454 = vadd.f32 %v293, %v442
        %v455 = vadd.f32 %v294, %v445
        %456 = vst [vmem:[#allocation2] sm:$0xff] %v448
        %457 = vst [vmem:[#allocation2 + $0x8] sm:$0xff] %v449
        %458 = vst [vmem:[#allocation2 + $0x10] sm:$0xff] %v450
        %459 = vst [vmem:[#allocation2 + $0x18] sm:$0xff] %v451
        %460 = vst [vmem:[#allocation2 + $0x20] sm:$0xff] %v452
        %461 = vst [vmem:[#allocation2 + $0x28] sm:$0xff] %v453
        %462 = vst [vmem:[#allocation2 + $0x30] sm:$0xff] %v454
        %463 = vst [vmem:[#allocation2 + $0x38] sm:$0xff] %v455
        %v464 = vld [vmem:[#allocation2] sm:$0xff]
        %v465 = vld [vmem:[#allocation2 + $0x8] sm:$0xff]
        %v466 = vld [vmem:[#allocation2 + $0x10] sm:$0xff]
        %v467 = vld [vmem:[#allocation2 + $0x18] sm:$0xff]
        %v468 = vld [vmem:[#allocation2 + $0x20] sm:$0xff]
        %v469 = vld [vmem:[#allocation2 + $0x28] sm:$0xff]
        %v470 = vld [vmem:[#allocation2 + $0x30] sm:$0xff]
        %v471 = vld [vmem:[#allocation2 + $0x38] sm:$0xff]
        %s472 = scalar_lea.vmem [#allocation3], 192
        %v473 = vld [vmem:[%s472] sm:$0xf]
        %v474 = vld [vmem:[%s472 + $0x4] sm:$0xf]
        %v475 = vld [vmem:[%s472 + $0x8] sm:$0xf]
        %v476 = vld [vmem:[%s472 + $0xc] sm:$0xf]
        %v477 = vld [vmem:[%s472 + $0x10] sm:$0xf]
        %v478 = vld [vmem:[%s472 + $0x14] sm:$0xf]
        %v479 = vld [vmem:[%s472 + $0x18] sm:$0xf]
        %v480 = vld [vmem:[%s472 + $0x1c] sm:$0xf]
        %v481 = vld [vmem:[%s472 + $0x20] sm:$0xf]
        %v482 = vld [vmem:[%s472 + $0x24] sm:$0xf]
        %v483 = vld [vmem:[%s472 + $0x28] sm:$0xf]
        %v484 = vld [vmem:[%s472 + $0x2c] sm:$0xf]
        %v485 = vld [vmem:[%s472 + $0x30] sm:$0xf]
        %v486 = vld [vmem:[%s472 + $0x34] sm:$0xf]
        %v487 = vld [vmem:[%s472 + $0x38] sm:$0xf]
        %v488 = vld [vmem:[%s472 + $0x3c] sm:$0xf]
        %v490 = vunpack.c.l.b16 %v285
        %v491 = vpack.c.b16 %v321, %v320
        %v492 = vpack.c.b16 %v323, %v322
        %v493 = vpack.c.b16 %v325, %v324
        %v494 = vpack.c.b16 %v490, %v326
        %v515 = vunpack.c.l.b16 %v473
        %v516 = vunpack.c.l.b16 %v474
        %v517 = vunpack.c.l.b16 %v475
        %v518 = vunpack.c.l.b16 %v476
        %v519 = vunpack.c.l.b16 %v477
        %v520 = vunpack.c.l.b16 %v478
        %v521 = vunpack.c.l.b16 %v479
        %v522 = vunpack.c.l.b16 %v480
        %v523 = vunpack.c.l.b16 %v481
        %v524 = vunpack.c.l.b16 %v482
        %v525 = vunpack.c.l.b16 %v483
        %v526 = vunpack.c.l.b16 %v484
        %v527 = vunpack.c.l.b16 %v485
        %v528 = vunpack.c.l.b16 %v486
        %v529 = vunpack.c.l.b16 %v487
        %v530 = vunpack.c.l.b16 %v488
        %v531 = vpack.c.b16 %v516, %v515
        %v532 = vpack.c.b16 %v518, %v517
        %v533 = vpack.c.b16 %v520, %v519
        %v534 = vpack.c.b16 %v522, %v521
        %v535 = vpack.c.b16 %v524, %v523
        %v536 = vpack.c.b16 %v526, %v525
        %v537 = vpack.c.b16 %v528, %v527
        %v538 = vpack.c.b16 %v530, %v529
        %547 = vmatprep.subr.bf16.mxu0 0
        %548 = vmatpush1.bf16.msra.mxu0 %v538
        %549 = vmatprep.subr.bf16.mxu0 0
        %550 = vmatpush1.bf16.msra.mxu0 %v537
        %551 = vmatprep.subr.bf16.mxu0 0
        %552 = vmatpush1.bf16.msra.mxu0 %v536
        %553 = vmatprep.subr.bf16.mxu0 0
        %554 = vmatpush1.bf16.msra.mxu0 %v535
        %555 = vmatprep.subr.bf16.mxu0 0
        %556 = vmatpush1.bf16.msra.mxu0 %v534
        %557 = vmatprep.subr.bf16.mxu0 0
        %558 = vmatpush1.bf16.msra.mxu0 %v533
        %559 = vmatprep.subr.bf16.mxu0 0
        %560 = vmatpush1.bf16.msra.mxu0 %v532
        %561 = vmatprep.subr.bf16.mxu0 0
        %562 = vmatpush1.bf16.msra.mxu0 %v531
        %563 = vmatprep.subr.bf16.mxu0 0
        %564 = vmatpush2.bf16.msra.mxu0 0
        %565 = vmatprep.subr.bf16.mxu0 0
        %566 = vmatpush2.bf16.msra.mxu0 0
        %567 = vmatprep.subr.bf16.mxu0 0
        %568 = vmatpush2.bf16.msra.mxu0 0
        %569 = vmatprep.subr.bf16.mxu0 0
        %570 = vmatpush2.bf16.msra.mxu0 0
        %571 = vmatprep.subr.bf16.mxu0 0
        %572 = vmatpush2.bf16.msra.mxu0 0
        %573 = vmatprep.subr.bf16.mxu0 0
        %574 = vmatpush2.bf16.msra.mxu0 0
        %575 = vmatprep.subr.bf16.mxu0 0
        %576 = vmatpush2.bf16.msra.mxu0 0
        %577 = vmatprep.subr.bf16.mxu0 0
        %578 = vmatpush2.bf16.msra.mxu0 0
        %579 = vmatprep.mubr.bf16.mxu0 0
        %580 = vmatmul.mubr.bf16.gmra.mxu0 %v491
        %v581 = vpop.f32.mrf.mxu0
        %v582 = vadd.f32 0.0, %v581
        %v583 = vpop.f32.mrf.mxu0
        %v584 = vpop.f32.mrf.mxu0
        %v585 = vadd.f32 0.0, %v584
        %v586 = vpop.f32.mrf.mxu0
        %587 = vmatprep.mubr.bf16.mxu0 0
        %588 = vmatmul.mubr.bf16.gmra.mxu0 %v492
        %v589 = vpop.f32.mrf.mxu0
        %v590 = vadd.f32 0.0, %v589
        %v591 = vpop.f32.mrf.mxu0
        %v592 = vpop.f32.mrf.mxu0
        %v593 = vadd.f32 0.0, %v592
        %v594 = vpop.f32.mrf.mxu0
        %595 = vmatprep.mubr.bf16.mxu0 0
        %596 = vmatmul.mubr.bf16.gmra.mxu0 %v493
        %v597 = vpop.f32.mrf.mxu0
        %v598 = vadd.f32 0.0, %v597
        %v599 = vpop.f32.mrf.mxu0
        %v600 = vpop.f32.mrf.mxu0
        %v601 = vadd.f32 0.0, %v600
        %v602 = vpop.f32.mrf.mxu0
        %603 = vmatprep.mubr.bf16.mxu0 0
        %604 = vmatmul.mubr.bf16.gmra.mxu0 %v494
        %v605 = vpop.f32.mrf.mxu0
        %v606 = vadd.f32 0.0, %v605
        %v607 = vpop.f32.mrf.mxu0
        %v608 = vpop.f32.mrf.mxu0
        %v609 = vadd.f32 0.0, %v608
        %v610 = vpop.f32.mrf.mxu0
        %611 = vdwg.mxu0
        %v612 = vadd.f32 %v464, %v582
        %v613 = vadd.f32 %v465, %v585
        %v614 = vadd.f32 %v466, %v590
        %v615 = vadd.f32 %v467, %v593
        %v616 = vadd.f32 %v468, %v598
        %v617 = vadd.f32 %v469, %v601
        %v618 = vadd.f32 %v470, %v606
        %v619 = vadd.f32 %v471, %v609
        %620 = vst [vmem:[#allocation2] sm:$0xff] %v612
        %621 = vst [vmem:[#allocation2 + $0x8] sm:$0xff] %v613
        %622 = vst [vmem:[#allocation2 + $0x10] sm:$0xff] %v614
        %623 = vst [vmem:[#allocation2 + $0x18] sm:$0xff] %v615
        %624 = vst [vmem:[#allocation2 + $0x20] sm:$0xff] %v616
        %625 = vst [vmem:[#allocation2 + $0x28] sm:$0xff] %v617
        %626 = vst [vmem:[#allocation2 + $0x30] sm:$0xff] %v618
        %627 = vst [vmem:[#allocation2 + $0x38] sm:$0xff] %v619
        %v628 = vld [vmem:[#allocation2] sm:$0xff]
        %v629 = vld [vmem:[#allocation2 + $0x8] sm:$0xff]
        %v630 = vld [vmem:[#allocation2 + $0x10] sm:$0xff]
        %v631 = vld [vmem:[#allocation2 + $0x18] sm:$0xff]
        %v632 = vld [vmem:[#allocation2 + $0x20] sm:$0xff]
        %v633 = vld [vmem:[#allocation2 + $0x28] sm:$0xff]
        %v634 = vld [vmem:[#allocation2 + $0x30] sm:$0xff]
        %v635 = vld [vmem:[#allocation2 + $0x38] sm:$0xff]
        %s636 = scalar_lea.vmem [#allocation3], 384
        %v637 = vld [vmem:[%s636] sm:$0xf]
        %v638 = vld [vmem:[%s636 + $0x4] sm:$0xf]
        %v639 = vld [vmem:[%s636 + $0x8] sm:$0xf]
        %v640 = vld [vmem:[%s636 + $0xc] sm:$0xf]
        %v641 = vld [vmem:[%s636 + $0x10] sm:$0xf]
        %v642 = vld [vmem:[%s636 + $0x14] sm:$0xf]
        %v643 = vld [vmem:[%s636 + $0x18] sm:$0xf]
        %v644 = vld [vmem:[%s636 + $0x1c] sm:$0xf]
        %v645 = vld [vmem:[%s636 + $0x20] sm:$0xf]
        %v646 = vld [vmem:[%s636 + $0x24] sm:$0xf]
        %v647 = vld [vmem:[%s636 + $0x28] sm:$0xf]
        %v648 = vld [vmem:[%s636 + $0x2c] sm:$0xf]
        %v649 = vld [vmem:[%s636 + $0x30] sm:$0xf]
        %v650 = vld [vmem:[%s636 + $0x34] sm:$0xf]
        %v651 = vld [vmem:[%s636 + $0x38] sm:$0xf]
        %v652 = vld [vmem:[%s636 + $0x3c] sm:$0xf]
        %v654 = vunpack.c.l.b16 %v286
        %v655 = vpack.c.b16 %v654, %v490
        %v673 = vunpack.c.l.b16 %v637
        %v674 = vunpack.c.l.b16 %v638
        %v675 = vunpack.c.l.b16 %v639
        %v676 = vunpack.c.l.b16 %v640
        %v677 = vunpack.c.l.b16 %v641
        %v678 = vunpack.c.l.b16 %v642
        %v679 = vunpack.c.l.b16 %v643
        %v680 = vunpack.c.l.b16 %v644
        %v681 = vunpack.c.l.b16 %v645
        %v682 = vunpack.c.l.b16 %v646
        %v683 = vunpack.c.l.b16 %v647
        %v684 = vunpack.c.l.b16 %v648
        %v685 = vunpack.c.l.b16 %v649
        %v686 = vunpack.c.l.b16 %v650
        %v687 = vunpack.c.l.b16 %v651
        %v688 = vunpack.c.l.b16 %v652
        %v689 = vpack.c.b16 %v674, %v673
        %v690 = vpack.c.b16 %v676, %v675
        %v691 = vpack.c.b16 %v678, %v677
        %v692 = vpack.c.b16 %v680, %v679
        %v693 = vpack.c.b16 %v682, %v681
        %v694 = vpack.c.b16 %v684, %v683
        %v695 = vpack.c.b16 %v686, %v685
        %v696 = vpack.c.b16 %v688, %v687
        %705 = vmatprep.subr.bf16.mxu0 0
        %706 = vmatpush1.bf16.msra.mxu0 %v696
        %707 = vmatprep.subr.bf16.mxu0 0
        %708 = vmatpush1.bf16.msra.mxu0 %v695
        %709 = vmatprep.subr.bf16.mxu0 0
        %710 = vmatpush1.bf16.msra.mxu0 %v694
        %711 = vmatprep.subr.bf16.mxu0 0
        %712 = vmatpush1.bf16.msra.mxu0 %v693
        %713 = vmatprep.subr.bf16.mxu0 0
        %714 = vmatpush1.bf16.msra.mxu0 %v692
        %715 = vmatprep.subr.bf16.mxu0 0
        %716 = vmatpush1.bf16.msra.mxu0 %v691
        %717 = vmatprep.subr.bf16.mxu0 0
        %718 = vmatpush1.bf16.msra.mxu0 %v690
        %719 = vmatprep.subr.bf16.mxu0 0
        %720 = vmatpush1.bf16.msra.mxu0 %v689
        %721 = vmatprep.subr.bf16.mxu0 0
        %722 = vmatpush2.bf16.msra.mxu0 0
        %723 = vmatprep.subr.bf16.mxu0 0
        %724 = vmatpush2.bf16.msra.mxu0 0
        %725 = vmatprep.subr.bf16.mxu0 0
        %726 = vmatpush2.bf16.msra.mxu0 0
        %727 = vmatprep.subr.bf16.mxu0 0
        %728 = vmatpush2.bf16.msra.mxu0 0
        %729 = vmatprep.subr.bf16.mxu0 0
        %730 = vmatpush2.bf16.msra.mxu0 0
        %731 = vmatprep.subr.bf16.mxu0 0
        %732 = vmatpush2.bf16.msra.mxu0 0
        %733 = vmatprep.subr.bf16.mxu0 0
        %734 = vmatpush2.bf16.msra.mxu0 0
        %735 = vmatprep.subr.bf16.mxu0 0
        %736 = vmatpush2.bf16.msra.mxu0 0
        %737 = vmatprep.mubr.bf16.mxu0 0
        %738 = vmatmul.mubr.bf16.gmra.mxu0 %v328
        %v739 = vpop.f32.mrf.mxu0
        %v740 = vadd.f32 0.0, %v739
        %v741 = vpop.f32.mrf.mxu0
        %v742 = vpop.f32.mrf.mxu0
        %v743 = vadd.f32 0.0, %v742
        %v744 = vpop.f32.mrf.mxu0
        %745 = vmatprep.mubr.bf16.mxu0 0
        %746 = vmatmul.mubr.bf16.gmra.mxu0 %v329
        %v747 = vpop.f32.mrf.mxu0
        %v748 = vadd.f32 0.0, %v747
        %v749 = vpop.f32.mrf.mxu0
        %v750 = vpop.f32.mrf.mxu0
        %v751 = vadd.f32 0.0, %v750
        %v752 = vpop.f32.mrf.mxu0
        %753 = vmatprep.mubr.bf16.mxu0 0
        %754 = vmatmul.mubr.bf16.gmra.mxu0 %v330
        %v755 = vpop.f32.mrf.mxu0
        %v756 = vadd.f32 0.0, %v755
        %v757 = vpop.f32.mrf.mxu0
        %v758 = vpop.f32.mrf.mxu0
        %v759 = vadd.f32 0.0, %v758
        %v760 = vpop.f32.mrf.mxu0
        %761 = vmatprep.mubr.bf16.mxu0 0
        %762 = vmatmul.mubr.bf16.gmra.mxu0 %v655
        %v763 = vpop.f32.mrf.mxu0
        %v764 = vadd.f32 0.0, %v763
        %v765 = vpop.f32.mrf.mxu0
        %v766 = vpop.f32.mrf.mxu0
        %v767 = vadd.f32 0.0, %v766
        %v768 = vpop.f32.mrf.mxu0
        %769 = vdwg.mxu0
        %v770 = vadd.f32 %v628, %v740
        %v771 = vadd.f32 %v629, %v743
        %v772 = vadd.f32 %v630, %v748
        %v773 = vadd.f32 %v631, %v751
        %v774 = vadd.f32 %v632, %v756
        %v775 = vadd.f32 %v633, %v759
        %v776 = vadd.f32 %v634, %v764
        %v777 = vadd.f32 %v635, %v767
        %778 = vst [vmem:[#allocation2] sm:$0xff] %v770
        %779 = vst [vmem:[#allocation2 + $0x8] sm:$0xff] %v771
        %780 = vst [vmem:[#allocation2 + $0x10] sm:$0xff] %v772
        %781 = vst [vmem:[#allocation2 + $0x18] sm:$0xff] %v773
        %782 = vst [vmem:[#allocation2 + $0x20] sm:$0xff] %v774
        %783 = vst [vmem:[#allocation2 + $0x28] sm:$0xff] %v775
        %784 = vst [vmem:[#allocation2 + $0x30] sm:$0xff] %v776
        %785 = vst [vmem:[#allocation2 + $0x38] sm:$0xff] %v777
        %v786 = vld [vmem:[%s253] sm:$0xf]
        %v787 = vld [vmem:[%s253 + $0x4] sm:$0x1]
        %v788 = vld [vmem:[%s253 + $0x8] sm:$0xf]
        %v789 = vld [vmem:[%s253 + $0xc] sm:$0x1]
        %v790 = vld [vmem:[%s253 + $0x10] sm:$0xf]
        %v791 = vld [vmem:[%s253 + $0x14] sm:$0x1]
        %v792 = vld [vmem:[%s253 + $0x18] sm:$0xf]
        %v793 = vld [vmem:[%s253 + $0x1c] sm:$0x1]
        %v794 = vld [vmem:[%s253 + $0x20] sm:$0xf]
        %v795 = vld [vmem:[%s253 + $0x24] sm:$0x1]
        %v796 = vld [vmem:[%s253 + $0x28] sm:$0xf]
        %v797 = vld [vmem:[%s253 + $0x2c] sm:$0x1]
        %v798 = vld [vmem:[%s253 + $0x30] sm:$0xf]
        %v799 = vld [vmem:[%s253 + $0x34] sm:$0x1]
        %v800 = vld [vmem:[%s253 + $0x38] sm:$0xf]
        %v801 = vld [vmem:[%s253 + $0x3c] sm:$0x1]
        %v802 = vld [vmem:[%s253 + $0x40] sm:$0xf]
        %v803 = vld [vmem:[%s253 + $0x44] sm:$0x1]
        %v804 = vld [vmem:[%s253 + $0x48] sm:$0xf]
        %v805 = vld [vmem:[%s253 + $0x4c] sm:$0x1]
        %vm806 = vsmask.f32 3328
        %vm807 = vsmask.f32 7440
        %vm808 = vmor %vm806, %vm807
        %v810 = vshrl.u32 %v786, 16
        %v812 = vrot.slane %v810, 4
        %v813 = vshll.u32 %v786, 16
        %v815 = vrot.slane %v813, 5
        %v816 = vor.u32 %v812, %v815
        %v817 = vrot.slane %v816, 4
        %v819 = vshll.u32 %v787, 16
        %v821 = vrot.slane %v819, 5
        %v822 = vsel %vm808, %v817, %v821
        %v824 = vshrl.u32 %v788, 16
        %v826 = vrot.slane %v824, 4
        %v827 = vshll.u32 %v788, 16
        %v829 = vrot.slane %v827, 5
        %v830 = vor.u32 %v826, %v829
        %v831 = vrot.slane %v830, 4
        %v833 = vshll.u32 %v789, 16
        %v835 = vrot.slane %v833, 5
        %v836 = vsel %vm808, %v831, %v835
        %v838 = vshrl.u32 %v790, 16
        %v840 = vrot.slane %v838, 4
        %v841 = vshll.u32 %v790, 16
        %v843 = vrot.slane %v841, 5
        %v844 = vor.u32 %v840, %v843
        %v845 = vrot.slane %v844, 4
        %v847 = vshll.u32 %v791, 16
        %v849 = vrot.slane %v847, 5
        %v850 = vsel %vm808, %v845, %v849
        %v852 = vshrl.u32 %v792, 16
        %v854 = vrot.slane %v852, 4
        %v855 = vshll.u32 %v792, 16
        %v857 = vrot.slane %v855, 5
        %v858 = vor.u32 %v854, %v857
        %v859 = vrot.slane %v858, 4
        %v861 = vshll.u32 %v793, 16
        %v863 = vrot.slane %v861, 5
        %v864 = vsel %vm808, %v859, %v863
        %v866 = vshrl.u32 %v794, 16
        %v868 = vrot.slane %v866, 4
        %v869 = vshll.u32 %v794, 16
        %v871 = vrot.slane %v869, 5
        %v872 = vor.u32 %v868, %v871
        %v873 = vrot.slane %v872, 4
        %v875 = vshll.u32 %v795, 16
        %v877 = vrot.slane %v875, 5
        %v878 = vsel %vm808, %v873, %v877
        %v880 = vshrl.u32 %v796, 16
        %v882 = vrot.slane %v880, 4
        %v883 = vshll.u32 %v796, 16
        %v885 = vrot.slane %v883, 5
        %v886 = vor.u32 %v882, %v885
        %v887 = vrot.slane %v886, 4
        %v889 = vshll.u32 %v797, 16
        %v891 = vrot.slane %v889, 5
        %v892 = vsel %vm808, %v887, %v891
        %v894 = vshrl.u32 %v798, 16
        %v896 = vrot.slane %v894, 4
        %v897 = vshll.u32 %v798, 16
        %v899 = vrot.slane %v897, 5
        %v900 = vor.u32 %v896, %v899
        %v901 = vrot.slane %v900, 4
        %v903 = vshll.u32 %v799, 16
        %v905 = vrot.slane %v903, 5
        %v906 = vsel %vm808, %v901, %v905
        %v908 = vshrl.u32 %v800, 16
        %v910 = vrot.slane %v908, 4
        %v911 = vshll.u32 %v800, 16
        %v913 = vrot.slane %v911, 5
        %v914 = vor.u32 %v910, %v913
        %v915 = vrot.slane %v914, 4
        %v917 = vshll.u32 %v801, 16
        %v919 = vrot.slane %v917, 5
        %v920 = vsel %vm808, %v915, %v919
        %v922 = vshrl.u32 %v802, 16
        %v924 = vrot.slane %v922, 4
        %v925 = vshll.u32 %v802, 16
        %v927 = vrot.slane %v925, 5
        %v928 = vor.u32 %v924, %v927
        %v929 = vrot.slane %v928, 4
        %v931 = vshll.u32 %v803, 16
        %v933 = vrot.slane %v931, 5
        %v934 = vsel %vm808, %v929, %v933
        %v936 = vshrl.u32 %v804, 16
        %v938 = vrot.slane %v936, 4
        %v939 = vshll.u32 %v804, 16
        %v941 = vrot.slane %v939, 5
        %v942 = vor.u32 %v938, %v941
        %v943 = vrot.slane %v942, 4
        %v945 = vshll.u32 %v805, 16
        %v947 = vrot.slane %v945, 5
        %v948 = vsel %vm808, %v943, %v947
        %v949 = vld [vmem:[#allocation2] sm:$0xff]
        %v950 = vld [vmem:[#allocation2 + $0x8] sm:$0xff]
        %v951 = vld [vmem:[#allocation2 + $0x10] sm:$0xff]
        %v952 = vld [vmem:[#allocation2 + $0x18] sm:$0xff]
        %v953 = vld [vmem:[#allocation2 + $0x20] sm:$0xff]
        %v954 = vld [vmem:[#allocation2 + $0x28] sm:$0xff]
        %v955 = vld [vmem:[#allocation2 + $0x30] sm:$0xff]
        %v956 = vld [vmem:[#allocation2 + $0x38] sm:$0xff]
        %s957 = scalar_lea.vmem [#allocation3], 64
        %v958 = vld [vmem:[%s957] sm:$0xf]
        %v959 = vld [vmem:[%s957 + $0x4] sm:$0xf]
        %v960 = vld [vmem:[%s957 + $0x8] sm:$0xf]
        %v961 = vld [vmem:[%s957 + $0xc] sm:$0xf]
        %v962 = vld [vmem:[%s957 + $0x10] sm:$0xf]
        %v963 = vld [vmem:[%s957 + $0x14] sm:$0xf]
        %v964 = vld [vmem:[%s957 + $0x18] sm:$0xf]
        %v965 = vld [vmem:[%s957 + $0x1c] sm:$0xf]
        %v966 = vld [vmem:[%s957 + $0x20] sm:$0xf]
        %v967 = vld [vmem:[%s957 + $0x24] sm:$0xf]
        %v968 = vld [vmem:[%s957 + $0x28] sm:$0xf]
        %v969 = vld [vmem:[%s957 + $0x2c] sm:$0xf]
        %v970 = vld [vmem:[%s957 + $0x30] sm:$0xf]
        %v971 = vld [vmem:[%s957 + $0x34] sm:$0xf]
        %v972 = vld [vmem:[%s957 + $0x38] sm:$0xf]
        %v973 = vld [vmem:[%s957 + $0x3c] sm:$0xf]
        %v974 = vunpack.c.l.b16 %v822
        %v975 = vunpack.c.l.b16 %v836
        %v976 = vunpack.c.l.b16 %v850
        %v977 = vunpack.c.l.b16 %v864
        %v978 = vunpack.c.l.b16 %v878
        %v979 = vunpack.c.l.b16 %v892
        %v980 = vunpack.c.l.b16 %v906
        %v981 = vunpack.c.l.b16 %v920
        %v982 = vpack.c.b16 %v975, %v974
        %v983 = vpack.c.b16 %v977, %v976
        %v984 = vpack.c.b16 %v979, %v978
        %v985 = vpack.c.b16 %v981, %v980
        %v1006 = vunpack.c.l.b16 %v958
        %v1007 = vunpack.c.l.b16 %v959
        %v1008 = vunpack.c.l.b16 %v960
        %v1009 = vunpack.c.l.b16 %v961
        %v1010 = vunpack.c.l.b16 %v962
        %v1011 = vunpack.c.l.b16 %v963
        %v1012 = vunpack.c.l.b16 %v964
        %v1013 = vunpack.c.l.b16 %v965
        %v1014 = vunpack.c.l.b16 %v966
        %v1015 = vunpack.c.l.b16 %v967
        %v1016 = vunpack.c.l.b16 %v968
        %v1017 = vunpack.c.l.b16 %v969
        %v1018 = vunpack.c.l.b16 %v970
        %v1019 = vunpack.c.l.b16 %v971
        %v1020 = vunpack.c.l.b16 %v972
        %v1021 = vunpack.c.l.b16 %v973
        %v1022 = vpack.c.b16 %v1007, %v1006
        %v1023 = vpack.c.b16 %v1009, %v1008
        %v1024 = vpack.c.b16 %v1011, %v1010
        %v1025 = vpack.c.b16 %v1013, %v1012
        %v1026 = vpack.c.b16 %v1015, %v1014
        %v1027 = vpack.c.b16 %v1017, %v1016
        %v1028 = vpack.c.b16 %v1019, %v1018
        %v1029 = vpack.c.b16 %v1021, %v1020
        %1038 = vmatprep.subr.bf16.mxu0 0
        %1039 = vmatpush1.bf16.msra.mxu0 %v1029
        %1040 = vmatprep.subr.bf16.mxu0 0
        %1041 = vmatpush1.bf16.msra.mxu0 %v1028
        %1042 = vmatprep.subr.bf16.mxu0 0
        %1043 = vmatpush1.bf16.msra.mxu0 %v1027
        %1044 = vmatprep.subr.bf16.mxu0 0
        %1045 = vmatpush1.bf16.msra.mxu0 %v1026
        %1046 = vmatprep.subr.bf16.mxu0 0
        %1047 = vmatpush1.bf16.msra.mxu0 %v1025
        %1048 = vmatprep.subr.bf16.mxu0 0
        %1049 = vmatpush1.bf16.msra.mxu0 %v1024
        %1050 = vmatprep.subr.bf16.mxu0 0
        %1051 = vmatpush1.bf16.msra.mxu0 %v1023
        %1052 = vmatprep.subr.bf16.mxu0 0
        %1053 = vmatpush1.bf16.msra.mxu0 %v1022
        %1054 = vmatprep.subr.bf16.mxu0 0
        %1055 = vmatpush2.bf16.msra.mxu0 0
        %1056 = vmatprep.subr.bf16.mxu0 0
        %1057 = vmatpush2.bf16.msra.mxu0 0
        %1058 = vmatprep.subr.bf16.mxu0 0
        %1059 = vmatpush2.bf16.msra.mxu0 0
        %1060 = vmatprep.subr.bf16.mxu0 0
        %1061 = vmatpush2.bf16.msra.mxu0 0
        %1062 = vmatprep.subr.bf16.mxu0 0
        %1063 = vmatpush2.bf16.msra.mxu0 0
        %1064 = vmatprep.subr.bf16.mxu0 0
        %1065 = vmatpush2.bf16.msra.mxu0 0
        %1066 = vmatprep.subr.bf16.mxu0 0
        %1067 = vmatpush2.bf16.msra.mxu0 0
        %1068 = vmatprep.subr.bf16.mxu0 0
        %1069 = vmatpush2.bf16.msra.mxu0 0
        %1070 = vmatprep.mubr.bf16.mxu0 0
        %1071 = vmatmul.mubr.bf16.gmra.mxu0 %v982
        %v1072 = vpop.f32.mrf.mxu0
        %v1073 = vadd.f32 0.0, %v1072
        %v1074 = vpop.f32.mrf.mxu0
        %v1075 = vpop.f32.mrf.mxu0
        %v1076 = vadd.f32 0.0, %v1075
        %v1077 = vpop.f32.mrf.mxu0
        %1078 = vmatprep.mubr.bf16.mxu0 0
        %1079 = vmatmul.mubr.bf16.gmra.mxu0 %v983
        %v1080 = vpop.f32.mrf.mxu0
        %v1081 = vadd.f32 0.0, %v1080
        %v1082 = vpop.f32.mrf.mxu0
        %v1083 = vpop.f32.mrf.mxu0
        %v1084 = vadd.f32 0.0, %v1083
        %v1085 = vpop.f32.mrf.mxu0
        %1086 = vmatprep.mubr.bf16.mxu0 0
        %1087 = vmatmul.mubr.bf16.gmra.mxu0 %v984
        %v1088 = vpop.f32.mrf.mxu0
        %v1089 = vadd.f32 0.0, %v1088
        %v1090 = vpop.f32.mrf.mxu0
        %v1091 = vpop.f32.mrf.mxu0
        %v1092 = vadd.f32 0.0, %v1091
        %v1093 = vpop.f32.mrf.mxu0
        %1094 = vmatprep.mubr.bf16.mxu0 0
        %1095 = vmatmul.mubr.bf16.gmra.mxu0 %v985
        %v1096 = vpop.f32.mrf.mxu0
        %v1097 = vadd.f32 0.0, %v1096
        %v1098 = vpop.f32.mrf.mxu0
        %v1099 = vpop.f32.mrf.mxu0
        %v1100 = vadd.f32 0.0, %v1099
        %v1101 = vpop.f32.mrf.mxu0
        %1102 = vdwg.mxu0
        %v1103 = vadd.f32 %v949, %v1073
        %v1104 = vadd.f32 %v950, %v1076
        %v1105 = vadd.f32 %v951, %v1081
        %v1106 = vadd.f32 %v952, %v1084
        %v1107 = vadd.f32 %v953, %v1089
        %v1108 = vadd.f32 %v954, %v1092
        %v1109 = vadd.f32 %v955, %v1097
        %v1110 = vadd.f32 %v956, %v1100
        %1111 = vst [vmem:[#allocation2] sm:$0xff] %v1103
        %1112 = vst [vmem:[#allocation2 + $0x8] sm:$0xff] %v1104
        %1113 = vst [vmem:[#allocation2 + $0x10] sm:$0xff] %v1105
        %1114 = vst [vmem:[#allocation2 + $0x18] sm:$0xff] %v1106
        %1115 = vst [vmem:[#allocation2 + $0x20] sm:$0xff] %v1107
        %1116 = vst [vmem:[#allocation2 + $0x28] sm:$0xff] %v1108
        %1117 = vst [vmem:[#allocation2 + $0x30] sm:$0xff] %v1109
        %1118 = vst [vmem:[#allocation2 + $0x38] sm:$0xff] %v1110
        %v1119 = vld [vmem:[#allocation2] sm:$0xff]
        %v1120 = vld [vmem:[#allocation2 + $0x8] sm:$0xff]
        %v1121 = vld [vmem:[#allocation2 + $0x10] sm:$0xff]
        %v1122 = vld [vmem:[#allocation2 + $0x18] sm:$0xff]
        %v1123 = vld [vmem:[#allocation2 + $0x20] sm:$0xff]
        %v1124 = vld [vmem:[#allocation2 + $0x28] sm:$0xff]
        %v1125 = vld [vmem:[#allocation2 + $0x30] sm:$0xff]
        %v1126 = vld [vmem:[#allocation2 + $0x38] sm:$0xff]
        %s1127 = scalar_lea.vmem [#allocation3], 256
        %v1128 = vld [vmem:[%s1127] sm:$0xf]
        %v1129 = vld [vmem:[%s1127 + $0x4] sm:$0xf]
        %v1130 = vld [vmem:[%s1127 + $0x8] sm:$0xf]
        %v1131 = vld [vmem:[%s1127 + $0xc] sm:$0xf]
        %v1132 = vld [vmem:[%s1127 + $0x10] sm:$0xf]
        %v1133 = vld [vmem:[%s1127 + $0x14] sm:$0xf]
        %v1134 = vld [vmem:[%s1127 + $0x18] sm:$0xf]
        %v1135 = vld [vmem:[%s1127 + $0x1c] sm:$0xf]
        %v1136 = vld [vmem:[%s1127 + $0x20] sm:$0xf]
        %v1137 = vld [vmem:[%s1127 + $0x24] sm:$0xf]
        %v1138 = vld [vmem:[%s1127 + $0x28] sm:$0xf]
        %v1139 = vld [vmem:[%s1127 + $0x2c] sm:$0xf]
        %v1140 = vld [vmem:[%s1127 + $0x30] sm:$0xf]
        %v1141 = vld [vmem:[%s1127 + $0x34] sm:$0xf]
        %v1142 = vld [vmem:[%s1127 + $0x38] sm:$0xf]
        %v1143 = vld [vmem:[%s1127 + $0x3c] sm:$0xf]
        %v1144 = vunpack.c.l.b16 %v934
        %v1145 = vpack.c.b16 %v976, %v975
        %v1146 = vpack.c.b16 %v978, %v977
        %v1147 = vpack.c.b16 %v980, %v979
        %v1148 = vpack.c.b16 %v1144, %v981
        %v1169 = vunpack.c.l.b16 %v1128
        %v1170 = vunpack.c.l.b16 %v1129
        %v1171 = vunpack.c.l.b16 %v1130
        %v1172 = vunpack.c.l.b16 %v1131
        %v1173 = vunpack.c.l.b16 %v1132
        %v1174 = vunpack.c.l.b16 %v1133
        %v1175 = vunpack.c.l.b16 %v1134
        %v1176 = vunpack.c.l.b16 %v1135
        %v1177 = vunpack.c.l.b16 %v1136
        %v1178 = vunpack.c.l.b16 %v1137
        %v1179 = vunpack.c.l.b16 %v1138
        %v1180 = vunpack.c.l.b16 %v1139
        %v1181 = vunpack.c.l.b16 %v1140
        %v1182 = vunpack.c.l.b16 %v1141
        %v1183 = vunpack.c.l.b16 %v1142
        %v1184 = vunpack.c.l.b16 %v1143
        %v1185 = vpack.c.b16 %v1170, %v1169
        %v1186 = vpack.c.b16 %v1172, %v1171
        %v1187 = vpack.c.b16 %v1174, %v1173
        %v1188 = vpack.c.b16 %v1176, %v1175
        %v1189 = vpack.c.b16 %v1178, %v1177
        %v1190 = vpack.c.b16 %v1180, %v1179
        %v1191 = vpack.c.b16 %v1182, %v1181
        %v1192 = vpack.c.b16 %v1184, %v1183
        %1201 = vmatprep.subr.bf16.mxu0 0
        %1202 = vmatpush1.bf16.msra.mxu0 %v1192
        %1203 = vmatprep.subr.bf16.mxu0 0
        %1204 = vmatpush1.bf16.msra.mxu0 %v1191
        %1205 = vmatprep.subr.bf16.mxu0 0
        %1206 = vmatpush1.bf16.msra.mxu0 %v1190
        %1207 = vmatprep.subr.bf16.mxu0 0
        %1208 = vmatpush1.bf16.msra.mxu0 %v1189
        %1209 = vmatprep.subr.bf16.mxu0 0
        %1210 = vmatpush1.bf16.msra.mxu0 %v1188
        %1211 = vmatprep.subr.bf16.mxu0 0
        %1212 = vmatpush1.bf16.msra.mxu0 %v1187
        %1213 = vmatprep.subr.bf16.mxu0 0
        %1214 = vmatpush1.bf16.msra.mxu0 %v1186
        %1215 = vmatprep.subr.bf16.mxu0 0
        %1216 = vmatpush1.bf16.msra.mxu0 %v1185
        %1217 = vmatprep.subr.bf16.mxu0 0
        %1218 = vmatpush2.bf16.msra.mxu0 0
        %1219 = vmatprep.subr.bf16.mxu0 0
        %1220 = vmatpush2.bf16.msra.mxu0 0
        %1221 = vmatprep.subr.bf16.mxu0 0
        %1222 = vmatpush2.bf16.msra.mxu0 0
        %1223 = vmatprep.subr.bf16.mxu0 0
        %1224 = vmatpush2.bf16.msra.mxu0 0
        %1225 = vmatprep.subr.bf16.mxu0 0
        %1226 = vmatpush2.bf16.msra.mxu0 0
        %1227 = vmatprep.subr.bf16.mxu0 0
        %1228 = vmatpush2.bf16.msra.mxu0 0
        %1229 = vmatprep.subr.bf16.mxu0 0
        %1230 = vmatpush2.bf16.msra.mxu0 0
        %1231 = vmatprep.subr.bf16.mxu0 0
        %1232 = vmatpush2.bf16.msra.mxu0 0
        %1233 = vmatprep.mubr.bf16.mxu0 0
        %1234 = vmatmul.mubr.bf16.gmra.mxu0 %v1145
        %v1235 = vpop.f32.mrf.mxu0
        %v1236 = vadd.f32 0.0, %v1235
        %v1237 = vpop.f32.mrf.mxu0
        %v1238 = vpop.f32.mrf.mxu0
        %v1239 = vadd.f32 0.0, %v1238
        %v1240 = vpop.f32.mrf.mxu0
        %1241 = vmatprep.mubr.bf16.mxu0 0
        %1242 = vmatmul.mubr.bf16.gmra.mxu0 %v1146
        %v1243 = vpop.f32.mrf.mxu0
        %v1244 = vadd.f32 0.0, %v1243
        %v1245 = vpop.f32.mrf.mxu0
        %v1246 = vpop.f32.mrf.mxu0
        %v1247 = vadd.f32 0.0, %v1246
        %v1248 = vpop.f32.mrf.mxu0
        %1249 = vmatprep.mubr.bf16.mxu0 0
        %1250 = vmatmul.mubr.bf16.gmra.mxu0 %v1147
        %v1251 = vpop.f32.mrf.mxu0
        %v1252 = vadd.f32 0.0, %v1251
        %v1253 = vpop.f32.mrf.mxu0
        %v1254 = vpop.f32.mrf.mxu0
        %v1255 = vadd.f32 0.0, %v1254
        %v1256 = vpop.f32.mrf.mxu0
        %1257 = vmatprep.mubr.bf16.mxu0 0
        %1258 = vmatmul.mubr.bf16.gmra.mxu0 %v1148
        %v1259 = vpop.f32.mrf.mxu0
        %v1260 = vadd.f32 0.0, %v1259
        %v1261 = vpop.f32.mrf.mxu0
        %v1262 = vpop.f32.mrf.mxu0
        %v1263 = vadd.f32 0.0, %v1262
        %v1264 = vpop.f32.mrf.mxu0
        %1265 = vdwg.mxu0
        %v1266 = vadd.f32 %v1119, %v1236
        %v1267 = vadd.f32 %v1120, %v1239
        %v1268 = vadd.f32 %v1121, %v1244
        %v1269 = vadd.f32 %v1122, %v1247
        %v1270 = vadd.f32 %v1123, %v1252
        %v1271 = vadd.f32 %v1124, %v1255
        %v1272 = vadd.f32 %v1125, %v1260
        %v1273 = vadd.f32 %v1126, %v1263
        %1274 = vst [vmem:[#allocation2] sm:$0xff] %v1266
        %1275 = vst [vmem:[#allocation2 + $0x8] sm:$0xff] %v1267
        %1276 = vst [vmem:[#allocation2 + $0x10] sm:$0xff] %v1268
        %1277 = vst [vmem:[#allocation2 + $0x18] sm:$0xff] %v1269
        %1278 = vst [vmem:[#allocation2 + $0x20] sm:$0xff] %v1270
        %1279 = vst [vmem:[#allocation2 + $0x28] sm:$0xff] %v1271
        %1280 = vst [vmem:[#allocation2 + $0x30] sm:$0xff] %v1272
        %1281 = vst [vmem:[#allocation2 + $0x38] sm:$0xff] %v1273
        %v1282 = vld [vmem:[#allocation2] sm:$0xff]
        %v1283 = vld [vmem:[#allocation2 + $0x8] sm:$0xff]
        %v1284 = vld [vmem:[#allocation2 + $0x10] sm:$0xff]
        %v1285 = vld [vmem:[#allocation2 + $0x18] sm:$0xff]
        %v1286 = vld [vmem:[#allocation2 + $0x20] sm:$0xff]
        %v1287 = vld [vmem:[#allocation2 + $0x28] sm:$0xff]
        %v1288 = vld [vmem:[#allocation2 + $0x30] sm:$0xff]
        %v1289 = vld [vmem:[#allocation2 + $0x38] sm:$0xff]
        %s1290 = scalar_lea.vmem [#allocation3], 448
        %v1291 = vld [vmem:[%s1290] sm:$0xf]
        %v1292 = vld [vmem:[%s1290 + $0x4] sm:$0xf]
        %v1293 = vld [vmem:[%s1290 + $0x8] sm:$0xf]
        %v1294 = vld [vmem:[%s1290 + $0xc] sm:$0xf]
        %v1295 = vld [vmem:[%s1290 + $0x10] sm:$0xf]
        %v1296 = vld [vmem:[%s1290 + $0x14] sm:$0xf]
        %v1297 = vld [vmem:[%s1290 + $0x18] sm:$0xf]
        %v1298 = vld [vmem:[%s1290 + $0x1c] sm:$0xf]
        %v1299 = vld [vmem:[%s1290 + $0x20] sm:$0xf]
        %v1300 = vld [vmem:[%s1290 + $0x24] sm:$0xf]
        %v1301 = vld [vmem:[%s1290 + $0x28] sm:$0xf]
        %v1302 = vld [vmem:[%s1290 + $0x2c] sm:$0xf]
        %v1303 = vld [vmem:[%s1290 + $0x30] sm:$0xf]
        %v1304 = vld [vmem:[%s1290 + $0x34] sm:$0xf]
        %v1305 = vld [vmem:[%s1290 + $0x38] sm:$0xf]
        %v1306 = vld [vmem:[%s1290 + $0x3c] sm:$0xf]
        %v1307 = vunpack.c.l.b16 %v948
        %v1308 = vpack.c.b16 %v1307, %v1144
        %v1326 = vunpack.c.l.b16 %v1291
        %v1327 = vunpack.c.l.b16 %v1292
        %v1328 = vunpack.c.l.b16 %v1293
        %v1329 = vunpack.c.l.b16 %v1294
        %v1330 = vunpack.c.l.b16 %v1295
        %v1331 = vunpack.c.l.b16 %v1296
        %v1332 = vunpack.c.l.b16 %v1297
        %v1333 = vunpack.c.l.b16 %v1298
        %v1334 = vunpack.c.l.b16 %v1299
        %v1335 = vunpack.c.l.b16 %v1300
        %v1336 = vunpack.c.l.b16 %v1301
        %v1337 = vunpack.c.l.b16 %v1302
        %v1338 = vunpack.c.l.b16 %v1303
        %v1339 = vunpack.c.l.b16 %v1304
        %v1340 = vunpack.c.l.b16 %v1305
        %v1341 = vunpack.c.l.b16 %v1306
        %v1342 = vpack.c.b16 %v1327, %v1326
        %v1343 = vpack.c.b16 %v1329, %v1328
        %v1344 = vpack.c.b16 %v1331, %v1330
        %v1345 = vpack.c.b16 %v1333, %v1332
        %v1346 = vpack.c.b16 %v1335, %v1334
        %v1347 = vpack.c.b16 %v1337, %v1336
        %v1348 = vpack.c.b16 %v1339, %v1338
        %v1349 = vpack.c.b16 %v1341, %v1340
        %1358 = vmatprep.subr.bf16.mxu0 0
        %1359 = vmatpush1.bf16.msra.mxu0 %v1349
        %1360 = vmatprep.subr.bf16.mxu0 0
        %1361 = vmatpush1.bf16.msra.mxu0 %v1348
        %1362 = vmatprep.subr.bf16.mxu0 0
        %1363 = vmatpush1.bf16.msra.mxu0 %v1347
        %1364 = vmatprep.subr.bf16.mxu0 0
        %1365 = vmatpush1.bf16.msra.mxu0 %v1346
        %1366 = vmatprep.subr.bf16.mxu0 0
        %1367 = vmatpush1.bf16.msra.mxu0 %v1345
        %1368 = vmatprep.subr.bf16.mxu0 0
        %1369 = vmatpush1.bf16.msra.mxu0 %v1344
        %1370 = vmatprep.subr.bf16.mxu0 0
        %1371 = vmatpush1.bf16.msra.mxu0 %v1343
        %1372 = vmatprep.subr.bf16.mxu0 0
        %1373 = vmatpush1.bf16.msra.mxu0 %v1342
        %1374 = vmatprep.subr.bf16.mxu0 0
        %1375 = vmatpush2.bf16.msra.mxu0 0
        %1376 = vmatprep.subr.bf16.mxu0 0
        %1377 = vmatpush2.bf16.msra.mxu0 0
        %1378 = vmatprep.subr.bf16.mxu0 0
        %1379 = vmatpush2.bf16.msra.mxu0 0
        %1380 = vmatprep.subr.bf16.mxu0 0
        %1381 = vmatpush2.bf16.msra.mxu0 0
        %1382 = vmatprep.subr.bf16.mxu0 0
        %1383 = vmatpush2.bf16.msra.mxu0 0
        %1384 = vmatprep.subr.bf16.mxu0 0
        %1385 = vmatpush2.bf16.msra.mxu0 0
        %1386 = vmatprep.subr.bf16.mxu0 0
        %1387 = vmatpush2.bf16.msra.mxu0 0
        %1388 = vmatprep.subr.bf16.mxu0 0
        %1389 = vmatpush2.bf16.msra.mxu0 0
        %1390 = vmatprep.mubr.bf16.mxu0 0
        %1391 = vmatmul.mubr.bf16.gmra.mxu0 %v983
        %v1392 = vpop.f32.mrf.mxu0
        %v1393 = vadd.f32 0.0, %v1392
        %v1394 = vpop.f32.mrf.mxu0
        %v1395 = vpop.f32.mrf.mxu0
        %v1396 = vadd.f32 0.0, %v1395
        %v1397 = vpop.f32.mrf.mxu0
        %1398 = vmatprep.mubr.bf16.mxu0 0
        %1399 = vmatmul.mubr.bf16.gmra.mxu0 %v984
        %v1400 = vpop.f32.mrf.mxu0
        %v1401 = vadd.f32 0.0, %v1400
        %v1402 = vpop.f32.mrf.mxu0
        %v1403 = vpop.f32.mrf.mxu0
        %v1404 = vadd.f32 0.0, %v1403
        %v1405 = vpop.f32.mrf.mxu0
        %1406 = vmatprep.mubr.bf16.mxu0 0
        %1407 = vmatmul.mubr.bf16.gmra.mxu0 %v985
        %v1408 = vpop.f32.mrf.mxu0
        %v1409 = vadd.f32 0.0, %v1408
        %v1410 = vpop.f32.mrf.mxu0
        %v1411 = vpop.f32.mrf.mxu0
        %v1412 = vadd.f32 0.0, %v1411
        %v1413 = vpop.f32.mrf.mxu0
        %1414 = vmatprep.mubr.bf16.mxu0 0
        %1415 = vmatmul.mubr.bf16.gmra.mxu0 %v1308
        %v1416 = vpop.f32.mrf.mxu0
        %v1417 = vadd.f32 0.0, %v1416
        %v1418 = vpop.f32.mrf.mxu0
        %v1419 = vpop.f32.mrf.mxu0
        %v1420 = vadd.f32 0.0, %v1419
        %v1421 = vpop.f32.mrf.mxu0
        %1422 = vdwg.mxu0
        %v1423 = vadd.f32 %v1282, %v1393
        %v1424 = vadd.f32 %v1283, %v1396
        %v1425 = vadd.f32 %v1284, %v1401
        %v1426 = vadd.f32 %v1285, %v1404
        %v1427 = vadd.f32 %v1286, %v1409
        %v1428 = vadd.f32 %v1287, %v1412
        %v1429 = vadd.f32 %v1288, %v1417
        %v1430 = vadd.f32 %v1289, %v1420
        %1431 = vst [vmem:[#allocation2] sm:$0xff] %v1423
        %1432 = vst [vmem:[#allocation2 + $0x8] sm:$0xff] %v1424
        %1433 = vst [vmem:[#allocation2 + $0x10] sm:$0xff] %v1425
        %1434 = vst [vmem:[#allocation2 + $0x18] sm:$0xff] %v1426
        %1435 = vst [vmem:[#allocation2 + $0x20] sm:$0xff] %v1427
        %1436 = vst [vmem:[#allocation2 + $0x28] sm:$0xff] %v1428
        %1437 = vst [vmem:[#allocation2 + $0x30] sm:$0xff] %v1429
        %1438 = vst [vmem:[#allocation2 + $0x38] sm:$0xff] %v1430
        %v1439 = vld [vmem:[%s253] sm:$0xe]
        %v1440 = vld [vmem:[%s253 + $0x4] sm:$0x1]
        %v1441 = vld [vmem:[%s253 + $0x8] sm:$0xe]
        %v1442 = vld [vmem:[%s253 + $0xc] sm:$0x1]
        %v1443 = vld [vmem:[%s253 + $0x10] sm:$0xe]
        %v1444 = vld [vmem:[%s253 + $0x14] sm:$0x1]
        %v1445 = vld [vmem:[%s253 + $0x18] sm:$0xe]
        %v1446 = vld [vmem:[%s253 + $0x1c] sm:$0x1]
        %v1447 = vld [vmem:[%s253 + $0x20] sm:$0xe]
        %v1448 = vld [vmem:[%s253 + $0x24] sm:$0x1]
        %v1449 = vld [vmem:[%s253 + $0x28] sm:$0xe]
        %v1450 = vld [vmem:[%s253 + $0x2c] sm:$0x1]
        %v1451 = vld [vmem:[%s253 + $0x30] sm:$0xe]
        %v1452 = vld [vmem:[%s253 + $0x34] sm:$0x1]
        %v1453 = vld [vmem:[%s253 + $0x38] sm:$0xe]
        %v1454 = vld [vmem:[%s253 + $0x3c] sm:$0x1]
        %v1455 = vld [vmem:[%s253 + $0x40] sm:$0xe]
        %v1456 = vld [vmem:[%s253 + $0x44] sm:$0x1]
        %v1457 = vld [vmem:[%s253 + $0x48] sm:$0xe]
        %v1458 = vld [vmem:[%s253 + $0x4c] sm:$0x1]
        %vm1479 = vcmask 1042432
        %vm1480 = vcmask 1046532
        %vm1481 = vmor %vm1479, %vm1480
        %v1482 = vrot.slane %v1439, 5
        %v1483 = vrot.slane %v1482, 4
        %v1484 = vrot.slane %v1440, 5
        %v1485 = vsel %vm1481, %v1483, %v1484
        %v1486 = vrot.slane %v1441, 5
        %v1487 = vrot.slane %v1486, 4
        %v1488 = vrot.slane %v1442, 5
        %v1489 = vsel %vm1481, %v1487, %v1488
        %v1490 = vrot.slane %v1443, 5
        %v1491 = vrot.slane %v1490, 4
        %v1492 = vrot.slane %v1444, 5
        %v1493 = vsel %vm1481, %v1491, %v1492
        %v1494 = vrot.slane %v1445, 5
        %v1495 = vrot.slane %v1494, 4
        %v1496 = vrot.slane %v1446, 5
        %v1497 = vsel %vm1481, %v1495, %v1496
        %v1498 = vrot.slane %v1447, 5
        %v1499 = vrot.slane %v1498, 4
        %v1500 = vrot.slane %v1448, 5
        %v1501 = vsel %vm1481, %v1499, %v1500
        %v1502 = vrot.slane %v1449, 5
        %v1503 = vrot.slane %v1502, 4
        %v1504 = vrot.slane %v1450, 5
        %v1505 = vsel %vm1481, %v1503, %v1504
        %v1506 = vrot.slane %v1451, 5
        %v1507 = vrot.slane %v1506, 4
        %v1508 = vrot.slane %v1452, 5
        %v1509 = vsel %vm1481, %v1507, %v1508
        %v1510 = vrot.slane %v1453, 5
        %v1511 = vrot.slane %v1510, 4
        %v1512 = vrot.slane %v1454, 5
        %v1513 = vsel %vm1481, %v1511, %v1512
        %v1514 = vrot.slane %v1455, 5
        %v1515 = vrot.slane %v1514, 4
        %v1516 = vrot.slane %v1456, 5
        %v1517 = vsel %vm1481, %v1515, %v1516
        %v1518 = vrot.slane %v1457, 5
        %v1519 = vrot.slane %v1518, 4
        %v1520 = vrot.slane %v1458, 5
        %v1521 = vsel %vm1481, %v1519, %v1520
        %v1522 = vld [vmem:[#allocation2] sm:$0xff]
        %v1523 = vld [vmem:[#allocation2 + $0x8] sm:$0xff]
        %v1524 = vld [vmem:[#allocation2 + $0x10] sm:$0xff]
        %v1525 = vld [vmem:[#allocation2 + $0x18] sm:$0xff]
        %v1526 = vld [vmem:[#allocation2 + $0x20] sm:$0xff]
        %v1527 = vld [vmem:[#allocation2 + $0x28] sm:$0xff]
        %v1528 = vld [vmem:[#allocation2 + $0x30] sm:$0xff]
        %v1529 = vld [vmem:[#allocation2 + $0x38] sm:$0xff]
        %s1530 = scalar_lea.vmem [#allocation3], 128
        %v1531 = vld [vmem:[%s1530] sm:$0xf]
        %v1532 = vld [vmem:[%s1530 + $0x4] sm:$0xf]
        %v1533 = vld [vmem:[%s1530 + $0x8] sm:$0xf]
        %v1534 = vld [vmem:[%s1530 + $0xc] sm:$0xf]
        %v1535 = vld [vmem:[%s1530 + $0x10] sm:$0xf]
        %v1536 = vld [vmem:[%s1530 + $0x14] sm:$0xf]
        %v1537 = vld [vmem:[%s1530 + $0x18] sm:$0xf]
        %v1538 = vld [vmem:[%s1530 + $0x1c] sm:$0xf]
        %v1539 = vld [vmem:[%s1530 + $0x20] sm:$0xf]
        %v1540 = vld [vmem:[%s1530 + $0x24] sm:$0xf]
        %v1541 = vld [vmem:[%s1530 + $0x28] sm:$0xf]
        %v1542 = vld [vmem:[%s1530 + $0x2c] sm:$0xf]
        %v1543 = vld [vmem:[%s1530 + $0x30] sm:$0xf]
        %v1544 = vld [vmem:[%s1530 + $0x34] sm:$0xf]
        %v1545 = vld [vmem:[%s1530 + $0x38] sm:$0xf]
        %v1546 = vld [vmem:[%s1530 + $0x3c] sm:$0xf]
        %v1547 = vunpack.c.l.b16 %v1485
        %v1548 = vunpack.c.l.b16 %v1489
        %v1549 = vunpack.c.l.b16 %v1493
        %v1550 = vunpack.c.l.b16 %v1497
        %v1551 = vunpack.c.l.b16 %v1501
        %v1552 = vunpack.c.l.b16 %v1505
        %v1553 = vunpack.c.l.b16 %v1509
        %v1554 = vunpack.c.l.b16 %v1513
        %v1555 = vpack.c.b16 %v1548, %v1547
        %v1556 = vpack.c.b16 %v1550, %v1549
        %v1557 = vpack.c.b16 %v1552, %v1551
        %v1558 = vpack.c.b16 %v1554, %v1553
        %v1579 = vunpack.c.l.b16 %v1531
        %v1580 = vunpack.c.l.b16 %v1532
        %v1581 = vunpack.c.l.b16 %v1533
        %v1582 = vunpack.c.l.b16 %v1534
        %v1583 = vunpack.c.l.b16 %v1535
        %v1584 = vunpack.c.l.b16 %v1536
        %v1585 = vunpack.c.l.b16 %v1537
        %v1586 = vunpack.c.l.b16 %v1538
        %v1587 = vunpack.c.l.b16 %v1539
        %v1588 = vunpack.c.l.b16 %v1540
        %v1589 = vunpack.c.l.b16 %v1541
        %v1590 = vunpack.c.l.b16 %v1542
        %v1591 = vunpack.c.l.b16 %v1543
        %v1592 = vunpack.c.l.b16 %v1544
        %v1593 = vunpack.c.l.b16 %v1545
        %v1594 = vunpack.c.l.b16 %v1546
        %v1595 = vpack.c.b16 %v1580, %v1579
        %v1596 = vpack.c.b16 %v1582, %v1581
        %v1597 = vpack.c.b16 %v1584, %v1583
        %v1598 = vpack.c.b16 %v1586, %v1585
        %v1599 = vpack.c.b16 %v1588, %v1587
        %v1600 = vpack.c.b16 %v1590, %v1589
        %v1601 = vpack.c.b16 %v1592, %v1591
        %v1602 = vpack.c.b16 %v1594, %v1593
        %1611 = vmatprep.subr.bf16.mxu0 0
        %1612 = vmatpush1.bf16.msra.mxu0 %v1602
        %1613 = vmatprep.subr.bf16.mxu0 0
        %1614 = vmatpush1.bf16.msra.mxu0 %v1601
        %1615 = vmatprep.subr.bf16.mxu0 0
        %1616 = vmatpush1.bf16.msra.mxu0 %v1600
        %1617 = vmatprep.subr.bf16.mxu0 0
        %1618 = vmatpush1.bf16.msra.mxu0 %v1599
        %1619 = vmatprep.subr.bf16.mxu0 0
        %1620 = vmatpush1.bf16.msra.mxu0 %v1598
        %1621 = vmatprep.subr.bf16.mxu0 0
        %1622 = vmatpush1.bf16.msra.mxu0 %v1597
        %1623 = vmatprep.subr.bf16.mxu0 0
        %1624 = vmatpush1.bf16.msra.mxu0 %v1596
        %1625 = vmatprep.subr.bf16.mxu0 0
        %1626 = vmatpush1.bf16.msra.mxu0 %v1595
        %1627 = vmatprep.subr.bf16.mxu0 0
        %1628 = vmatpush2.bf16.msra.mxu0 0
        %1629 = vmatprep.subr.bf16.mxu0 0
        %1630 = vmatpush2.bf16.msra.mxu0 0
        %1631 = vmatprep.subr.bf16.mxu0 0
        %1632 = vmatpush2.bf16.msra.mxu0 0
        %1633 = vmatprep.subr.bf16.mxu0 0
        %1634 = vmatpush2.bf16.msra.mxu0 0
        %1635 = vmatprep.subr.bf16.mxu0 0
        %1636 = vmatpush2.bf16.msra.mxu0 0
        %1637 = vmatprep.subr.bf16.mxu0 0
        %1638 = vmatpush2.bf16.msra.mxu0 0
        %1639 = vmatprep.subr.bf16.mxu0 0
        %1640 = vmatpush2.bf16.msra.mxu0 0
        %1641 = vmatprep.subr.bf16.mxu0 0
        %1642 = vmatpush2.bf16.msra.mxu0 0
        %1643 = vmatprep.mubr.bf16.mxu0 0
        %1644 = vmatmul.mubr.bf16.gmra.mxu0 %v1555
        %v1645 = vpop.f32.mrf.mxu0
        %v1646 = vadd.f32 0.0, %v1645
        %v1647 = vpop.f32.mrf.mxu0
        %v1648 = vpop.f32.mrf.mxu0
        %v1649 = vadd.f32 0.0, %v1648
        %v1650 = vpop.f32.mrf.mxu0
        %1651 = vmatprep.mubr.bf16.mxu0 0
        %1652 = vmatmul.mubr.bf16.gmra.mxu0 %v1556
        %v1653 = vpop.f32.mrf.mxu0
        %v1654 = vadd.f32 0.0, %v1653
        %v1655 = vpop.f32.mrf.mxu0
        %v1656 = vpop.f32.mrf.mxu0
        %v1657 = vadd.f32 0.0, %v1656
        %v1658 = vpop.f32.mrf.mxu0
        %1659 = vmatprep.mubr.bf16.mxu0 0
        %1660 = vmatmul.mubr.bf16.gmra.mxu0 %v1557
        %v1661 = vpop.f32.mrf.mxu0
        %v1662 = vadd.f32 0.0, %v1661
        %v1663 = vpop.f32.mrf.mxu0
        %v1664 = vpop.f32.mrf.mxu0
        %v1665 = vadd.f32 0.0, %v1664
        %v1666 = vpop.f32.mrf.mxu0
        %1667 = vmatprep.mubr.bf16.mxu0 0
        %1668 = vmatmul.mubr.bf16.gmra.mxu0 %v1558
        %v1669 = vpop.f32.mrf.mxu0
        %v1670 = vadd.f32 0.0, %v1669
        %v1671 = vpop.f32.mrf.mxu0
        %v1672 = vpop.f32.mrf.mxu0
        %v1673 = vadd.f32 0.0, %v1672
        %v1674 = vpop.f32.mrf.mxu0
        %1675 = vdwg.mxu0
        %v1676 = vadd.f32 %v1522, %v1646
        %v1677 = vadd.f32 %v1523, %v1649
        %v1678 = vadd.f32 %v1524, %v1654
        %v1679 = vadd.f32 %v1525, %v1657
        %v1680 = vadd.f32 %v1526, %v1662
        %v1681 = vadd.f32 %v1527, %v1665
        %v1682 = vadd.f32 %v1528, %v1670
        %v1683 = vadd.f32 %v1529, %v1673
        %1684 = vst [vmem:[#allocation2] sm:$0xff] %v1676
        %1685 = vst [vmem:[#allocation2 + $0x8] sm:$0xff] %v1677
        %1686 = vst [vmem:[#allocation2 + $0x10] sm:$0xff] %v1678
        %1687 = vst [vmem:[#allocation2 + $0x18] sm:$0xff] %v1679
        %1688 = vst [vmem:[#allocation2 + $0x20] sm:$0xff] %v1680
        %1689 = vst [vmem:[#allocation2 + $0x28] sm:$0xff] %v1681
        %1690 = vst [vmem:[#allocation2 + $0x30] sm:$0xff] %v1682
        %1691 = vst [vmem:[#allocation2 + $0x38] sm:$0xff] %v1683
        %v1692 = vld [vmem:[#allocation2] sm:$0xff]
        %v1693 = vld [vmem:[#allocation2 + $0x8] sm:$0xff]
        %v1694 = vld [vmem:[#allocation2 + $0x10] sm:$0xff]
        %v1695 = vld [vmem:[#allocation2 + $0x18] sm:$0xff]
        %v1696 = vld [vmem:[#allocation2 + $0x20] sm:$0xff]
        %v1697 = vld [vmem:[#allocation2 + $0x28] sm:$0xff]
        %v1698 = vld [vmem:[#allocation2 + $0x30] sm:$0xff]
        %v1699 = vld [vmem:[#allocation2 + $0x38] sm:$0xff]
        %s1700 = scalar_lea.vmem [#allocation3], 320
        %v1701 = vld [vmem:[%s1700] sm:$0xf]
        %v1702 = vld [vmem:[%s1700 + $0x4] sm:$0xf]
        %v1703 = vld [vmem:[%s1700 + $0x8] sm:$0xf]
        %v1704 = vld [vmem:[%s1700 + $0xc] sm:$0xf]
        %v1705 = vld [vmem:[%s1700 + $0x10] sm:$0xf]
        %v1706 = vld [vmem:[%s1700 + $0x14] sm:$0xf]
        %v1707 = vld [vmem:[%s1700 + $0x18] sm:$0xf]
        %v1708 = vld [vmem:[%s1700 + $0x1c] sm:$0xf]
        %v1709 = vld [vmem:[%s1700 + $0x20] sm:$0xf]
        %v1710 = vld [vmem:[%s1700 + $0x24] sm:$0xf]
        %v1711 = vld [vmem:[%s1700 + $0x28] sm:$0xf]
        %v1712 = vld [vmem:[%s1700 + $0x2c] sm:$0xf]
        %v1713 = vld [vmem:[%s1700 + $0x30] sm:$0xf]
        %v1714 = vld [vmem:[%s1700 + $0x34] sm:$0xf]
        %v1715 = vld [vmem:[%s1700 + $0x38] sm:$0xf]
        %v1716 = vld [vmem:[%s1700 + $0x3c] sm:$0xf]
        %v1717 = vunpack.c.l.b16 %v1517
        %v1718 = vpack.c.b16 %v1549, %v1548
        %v1719 = vpack.c.b16 %v1551, %v1550
        %v1720 = vpack.c.b16 %v1553, %v1552
        %v1721 = vpack.c.b16 %v1717, %v1554
        %v1742 = vunpack.c.l.b16 %v1701
        %v1743 = vunpack.c.l.b16 %v1702
        %v1744 = vunpack.c.l.b16 %v1703
        %v1745 = vunpack.c.l.b16 %v1704
        %v1746 = vunpack.c.l.b16 %v1705
        %v1747 = vunpack.c.l.b16 %v1706
        %v1748 = vunpack.c.l.b16 %v1707
        %v1749 = vunpack.c.l.b16 %v1708
        %v1750 = vunpack.c.l.b16 %v1709
        %v1751 = vunpack.c.l.b16 %v1710
        %v1752 = vunpack.c.l.b16 %v1711
        %v1753 = vunpack.c.l.b16 %v1712
        %v1754 = vunpack.c.l.b16 %v1713
        %v1755 = vunpack.c.l.b16 %v1714
        %v1756 = vunpack.c.l.b16 %v1715
        %v1757 = vunpack.c.l.b16 %v1716
        %v1758 = vpack.c.b16 %v1743, %v1742
        %v1759 = vpack.c.b16 %v1745, %v1744
        %v1760 = vpack.c.b16 %v1747, %v1746
        %v1761 = vpack.c.b16 %v1749, %v1748
        %v1762 = vpack.c.b16 %v1751, %v1750
        %v1763 = vpack.c.b16 %v1753, %v1752
        %v1764 = vpack.c.b16 %v1755, %v1754
        %v1765 = vpack.c.b16 %v1757, %v1756
        %1774 = vmatprep.subr.bf16.mxu0 0
        %1775 = vmatpush1.bf16.msra.mxu0 %v1765
        %1776 = vmatprep.subr.bf16.mxu0 0
        %1777 = vmatpush1.bf16.msra.mxu0 %v1764
        %1778 = vmatprep.subr.bf16.mxu0 0
        %1779 = vmatpush1.bf16.msra.mxu0 %v1763
        %1780 = vmatprep.subr.bf16.mxu0 0
        %1781 = vmatpush1.bf16.msra.mxu0 %v1762
        %1782 = vmatprep.subr.bf16.mxu0 0
        %1783 = vmatpush1.bf16.msra.mxu0 %v1761
        %1784 = vmatprep.subr.bf16.mxu0 0
        %1785 = vmatpush1.bf16.msra.mxu0 %v1760
        %1786 = vmatprep.subr.bf16.mxu0 0
        %1787 = vmatpush1.bf16.msra.mxu0 %v1759
        %1788 = vmatprep.subr.bf16.mxu0 0
        %1789 = vmatpush1.bf16.msra.mxu0 %v1758
        %1790 = vmatprep.subr.bf16.mxu0 0
        %1791 = vmatpush2.bf16.msra.mxu0 0
        %1792 = vmatprep.subr.bf16.mxu0 0
        %1793 = vmatpush2.bf16.msra.mxu0 0
        %1794 = vmatprep.subr.bf16.mxu0 0
        %1795 = vmatpush2.bf16.msra.mxu0 0
        %1796 = vmatprep.subr.bf16.mxu0 0
        %1797 = vmatpush2.bf16.msra.mxu0 0
        %1798 = vmatprep.subr.bf16.mxu0 0
        %1799 = vmatpush2.bf16.msra.mxu0 0
        %1800 = vmatprep.subr.bf16.mxu0 0
        %1801 = vmatpush2.bf16.msra.mxu0 0
        %1802 = vmatprep.subr.bf16.mxu0 0
        %1803 = vmatpush2.bf16.msra.mxu0 0
        %1804 = vmatprep.subr.bf16.mxu0 0
        %1805 = vmatpush2.bf16.msra.mxu0 0
        %1806 = vmatprep.mubr.bf16.mxu0 0
        %1807 = vmatmul.mubr.bf16.gmra.mxu0 %v1718
        %v1808 = vpop.f32.mrf.mxu0
        %v1809 = vadd.f32 0.0, %v1808
        %v1810 = vpop.f32.mrf.mxu0
        %v1811 = vpop.f32.mrf.mxu0
        %v1812 = vadd.f32 0.0, %v1811
        %v1813 = vpop.f32.mrf.mxu0
        %1814 = vmatprep.mubr.bf16.mxu0 0
        %1815 = vmatmul.mubr.bf16.gmra.mxu0 %v1719
        %v1816 = vpop.f32.mrf.mxu0
        %v1817 = vadd.f32 0.0, %v1816
        %v1818 = vpop.f32.mrf.mxu0
        %v1819 = vpop.f32.mrf.mxu0
        %v1820 = vadd.f32 0.0, %v1819
        %v1821 = vpop.f32.mrf.mxu0
        %1822 = vmatprep.mubr.bf16.mxu0 0
        %1823 = vmatmul.mubr.bf16.gmra.mxu0 %v1720
        %v1824 = vpop.f32.mrf.mxu0
        %v1825 = vadd.f32 0.0, %v1824
        %v1826 = vpop.f32.mrf.mxu0
        %v1827 = vpop.f32.mrf.mxu0
        %v1828 = vadd.f32 0.0, %v1827
        %v1829 = vpop.f32.mrf.mxu0
        %1830 = vmatprep.mubr.bf16.mxu0 0
        %1831 = vmatmul.mubr.bf16.gmra.mxu0 %v1721
        %v1832 = vpop.f32.mrf.mxu0
        %v1833 = vadd.f32 0.0, %v1832
        %v1834 = vpop.f32.mrf.mxu0
        %v1835 = vpop.f32.mrf.mxu0
        %v1836 = vadd.f32 0.0, %v1835
        %v1837 = vpop.f32.mrf.mxu0
        %1838 = vdwg.mxu0
        %v1839 = vadd.f32 %v1692, %v1809
        %v1840 = vadd.f32 %v1693, %v1812
        %v1841 = vadd.f32 %v1694, %v1817
        %v1842 = vadd.f32 %v1695, %v1820
        %v1843 = vadd.f32 %v1696, %v1825
        %v1844 = vadd.f32 %v1697, %v1828
        %v1845 = vadd.f32 %v1698, %v1833
        %v1846 = vadd.f32 %v1699, %v1836
        %1847 = vst [vmem:[#allocation2] sm:$0xff] %v1839
        %1848 = vst [vmem:[#allocation2 + $0x8] sm:$0xff] %v1840
        %1849 = vst [vmem:[#allocation2 + $0x10] sm:$0xff] %v1841
        %1850 = vst [vmem:[#allocation2 + $0x18] sm:$0xff] %v1842
        %1851 = vst [vmem:[#allocation2 + $0x20] sm:$0xff] %v1843
        %1852 = vst [vmem:[#allocation2 + $0x28] sm:$0xff] %v1844
        %1853 = vst [vmem:[#allocation2 + $0x30] sm:$0xff] %v1845
        %1854 = vst [vmem:[#allocation2 + $0x38] sm:$0xff] %v1846
        %v1855 = vld [vmem:[#allocation2] sm:$0xff]
        %v1856 = vld [vmem:[#allocation2 + $0x8] sm:$0xff]
        %v1857 = vld [vmem:[#allocation2 + $0x10] sm:$0xff]
        %v1858 = vld [vmem:[#allocation2 + $0x18] sm:$0xff]
        %v1859 = vld [vmem:[#allocation2 + $0x20] sm:$0xff]
        %v1860 = vld [vmem:[#allocation2 + $0x28] sm:$0xff]
        %v1861 = vld [vmem:[#allocation2 + $0x30] sm:$0xff]
        %v1862 = vld [vmem:[#allocation2 + $0x38] sm:$0xff]
        %s1863 = scalar_lea.vmem [#allocation3], 512
        %v1864 = vld [vmem:[%s1863] sm:$0xf]
        %v1865 = vld [vmem:[%s1863 + $0x4] sm:$0xf]
        %v1866 = vld [vmem:[%s1863 + $0x8] sm:$0xf]
        %v1867 = vld [vmem:[%s1863 + $0xc] sm:$0xf]
        %v1868 = vld [vmem:[%s1863 + $0x10] sm:$0xf]
        %v1869 = vld [vmem:[%s1863 + $0x14] sm:$0xf]
        %v1870 = vld [vmem:[%s1863 + $0x18] sm:$0xf]
        %v1871 = vld [vmem:[%s1863 + $0x1c] sm:$0xf]
        %v1872 = vld [vmem:[%s1863 + $0x20] sm:$0xf]
        %v1873 = vld [vmem:[%s1863 + $0x24] sm:$0xf]
        %v1874 = vld [vmem:[%s1863 + $0x28] sm:$0xf]
        %v1875 = vld [vmem:[%s1863 + $0x2c] sm:$0xf]
        %v1876 = vld [vmem:[%s1863 + $0x30] sm:$0xf]
        %v1877 = vld [vmem:[%s1863 + $0x34] sm:$0xf]
        %v1878 = vld [vmem:[%s1863 + $0x38] sm:$0xf]
        %v1879 = vld [vmem:[%s1863 + $0x3c] sm:$0xf]
        %v1880 = vunpack.c.l.b16 %v1521
        %v1881 = vpack.c.b16 %v1880, %v1717
        %v1899 = vunpack.c.l.b16 %v1864
        %v1900 = vunpack.c.l.b16 %v1865
        %v1901 = vunpack.c.l.b16 %v1866
        %v1902 = vunpack.c.l.b16 %v1867
        %v1903 = vunpack.c.l.b16 %v1868
        %v1904 = vunpack.c.l.b16 %v1869
        %v1905 = vunpack.c.l.b16 %v1870
        %v1906 = vunpack.c.l.b16 %v1871
        %v1907 = vunpack.c.l.b16 %v1872
        %v1908 = vunpack.c.l.b16 %v1873
        %v1909 = vunpack.c.l.b16 %v1874
        %v1910 = vunpack.c.l.b16 %v1875
        %v1911 = vunpack.c.l.b16 %v1876
        %v1912 = vunpack.c.l.b16 %v1877
        %v1913 = vunpack.c.l.b16 %v1878
        %v1914 = vunpack.c.l.b16 %v1879
        %v1915 = vpack.c.b16 %v1900, %v1899
        %v1916 = vpack.c.b16 %v1902, %v1901
        %v1917 = vpack.c.b16 %v1904, %v1903
        %v1918 = vpack.c.b16 %v1906, %v1905
        %v1919 = vpack.c.b16 %v1908, %v1907
        %v1920 = vpack.c.b16 %v1910, %v1909
        %v1921 = vpack.c.b16 %v1912, %v1911
        %v1922 = vpack.c.b16 %v1914, %v1913
        %1931 = vmatprep.subr.bf16.mxu0 0
        %1932 = vmatpush1.bf16.msra.mxu0 %v1922
        %1933 = vmatprep.subr.bf16.mxu0 0
        %1934 = vmatpush1.bf16.msra.mxu0 %v1921
        %1935 = vmatprep.subr.bf16.mxu0 0
        %1936 = vmatpush1.bf16.msra.mxu0 %v1920
        %1937 = vmatprep.subr.bf16.mxu0 0
        %1938 = vmatpush1.bf16.msra.mxu0 %v1919
        %1939 = vmatprep.subr.bf16.mxu0 0
        %1940 = vmatpush1.bf16.msra.mxu0 %v1918
        %1941 = vmatprep.subr.bf16.mxu0 0
        %1942 = vmatpush1.bf16.msra.mxu0 %v1917
        %1943 = vmatprep.subr.bf16.mxu0 0
        %1944 = vmatpush1.bf16.msra.mxu0 %v1916
        %1945 = vmatprep.subr.bf16.mxu0 0
        %1946 = vmatpush1.bf16.msra.mxu0 %v1915
        %1947 = vmatprep.subr.bf16.mxu0 0
        %1948 = vmatpush2.bf16.msra.mxu0 0
        %1949 = vmatprep.subr.bf16.mxu0 0
        %1950 = vmatpush2.bf16.msra.mxu0 0
        %1951 = vmatprep.subr.bf16.mxu0 0
        %1952 = vmatpush2.bf16.msra.mxu0 0
        %1953 = vmatprep.subr.bf16.mxu0 0
        %1954 = vmatpush2.bf16.msra.mxu0 0
        %1955 = vmatprep.subr.bf16.mxu0 0
        %1956 = vmatpush2.bf16.msra.mxu0 0
        %1957 = vmatprep.subr.bf16.mxu0 0
        %1958 = vmatpush2.bf16.msra.mxu0 0
        %1959 = vmatprep.subr.bf16.mxu0 0
        %1960 = vmatpush2.bf16.msra.mxu0 0
        %1961 = vmatprep.subr.bf16.mxu0 0
        %1962 = vmatpush2.bf16.msra.mxu0 0
        %1963 = vmatprep.mubr.bf16.mxu0 0
        %1964 = vmatmul.mubr.bf16.gmra.mxu0 %v1556
        %v1965 = vpop.f32.mrf.mxu0
        %v1966 = vadd.f32 0.0, %v1965
        %v1967 = vpop.f32.mrf.mxu0
        %v1968 = vpop.f32.mrf.mxu0
        %v1969 = vadd.f32 0.0, %v1968
        %v1970 = vpop.f32.mrf.mxu0
        %1971 = vmatprep.mubr.bf16.mxu0 0
        %1972 = vmatmul.mubr.bf16.gmra.mxu0 %v1557
        %v1973 = vpop.f32.mrf.mxu0
        %v1974 = vadd.f32 0.0, %v1973
        %v1975 = vpop.f32.mrf.mxu0
        %v1976 = vpop.f32.mrf.mxu0
        %v1977 = vadd.f32 0.0, %v1976
        %v1978 = vpop.f32.mrf.mxu0
        %1979 = vmatprep.mubr.bf16.mxu0 0
        %1980 = vmatmul.mubr.bf16.gmra.mxu0 %v1558
        %v1981 = vpop.f32.mrf.mxu0
        %v1982 = vadd.f32 0.0, %v1981
        %v1983 = vpop.f32.mrf.mxu0
        %v1984 = vpop.f32.mrf.mxu0
        %v1985 = vadd.f32 0.0, %v1984
        %v1986 = vpop.f32.mrf.mxu0
        %1987 = vmatprep.mubr.bf16.mxu0 0
        %1988 = vmatmul.mubr.bf16.gmra.mxu0 %v1881
        %v1989 = vpop.f32.mrf.mxu0
        %v1990 = vadd.f32 0.0, %v1989
        %v1991 = vpop.f32.mrf.mxu0
        %v1992 = vpop.f32.mrf.mxu0
        %v1993 = vadd.f32 0.0, %v1992
        %v1994 = vpop.f32.mrf.mxu0
        %1995 = vdwg.mxu0
        %v1996 = vadd.f32 %v1855, %v1966
        %v1997 = vadd.f32 %v1856, %v1969
        %v1998 = vadd.f32 %v1857, %v1974
        %v1999 = vadd.f32 %v1858, %v1977
        %v2000 = vadd.f32 %v1859, %v1982
        %v2001 = vadd.f32 %v1860, %v1985
        %v2002 = vadd.f32 %v1861, %v1990
        %v2003 = vadd.f32 %v1862, %v1993
        %2004 = vst [vmem:[#allocation2] sm:$0xff] %v1996
        %2005 = vst [vmem:[#allocation2 + $0x8] sm:$0xff] %v1997
        %2006 = vst [vmem:[#allocation2 + $0x10] sm:$0xff] %v1998
        %2007 = vst [vmem:[#allocation2 + $0x18] sm:$0xff] %v1999
        %2008 = vst [vmem:[#allocation2 + $0x20] sm:$0xff] %v2000
        %2009 = vst [vmem:[#allocation2 + $0x28] sm:$0xff] %v2001
        %2010 = vst [vmem:[#allocation2 + $0x30] sm:$0xff] %v2002
        %2011 = vst [vmem:[#allocation2 + $0x38] sm:$0xff] %v2003
        %v2012 = vld [vmem:[#allocation2] sm:$0xff]
        %v2013 = vld [vmem:[#allocation2 + $0x8] sm:$0xff]
        %v2014 = vld [vmem:[#allocation2 + $0x10] sm:$0xff]
        %v2015 = vld [vmem:[#allocation2 + $0x18] sm:$0xff]
        %v2016 = vld [vmem:[#allocation2 + $0x20] sm:$0xff]
        %v2017 = vld [vmem:[#allocation2 + $0x28] sm:$0xff]
        %v2018 = vld [vmem:[#allocation2 + $0x30] sm:$0xff]
        %v2019 = vld [vmem:[#allocation2 + $0x38] sm:$0xff]
        %v2020 = vld [vmem:[%s256] sm:$0x1]
        %v2022 = vlaneseq
        %v2023 = vshrl.u32 %v2022, 7
        %v2024 = vsub.s32 0, %v2023
        %v2025 = vrot.slane %v2020, %v2024
        %v2027 = vmul.f32 %v2012, %v2025
        %v2028 = vmul.f32 %v2013, %v2025
        %v2029 = vmul.f32 %v2014, %v2025
        %v2030 = vmul.f32 %v2015, %v2025
        %v2031 = vmul.f32 %v2016, %v2025
        %v2032 = vmul.f32 %v2017, %v2025
        %v2033 = vmul.f32 %v2018, %v2025
        %v2034 = vmul.f32 %v2019, %v2025
        %v2035 = vld [vmem:[%s259] sm:$0x1]
        %v2037 = vlaneseq
        %v2038 = vshrl.u32 %v2037, 7
        %v2039 = vsub.s32 0, %v2038
        %v2040 = vrot.slane %v2035, %v2039
        %v2042 = vadd.f32 %v2027, %v2040
        %v2043 = vadd.f32 %v2028, %v2040
        %v2044 = vadd.f32 %v2029, %v2040
        %v2045 = vadd.f32 %v2030, %v2040
        %v2046 = vadd.f32 %v2031, %v2040
        %v2047 = vadd.f32 %v2032, %v2040
        %v2048 = vadd.f32 %v2033, %v2040
        %v2049 = vadd.f32 %v2034, %v2040
        %v2050 = vmax.f32 %v2042, 0.0
        %v2051 = vmax.f32 %v2043, 0.0
        %v2052 = vmax.f32 %v2044, 0.0
        %v2053 = vmax.f32 %v2045, 0.0
        %v2054 = vmax.f32 %v2046, 0.0
        %v2055 = vmax.f32 %v2047, 0.0
        %v2056 = vmax.f32 %v2048, 0.0
        %v2057 = vmax.f32 %v2049, 0.0
        %v2058 = vpack.c.bf16 %v2050, %v2050
        %v2059 = vpack.c.bf16 %v2051, %v2051
        %v2060 = vpack.c.bf16 %v2052, %v2052
        %v2061 = vpack.c.bf16 %v2053, %v2053
        %v2062 = vpack.c.bf16 %v2054, %v2054
        %v2063 = vpack.c.bf16 %v2055, %v2055
        %v2064 = vpack.c.bf16 %v2056, %v2056
        %v2065 = vpack.c.bf16 %v2057, %v2057
        %2066 = vst [vmem:[%s267] sm:$0xf] %v2058
        %2067 = vst [vmem:[%s267 + $0x4] sm:$0xf] %v2059
        %2068 = vst [vmem:[%s267 + $0x8] sm:$0xf] %v2060
        %2069 = vst [vmem:[%s267 + $0xc] sm:$0xf] %v2061
        %2070 = vst [vmem:[%s267 + $0x10] sm:$0xf] %v2062
        %2071 = vst [vmem:[%s267 + $0x14] sm:$0xf] %v2063
        %2072 = vst [vmem:[%s267 + $0x18] sm:$0xf] %v2064
        %2073 = vst [vmem:[%s267 + $0x1c] sm:$0xf] %v2065
        %p2074 = scmp.lt.s32.totalorder %s20, 1
        %s2075 = scalar_select %p2074, %s20, 1
        %p2076 = scmp.lt.s32.totalorder %s21, 0
        %s2077 = scalar_select %p2076, %s21, 0
        %s2078 = smul.addr %s2075, 8
        %s2079 = sadd.s32 %s2077, %s2078
        %s2080 = smul.addr %s2079, 4
        %s2081 = scalar_lea.vmem %s4, %s2080
        // Predicated region
        $region41: #{_lambda_.10} parent=35 // pred_check
          %p2082 = pneg %p152
        $region42: #{_lambda_.10} parent=35 // pred_check_branch
          %2084 = sbr.rel (%p2082) target = $region44
        $region43: #{_lambda_.10} parent=35 // pred_region
          _
        $region44: #{_lambda_.10} parent=35 // pred_fallthru
          _
      $region36: #{_lambda_.10} parent=5 // pred_fallthru
        _
      %p2085 = scmp.le.s32.totalorder 2, %s11
      // Predicated region
      $region45: #{_lambda_.10} parent=5 // pred_check
        %p2086 = pneg %p2085
      $region46: #{_lambda_.10} parent=5 // pred_check_branch
        %2088 = sbr.rel (%p2086) target = $region48
      $region47: #{_lambda_.10} parent=5 // pred_region
        %s2089 = ssub.s32 %s11, 2
        // Predicated region
        $region49: #{_lambda_.10} parent=47 // pred_check
          %p2090 = pneg %p158
        $region50: #{_lambda_.10} parent=47 // pred_check_branch
          %2092 = sbr.rel (%p2090) target = $region52
        $region51: #{_lambda_.10} parent=47 // pred_region
          %p2093 = scmp.lt.s32.totalorder %s22, 1
          %s2094 = scalar_select %p2093, %s22, 1
          %p2095 = scmp.lt.s32.totalorder %s23, 0
          %s2096 = scalar_select %p2095, %s23, 0
          %s2097 = smul.addr %s2094, 8
          %s2098 = sadd.s32 %s2096, %s2097
          %s2099 = smul.addr %s2098, 4
          %s2100 = scalar_lea.vmem %s4, %s2099
        $region52: #{_lambda_.10} parent=47 // pred_fallthru
          _
      $region48: #{_lambda_.10} parent=5 // pred_fallthru
        _
    $region6: #{_lambda_.10} parent=1 // loop_footer
      %s15 = sadd.s32 1, %s11
    $region7: #{_lambda_.10} parent=1 // loop_footer_branch
      %10 = sbr.rel target = $region3
    $region8: #{_lambda_.10} parent=1 // loop_exit
      _
    %2101 = vsyncpa [#allocation4], 1
    %s2102 = scalar_lea.sflag [#allocation4], 1
    %2103 = vsyncpa %s2102, 1

// kernel: _lambda_.12
$region0: #{_lambda_.12}
  #allocation0 [shape = 'u32[]', space=smem, size = 0x4, offset = 0x4, fixed_abs, tag = 'smem constant byte address 0x4 - core index']
  #allocation1 [shape = 'u32[144,128]{1,0:T(1,128)}', space=vmem, size = 0x12000, scoped, tag = 'internal scratch']
  #allocation2 [shape = 'f32[1,1]{1,0:T(1,128)S(6)}', space=smem, size = 0x200, scoped, tag = 'scoped memory for _lambda_.12']
  %s0 = inlined_call_operand.vmem [shape: bf16[2,64,512], index: 0, kind: input, shape index: {}, may-alias: {0,1,2}]
  %s1 = inlined_call_operand.vmem [shape: bf16[2,64,512], index: 1, kind: input, shape index: {}, may-alias: {0,1,2}]
  %s2 = inlined_call_operand.vmem [shape: bf16[2,64,512], index: 2, kind: input, shape index: {}, may-alias: {0,1,2}]
  %s3 = inlined_call_operand.vmem [shape: bf16[2,64,128], index: 3, kind: input, shape index: {}, may-alias: {3,5}]
  %s4 = inlined_call_operand.<no memory space> [shape: f32[1,1], index: 4, kind: input, shape index: {}]
  %s5 = inlined_call_operand.vmem [shape: bf16[2,64,128], index: 5, kind: output, shape index: {}, may-alias: {3,5}]
  %s6 = sld [smem:[#allocation0]]
  $region176: #{_lambda_.12} parent=0
    _
  %s8 = ssub.s32 1, %s6
  %s9 = scalar_select 0, %s8, %s6
  %10 = sst [smem:[#allocation2]] %s4
  $region1: #{_lambda_.12} parent=0
    #allocation3 [shape = 'u8[32768]{0}', space=vmem, size = 0x8000, scoped, tag = 'input window, operand 0']
    #allocation4 [shape = 'u8[32768]{0}', space=vmem, size = 0x8000, scoped, tag = 'input window, operand 1']
    #allocation5 [shape = 'u8[32768]{0}', space=vmem, size = 0x8000, scoped, tag = 'input window, operand 2']
    loop: start=0, step=1, limit=4
    $region2: #{_lambda_.12} parent=1 // loop_pre_header
      _
    $region3: #{_lambda_.12} parent=1 // loop_header
      %s12 = sphi 0, %s16
      %p13 = scmp.ge.s32.totalorder %s12, 4
      %s19 = sphi 0, %s31
      %s20 = sphi 0, %s27
      %s21 = sphi 0, %s19
      %s22 = sphi 0, %s20
      %s23 = sphi 0, %s21
      %s24 = sphi 0, %s22
      %s36 = sphi 0, %s38
      %s39 = sphi 0, %s36
      %s40 = sphi 0, %s39
      %s56 = sphi 0, %s40
      %s62 = sphi 0, %s64
      %s65 = sphi 0, %s62
      %s66 = sphi 0, %s65
      %s82 = sphi 0, %s66
      %s88 = sphi 0, %s90
      %s91 = sphi 0, %s88
      %s92 = sphi 0, %s91
      %s108 = sphi 0, %s92
      %s116 = sphi 0, %s118
      %s119 = sphi 0, %s116
      %s120 = sphi 0, %s119
      %s136 = sphi 0, %s120
      %s140 = sphi 0, %s140
      %s142 = sphi 0, %s140
      %s143 = sphi 0, %s142
      %s157 = sphi 0, %s143
      %s165 = sphi 0, %s167
      %s168 = sphi 0, %s165
      %s169 = sphi 0, %s168
      %s185 = sphi 0, %s169
    $region4: #{_lambda_.12} parent=1 // loop_header_branch
      %15 = sbr.rel (%p13) target = $region8
    $region5: #{_lambda_.12} parent=1 // loop_body
      %s17 = ssub.s32 %s12, 1
      %s18 = ssub.s32 %s12, 2
      %s25 = sadd.s32 1, %s20
      %p26 = scmp.ge.s32.totalorder %s25, 1
      %s27 = scalar_select %p26, 0, %s25
      %s28 = sadd.s32 1, %s19
      %s29 = scalar_select %p26, %s28, %s19
      %p30 = scmp.ge.s32.totalorder %s29, 2
      %s31 = scalar_select %p30, 0, %s29
      %s32 = ssub.s32 %s19, %s31
      %s33 = ssub.s32 %s20, %s27
      %s34 = sor.u32 %s32, %s33
      %p35 = scmp.eq.s32.totalorder %s34, 0
      %s37 = sadd.s32 %s36, 1
      %s38 = scalar_select %p35, %s36, %s37
      %p41 = pneg %p35
      %p42 = scmp.eq.s32.totalorder %s12, 1
      %p43 = por %p41, %p42
      %p44 = scmp.ne.s32.totalorder %s36, %s39
      %p45 = scmp.eq.s32.totalorder %s12, 0
      %p46 = por %p44, %p45
      %p47 = scmp.ne.s32.totalorder %s36, %s39
      %p48 = scmp.eq.s32.totalorder %s17, 1
      %p49 = por %p47, %p48
      %p50 = scmp.ne.s32.totalorder %s39, %s40
      %p51 = scmp.eq.s32.totalorder %s17, 0
      %p52 = por %p50, %p51
      %p53 = scmp.ne.s32.totalorder %s39, %s40
      %p54 = scmp.eq.s32.totalorder %s18, 1
      %p55 = por %p53, %p54
      %p57 = scmp.ne.s32.totalorder %s40, %s56
      %p58 = scmp.eq.s32.totalorder %s18, 0
      %p59 = por %p57, %p58
      %s60 = ssub.s32 %s19, %s31
      %p61 = scmp.eq.s32.totalorder %s60, 0
      %s63 = sadd.s32 %s62, 1
      %s64 = scalar_select %p61, %s62, %s63
      %p67 = pneg %p61
      %p68 = scmp.eq.s32.totalorder %s12, 1
      %p69 = por %p67, %p68
      %p70 = scmp.ne.s32.totalorder %s62, %s65
      %p71 = scmp.eq.s32.totalorder %s12, 0
      %p72 = por %p70, %p71
      %p73 = scmp.ne.s32.totalorder %s62, %s65
      %p74 = scmp.eq.s32.totalorder %s17, 1
      %p75 = por %p73, %p74
      %p76 = scmp.ne.s32.totalorder %s65, %s66
      %p77 = scmp.eq.s32.totalorder %s17, 0
      %p78 = por %p76, %p77
      %p79 = scmp.ne.s32.totalorder %s65, %s66
      %p80 = scmp.eq.s32.totalorder %s18, 1
      %p81 = por %p79, %p80
      %p83 = scmp.ne.s32.totalorder %s66, %s82
      %p84 = scmp.eq.s32.totalorder %s18, 0
      %p85 = por %p83, %p84
      %s86 = ssub.s32 %s19, %s31
      %p87 = scmp.eq.s32.totalorder %s86, 0
      %s89 = sadd.s32 %s88, 1
      %s90 = scalar_select %p87, %s88, %s89
      %p93 = pneg %p87
      %p94 = scmp.eq.s32.totalorder %s12, 1
      %p95 = por %p93, %p94
      %p96 = scmp.ne.s32.totalorder %s88, %s91
      %p97 = scmp.eq.s32.totalorder %s12, 0
      %p98 = por %p96, %p97
      %p99 = scmp.ne.s32.totalorder %s88, %s91
      %p100 = scmp.eq.s32.totalorder %s17, 1
      %p101 = por %p99, %p100
      %p102 = scmp.ne.s32.totalorder %s91, %s92
      %p103 = scmp.eq.s32.totalorder %s17, 0
      %p104 = por %p102, %p103
      %p105 = scmp.ne.s32.totalorder %s91, %s92
      %p106 = scmp.eq.s32.totalorder %s18, 1
      %p107 = por %p105, %p106
      %p109 = scmp.ne.s32.totalorder %s92, %s108
      %p110 = scmp.eq.s32.totalorder %s18, 0
      %p111 = por %p109, %p110
      %s112 = ssub.s32 %s19, %s31
      %s113 = ssub.s32 %s20, %s27
      %s114 = sor.u32 %s112, %s113
      %p115 = scmp.eq.s32.totalorder %s114, 0
      %s117 = sadd.s32 %s116, 1
      %s118 = scalar_select %p115, %s116, %s117
      %p121 = pneg %p115
      %p122 = scmp.eq.s32.totalorder %s12, 1
      %p123 = por %p121, %p122
      %p124 = scmp.ne.s32.totalorder %s116, %s119
      %p125 = scmp.eq.s32.totalorder %s12, 0
      %p126 = por %p124, %p125
      %p127 = scmp.ne.s32.totalorder %s116, %s119
      %p128 = scmp.eq.s32.totalorder %s17, 1
      %p129 = por %p127, %p128
      %p130 = scmp.ne.s32.totalorder %s119, %s120
      %p131 = scmp.eq.s32.totalorder %s17, 0
      %p132 = por %p130, %p131
      %p133 = scmp.ne.s32.totalorder %s119, %s120
      %p134 = scmp.eq.s32.totalorder %s18, 1
      %p135 = por %p133, %p134
      %p137 = scmp.ne.s32.totalorder %s120, %s136
      %p138 = scmp.eq.s32.totalorder %s18, 0
      %p139 = por %p137, %p138
      %s141 = sadd.s32 %s140, 1
      %p144 = scmp.eq.s32.totalorder %s12, 1
      %p145 = scmp.ne.s32.totalorder %s140, %s142
      %p146 = scmp.eq.s32.totalorder %s12, 0
      %p147 = por %p145, %p146
      %p148 = scmp.ne.s32.totalorder %s140, %s142
      %p149 = scmp.eq.s32.totalorder %s17, 1
      %p150 = por %p148, %p149
      %p151 = scmp.ne.s32.totalorder %s142, %s143
      %p152 = scmp.eq.s32.totalorder %s17, 0
      %p153 = por %p151, %p152
      %p154 = scmp.ne.s32.totalorder %s142, %s143
      %p155 = scmp.eq.s32.totalorder %s18, 1
      %p156 = por %p154, %p155
      %p158 = scmp.ne.s32.totalorder %s143, %s157
      %p159 = scmp.eq.s32.totalorder %s18, 0
      %p160 = por %p158, %p159
      %s161 = ssub.s32 %s19, %s31
      %s162 = ssub.s32 %s20, %s27
      %s163 = sor.u32 %s161, %s162
      %p164 = scmp.eq.s32.totalorder %s163, 0
      %s166 = sadd.s32 %s165, 1
      %s167 = scalar_select %p164, %s165, %s166
      %p170 = pneg %p164
      %p171 = scmp.eq.s32.totalorder %s12, 1
      %p172 = por %p170, %p171
      %p173 = scmp.ne.s32.totalorder %s165, %s168
      %p174 = scmp.eq.s32.totalorder %s12, 0
      %p175 = por %p173, %p174
      %p176 = scmp.ne.s32.totalorder %s165, %s168
      %p177 = scmp.eq.s32.totalorder %s17, 1
      %p178 = por %p176, %p177
      %p179 = scmp.ne.s32.totalorder %s168, %s169
      %p180 = scmp.eq.s32.totalorder %s17, 0
      %p181 = por %p179, %p180
      %p182 = scmp.ne.s32.totalorder %s168, %s169
      %p183 = scmp.eq.s32.totalorder %s18, 1
      %p184 = por %p182, %p183
      %p186 = scmp.ne.s32.totalorder %s169, %s185
      %p187 = scmp.eq.s32.totalorder %s18, 0
      %p188 = por %p186, %p187
      %p189 = scmp.le.s32.totalorder 1, %s12
      %p190 = scmp.lt.s32.totalorder %s12, 3
      %p191 = pnand %p189, %p190
      %p192 = pneg %p191
      // Predicated region
      $region9: #{_lambda_.12} parent=5 // pred_check
        _
      $region10: #{_lambda_.12} parent=5 // pred_check_branch
        %194 = sbr.rel (%p191) target = $region12
      $region11: #{_lambda_.12} parent=5 // pred_region
        %s195 = ssub.s32 %s12, 1
        // Predicated region
        $region13: #{_lambda_.12} parent=11 // pred_check
          %p196 = pneg %p153
        $region14: #{_lambda_.12} parent=11 // pred_check_branch
          %198 = sbr.rel (%p196) target = $region16
        $region15: #{_lambda_.12} parent=11 // pred_region
          _
        $region16: #{_lambda_.12} parent=11 // pred_fallthru
          _
      $region12: #{_lambda_.12} parent=5 // pred_fallthru
        _
      %p199 = scmp.lt.s32.totalorder %s12, 2
      // Predicated region
      $region17: #{_lambda_.12} parent=5 // pred_check
        %p200 = pneg %p199
      $region18: #{_lambda_.12} parent=5 // pred_check_branch
        %202 = sbr.rel (%p200) target = $region20
      $region19: #{_lambda_.12} parent=5 // pred_region
        // Predicated region
        $region21: #{_lambda_.12} parent=19 // pred_check
          %p203 = pneg %p46
        $region22: #{_lambda_.12} parent=19 // pred_check_branch
          %205 = sbr.rel (%p203) target = $region24
        $region23: #{_lambda_.12} parent=19 // pred_region
          %s206 = sand.u32 %s36, 1
          %s207 = sand.u32 %s36, 1
          %s208 = smul.addr %s207, 32
          %s209 = scalar_lea.vmem [#allocation3], %s208
          %s210 = smul.u32 8, %s20
          %s211 = smul.addr %s210, 4
          %s212 = sadd.s32 1, %s211
          %s213 = smul.addr %s19, 32
          %s214 = sadd.s32 %s212, %s213
          %s215 = smul.addr %s214, 4
          %s216 = scalar_lea.vmem %s0, %s215
          // Predicated region
          $region25: #{_lambda_.12} parent=23 // pred_check
            _
          $region26: #{_lambda_.12} parent=23 // pred_check_branch
            %218 = sbr.rel (0) target = $region28
          $region27: #{_lambda_.12} parent=23 // pred_region
            // Predicated region
            $region29: #{_lambda_.12} parent=27 // pred_check
              _
            $region30: #{_lambda_.12} parent=27 // pred_check_branch
              %220 = sbr.rel target = $region32
            $region31: #{_lambda_.12} parent=27 // pred_region
              // Predicated region
              $region44: #{_lambda_.12} parent=31 // pred_check
                _
              $region45: #{_lambda_.12} parent=31 // pred_check_branch
                %250 = sbr.rel (0) target = $region47
              $region46: #{_lambda_.12} parent=31 // pred_region
                loop: start=0, step=1, limit=1
                $region48: #{_lambda_.12} parent=46 // loop_pre_header
                  _
                $region49: #{_lambda_.12} parent=46 // loop_header
                  %s252 = sphi 0, %s256
                  %p253 = scmp.ge.s32.totalorder %s252, 1
                  %s257 = sphi %s216, %s216
                  %s258 = sphi %s209, %s209
                $region50: #{_lambda_.12} parent=46 // loop_header_branch
                  %255 = sbr.rel (%p253) target = $region54
                $region51: #{_lambda_.12} parent=46 // loop_body
                  _
                $region52: #{_lambda_.12} parent=46 // loop_footer
                  %s256 = sadd.s32 1, %s252
                $region53: #{_lambda_.12} parent=46 // loop_footer_branch
                  %251 = sbr.rel target = $region49
                $region54: #{_lambda_.12} parent=46 // loop_exit
                  _
                %s260 = ssub.s32 16, 1
                loop: start=0, step=1, limit=1
                $region55: #{_lambda_.12} parent=46 // loop_pre_header
                  _
                $region56: #{_lambda_.12} parent=46 // loop_header
                  %s262 = sphi 0, %s266
                  %p263 = scmp.ge.s32.totalorder %s262, 1
                  %s267 = sphi %s216, %s216
                  %s268 = sphi %s209, %s209
                $region57: #{_lambda_.12} parent=46 // loop_header_branch
                  %265 = sbr.rel (%p263) target = $region61
                $region58: #{_lambda_.12} parent=46 // loop_body
                  %v269 = vld [vmem:[%s267] sm:%s260]
                  %270 = vst [vmem:[%s268] sm:%s260] %v269
                  %v271 = vld [vmem:[%s267 + $0x10] sm:%s260]
                  %272 = vst [vmem:[%s268 + $0x4] sm:%s260] %v271
                  %v273 = vld [vmem:[%s267 + $0x20] sm:%s260]
                  %274 = vst [vmem:[%s268 + $0x8] sm:%s260] %v273
                  %v275 = vld [vmem:[%s267 + $0x30] sm:%s260]
                  %276 = vst [vmem:[%s268 + $0xc] sm:%s260] %v275
                  %v277 = vld [vmem:[%s267 + $0x40] sm:%s260]
                  %278 = vst [vmem:[%s268 + $0x10] sm:%s260] %v277
                  %v279 = vld [vmem:[%s267 + $0x50] sm:%s260]
                  %280 = vst [vmem:[%s268 + $0x14] sm:%s260] %v279
                  %v281 = vld [vmem:[%s267 + $0x60] sm:%s260]
                  %282 = vst [vmem:[%s268 + $0x18] sm:%s260] %v281
                  %v283 = vld [vmem:[%s267 + $0x70] sm:%s260]
                  %284 = vst [vmem:[%s268 + $0x1c] sm:%s260] %v283
                $region59: #{_lambda_.12} parent=46 // loop_footer
                  %s266 = sadd.s32 1, %s262
                $region60: #{_lambda_.12} parent=46 // loop_footer_branch
                  %261 = sbr.rel target = $region56
                $region61: #{_lambda_.12} parent=46 // loop_exit
                  _
              $region47: #{_lambda_.12} parent=31 // pred_fallthru
                _
            $region32: #{_lambda_.12} parent=27 // pred_fallthru
              _
            // Predicated region
            $region33: #{_lambda_.12} parent=27 // pred_check
              _
            $region34: #{_lambda_.12} parent=27 // pred_check_branch
              %222 = sbr.rel (0) target = $region36
            $region35: #{_lambda_.12} parent=27 // pred_region
              %s224 = ssub.s32 16, 1
              loop: start=0, step=1, limit=1
              $region37: #{_lambda_.12} parent=35 // loop_pre_header
                _
              $region38: #{_lambda_.12} parent=35 // loop_header
                %s226 = sphi 0, %s230
                %p227 = scmp.ge.s32.totalorder %s226, 1
                %s231 = sphi %s216, %s216
                %s232 = sphi %s209, %s209
              $region39: #{_lambda_.12} parent=35 // loop_header_branch
                %229 = sbr.rel (%p227) target = $region43
              $region40: #{_lambda_.12} parent=35 // loop_body
                %v233 = vld [vmem:[%s231] sm:%s224]
                %234 = vst [vmem:[%s232] sm:%s224] %v233
                %v235 = vld [vmem:[%s231 + $0x10] sm:%s224]
                %236 = vst [vmem:[%s232 + $0x4] sm:%s224] %v235
                %v237 = vld [vmem:[%s231 + $0x20] sm:%s224]
                %238 = vst [vmem:[%s232 + $0x8] sm:%s224] %v237
                %v239 = vld [vmem:[%s231 + $0x30] sm:%s224]
                %240 = vst [vmem:[%s232 + $0xc] sm:%s224] %v239
                %v241 = vld [vmem:[%s231 + $0x40] sm:%s224]
                %242 = vst [vmem:[%s232 + $0x10] sm:%s224] %v241
                %v243 = vld [vmem:[%s231 + $0x50] sm:%s224]
                %244 = vst [vmem:[%s232 + $0x14] sm:%s224] %v243
                %v245 = vld [vmem:[%s231 + $0x60] sm:%s224]
                %246 = vst [vmem:[%s232 + $0x18] sm:%s224] %v245
                %v247 = vld [vmem:[%s231 + $0x70] sm:%s224]
                %248 = vst [vmem:[%s232 + $0x1c] sm:%s224] %v247
              $region41: #{_lambda_.12} parent=35 // loop_footer
                %s230 = sadd.s32 1, %s226
              $region42: #{_lambda_.12} parent=35 // loop_footer_branch
                %225 = sbr.rel target = $region38
              $region43: #{_lambda_.12} parent=35 // loop_exit
                _
            $region36: #{_lambda_.12} parent=27 // pred_fallthru
              _
          $region28: #{_lambda_.12} parent=23 // pred_fallthru
            _
          %285 = vnop
        $region24: #{_lambda_.12} parent=19 // pred_fallthru
          _
        // Predicated region
        $region62: #{_lambda_.12} parent=19 // pred_check
          %p286 = pneg %p72
        $region63: #{_lambda_.12} parent=19 // pred_check_branch
          %288 = sbr.rel (%p286) target = $region65
        $region64: #{_lambda_.12} parent=19 // pred_region
          %s289 = sand.u32 %s62, 1
          %s290 = sand.u32 %s62, 1
          %s291 = smul.addr %s290, 32
          %s292 = scalar_lea.vmem [#allocation4], %s291
          %s293 = smul.addr %s19, 32
          %s294 = sadd.s32 2, %s293
          %s295 = smul.addr %s294, 4
          %s296 = scalar_lea.vmem %s1, %s295
          // Predicated region
          $region66: #{_lambda_.12} parent=64 // pred_check
            _
          $region67: #{_lambda_.12} parent=64 // pred_check_branch
            %298 = sbr.rel (0) target = $region69
          $region68: #{_lambda_.12} parent=64 // pred_region
            // Predicated region
            $region70: #{_lambda_.12} parent=68 // pred_check
              _
            $region71: #{_lambda_.12} parent=68 // pred_check_branch
              %300 = sbr.rel target = $region73
            $region72: #{_lambda_.12} parent=68 // pred_region
              // Predicated region
              $region85: #{_lambda_.12} parent=72 // pred_check
                _
              $region86: #{_lambda_.12} parent=72 // pred_check_branch
                %330 = sbr.rel (0) target = $region88
              $region87: #{_lambda_.12} parent=72 // pred_region
                loop: start=0, step=1, limit=1
                $region89: #{_lambda_.12} parent=87 // loop_pre_header
                  _
                $region90: #{_lambda_.12} parent=87 // loop_header
                  %s332 = sphi 0, %s336
                  %p333 = scmp.ge.s32.totalorder %s332, 1
                  %s337 = sphi %s296, %s296
                  %s338 = sphi %s292, %s292
                $region91: #{_lambda_.12} parent=87 // loop_header_branch
                  %335 = sbr.rel (%p333) target = $region95
                $region92: #{_lambda_.12} parent=87 // loop_body
                  _
                $region93: #{_lambda_.12} parent=87 // loop_footer
                  %s336 = sadd.s32 1, %s332
                $region94: #{_lambda_.12} parent=87 // loop_footer_branch
                  %331 = sbr.rel target = $region90
                $region95: #{_lambda_.12} parent=87 // loop_exit
                  _
                %s340 = ssub.s32 16, 1
                loop: start=0, step=1, limit=1
                $region96: #{_lambda_.12} parent=87 // loop_pre_header
                  _
                $region97: #{_lambda_.12} parent=87 // loop_header
                  %s342 = sphi 0, %s346
                  %p343 = scmp.ge.s32.totalorder %s342, 1
                  %s347 = sphi %s296, %s296
                  %s348 = sphi %s292, %s292
                $region98: #{_lambda_.12} parent=87 // loop_header_branch
                  %345 = sbr.rel (%p343) target = $region102
                $region99: #{_lambda_.12} parent=87 // loop_body
                  %v349 = vld [vmem:[%s347] sm:%s340]
                  %350 = vst [vmem:[%s348] sm:%s340] %v349
                  %v351 = vld [vmem:[%s347 + $0x10] sm:%s340]
                  %352 = vst [vmem:[%s348 + $0x4] sm:%s340] %v351
                  %v353 = vld [vmem:[%s347 + $0x20] sm:%s340]
                  %354 = vst [vmem:[%s348 + $0x8] sm:%s340] %v353
                  %v355 = vld [vmem:[%s347 + $0x30] sm:%s340]
                  %356 = vst [vmem:[%s348 + $0xc] sm:%s340] %v355
                  %v357 = vld [vmem:[%s347 + $0x40] sm:%s340]
                  %358 = vst [vmem:[%s348 + $0x10] sm:%s340] %v357
                  %v359 = vld [vmem:[%s347 + $0x50] sm:%s340]
                  %360 = vst [vmem:[%s348 + $0x14] sm:%s340] %v359
                  %v361 = vld [vmem:[%s347 + $0x60] sm:%s340]
                  %362 = vst [vmem:[%s348 + $0x18] sm:%s340] %v361
                  %v363 = vld [vmem:[%s347 + $0x70] sm:%s340]
                  %364 = vst [vmem:[%s348 + $0x1c] sm:%s340] %v363
                $region100: #{_lambda_.12} parent=87 // loop_footer
                  %s346 = sadd.s32 1, %s342
                $region101: #{_lambda_.12} parent=87 // loop_footer_branch
                  %341 = sbr.rel target = $region97
                $region102: #{_lambda_.12} parent=87 // loop_exit
                  _
              $region88: #{_lambda_.12} parent=72 // pred_fallthru
                _
            $region73: #{_lambda_.12} parent=68 // pred_fallthru
              _
            // Predicated region
            $region74: #{_lambda_.12} parent=68 // pred_check
              _
            $region75: #{_lambda_.12} parent=68 // pred_check_branch
              %302 = sbr.rel (0) target = $region77
            $region76: #{_lambda_.12} parent=68 // pred_region
              %s304 = ssub.s32 16, 1
              loop: start=0, step=1, limit=1
              $region78: #{_lambda_.12} parent=76 // loop_pre_header
                _
              $region79: #{_lambda_.12} parent=76 // loop_header
                %s306 = sphi 0, %s310
                %p307 = scmp.ge.s32.totalorder %s306, 1
                %s311 = sphi %s296, %s296
                %s312 = sphi %s292, %s292
              $region80: #{_lambda_.12} parent=76 // loop_header_branch
                %309 = sbr.rel (%p307) target = $region84
              $region81: #{_lambda_.12} parent=76 // loop_body
                %v313 = vld [vmem:[%s311] sm:%s304]
                %314 = vst [vmem:[%s312] sm:%s304] %v313
                %v315 = vld [vmem:[%s311 + $0x10] sm:%s304]
                %316 = vst [vmem:[%s312 + $0x4] sm:%s304] %v315
                %v317 = vld [vmem:[%s311 + $0x20] sm:%s304]
                %318 = vst [vmem:[%s312 + $0x8] sm:%s304] %v317
                %v319 = vld [vmem:[%s311 + $0x30] sm:%s304]
                %320 = vst [vmem:[%s312 + $0xc] sm:%s304] %v319
                %v321 = vld [vmem:[%s311 + $0x40] sm:%s304]
                %322 = vst [vmem:[%s312 + $0x10] sm:%s304] %v321
                %v323 = vld [vmem:[%s311 + $0x50] sm:%s304]
                %324 = vst [vmem:[%s312 + $0x14] sm:%s304] %v323
                %v325 = vld [vmem:[%s311 + $0x60] sm:%s304]
                %326 = vst [vmem:[%s312 + $0x18] sm:%s304] %v325
                %v327 = vld [vmem:[%s311 + $0x70] sm:%s304]
                %328 = vst [vmem:[%s312 + $0x1c] sm:%s304] %v327
              $region82: #{_lambda_.12} parent=76 // loop_footer
                %s310 = sadd.s32 1, %s306
              $region83: #{_lambda_.12} parent=76 // loop_footer_branch
                %305 = sbr.rel target = $region79
              $region84: #{_lambda_.12} parent=76 // loop_exit
                _
            $region77: #{_lambda_.12} parent=68 // pred_fallthru
              _
          $region69: #{_lambda_.12} parent=64 // pred_fallthru
            _
          %365 = vnop
        $region65: #{_lambda_.12} parent=19 // pred_fallthru
          _
        // Predicated region
        $region103: #{_lambda_.12} parent=19 // pred_check
          %p366 = pneg %p98
        $region104: #{_lambda_.12} parent=19 // pred_check_branch
          %368 = sbr.rel (%p366) target = $region106
        $region105: #{_lambda_.12} parent=19 // pred_region
          %s369 = sand.u32 %s88, 1
          %s370 = sand.u32 %s88, 1
          %s371 = smul.addr %s370, 32
          %s372 = scalar_lea.vmem [#allocation5], %s371
          %s373 = smul.addr %s19, 32
          %s374 = smul.addr %s373, 4
          %s375 = scalar_lea.vmem %s2, %s374
          // Predicated region
          $region107: #{_lambda_.12} parent=105 // pred_check
            _
          $region108: #{_lambda_.12} parent=105 // pred_check_branch
            %377 = sbr.rel (0) target = $region110
          $region109: #{_lambda_.12} parent=105 // pred_region
            // Predicated region
            $region111: #{_lambda_.12} parent=109 // pred_check
              _
            $region112: #{_lambda_.12} parent=109 // pred_check_branch
              %379 = sbr.rel target = $region114
            $region113: #{_lambda_.12} parent=109 // pred_region
              // Predicated region
              $region126: #{_lambda_.12} parent=113 // pred_check
                _
              $region127: #{_lambda_.12} parent=113 // pred_check_branch
                %409 = sbr.rel (0) target = $region129
              $region128: #{_lambda_.12} parent=113 // pred_region
                loop: start=0, step=1, limit=1
                $region130: #{_lambda_.12} parent=128 // loop_pre_header
                  _
                $region131: #{_lambda_.12} parent=128 // loop_header
                  %s411 = sphi 0, %s415
                  %p412 = scmp.ge.s32.totalorder %s411, 1
                  %s416 = sphi %s375, %s375
                  %s417 = sphi %s372, %s372
                $region132: #{_lambda_.12} parent=128 // loop_header_branch
                  %414 = sbr.rel (%p412) target = $region136
                $region133: #{_lambda_.12} parent=128 // loop_body
                  _
                $region134: #{_lambda_.12} parent=128 // loop_footer
                  %s415 = sadd.s32 1, %s411
                $region135: #{_lambda_.12} parent=128 // loop_footer_branch
                  %410 = sbr.rel target = $region131
                $region136: #{_lambda_.12} parent=128 // loop_exit
                  _
                %s419 = ssub.s32 16, 1
                loop: start=0, step=1, limit=1
                $region137: #{_lambda_.12} parent=128 // loop_pre_header
                  _
                $region138: #{_lambda_.12} parent=128 // loop_header
                  %s421 = sphi 0, %s425
                  %p422 = scmp.ge.s32.totalorder %s421, 1
                  %s426 = sphi %s375, %s375
                  %s427 = sphi %s372, %s372
                $region139: #{_lambda_.12} parent=128 // loop_header_branch
                  %424 = sbr.rel (%p422) target = $region143
                $region140: #{_lambda_.12} parent=128 // loop_body
                  %v428 = vld [vmem:[%s426] sm:%s419]
                  %429 = vst [vmem:[%s427] sm:%s419] %v428
                  %v430 = vld [vmem:[%s426 + $0x10] sm:%s419]
                  %431 = vst [vmem:[%s427 + $0x4] sm:%s419] %v430
                  %v432 = vld [vmem:[%s426 + $0x20] sm:%s419]
                  %433 = vst [vmem:[%s427 + $0x8] sm:%s419] %v432
                  %v434 = vld [vmem:[%s426 + $0x30] sm:%s419]
                  %435 = vst [vmem:[%s427 + $0xc] sm:%s419] %v434
                  %v436 = vld [vmem:[%s426 + $0x40] sm:%s419]
                  %437 = vst [vmem:[%s427 + $0x10] sm:%s419] %v436
                  %v438 = vld [vmem:[%s426 + $0x50] sm:%s419]
                  %439 = vst [vmem:[%s427 + $0x14] sm:%s419] %v438
                  %v440 = vld [vmem:[%s426 + $0x60] sm:%s419]
                  %441 = vst [vmem:[%s427 + $0x18] sm:%s419] %v440
                  %v442 = vld [vmem:[%s426 + $0x70] sm:%s419]
                  %443 = vst [vmem:[%s427 + $0x1c] sm:%s419] %v442
                $region141: #{_lambda_.12} parent=128 // loop_footer
                  %s425 = sadd.s32 1, %s421
                $region142: #{_lambda_.12} parent=128 // loop_footer_branch
                  %420 = sbr.rel target = $region138
                $region143: #{_lambda_.12} parent=128 // loop_exit
                  _
              $region129: #{_lambda_.12} parent=113 // pred_fallthru
                _
            $region114: #{_lambda_.12} parent=109 // pred_fallthru
              _
            // Predicated region
            $region115: #{_lambda_.12} parent=109 // pred_check
              _
            $region116: #{_lambda_.12} parent=109 // pred_check_branch
              %381 = sbr.rel (0) target = $region118
            $region117: #{_lambda_.12} parent=109 // pred_region
              %s383 = ssub.s32 16, 1
              loop: start=0, step=1, limit=1
              $region119: #{_lambda_.12} parent=117 // loop_pre_header
                _
              $region120: #{_lambda_.12} parent=117 // loop_header
                %s385 = sphi 0, %s389
                %p386 = scmp.ge.s32.totalorder %s385, 1
                %s390 = sphi %s375, %s375
                %s391 = sphi %s372, %s372
              $region121: #{_lambda_.12} parent=117 // loop_header_branch
                %388 = sbr.rel (%p386) target = $region125
              $region122: #{_lambda_.12} parent=117 // loop_body
                %v392 = vld [vmem:[%s390] sm:%s383]
                %393 = vst [vmem:[%s391] sm:%s383] %v392
                %v394 = vld [vmem:[%s390 + $0x10] sm:%s383]
                %395 = vst [vmem:[%s391 + $0x4] sm:%s383] %v394
                %v396 = vld [vmem:[%s390 + $0x20] sm:%s383]
                %397 = vst [vmem:[%s391 + $0x8] sm:%s383] %v396
                %v398 = vld [vmem:[%s390 + $0x30] sm:%s383]
                %399 = vst [vmem:[%s391 + $0xc] sm:%s383] %v398
                %v400 = vld [vmem:[%s390 + $0x40] sm:%s383]
                %401 = vst [vmem:[%s391 + $0x10] sm:%s383] %v400
                %v402 = vld [vmem:[%s390 + $0x50] sm:%s383]
                %403 = vst [vmem:[%s391 + $0x14] sm:%s383] %v402
                %v404 = vld [vmem:[%s390 + $0x60] sm:%s383]
                %405 = vst [vmem:[%s391 + $0x18] sm:%s383] %v404
                %v406 = vld [vmem:[%s390 + $0x70] sm:%s383]
                %407 = vst [vmem:[%s391 + $0x1c] sm:%s383] %v406
              $region123: #{_lambda_.12} parent=117 // loop_footer
                %s389 = sadd.s32 1, %s385
              $region124: #{_lambda_.12} parent=117 // loop_footer_branch
                %384 = sbr.rel target = $region120
              $region125: #{_lambda_.12} parent=117 // loop_exit
                _
            $region118: #{_lambda_.12} parent=109 // pred_fallthru
              _
          $region110: #{_lambda_.12} parent=105 // pred_fallthru
            _
          %444 = vnop
        $region106: #{_lambda_.12} parent=19 // pred_fallthru
          _
        // Predicated region
        $region144: #{_lambda_.12} parent=19 // pred_check
          %p445 = pneg %p126
        $region145: #{_lambda_.12} parent=19 // pred_check_branch
          %447 = sbr.rel (%p445) target = $region147
        $region146: #{_lambda_.12} parent=19 // pred_region
          %s448 = smul.u32 8, %s20
          %p449 = scmp.lt.s32.totalorder %s19, 1
          %s450 = scalar_select %p449, %s19, 1
          %p451 = scmp.lt.s32.totalorder %s448, 7
          %s452 = scalar_select %p451, %s448, 7
          %s453 = smul.addr %s450, 8
          %s454 = sadd.s32 %s452, %s453
          %s455 = smul.addr %s454, 4
          %s456 = scalar_lea.vmem %s3, %s455
          %s457 = smul.u32 8, %s20
        $region147: #{_lambda_.12} parent=19 // pred_fallthru
          _
      $region20: #{_lambda_.12} parent=5 // pred_fallthru
        _
      %p458 = scmp.le.s32.totalorder 1, %s12
      %p459 = scmp.lt.s32.totalorder %s12, 3
      %p460 = pnand %p458, %p459
      %p461 = pneg %p460
      // Predicated region
      $region148: #{_lambda_.12} parent=5 // pred_check
        _
      $region149: #{_lambda_.12} parent=5 // pred_check_branch
        %463 = sbr.rel (%p460) target = $region151
      $region150: #{_lambda_.12} parent=5 // pred_region
        %s464 = ssub.s32 %s12, 1
        %s465 = sand.u32 %s39, 1
        %s466 = sand.u32 %s39, 1
        %s467 = smul.addr %s466, 32
        %s468 = scalar_lea.vmem [#allocation3], %s467
        // Predicated region
        $region152: #{_lambda_.12} parent=150 // pred_check
          %p469 = pneg %p52
        $region153: #{_lambda_.12} parent=150 // pred_check_branch
          %471 = sbr.rel (%p469) target = $region155
        $region154: #{_lambda_.12} parent=150 // pred_region
          _
        $region155: #{_lambda_.12} parent=150 // pred_fallthru
          _
        %s472 = sand.u32 %s65, 1
        %s473 = sand.u32 %s65, 1
        %s474 = smul.addr %s473, 32
        %s475 = scalar_lea.vmem [#allocation4], %s474
        // Predicated region
        $region156: #{_lambda_.12} parent=150 // pred_check
          %p476 = pneg %p78
        $region157: #{_lambda_.12} parent=150 // pred_check_branch
          %478 = sbr.rel (%p476) target = $region159
        $region158: #{_lambda_.12} parent=150 // pred_region
          _
        $region159: #{_lambda_.12} parent=150 // pred_fallthru
          _
        %s479 = sand.u32 %s91, 1
        %s480 = sand.u32 %s91, 1
        %s481 = smul.addr %s480, 32
        %s482 = scalar_lea.vmem [#allocation5], %s481
        // Predicated region
        $region160: #{_lambda_.12} parent=150 // pred_check
          %p483 = pneg %p104
        $region161: #{_lambda_.12} parent=150 // pred_check_branch
          %485 = sbr.rel (%p483) target = $region163
        $region162: #{_lambda_.12} parent=150 // pred_region
          _
        $region163: #{_lambda_.12} parent=150 // pred_fallthru
          _
        %s486 = sand.u32 %s39, 1
        %s487 = sand.u32 %s39, 1
        %s488 = smul.addr %s487, 32
        %s489 = scalar_lea.vmem [#allocation3], %s488
        %p490 = pneg %p52
        %p491 = pneg %p49
        %s492 = sand.u32 %s65, 1
        %s493 = sand.u32 %s65, 1
        %s494 = smul.addr %s493, 32
        %s495 = scalar_lea.vmem [#allocation4], %s494
        %p496 = pneg %p78
        %p497 = pneg %p75
        %s498 = sand.u32 %s91, 1
        %s499 = sand.u32 %s91, 1
        %s500 = smul.addr %s499, 32
        %s501 = scalar_lea.vmem [#allocation5], %s500
        %p502 = pneg %p104
        %p503 = pneg %p101
        %s504 = smul.u32 8, %s22
        %p505 = scmp.lt.s32.totalorder %s21, 1
        %s506 = scalar_select %p505, %s21, 1
        %p507 = scmp.lt.s32.totalorder %s504, 7
        %s508 = scalar_select %p507, %s504, 7
        %s509 = smul.addr %s506, 8
        %s510 = sadd.s32 %s508, %s509
        %s511 = smul.addr %s510, 4
        %s512 = scalar_lea.vmem %s3, %s511
        %p513 = pneg %p132
        %p514 = pneg %p129
        %p515 = pneg %p153
        %p516 = pneg %p150
        %p517 = pneg %p181
        %p518 = pneg %p178
        %s519 = smul.u32 8, %s22
        %p520 = scmp.lt.s32.totalorder %s21, 1
        %s521 = scalar_select %p520, %s21, 1
        %p522 = scmp.lt.s32.totalorder %s519, 7
        %s523 = scalar_select %p522, %s519, 7
        %s524 = smul.addr %s521, 8
        %s525 = sadd.s32 %s523, %s524
        %s526 = smul.addr %s525, 4
        %s527 = scalar_lea.vmem %s5, %s526
        %s528 = smul.u32 8, %s22
        %s529 = smul.u32 8, %s22
        %p530 = scmp.lt.s32.totalorder %s21, 1
        %s531 = scalar_select %p530, %s21, 1
        %p532 = scmp.lt.s32.totalorder %s529, 7
        %s533 = scalar_select %p532, %s529, 7
        %s534 = smul.addr %s531, 8
        %s535 = sadd.s32 %s533, %s534
        %s536 = smul.addr %s535, 4
        %s537 = scalar_lea.vmem %s3, %s536
        %s538 = smul.u32 8, %s22
        %s539 = smul.u32 8, %s22
        %p540 = scmp.lt.s32.totalorder %s21, 1
        %s541 = scalar_select %p540, %s21, 1
        %p542 = scmp.lt.s32.totalorder %s539, 7
        %s543 = scalar_select %p542, %s539, 7
        %s544 = smul.addr %s541, 8
        %s545 = sadd.s32 %s543, %s544
        %s546 = smul.addr %s545, 4
        %s547 = scalar_lea.vmem %s5, %s546
        %s548 = smul.u32 8, %s22
        %v550 = vld [vmem:[%s468] sm:$0xf]
        %v551 = vld [vmem:[%s468 + $0x4] sm:$0xf]
        %v552 = vld [vmem:[%s468 + $0x8] sm:$0xf]
        %v553 = vld [vmem:[%s468 + $0xc] sm:$0xf]
        %v554 = vld [vmem:[%s468 + $0x10] sm:$0xf]
        %v555 = vld [vmem:[%s468 + $0x14] sm:$0xf]
        %v556 = vld [vmem:[%s468 + $0x18] sm:$0xf]
        %v557 = vld [vmem:[%s468 + $0x1c] sm:$0xf]
        %v558 = vld [vmem:[%s475] sm:$0xf]
        %v559 = vld [vmem:[%s475 + $0x4] sm:$0xf]
        %v560 = vld [vmem:[%s475 + $0x8] sm:$0xf]
        %v561 = vld [vmem:[%s475 + $0xc] sm:$0xf]
        %v562 = vld [vmem:[%s475 + $0x10] sm:$0xf]
        %v563 = vld [vmem:[%s475 + $0x14] sm:$0xf]
        %v564 = vld [vmem:[%s475 + $0x18] sm:$0xf]
        %v565 = vld [vmem:[%s475 + $0x1c] sm:$0xf]
        %v566 = vld [vmem:[%s482] sm:$0xf]
        %v567 = vld [vmem:[%s482 + $0x4] sm:$0xf]
        %v568 = vld [vmem:[%s482 + $0x8] sm:$0xf]
        %v569 = vld [vmem:[%s482 + $0xc] sm:$0xf]
        %v570 = vld [vmem:[%s482 + $0x10] sm:$0xf]
        %v571 = vld [vmem:[%s482 + $0x14] sm:$0xf]
        %v572 = vld [vmem:[%s482 + $0x18] sm:$0xf]
        %v573 = vld [vmem:[%s482 + $0x1c] sm:$0xf]
        %v582 = vunpack.c.l.b16 %v550
        %v583 = vunpack.c.l.b16 %v551
        %v584 = vunpack.c.l.b16 %v552
        %v585 = vunpack.c.l.b16 %v553
        %v586 = vunpack.c.l.b16 %v554
        %v587 = vunpack.c.l.b16 %v555
        %v588 = vunpack.c.l.b16 %v556
        %v589 = vunpack.c.l.b16 %v557
        %v590 = vpack.c.b16 %v583, %v582
        %v591 = vpack.c.b16 %v585, %v584
        %v592 = vpack.c.b16 %v587, %v586
        %v593 = vpack.c.b16 %v589, %v588
        %v606 = vunpack.c.l.b16 %v558
        %v607 = vunpack.c.l.b16 %v559
        %v608 = vunpack.c.l.b16 %v560
        %v609 = vunpack.c.l.b16 %v561
        %v610 = vunpack.c.l.b16 %v562
        %v611 = vunpack.c.l.b16 %v563
        %v612 = vunpack.c.l.b16 %v564
        %v613 = vunpack.c.l.b16 %v565
        %v614 = vpack.c.b16 %v607, %v606
        %v615 = vpack.c.b16 %v609, %v608
        %v616 = vpack.c.b16 %v611, %v610
        %v617 = vpack.c.b16 %v613, %v612
        %622 = vmatprep.subr.bf16.mxu0 0
        %623 = vmatpush1.bf16.xpose.msra.mxu0 0
        %624 = vmatprep.subr.bf16.mxu0 0
        %625 = vmatpush1.bf16.xpose.msra.mxu0 0
        %626 = vmatprep.subr.bf16.mxu0 0
        %627 = vmatpush1.bf16.xpose.msra.mxu0 0
        %628 = vmatprep.subr.bf16.mxu0 0
        %629 = vmatpush1.bf16.xpose.msra.mxu0 0
        %630 = vmatprep.subr.bf16.mxu0 0
        %631 = vmatpush1.bf16.xpose.msra.mxu0 %v617
        %632 = vmatprep.subr.bf16.mxu0 0
        %633 = vmatpush1.bf16.xpose.msra.mxu0 %v616
        %634 = vmatprep.subr.bf16.mxu0 0
        %635 = vmatpush1.bf16.xpose.msra.mxu0 %v615
        %636 = vmatprep.subr.bf16.mxu0 0
        %637 = vmatpush1.bf16.xpose.msra.mxu0 %v614
        %638 = vmatprep.subr.bf16.mxu0 0
        %639 = vmatpush2.bf16.xpose.msra.mxu0 0
        %640 = vmatprep.subr.bf16.mxu0 0
        %641 = vmatpush2.bf16.xpose.msra.mxu0 0
        %642 = vmatprep.subr.bf16.mxu0 0
        %643 = vmatpush2.bf16.xpose.msra.mxu0 0
        %644 = vmatprep.subr.bf16.mxu0 0
        %645 = vmatpush2.bf16.xpose.msra.mxu0 0
        %646 = vmatprep.subr.bf16.mxu0 0
        %647 = vmatpush2.bf16.xpose.msra.mxu0 0
        %648 = vmatprep.subr.bf16.mxu0 0
        %649 = vmatpush2.bf16.xpose.msra.mxu0 0
        %650 = vmatprep.subr.bf16.mxu0 0
        %651 = vmatpush2.bf16.xpose.msra.mxu0 0
        %652 = vmatprep.subr.bf16.mxu0 0
        %653 = vmatpush2.bf16.xpose.msra.mxu0 0
        %654 = vmatprep.mubr.bf16.mxu0 0
        %655 = vmatmul.mubr.bf16.gmra.mxu0 %v590
        %v656 = vpop.f32.mrf.mxu0
        %v657 = vadd.f32 0.0, %v656
        %v658 = vpop.f32.mrf.mxu0
        %v659 = vpop.f32.mrf.mxu0
        %v660 = vadd.f32 0.0, %v659
        %v661 = vpop.f32.mrf.mxu0
        %662 = vmatprep.mubr.bf16.mxu0 0
        %663 = vmatmul.mubr.bf16.gmra.mxu0 %v591
        %v664 = vpop.f32.mrf.mxu0
        %v665 = vadd.f32 0.0, %v664
        %v666 = vpop.f32.mrf.mxu0
        %v667 = vpop.f32.mrf.mxu0
        %v668 = vadd.f32 0.0, %v667
        %v669 = vpop.f32.mrf.mxu0
        %670 = vmatprep.mubr.bf16.mxu0 0
        %671 = vmatmul.mubr.bf16.gmra.mxu0 %v592
        %v672 = vpop.f32.mrf.mxu0
        %v673 = vadd.f32 0.0, %v672
        %v674 = vpop.f32.mrf.mxu0
        %v675 = vpop.f32.mrf.mxu0
        %v676 = vadd.f32 0.0, %v675
        %v677 = vpop.f32.mrf.mxu0
        %678 = vmatprep.mubr.bf16.mxu0 0
        %679 = vmatmul.mubr.bf16.gmra.mxu0 %v593
        %v680 = vpop.f32.mrf.mxu0
        %v681 = vadd.f32 0.0, %v680
        %v682 = vpop.f32.mrf.mxu0
        %v683 = vpop.f32.mrf.mxu0
        %v684 = vadd.f32 0.0, %v683
        %v685 = vpop.f32.mrf.mxu0
        %686 = vdwg.mxu0
        %vm687 = vcmask 523264
        %v688 = vsel %vm687, %v657, -inf
        %689 = vmax.xlane.f32.xlu0 %v688
        %v690 = vpop.xlane.xlu0 %689
        %v691 = vsel %vm687, %v660, -inf
        %692 = vmax.xlane.f32.xlu0 %v691
        %v693 = vpop.xlane.xlu0 %692
        %v694 = vsel %vm687, %v665, -inf
        %695 = vmax.xlane.f32.xlu0 %v694
        %v696 = vpop.xlane.xlu0 %695
        %v697 = vsel %vm687, %v668, -inf
        %698 = vmax.xlane.f32.xlu0 %v697
        %v699 = vpop.xlane.xlu0 %698
        %v700 = vsel %vm687, %v673, -inf
        %701 = vmax.xlane.f32.xlu0 %v700
        %v702 = vpop.xlane.xlu0 %701
        %v703 = vsel %vm687, %v676, -inf
        %704 = vmax.xlane.f32.xlu0 %v703
        %v705 = vpop.xlane.xlu0 %704
        %v706 = vsel %vm687, %v681, -inf
        %707 = vmax.xlane.f32.xlu0 %v706
        %v708 = vpop.xlane.xlu0 %707
        %v709 = vsel %vm687, %v684, -inf
        %710 = vmax.xlane.f32.xlu0 %v709
        %v711 = vpop.xlane.xlu0 %710
        %v712 = vsub.f32 %v657, %v690
        %v713 = vsub.f32 %v660, %v693
        %v714 = vsub.f32 %v665, %v696
        %v715 = vsub.f32 %v668, %v699
        %v716 = vsub.f32 %v673, %v702
        %v717 = vsub.f32 %v676, %v705
        %v718 = vsub.f32 %v681, %v708
        %v719 = vsub.f32 %v684, %v711
        %v720 = vmul.f32 %v712, 1.442695
        %v721 = vpow.pop %v720
        %v722 = vmul.f32 %v713, 1.442695
        %v723 = vpow.pop %v722
        %v724 = vmul.f32 %v714, 1.442695
        %v725 = vpow.pop %v724
        %v726 = vmul.f32 %v715, 1.442695
        %v727 = vpow.pop %v726
        %v728 = vmul.f32 %v716, 1.442695
        %v729 = vpow.pop %v728
        %v730 = vmul.f32 %v717, 1.442695
        %v731 = vpow.pop %v730
        %v732 = vmul.f32 %v718, 1.442695
        %v733 = vpow.pop %v732
        %v734 = vmul.f32 %v719, 1.442695
        %v735 = vpow.pop %v734
        %v736 = vsel %vm687, %v721, 0.0
        %737 = vadd.xlane.f32.xlu0 %v736
        %v738 = vpop.xlane.xlu0 %737
        %v739 = vsel %vm687, %v723, 0.0
        %740 = vadd.xlane.f32.xlu0 %v739
        %v741 = vpop.xlane.xlu0 %740
        %v742 = vsel %vm687, %v725, 0.0
        %743 = vadd.xlane.f32.xlu0 %v742
        %v744 = vpop.xlane.xlu0 %743
        %v745 = vsel %vm687, %v727, 0.0
        %746 = vadd.xlane.f32.xlu0 %v745
        %v747 = vpop.xlane.xlu0 %746
        %v748 = vsel %vm687, %v729, 0.0
        %749 = vadd.xlane.f32.xlu0 %v748
        %v750 = vpop.xlane.xlu0 %749
        %v751 = vsel %vm687, %v731, 0.0
        %752 = vadd.xlane.f32.xlu0 %v751
        %v753 = vpop.xlane.xlu0 %752
        %v754 = vsel %vm687, %v733, 0.0
        %755 = vadd.xlane.f32.xlu0 %v754
        %v756 = vpop.xlane.xlu0 %755
        %v757 = vsel %vm687, %v735, 0.0
        %758 = vadd.xlane.f32.xlu0 %v757
        %v759 = vpop.xlane.xlu0 %758
        %v760 = vrcp.pop %v738
        %v761 = vrcp.pop %v741
        %v762 = vrcp.pop %v744
        %v763 = vrcp.pop %v747
        %v764 = vrcp.pop %v750
        %v765 = vrcp.pop %v753
        %v766 = vrcp.pop %v756
        %v767 = vrcp.pop %v759
        %v768 = vmul.f32 %v721, %v760
        %v769 = vmul.f32 %v723, %v761
        %v770 = vmul.f32 %v725, %v762
        %v771 = vmul.f32 %v727, %v763
        %v772 = vmul.f32 %v729, %v764
        %v773 = vmul.f32 %v731, %v765
        %v774 = vmul.f32 %v733, %v766
        %v775 = vmul.f32 %v735, %v767
        %v776 = vpack.c.bf16 %v769, %v768
        %v777 = vpack.c.bf16 %v771, %v770
        %v778 = vpack.c.bf16 %v773, %v772
        %v779 = vpack.c.bf16 %v775, %v774
        %v788 = vunpack.c.l.b16 %v566
        %v789 = vunpack.c.l.b16 %v567
        %v790 = vunpack.c.l.b16 %v568
        %v791 = vunpack.c.l.b16 %v569
        %v792 = vunpack.c.l.b16 %v570
        %v793 = vunpack.c.l.b16 %v571
        %v794 = vunpack.c.l.b16 %v572
        %v795 = vunpack.c.l.b16 %v573
        %v796 = vpack.c.b16 %v789, %v788
        %v797 = vpack.c.b16 %v791, %v790
        %v798 = vpack.c.b16 %v793, %v792
        %v799 = vpack.c.b16 %v795, %v794
        %v805 = vsel %vm687, %v776, 0
        %v808 = vsel %vm687, %v777, 0
        %v811 = vsel %vm687, %v778, 0
        %v814 = vsel %vm687, %v779, 0
        %816 = vmatprep.subr.bf16.mxu0 0
        %817 = vmatpush1.bf16.msra.mxu0 0
        %818 = vmatprep.subr.bf16.mxu0 0
        %819 = vmatpush1.bf16.msra.mxu0 0
        %820 = vmatprep.subr.bf16.mxu0 0
        %821 = vmatpush1.bf16.msra.mxu0 0
        %822 = vmatprep.subr.bf16.mxu0 0
        %823 = vmatpush1.bf16.msra.mxu0 0
        %824 = vmatprep.subr.bf16.mxu0 0
        %825 = vmatpush1.bf16.msra.mxu0 %v799
        %826 = vmatprep.subr.bf16.mxu0 0
        %827 = vmatpush1.bf16.msra.mxu0 %v798
        %828 = vmatprep.subr.bf16.mxu0 0
        %829 = vmatpush1.bf16.msra.mxu0 %v797
        %830 = vmatprep.subr.bf16.mxu0 0
        %831 = vmatpush1.bf16.msra.mxu0 %v796
        %832 = vmatprep.subr.bf16.mxu0 0
        %833 = vmatpush2.bf16.msra.mxu0 0
        %834 = vmatprep.subr.bf16.mxu0 0
        %835 = vmatpush2.bf16.msra.mxu0 0
        %836 = vmatprep.subr.bf16.mxu0 0
        %837 = vmatpush2.bf16.msra.mxu0 0
        %838 = vmatprep.subr.bf16.mxu0 0
        %839 = vmatpush2.bf16.msra.mxu0 0
        %840 = vmatprep.subr.bf16.mxu0 0
        %841 = vmatpush2.bf16.msra.mxu0 0
        %842 = vmatprep.subr.bf16.mxu0 0
        %843 = vmatpush2.bf16.msra.mxu0 0
        %844 = vmatprep.subr.bf16.mxu0 0
        %845 = vmatpush2.bf16.msra.mxu0 0
        %846 = vmatprep.subr.bf16.mxu0 0
        %847 = vmatpush2.bf16.msra.mxu0 0
        %848 = vmatprep.mubr.bf16.mxu0 0
        %849 = vmatmul.mubr.bf16.gmra.mxu0 %v805
        %v850 = vpop.f32.mrf.mxu0
        %v851 = vadd.f32 0.0, %v850
        %v852 = vpop.f32.mrf.mxu0
        %v853 = vpop.f32.mrf.mxu0
        %v854 = vadd.f32 0.0, %v853
        %v855 = vpop.f32.mrf.mxu0
        %856 = vmatprep.mubr.bf16.mxu0 0
        %857 = vmatmul.mubr.bf16.gmra.mxu0 %v808
        %v858 = vpop.f32.mrf.mxu0
        %v859 = vadd.f32 0.0, %v858
        %v860 = vpop.f32.mrf.mxu0
        %v861 = vpop.f32.mrf.mxu0
        %v862 = vadd.f32 0.0, %v861
        %v863 = vpop.f32.mrf.mxu0
        %864 = vmatprep.mubr.bf16.mxu0 0
        %865 = vmatmul.mubr.bf16.gmra.mxu0 %v811
        %v866 = vpop.f32.mrf.mxu0
        %v867 = vadd.f32 0.0, %v866
        %v868 = vpop.f32.mrf.mxu0
        %v869 = vpop.f32.mrf.mxu0
        %v870 = vadd.f32 0.0, %v869
        %v871 = vpop.f32.mrf.mxu0
        %872 = vmatprep.mubr.bf16.mxu0 0
        %873 = vmatmul.mubr.bf16.gmra.mxu0 %v814
        %v874 = vpop.f32.mrf.mxu0
        %v875 = vadd.f32 0.0, %v874
        %v876 = vpop.f32.mrf.mxu0
        %v877 = vpop.f32.mrf.mxu0
        %v878 = vadd.f32 0.0, %v877
        %v879 = vpop.f32.mrf.mxu0
        %880 = vdwg.mxu0
        %s881 = sld [smem:[#allocation2]]
        %v882 = vstv %s881
        %v883 = vmul.f32 %v882, %v851
        %v884 = vmul.f32 %v882, %v854
        %v885 = vmul.f32 %v882, %v859
        %v886 = vmul.f32 %v882, %v862
        %v887 = vmul.f32 %v882, %v867
        %v888 = vmul.f32 %v882, %v870
        %v889 = vmul.f32 %v882, %v875
        %v890 = vmul.f32 %v882, %v878
        %v891 = vld [vmem:[%s537] sm:$0xf]
        %v892 = vld [vmem:[%s537 + $0x4] sm:$0xf]
        %v893 = vld [vmem:[%s537 + $0x8] sm:$0xf]
        %v894 = vld [vmem:[%s537 + $0xc] sm:$0xf]
        %v895 = vld [vmem:[%s537 + $0x10] sm:$0xf]
        %v896 = vld [vmem:[%s537 + $0x14] sm:$0xf]
        %v897 = vld [vmem:[%s537 + $0x18] sm:$0xf]
        %v898 = vld [vmem:[%s537 + $0x1c] sm:$0xf]
        %v899 = vunpack.c.l.bf16 %v891
        %v900 = vunpack.c.l.bf16 %v892
        %v901 = vunpack.c.l.bf16 %v893
        %v902 = vunpack.c.l.bf16 %v894
        %v903 = vunpack.c.l.bf16 %v895
        %v904 = vunpack.c.l.bf16 %v896
        %v905 = vunpack.c.l.bf16 %v897
        %v906 = vunpack.c.l.bf16 %v898
        %v907 = vadd.f32 %v883, %v899
        %v908 = vadd.f32 %v884, %v900
        %v909 = vadd.f32 %v885, %v901
        %v910 = vadd.f32 %v886, %v902
        %v911 = vadd.f32 %v887, %v903
        %v912 = vadd.f32 %v888, %v904
        %v913 = vadd.f32 %v889, %v905
        %v914 = vadd.f32 %v890, %v906
        %v915 = vpack.c.bf16 %v908, %v907
        %v916 = vpack.c.bf16 %v910, %v909
        %v917 = vpack.c.bf16 %v912, %v911
        %v918 = vpack.c.bf16 %v914, %v913
        %v923 = vunpack.c.l.b16 %v915
        %v924 = vunpack.c.h.b16 %v915
        %v925 = vunpack.c.l.b16 %v916
        %v926 = vunpack.c.h.b16 %v916
        %v927 = vunpack.c.l.b16 %v917
        %v928 = vunpack.c.h.b16 %v917
        %v929 = vunpack.c.l.b16 %v918
        %v930 = vunpack.c.h.b16 %v918
        %v931 = vpack.c.b16 %v923, %v923
        %v932 = vpack.c.b16 %v924, %v924
        %v933 = vpack.c.b16 %v925, %v925
        %v934 = vpack.c.b16 %v926, %v926
        %v935 = vpack.c.b16 %v927, %v927
        %v936 = vpack.c.b16 %v928, %v928
        %v937 = vpack.c.b16 %v929, %v929
        %v938 = vpack.c.b16 %v930, %v930
        %947 = vst [vmem:[%s547] sm:$0xf] %v931
        %948 = vst [vmem:[%s547 + $0x4] sm:$0xf] %v932
        %949 = vst [vmem:[%s547 + $0x8] sm:$0xf] %v933
        %950 = vst [vmem:[%s547 + $0xc] sm:$0xf] %v934
        %951 = vst [vmem:[%s547 + $0x10] sm:$0xf] %v935
        %952 = vst [vmem:[%s547 + $0x14] sm:$0xf] %v936
        %953 = vst [vmem:[%s547 + $0x18] sm:$0xf] %v937
        %954 = vst [vmem:[%s547 + $0x1c] sm:$0xf] %v938
        %s955 = smul.u32 8, %s22
        %p956 = scmp.lt.s32.totalorder %s21, 1
        %s957 = scalar_select %p956, %s21, 1
        %p958 = scmp.lt.s32.totalorder %s955, 7
        %s959 = scalar_select %p958, %s955, 7
        %s960 = smul.addr %s957, 8
        %s961 = sadd.s32 %s959, %s960
        %s962 = smul.addr %s961, 4
        %s963 = scalar_lea.vmem %s5, %s962
        // Predicated region
        $region164: #{_lambda_.12} parent=150 // pred_check
          %p964 = pneg %p178
        $region165: #{_lambda_.12} parent=150 // pred_check_branch
          %966 = sbr.rel (%p964) target = $region167
        $region166: #{_lambda_.12} parent=150 // pred_region
          %s967 = smul.u32 8, %s22
        $region167: #{_lambda_.12} parent=150 // pred_fallthru
          _
      $region151: #{_lambda_.12} parent=5 // pred_fallthru
        _
      %p968 = scmp.le.s32.totalorder 2, %s12
      // Predicated region
      $region168: #{_lambda_.12} parent=5 // pred_check
        %p969 = pneg %p968
      $region169: #{_lambda_.12} parent=5 // pred_check_branch
        %971 = sbr.rel (%p969) target = $region171
      $region170: #{_lambda_.12} parent=5 // pred_region
        %s972 = ssub.s32 %s12, 2
        // Predicated region
        $region172: #{_lambda_.12} parent=170 // pred_check
          %p973 = pneg %p184
        $region173: #{_lambda_.12} parent=170 // pred_check_branch
          %975 = sbr.rel (%p973) target = $region175
        $region174: #{_lambda_.12} parent=170 // pred_region
          %s976 = smul.u32 8, %s24
          %p977 = scmp.lt.s32.totalorder %s23, 1
          %s978 = scalar_select %p977, %s23, 1
          %p979 = scmp.lt.s32.totalorder %s976, 7
          %s980 = scalar_select %p979, %s976, 7
          %s981 = smul.addr %s978, 8
          %s982 = sadd.s32 %s980, %s981
          %s983 = smul.addr %s982, 4
          %s984 = scalar_lea.vmem %s5, %s983
        $region175: #{_lambda_.12} parent=170 // pred_fallthru
          _
      $region171: #{_lambda_.12} parent=5 // pred_fallthru
        _
    $region6: #{_lambda_.12} parent=1 // loop_footer
      %s16 = sadd.s32 1, %s12
    $region7: #{_lambda_.12} parent=1 // loop_footer_branch
      %11 = sbr.rel target = $region3
    $region8: #{_lambda_.12} parent=1 // loop_exit
      _

// kernel: _lambda_.11
$region0: #{_lambda_.11}
  #allocation0 [shape = 'u32[]', space=smem, size = 0x4, offset = 0x4, fixed_abs, tag = 'smem constant byte address 0x4 - core index']
  #allocation1 [shape = 'u32[144,128]{1,0:T(1,128)}', space=vmem, size = 0x12000, scoped, tag = 'internal scratch']
  #allocation2 [shape = 'f32[128,256]{1,0:T(8,128)}', space=vmem, size = 0x20000, scoped, tag = 'scratch operand']
  %s0 = inlined_call_operand.vmem [shape: bf16[128,128], index: 0, kind: input, shape index: {}]
  %s1 = inlined_call_operand.vmem [shape: bf16[128,512], index: 1, kind: input, shape index: {}]
  %s2 = inlined_call_operand.vmem [shape: f32[1,512], index: 2, kind: input, shape index: {}]
  %s3 = inlined_call_operand.vmem [shape: f32[1,512], index: 3, kind: input, shape index: {}]
  %s4 = inlined_call_operand.vmem [shape: bf16[128,512], index: 4, kind: output, shape index: {}]
  %s5 = sld [smem:[#allocation0]]
  $region129: #{_lambda_.11} parent=0
    _
  %s7 = ssub.s32 1, %s5
  %s8 = scalar_select 0, %s7, %s5
  $region1: #{_lambda_.11} parent=0
    #allocation3 [shape = 'u8[131072]{0}', space=vmem, size = 0x20000, scoped, tag = 'input window, operand 1']
    #allocation4 [shape = 'u8[131072]{0}', space=vmem, size = 0x20000, scoped, tag = 'output window, operand 0']
    loop: start=0, step=1, limit=4
    $region2: #{_lambda_.11} parent=1 // loop_pre_header
      _
    $region3: #{_lambda_.11} parent=1 // loop_header
      %s10 = sphi 0, %s14
      %p11 = scmp.ge.s32.totalorder %s10, 4
      %s17 = sphi 0, %s36
      %s18 = sphi 0, %s32
      %s19 = sphi 0, %s28
      %s20 = sphi 0, %s17
      %s21 = sphi 0, %s18
      %s22 = sphi 0, %s19
      %s23 = sphi 0, %s20
      %s24 = sphi 0, %s21
      %s25 = sphi 0, %s22
      %s41 = sphi 0, %s43
      %s44 = sphi 0, %s41
      %s45 = sphi 0, %s44
      %s61 = sphi 0, %s45
      %s69 = sphi 0, %s71
      %s72 = sphi 0, %s69
      %s73 = sphi 0, %s72
      %s89 = sphi 0, %s73
      %s95 = sphi 0, %s97
      %s98 = sphi 0, %s95
      %s99 = sphi 0, %s98
      %s115 = sphi 0, %s99
      %s121 = sphi 0, %s123
      %s124 = sphi 0, %s121
      %s125 = sphi 0, %s124
      %s141 = sphi 0, %s125
      %s149 = sphi 0, %s151
      %s152 = sphi 0, %s149
      %s153 = sphi 0, %s152
      %s169 = sphi 0, %s153
    $region4: #{_lambda_.11} parent=1 // loop_header_branch
      %13 = sbr.rel (%p11) target = $region8
    $region5: #{_lambda_.11} parent=1 // loop_body
      %s15 = ssub.s32 %s10, 1
      %s16 = ssub.s32 %s10, 2
      %s26 = sadd.s32 1, %s19
      %p27 = scmp.ge.s32.totalorder %s26, 1
      %s28 = scalar_select %p27, 0, %s26
      %s29 = sadd.s32 1, %s18
      %s30 = scalar_select %p27, %s29, %s18
      %p31 = scmp.ge.s32.totalorder %s30, 2
      %s32 = scalar_select %p31, 0, %s30
      %s33 = sadd.s32 1, %s17
      %s34 = scalar_select %p31, %s33, %s17
      %p35 = scmp.ge.s32.totalorder %s34, 1
      %s36 = scalar_select %p35, 0, %s34
      %s37 = ssub.s32 %s17, %s36
      %s38 = ssub.s32 %s19, %s28
      %s39 = sor.u32 %s37, %s38
      %p40 = scmp.eq.s32.totalorder %s39, 0
      %s42 = sadd.s32 %s41, 1
      %s43 = scalar_select %p40, %s41, %s42
      %p46 = pneg %p40
      %p47 = scmp.eq.s32.totalorder %s10, 1
      %p48 = por %p46, %p47
      %p49 = scmp.ne.s32.totalorder %s41, %s44
      %p50 = scmp.eq.s32.totalorder %s10, 0
      %p51 = por %p49, %p50
      %p52 = scmp.ne.s32.totalorder %s41, %s44
      %p53 = scmp.eq.s32.totalorder %s15, 1
      %p54 = por %p52, %p53
      %p55 = scmp.ne.s32.totalorder %s44, %s45
      %p56 = scmp.eq.s32.totalorder %s15, 0
      %p57 = por %p55, %p56
      %p58 = scmp.ne.s32.totalorder %s44, %s45
      %p59 = scmp.eq.s32.totalorder %s16, 1
      %p60 = por %p58, %p59
      %p62 = scmp.ne.s32.totalorder %s45, %s61
      %p63 = scmp.eq.s32.totalorder %s16, 0
      %p64 = por %p62, %p63
      %s65 = ssub.s32 %s19, %s28
      %s66 = ssub.s32 %s18, %s32
      %s67 = sor.u32 %s65, %s66
      %p68 = scmp.eq.s32.totalorder %s67, 0
      %s70 = sadd.s32 %s69, 1
      %s71 = scalar_select %p68, %s69, %s70
      %p74 = pneg %p68
      %p75 = scmp.eq.s32.totalorder %s10, 1
      %p76 = por %p74, %p75
      %p77 = scmp.ne.s32.totalorder %s69, %s72
      %p78 = scmp.eq.s32.totalorder %s10, 0
      %p79 = por %p77, %p78
      %p80 = scmp.ne.s32.totalorder %s69, %s72
      %p81 = scmp.eq.s32.totalorder %s15, 1
      %p82 = por %p80, %p81
      %p83 = scmp.ne.s32.totalorder %s72, %s73
      %p84 = scmp.eq.s32.totalorder %s15, 0
      %p85 = por %p83, %p84
      %p86 = scmp.ne.s32.totalorder %s72, %s73
      %p87 = scmp.eq.s32.totalorder %s16, 1
      %p88 = por %p86, %p87
      %p90 = scmp.ne.s32.totalorder %s73, %s89
      %p91 = scmp.eq.s32.totalorder %s16, 0
      %p92 = por %p90, %p91
      %s93 = ssub.s32 %s18, %s32
      %p94 = scmp.eq.s32.totalorder %s93, 0
      %s96 = sadd.s32 %s95, 1
      %s97 = scalar_select %p94, %s95, %s96
      %p100 = pneg %p94
      %p101 = scmp.eq.s32.totalorder %s10, 1
      %p102 = por %p100, %p101
      %p103 = scmp.ne.s32.totalorder %s95, %s98
      %p104 = scmp.eq.s32.totalorder %s10, 0
      %p105 = por %p103, %p104
      %p106 = scmp.ne.s32.totalorder %s95, %s98
      %p107 = scmp.eq.s32.totalorder %s15, 1
      %p108 = por %p106, %p107
      %p109 = scmp.ne.s32.totalorder %s98, %s99
      %p110 = scmp.eq.s32.totalorder %s15, 0
      %p111 = por %p109, %p110
      %p112 = scmp.ne.s32.totalorder %s98, %s99
      %p113 = scmp.eq.s32.totalorder %s16, 1
      %p114 = por %p112, %p113
      %p116 = scmp.ne.s32.totalorder %s99, %s115
      %p117 = scmp.eq.s32.totalorder %s16, 0
      %p118 = por %p116, %p117
      %s119 = ssub.s32 %s18, %s32
      %p120 = scmp.eq.s32.totalorder %s119, 0
      %s122 = sadd.s32 %s121, 1
      %s123 = scalar_select %p120, %s121, %s122
      %p126 = pneg %p120
      %p127 = scmp.eq.s32.totalorder %s10, 1
      %p128 = por %p126, %p127
      %p129 = scmp.ne.s32.totalorder %s121, %s124
      %p130 = scmp.eq.s32.totalorder %s10, 0
      %p131 = por %p129, %p130
      %p132 = scmp.ne.s32.totalorder %s121, %s124
      %p133 = scmp.eq.s32.totalorder %s15, 1
      %p134 = por %p132, %p133
      %p135 = scmp.ne.s32.totalorder %s124, %s125
      %p136 = scmp.eq.s32.totalorder %s15, 0
      %p137 = por %p135, %p136
      %p138 = scmp.ne.s32.totalorder %s124, %s125
      %p139 = scmp.eq.s32.totalorder %s16, 1
      %p140 = por %p138, %p139
      %p142 = scmp.ne.s32.totalorder %s125, %s141
      %p143 = scmp.eq.s32.totalorder %s16, 0
      %p144 = por %p142, %p143
      %s145 = ssub.s32 %s17, %s36
      %s146 = ssub.s32 %s18, %s32
      %s147 = sor.u32 %s145, %s146
      %p148 = scmp.eq.s32.totalorder %s147, 0
      %s150 = sadd.s32 %s149, 1
      %s151 = scalar_select %p148, %s149, %s150
      %p154 = pneg %p148
      %p155 = scmp.eq.s32.totalorder %s10, 1
      %p156 = por %p154, %p155
      %p157 = scmp.ne.s32.totalorder %s149, %s152
      %p158 = scmp.eq.s32.totalorder %s10, 0
      %p159 = por %p157, %p158
      %p160 = scmp.ne.s32.totalorder %s149, %s152
      %p161 = scmp.eq.s32.totalorder %s15, 1
      %p162 = por %p160, %p161
      %p163 = scmp.ne.s32.totalorder %s152, %s153
      %p164 = scmp.eq.s32.totalorder %s15, 0
      %p165 = por %p163, %p164
      %p166 = scmp.ne.s32.totalorder %s152, %s153
      %p167 = scmp.eq.s32.totalorder %s16, 1
      %p168 = por %p166, %p167
      %p170 = scmp.ne.s32.totalorder %s153, %s169
      %p171 = scmp.eq.s32.totalorder %s16, 0
      %p172 = por %p170, %p171
      %p173 = scmp.le.s32.totalorder 1, %s10
      %p174 = scmp.lt.s32.totalorder %s10, 3
      %p175 = pnand %p173, %p174
      %p176 = pneg %p175
      // Predicated region
      $region9: #{_lambda_.11} parent=5 // pred_check
        _
      $region10: #{_lambda_.11} parent=5 // pred_check_branch
        %178 = sbr.rel (%p175) target = $region12
      $region11: #{_lambda_.11} parent=5 // pred_region
        %s179 = ssub.s32 %s10, 1
        // Predicated region
        $region13: #{_lambda_.11} parent=11 // pred_check
          %p180 = pneg %p57
        $region14: #{_lambda_.11} parent=11 // pred_check_branch
          %182 = sbr.rel (%p180) target = $region16
        $region15: #{_lambda_.11} parent=11 // pred_region
          %s183 = smul.u32 16, %s20
          %p184 = scmp.lt.s32.totalorder %s183, 15
          %s185 = scalar_select %p184, %s183, 15
          %p186 = scmp.lt.s32.totalorder %s22, 0
          %s187 = scalar_select %p186, %s22, 0
          %s188 = sadd.s32 %s187, %s185
          %s189 = smul.addr %s188, 4
          %s190 = scalar_lea.vmem %s0, %s189
          %s191 = smul.u32 16, %s20
        $region16: #{_lambda_.11} parent=11 // pred_fallthru
          _
      $region12: #{_lambda_.11} parent=5 // pred_fallthru
        _
      %p192 = scmp.lt.s32.totalorder %s10, 2
      // Predicated region
      $region17: #{_lambda_.11} parent=5 // pred_check
        %p193 = pneg %p192
      $region18: #{_lambda_.11} parent=5 // pred_check_branch
        %195 = sbr.rel (%p193) target = $region20
      $region19: #{_lambda_.11} parent=5 // pred_region
        // Predicated region
        $region21: #{_lambda_.11} parent=19 // pred_check
          %p196 = pneg %p79
        $region22: #{_lambda_.11} parent=19 // pred_check_branch
          %198 = sbr.rel (%p196) target = $region24
        $region23: #{_lambda_.11} parent=19 // pred_region
          %s199 = sand.u32 %s69, 1
          %s200 = sand.u32 %s69, 1
          %s201 = smul.addr %s200, 128
          %s202 = scalar_lea.vmem [#allocation3], %s201
          %s203 = smul.u32 16, %s19
          %s204 = smul.u32 2, %s18
          %s205 = smul.addr %s203, 4
          %s206 = sadd.s32 %s204, %s205
          %s207 = smul.addr %s206, 4
          %s208 = scalar_lea.vmem %s1, %s207
          // Predicated region
          $region25: #{_lambda_.11} parent=23 // pred_check
            _
          $region26: #{_lambda_.11} parent=23 // pred_check_branch
            %210 = sbr.rel (0) target = $region28
          $region27: #{_lambda_.11} parent=23 // pred_region
            // Predicated region
            $region29: #{_lambda_.11} parent=27 // pred_check
              _
            $region30: #{_lambda_.11} parent=27 // pred_check_branch
              %212 = sbr.rel (0) target = $region32
            $region31: #{_lambda_.11} parent=27 // pred_region
              // Predicated region
              $region44: #{_lambda_.11} parent=31 // pred_check
                _
              $region45: #{_lambda_.11} parent=31 // pred_check_branch
                %258 = sbr.rel (0) target = $region47
              $region46: #{_lambda_.11} parent=31 // pred_region
                loop: start=0, step=1, limit=1
                $region48: #{_lambda_.11} parent=46 // loop_pre_header
                  _
                $region49: #{_lambda_.11} parent=46 // loop_header
                  %s260 = sphi 0, %s264
                  %p261 = scmp.ge.s32.totalorder %s260, 1
                  %s265 = sphi %s208, %s208
                  %s266 = sphi %s202, %s202
                $region50: #{_lambda_.11} parent=46 // loop_header_branch
                  %263 = sbr.rel (%p261) target = $region54
                $region51: #{_lambda_.11} parent=46 // loop_body
                  %v267 = vld [vmem:[%s265] sm:$0xff]
                  %268 = vst [vmem:[%s266] sm:$0xff] %v267
                  %v269 = vld [vmem:[%s265 + $0x10] sm:$0xff]
                  %270 = vst [vmem:[%s266 + $0x8] sm:$0xff] %v269
                  %v271 = vld [vmem:[%s265 + $0x20] sm:$0xff]
                  %272 = vst [vmem:[%s266 + $0x10] sm:$0xff] %v271
                  %v273 = vld [vmem:[%s265 + $0x30] sm:$0xff]
                  %274 = vst [vmem:[%s266 + $0x18] sm:$0xff] %v273
                  %v275 = vld [vmem:[%s265 + $0x40] sm:$0xff]
                  %276 = vst [vmem:[%s266 + $0x20] sm:$0xff] %v275
                  %v277 = vld [vmem:[%s265 + $0x50] sm:$0xff]
                  %278 = vst [vmem:[%s266 + $0x28] sm:$0xff] %v277
                  %v279 = vld [vmem:[%s265 + $0x60] sm:$0xff]
                  %280 = vst [vmem:[%s266 + $0x30] sm:$0xff] %v279
                  %v281 = vld [vmem:[%s265 + $0x70] sm:$0xff]
                  %282 = vst [vmem:[%s266 + $0x38] sm:$0xff] %v281
                  %v283 = vld [vmem:[%s265 + $0x80] sm:$0xff]
                  %284 = vst [vmem:[%s266 + $0x40] sm:$0xff] %v283
                  %v285 = vld [vmem:[%s265 + $0x90] sm:$0xff]
                  %286 = vst [vmem:[%s266 + $0x48] sm:$0xff] %v285
                  %v287 = vld [vmem:[%s265 + $0xa0] sm:$0xff]
                  %288 = vst [vmem:[%s266 + $0x50] sm:$0xff] %v287
                  %v289 = vld [vmem:[%s265 + $0xb0] sm:$0xff]
                  %290 = vst [vmem:[%s266 + $0x58] sm:$0xff] %v289
                  %v291 = vld [vmem:[%s265 + $0xc0] sm:$0xff]
                  %292 = vst [vmem:[%s266 + $0x60] sm:$0xff] %v291
                  %v293 = vld [vmem:[%s265 + $0xd0] sm:$0xff]
                  %294 = vst [vmem:[%s266 + $0x68] sm:$0xff] %v293
                  %v295 = vld [vmem:[%s265 + $0xe0] sm:$0xff]
                  %296 = vst [vmem:[%s266 + $0x70] sm:$0xff] %v295
                  %v297 = vld [vmem:[%s265 + $0xf0] sm:$0xff]
                  %298 = vst [vmem:[%s266 + $0x78] sm:$0xff] %v297
                $region52: #{_lambda_.11} parent=46 // loop_footer
                  %s264 = sadd.s32 1, %s260
                $region53: #{_lambda_.11} parent=46 // loop_footer_branch
                  %259 = sbr.rel target = $region49
                $region54: #{_lambda_.11} parent=46 // loop_exit
                  _
              $region47: #{_lambda_.11} parent=31 // pred_fallthru
                _
              // Predicated region
              $region55: #{_lambda_.11} parent=31 // pred_check
                _
              $region56: #{_lambda_.11} parent=31 // pred_check_branch
                %300 = sbr.rel target = $region58
              $region57: #{_lambda_.11} parent=31 // pred_region
                _
              $region58: #{_lambda_.11} parent=31 // pred_fallthru
                _
            $region32: #{_lambda_.11} parent=27 // pred_fallthru
              _
            // Predicated region
            $region33: #{_lambda_.11} parent=27 // pred_check
              _
            $region34: #{_lambda_.11} parent=27 // pred_check_branch
              %214 = sbr.rel target = $region36
            $region35: #{_lambda_.11} parent=27 // pred_region
              %s216 = ssub.s32 256, 1
              loop: start=0, step=1, limit=1
              $region37: #{_lambda_.11} parent=35 // loop_pre_header
                _
              $region38: #{_lambda_.11} parent=35 // loop_header
                %s218 = sphi 0, %s222
                %p219 = scmp.ge.s32.totalorder %s218, 1
                %s223 = sphi %s208, %s208
                %s224 = sphi %s202, %s202
              $region39: #{_lambda_.11} parent=35 // loop_header_branch
                %221 = sbr.rel (%p219) target = $region43
              $region40: #{_lambda_.11} parent=35 // loop_body
                %v225 = vld [vmem:[%s223] sm:%s216]
                %226 = vst [vmem:[%s224] sm:%s216] %v225
                %v227 = vld [vmem:[%s223 + $0x10] sm:%s216]
                %228 = vst [vmem:[%s224 + $0x8] sm:%s216] %v227
                %v229 = vld [vmem:[%s223 + $0x20] sm:%s216]
                %230 = vst [vmem:[%s224 + $0x10] sm:%s216] %v229
                %v231 = vld [vmem:[%s223 + $0x30] sm:%s216]
                %232 = vst [vmem:[%s224 + $0x18] sm:%s216] %v231
                %v233 = vld [vmem:[%s223 + $0x40] sm:%s216]
                %234 = vst [vmem:[%s224 + $0x20] sm:%s216] %v233
                %v235 = vld [vmem:[%s223 + $0x50] sm:%s216]
                %236 = vst [vmem:[%s224 + $0x28] sm:%s216] %v235
                %v237 = vld [vmem:[%s223 + $0x60] sm:%s216]
                %238 = vst [vmem:[%s224 + $0x30] sm:%s216] %v237
                %v239 = vld [vmem:[%s223 + $0x70] sm:%s216]
                %240 = vst [vmem:[%s224 + $0x38] sm:%s216] %v239
                %v241 = vld [vmem:[%s223 + $0x80] sm:%s216]
                %242 = vst [vmem:[%s224 + $0x40] sm:%s216] %v241
                %v243 = vld [vmem:[%s223 + $0x90] sm:%s216]
                %244 = vst [vmem:[%s224 + $0x48] sm:%s216] %v243
                %v245 = vld [vmem:[%s223 + $0xa0] sm:%s216]
                %246 = vst [vmem:[%s224 + $0x50] sm:%s216] %v245
                %v247 = vld [vmem:[%s223 + $0xb0] sm:%s216]
                %248 = vst [vmem:[%s224 + $0x58] sm:%s216] %v247
                %v249 = vld [vmem:[%s223 + $0xc0] sm:%s216]
                %250 = vst [vmem:[%s224 + $0x60] sm:%s216] %v249
                %v251 = vld [vmem:[%s223 + $0xd0] sm:%s216]
                %252 = vst [vmem:[%s224 + $0x68] sm:%s216] %v251
                %v253 = vld [vmem:[%s223 + $0xe0] sm:%s216]
                %254 = vst [vmem:[%s224 + $0x70] sm:%s216] %v253
                %v255 = vld [vmem:[%s223 + $0xf0] sm:%s216]
                %256 = vst [vmem:[%s224 + $0x78] sm:%s216] %v255
              $region41: #{_lambda_.11} parent=35 // loop_footer
                %s222 = sadd.s32 1, %s218
              $region42: #{_lambda_.11} parent=35 // loop_footer_branch
                %217 = sbr.rel target = $region38
              $region43: #{_lambda_.11} parent=35 // loop_exit
                _
            $region36: #{_lambda_.11} parent=27 // pred_fallthru
              _
          $region28: #{_lambda_.11} parent=23 // pred_fallthru
            _
          %301 = vnop
        $region24: #{_lambda_.11} parent=19 // pred_fallthru
          _
        // Predicated region
        $region59: #{_lambda_.11} parent=19 // pred_check
          %p302 = pneg %p105
        $region60: #{_lambda_.11} parent=19 // pred_check_branch
          %304 = sbr.rel (%p302) target = $region62
        $region61: #{_lambda_.11} parent=19 // pred_region
          %s305 = smul.u32 2, %s18
          %p306 = scmp.lt.s32.totalorder %s305, 3
          %s307 = scalar_select %p306, %s305, 3
          %s308 = scalar_lea.vmem %s2, %s307
          %s309 = smul.u32 2, %s18
        $region62: #{_lambda_.11} parent=19 // pred_fallthru
          _
        // Predicated region
        $region63: #{_lambda_.11} parent=19 // pred_check
          %p310 = pneg %p131
        $region64: #{_lambda_.11} parent=19 // pred_check_branch
          %312 = sbr.rel (%p310) target = $region66
        $region65: #{_lambda_.11} parent=19 // pred_region
          %s313 = smul.u32 2, %s18
          %p314 = scmp.lt.s32.totalorder %s313, 3
          %s315 = scalar_select %p314, %s313, 3
          %s316 = scalar_lea.vmem %s3, %s315
          %s317 = smul.u32 2, %s18
        $region66: #{_lambda_.11} parent=19 // pred_fallthru
          _
      $region20: #{_lambda_.11} parent=5 // pred_fallthru
        _
      %p318 = scmp.le.s32.totalorder 1, %s10
      %p319 = scmp.lt.s32.totalorder %s10, 3
      %p320 = pnand %p318, %p319
      %p321 = pneg %p320
      // Predicated region
      $region67: #{_lambda_.11} parent=5 // pred_check
        _
      $region68: #{_lambda_.11} parent=5 // pred_check_branch
        %323 = sbr.rel (%p320) target = $region70
      $region69: #{_lambda_.11} parent=5 // pred_region
        %s324 = ssub.s32 %s10, 1
        %s325 = sand.u32 %s72, 1
        %s326 = sand.u32 %s72, 1
        %s327 = smul.addr %s326, 128
        %s328 = scalar_lea.vmem [#allocation3], %s327
        // Predicated region
        $region71: #{_lambda_.11} parent=69 // pred_check
          %p329 = pneg %p85
        $region72: #{_lambda_.11} parent=69 // pred_check_branch
          %331 = sbr.rel (%p329) target = $region74
        $region73: #{_lambda_.11} parent=69 // pred_region
          _
        $region74: #{_lambda_.11} parent=69 // pred_fallthru
          _
        %s332 = smul.u32 16, %s20
        %p333 = scmp.lt.s32.totalorder %s332, 15
        %s334 = scalar_select %p333, %s332, 15
        %p335 = scmp.lt.s32.totalorder %s22, 0
        %s336 = scalar_select %p335, %s22, 0
        %s337 = sadd.s32 %s336, %s334
        %s338 = smul.addr %s337, 4
        %s339 = scalar_lea.vmem %s0, %s338
        %p340 = pneg %p57
        %p341 = pneg %p54
        %s342 = sand.u32 %s72, 1
        %s343 = sand.u32 %s72, 1
        %s344 = smul.addr %s343, 128
        %s345 = scalar_lea.vmem [#allocation3], %s344
        %p346 = pneg %p85
        %p347 = pneg %p82
        %s348 = smul.u32 2, %s21
        %p349 = scmp.lt.s32.totalorder %s348, 3
        %s350 = scalar_select %p349, %s348, 3
        %s351 = scalar_lea.vmem %s2, %s350
        %p352 = pneg %p111
        %p353 = pneg %p108
        %s354 = smul.u32 2, %s21
        %p355 = scmp.lt.s32.totalorder %s354, 3
        %s356 = scalar_select %p355, %s354, 3
        %s357 = scalar_lea.vmem %s3, %s356
        %p358 = pneg %p137
        %p359 = pneg %p134
        %p360 = pneg %p165
        %p361 = pneg %p162
        %s362 = sand.u32 %s152, 1
        %s363 = sand.u32 %s152, 1
        %s364 = smul.addr %s363, 128
        %s365 = scalar_lea.vmem [#allocation4], %s364
        %s366 = smul.u32 16, %s20
        %p367 = scmp.lt.s32.totalorder %s366, 15
        %s368 = scalar_select %p367, %s366, 15
        %p369 = scmp.lt.s32.totalorder %s22, 0
        %s370 = scalar_select %p369, %s22, 0
        %s371 = sadd.s32 %s370, %s368
        %s372 = smul.addr %s371, 4
        %s373 = scalar_lea.vmem %s0, %s372
        %s374 = smul.u32 16, %s20
        %s375 = smul.u32 16, %s22
        %s376 = smul.u32 2, %s21
        %s377 = smul.u32 2, %s21
        %p378 = scmp.lt.s32.totalorder %s377, 3
        %s379 = scalar_select %p378, %s377, 3
        %s380 = scalar_lea.vmem %s2, %s379
        %s381 = smul.u32 2, %s21
        %s382 = smul.u32 2, %s21
        %p383 = scmp.lt.s32.totalorder %s382, 3
        %s384 = scalar_select %p383, %s382, 3
        %s385 = scalar_lea.vmem %s3, %s384
        %s386 = smul.u32 2, %s21
        %s387 = smul.u32 16, %s20
        %s388 = smul.u32 2, %s21
        %p390 = scmp.eq.s32.totalorder %s22, 0
        // Predicated region
        $region75: #{_lambda_.11} parent=69 // pred_check
          %p391 = pneg %p390
        $region76: #{_lambda_.11} parent=69 // pred_check_branch
          %393 = sbr.rel (%p391) target = $region78
        $region77: #{_lambda_.11} parent=69 // pred_region
          %394 = vst [vmem:[#allocation2] sm:$0xff] 0.0
          %395 = vst [vmem:[#allocation2 + $0x8] sm:$0xff] 0.0
          %396 = vst [vmem:[#allocation2 + $0x10] sm:$0xff] 0.0
          %397 = vst [vmem:[#allocation2 + $0x18] sm:$0xff] 0.0
          %398 = vst [vmem:[#allocation2 + $0x20] sm:$0xff] 0.0
          %399 = vst [vmem:[#allocation2 + $0x28] sm:$0xff] 0.0
          %400 = vst [vmem:[#allocation2 + $0x30] sm:$0xff] 0.0
          %401 = vst [vmem:[#allocation2 + $0x38] sm:$0xff] 0.0
          %402 = vst [vmem:[#allocation2 + $0x40] sm:$0xff] 0.0
          %403 = vst [vmem:[#allocation2 + $0x48] sm:$0xff] 0.0
          %404 = vst [vmem:[#allocation2 + $0x50] sm:$0xff] 0.0
          %405 = vst [vmem:[#allocation2 + $0x58] sm:$0xff] 0.0
          %406 = vst [vmem:[#allocation2 + $0x60] sm:$0xff] 0.0
          %407 = vst [vmem:[#allocation2 + $0x68] sm:$0xff] 0.0
          %408 = vst [vmem:[#allocation2 + $0x70] sm:$0xff] 0.0
          %409 = vst [vmem:[#allocation2 + $0x78] sm:$0xff] 0.0
          %410 = vst [vmem:[#allocation2 + $0x80] sm:$0xff] 0.0
          %411 = vst [vmem:[#allocation2 + $0x88] sm:$0xff] 0.0
          %412 = vst [vmem:[#allocation2 + $0x90] sm:$0xff] 0.0
          %413 = vst [vmem:[#allocation2 + $0x98] sm:$0xff] 0.0
          %414 = vst [vmem:[#allocation2 + $0xa0] sm:$0xff] 0.0
          %415 = vst [vmem:[#allocation2 + $0xa8] sm:$0xff] 0.0
          %416 = vst [vmem:[#allocation2 + $0xb0] sm:$0xff] 0.0
          %417 = vst [vmem:[#allocation2 + $0xb8] sm:$0xff] 0.0
          %418 = vst [vmem:[#allocation2 + $0xc0] sm:$0xff] 0.0
          %419 = vst [vmem:[#allocation2 + $0xc8] sm:$0xff] 0.0
          %420 = vst [vmem:[#allocation2 + $0xd0] sm:$0xff] 0.0
          %421 = vst [vmem:[#allocation2 + $0xd8] sm:$0xff] 0.0
          %422 = vst [vmem:[#allocation2 + $0xe0] sm:$0xff] 0.0
          %423 = vst [vmem:[#allocation2 + $0xe8] sm:$0xff] 0.0
          %424 = vst [vmem:[#allocation2 + $0xf0] sm:$0xff] 0.0
          %425 = vst [vmem:[#allocation2 + $0xf8] sm:$0xff] 0.0
        $region78: #{_lambda_.11} parent=69 // pred_fallthru
          _
        %v426 = vld [vmem:[#allocation2] sm:$0xff]
        %v427 = vld [vmem:[#allocation2 + $0x8] sm:$0xff]
        %v428 = vld [vmem:[#allocation2 + $0x10] sm:$0xff]
        %v429 = vld [vmem:[#allocation2 + $0x18] sm:$0xff]
        %v430 = vld [vmem:[#allocation2 + $0x20] sm:$0xff]
        %v431 = vld [vmem:[#allocation2 + $0x28] sm:$0xff]
        %v432 = vld [vmem:[#allocation2 + $0x30] sm:$0xff]
        %v433 = vld [vmem:[#allocation2 + $0x38] sm:$0xff]
        %v434 = vld [vmem:[#allocation2 + $0x40] sm:$0xff]
        %v435 = vld [vmem:[#allocation2 + $0x48] sm:$0xff]
        %v436 = vld [vmem:[#allocation2 + $0x50] sm:$0xff]
        %v437 = vld [vmem:[#allocation2 + $0x58] sm:$0xff]
        %v438 = vld [vmem:[#allocation2 + $0x60] sm:$0xff]
        %v439 = vld [vmem:[#allocation2 + $0x68] sm:$0xff]
        %v440 = vld [vmem:[#allocation2 + $0x70] sm:$0xff]
        %v441 = vld [vmem:[#allocation2 + $0x78] sm:$0xff]
        %v442 = vld [vmem:[#allocation2 + $0x80] sm:$0xff]
        %v443 = vld [vmem:[#allocation2 + $0x88] sm:$0xff]
        %v444 = vld [vmem:[#allocation2 + $0x90] sm:$0xff]
        %v445 = vld [vmem:[#allocation2 + $0x98] sm:$0xff]
        %v446 = vld [vmem:[#allocation2 + $0xa0] sm:$0xff]
        %v447 = vld [vmem:[#allocation2 + $0xa8] sm:$0xff]
        %v448 = vld [vmem:[#allocation2 + $0xb0] sm:$0xff]
        %v449 = vld [vmem:[#allocation2 + $0xb8] sm:$0xff]
        %v450 = vld [vmem:[#allocation2 + $0xc0] sm:$0xff]
        %v451 = vld [vmem:[#allocation2 + $0xc8] sm:$0xff]
        %v452 = vld [vmem:[#allocation2 + $0xd0] sm:$0xff]
        %v453 = vld [vmem:[#allocation2 + $0xd8] sm:$0xff]
        %v454 = vld [vmem:[#allocation2 + $0xe0] sm:$0xff]
        %v455 = vld [vmem:[#allocation2 + $0xe8] sm:$0xff]
        %v456 = vld [vmem:[#allocation2 + $0xf0] sm:$0xff]
        %v457 = vld [vmem:[#allocation2 + $0xf8] sm:$0xff]
        %v458 = vld [vmem:[%s373] sm:$0xf]
        %v459 = vld [vmem:[%s373 + $0x4] sm:$0xf]
        %v460 = vld [vmem:[%s373 + $0x8] sm:$0xf]
        %v461 = vld [vmem:[%s373 + $0xc] sm:$0xf]
        %v462 = vld [vmem:[%s373 + $0x10] sm:$0xf]
        %v463 = vld [vmem:[%s373 + $0x14] sm:$0xf]
        %v464 = vld [vmem:[%s373 + $0x18] sm:$0xf]
        %v465 = vld [vmem:[%s373 + $0x1c] sm:$0xf]
        %v466 = vld [vmem:[%s373 + $0x20] sm:$0xf]
        %v467 = vld [vmem:[%s373 + $0x24] sm:$0xf]
        %v468 = vld [vmem:[%s373 + $0x28] sm:$0xf]
        %v469 = vld [vmem:[%s373 + $0x2c] sm:$0xf]
        %v470 = vld [vmem:[%s373 + $0x30] sm:$0xf]
        %v471 = vld [vmem:[%s373 + $0x34] sm:$0xf]
        %v472 = vld [vmem:[%s373 + $0x38] sm:$0xf]
        %v473 = vld [vmem:[%s373 + $0x3c] sm:$0xf]
        %v474 = vld [vmem:[%s328] sm:$0xff]
        %v475 = vld [vmem:[%s328 + $0x8] sm:$0xff]
        %v476 = vld [vmem:[%s328 + $0x10] sm:$0xff]
        %v477 = vld [vmem:[%s328 + $0x18] sm:$0xff]
        %v478 = vld [vmem:[%s328 + $0x20] sm:$0xff]
        %v479 = vld [vmem:[%s328 + $0x28] sm:$0xff]
        %v480 = vld [vmem:[%s328 + $0x30] sm:$0xff]
        %v481 = vld [vmem:[%s328 + $0x38] sm:$0xff]
        %v482 = vld [vmem:[%s328 + $0x40] sm:$0xff]
        %v483 = vld [vmem:[%s328 + $0x48] sm:$0xff]
        %v484 = vld [vmem:[%s328 + $0x50] sm:$0xff]
        %v485 = vld [vmem:[%s328 + $0x58] sm:$0xff]
        %v486 = vld [vmem:[%s328 + $0x60] sm:$0xff]
        %v487 = vld [vmem:[%s328 + $0x68] sm:$0xff]
        %v488 = vld [vmem:[%s328 + $0x70] sm:$0xff]
        %v489 = vld [vmem:[%s328 + $0x78] sm:$0xff]
        %v506 = vunpack.c.l.b16 %v458
        %v507 = vunpack.c.l.b16 %v459
        %v508 = vunpack.c.l.b16 %v460
        %v509 = vunpack.c.l.b16 %v461
        %v510 = vunpack.c.l.b16 %v462
        %v511 = vunpack.c.l.b16 %v463
        %v512 = vunpack.c.l.b16 %v464
        %v513 = vunpack.c.l.b16 %v465
        %v514 = vunpack.c.l.b16 %v466
        %v515 = vunpack.c.l.b16 %v467
        %v516 = vunpack.c.l.b16 %v468
        %v517 = vunpack.c.l.b16 %v469
        %v518 = vunpack.c.l.b16 %v470
        %v519 = vunpack.c.l.b16 %v471
        %v520 = vunpack.c.l.b16 %v472
        %v521 = vunpack.c.l.b16 %v473
        %v522 = vpack.c.b16 %v507, %v506
        %v523 = vpack.c.b16 %v509, %v508
        %v524 = vpack.c.b16 %v511, %v510
        %v525 = vpack.c.b16 %v513, %v512
        %v526 = vpack.c.b16 %v515, %v514
        %v527 = vpack.c.b16 %v517, %v516
        %v528 = vpack.c.b16 %v519, %v518
        %v529 = vpack.c.b16 %v521, %v520
        %v554 = vunpack.c.l.b16 %v474
        %v555 = vunpack.c.h.b16 %v474
        %v556 = vunpack.c.l.b16 %v475
        %v557 = vunpack.c.h.b16 %v475
        %v558 = vunpack.c.l.b16 %v476
        %v559 = vunpack.c.h.b16 %v476
        %v560 = vunpack.c.l.b16 %v477
        %v561 = vunpack.c.h.b16 %v477
        %v562 = vunpack.c.l.b16 %v478
        %v563 = vunpack.c.h.b16 %v478
        %v564 = vunpack.c.l.b16 %v479
        %v565 = vunpack.c.h.b16 %v479
        %v566 = vunpack.c.l.b16 %v480
        %v567 = vunpack.c.h.b16 %v480
        %v568 = vunpack.c.l.b16 %v481
        %v569 = vunpack.c.h.b16 %v481
        %v570 = vunpack.c.l.b16 %v482
        %v571 = vunpack.c.h.b16 %v482
        %v572 = vunpack.c.l.b16 %v483
        %v573 = vunpack.c.h.b16 %v483
        %v574 = vunpack.c.l.b16 %v484
        %v575 = vunpack.c.h.b16 %v484
        %v576 = vunpack.c.l.b16 %v485
        %v577 = vunpack.c.h.b16 %v485
        %v578 = vunpack.c.l.b16 %v486
        %v579 = vunpack.c.h.b16 %v486
        %v580 = vunpack.c.l.b16 %v487
        %v581 = vunpack.c.h.b16 %v487
        %v582 = vunpack.c.l.b16 %v488
        %v583 = vunpack.c.h.b16 %v488
        %v584 = vunpack.c.l.b16 %v489
        %v585 = vunpack.c.h.b16 %v489
        %v586 = vpack.c.b16 %v556, %v554
        %v587 = vpack.c.b16 %v557, %v555
        %v588 = vpack.c.b16 %v560, %v558
        %v589 = vpack.c.b16 %v561, %v559
        %v590 = vpack.c.b16 %v564, %v562
        %v591 = vpack.c.b16 %v565, %v563
        %v592 = vpack.c.b16 %v568, %v566
        %v593 = vpack.c.b16 %v569, %v567
        %v594 = vpack.c.b16 %v572, %v570
        %v595 = vpack.c.b16 %v573, %v571
        %v596 = vpack.c.b16 %v576, %v574
        %v597 = vpack.c.b16 %v577, %v575
        %v598 = vpack.c.b16 %v580, %v578
        %v599 = vpack.c.b16 %v581, %v579
        %v600 = vpack.c.b16 %v584, %v582
        %v601 = vpack.c.b16 %v585, %v583
        %618 = vmatprep.subr.bf16.mxu0 %v601
        %619 = vmatpush1.bf16.msra.mxu0 %v600
        %620 = vmatprep.subr.bf16.mxu0 %v599
        %621 = vmatpush1.bf16.msra.mxu0 %v598
        %622 = vmatprep.subr.bf16.mxu0 %v597
        %623 = vmatpush1.bf16.msra.mxu0 %v596
        %624 = vmatprep.subr.bf16.mxu0 %v595
        %625 = vmatpush1.bf16.msra.mxu0 %v594
        %626 = vmatprep.subr.bf16.mxu0 %v593
        %627 = vmatpush1.bf16.msra.mxu0 %v592
        %628 = vmatprep.subr.bf16.mxu0 %v591
        %629 = vmatpush1.bf16.msra.mxu0 %v590
        %630 = vmatprep.subr.bf16.mxu0 %v589
        %631 = vmatpush1.bf16.msra.mxu0 %v588
        %632 = vmatprep.subr.bf16.mxu0 %v587
        %633 = vmatpush1.bf16.msra.mxu0 %v586
        %634 = vmatprep.subr.bf16.mxu0 0
        %635 = vmatpush2.bf16.msra.mxu0 0
        %636 = vmatprep.subr.bf16.mxu0 0
        %637 = vmatpush2.bf16.msra.mxu0 0
        %638 = vmatprep.subr.bf16.mxu0 0
        %639 = vmatpush2.bf16.msra.mxu0 0
        %640 = vmatprep.subr.bf16.mxu0 0
        %641 = vmatpush2.bf16.msra.mxu0 0
        %642 = vmatprep.subr.bf16.mxu0 0
        %643 = vmatpush2.bf16.msra.mxu0 0
        %644 = vmatprep.subr.bf16.mxu0 0
        %645 = vmatpush2.bf16.msra.mxu0 0
        %646 = vmatprep.subr.bf16.mxu0 0
        %647 = vmatpush2.bf16.msra.mxu0 0
        %648 = vmatprep.subr.bf16.mxu0 0
        %649 = vmatpush2.bf16.msra.mxu0 0
        %650 = vmatprep.mubr.bf16.mxu0 0
        %651 = vmatmul.mubr.bf16.gmra.mxu0 %v522
        %v652 = vpop.f32.mrf.mxu0
        %v653 = vadd.f32 0.0, %v652
        %v654 = vpop.f32.mrf.mxu0
        %v655 = vadd.f32 0.0, %v654
        %v656 = vpop.f32.mrf.mxu0
        %v657 = vadd.f32 0.0, %v656
        %v658 = vpop.f32.mrf.mxu0
        %v659 = vadd.f32 0.0, %v658
        %660 = vmatprep.mubr.bf16.mxu0 0
        %661 = vmatmul.mubr.bf16.gmra.mxu0 %v523
        %v662 = vpop.f32.mrf.mxu0
        %v663 = vadd.f32 0.0, %v662
        %v664 = vpop.f32.mrf.mxu0
        %v665 = vadd.f32 0.0, %v664
        %v666 = vpop.f32.mrf.mxu0
        %v667 = vadd.f32 0.0, %v666
        %v668 = vpop.f32.mrf.mxu0
        %v669 = vadd.f32 0.0, %v668
        %670 = vmatprep.mubr.bf16.mxu0 0
        %671 = vmatmul.mubr.bf16.gmra.mxu0 %v524
        %v672 = vpop.f32.mrf.mxu0
        %v673 = vadd.f32 0.0, %v672
        %v674 = vpop.f32.mrf.mxu0
        %v675 = vadd.f32 0.0, %v674
        %v676 = vpop.f32.mrf.mxu0
        %v677 = vadd.f32 0.0, %v676
        %v678 = vpop.f32.mrf.mxu0
        %v679 = vadd.f32 0.0, %v678
        %680 = vmatprep.mubr.bf16.mxu0 0
        %681 = vmatmul.mubr.bf16.gmra.mxu0 %v525
        %v682 = vpop.f32.mrf.mxu0
        %v683 = vadd.f32 0.0, %v682
        %v684 = vpop.f32.mrf.mxu0
        %v685 = vadd.f32 0.0, %v684
        %v686 = vpop.f32.mrf.mxu0
        %v687 = vadd.f32 0.0, %v686
        %v688 = vpop.f32.mrf.mxu0
        %v689 = vadd.f32 0.0, %v688
        %690 = vmatprep.mubr.bf16.mxu0 0
        %691 = vmatmul.mubr.bf16.gmra.mxu0 %v526
        %v692 = vpop.f32.mrf.mxu0
        %v693 = vadd.f32 0.0, %v692
        %v694 = vpop.f32.mrf.mxu0
        %v695 = vadd.f32 0.0, %v694
        %v696 = vpop.f32.mrf.mxu0
        %v697 = vadd.f32 0.0, %v696
        %v698 = vpop.f32.mrf.mxu0
        %v699 = vadd.f32 0.0, %v698
        %700 = vmatprep.mubr.bf16.mxu0 0
        %701 = vmatmul.mubr.bf16.gmra.mxu0 %v527
        %v702 = vpop.f32.mrf.mxu0
        %v703 = vadd.f32 0.0, %v702
        %v704 = vpop.f32.mrf.mxu0
        %v705 = vadd.f32 0.0, %v704
        %v706 = vpop.f32.mrf.mxu0
        %v707 = vadd.f32 0.0, %v706
        %v708 = vpop.f32.mrf.mxu0
        %v709 = vadd.f32 0.0, %v708
        %710 = vmatprep.mubr.bf16.mxu0 0
        %711 = vmatmul.mubr.bf16.gmra.mxu0 %v528
        %v712 = vpop.f32.mrf.mxu0
        %v713 = vadd.f32 0.0, %v712
        %v714 = vpop.f32.mrf.mxu0
        %v715 = vadd.f32 0.0, %v714
        %v716 = vpop.f32.mrf.mxu0
        %v717 = vadd.f32 0.0, %v716
        %v718 = vpop.f32.mrf.mxu0
        %v719 = vadd.f32 0.0, %v718
        %720 = vmatprep.mubr.bf16.mxu0 0
        %721 = vmatmul.mubr.bf16.gmra.mxu0 %v529
        %v722 = vpop.f32.mrf.mxu0
        %v723 = vadd.f32 0.0, %v722
        %v724 = vpop.f32.mrf.mxu0
        %v725 = vadd.f32 0.0, %v724
        %v726 = vpop.f32.mrf.mxu0
        %v727 = vadd.f32 0.0, %v726
        %v728 = vpop.f32.mrf.mxu0
        %v729 = vadd.f32 0.0, %v728
        %730 = vdwg.mxu0
        %v731 = vadd.f32 %v426, %v653
        %v732 = vadd.f32 %v427, %v655
        %v733 = vadd.f32 %v428, %v657
        %v734 = vadd.f32 %v429, %v659
        %v735 = vadd.f32 %v430, %v663
        %v736 = vadd.f32 %v431, %v665
        %v737 = vadd.f32 %v432, %v667
        %v738 = vadd.f32 %v433, %v669
        %v739 = vadd.f32 %v434, %v673
        %v740 = vadd.f32 %v435, %v675
        %v741 = vadd.f32 %v436, %v677
        %v742 = vadd.f32 %v437, %v679
        %v743 = vadd.f32 %v438, %v683
        %v744 = vadd.f32 %v439, %v685
        %v745 = vadd.f32 %v440, %v687
        %v746 = vadd.f32 %v441, %v689
        %v747 = vadd.f32 %v442, %v693
        %v748 = vadd.f32 %v443, %v695
        %v749 = vadd.f32 %v444, %v697
        %v750 = vadd.f32 %v445, %v699
        %v751 = vadd.f32 %v446, %v703
        %v752 = vadd.f32 %v447, %v705
        %v753 = vadd.f32 %v448, %v707
        %v754 = vadd.f32 %v449, %v709
        %v755 = vadd.f32 %v450, %v713
        %v756 = vadd.f32 %v451, %v715
        %v757 = vadd.f32 %v452, %v717
        %v758 = vadd.f32 %v453, %v719
        %v759 = vadd.f32 %v454, %v723
        %v760 = vadd.f32 %v455, %v725
        %v761 = vadd.f32 %v456, %v727
        %v762 = vadd.f32 %v457, %v729
        %763 = vst [vmem:[#allocation2] sm:$0xff] %v731
        %764 = vst [vmem:[#allocation2 + $0x8] sm:$0xff] %v732
        %765 = vst [vmem:[#allocation2 + $0x10] sm:$0xff] %v733
        %766 = vst [vmem:[#allocation2 + $0x18] sm:$0xff] %v734
        %767 = vst [vmem:[#allocation2 + $0x20] sm:$0xff] %v735
        %768 = vst [vmem:[#allocation2 + $0x28] sm:$0xff] %v736
        %769 = vst [vmem:[#allocation2 + $0x30] sm:$0xff] %v737
        %770 = vst [vmem:[#allocation2 + $0x38] sm:$0xff] %v738
        %771 = vst [vmem:[#allocation2 + $0x40] sm:$0xff] %v739
        %772 = vst [vmem:[#allocation2 + $0x48] sm:$0xff] %v740
        %773 = vst [vmem:[#allocation2 + $0x50] sm:$0xff] %v741
        %774 = vst [vmem:[#allocation2 + $0x58] sm:$0xff] %v742
        %775 = vst [vmem:[#allocation2 + $0x60] sm:$0xff] %v743
        %776 = vst [vmem:[#allocation2 + $0x68] sm:$0xff] %v744
        %777 = vst [vmem:[#allocation2 + $0x70] sm:$0xff] %v745
        %778 = vst [vmem:[#allocation2 + $0x78] sm:$0xff] %v746
        %779 = vst [vmem:[#allocation2 + $0x80] sm:$0xff] %v747
        %780 = vst [vmem:[#allocation2 + $0x88] sm:$0xff] %v748
        %781 = vst [vmem:[#allocation2 + $0x90] sm:$0xff] %v749
        %782 = vst [vmem:[#allocation2 + $0x98] sm:$0xff] %v750
        %783 = vst [vmem:[#allocation2 + $0xa0] sm:$0xff] %v751
        %784 = vst [vmem:[#allocation2 + $0xa8] sm:$0xff] %v752
        %785 = vst [vmem:[#allocation2 + $0xb0] sm:$0xff] %v753
        %786 = vst [vmem:[#allocation2 + $0xb8] sm:$0xff] %v754
        %787 = vst [vmem:[#allocation2 + $0xc0] sm:$0xff] %v755
        %788 = vst [vmem:[#allocation2 + $0xc8] sm:$0xff] %v756
        %789 = vst [vmem:[#allocation2 + $0xd0] sm:$0xff] %v757
        %790 = vst [vmem:[#allocation2 + $0xd8] sm:$0xff] %v758
        %791 = vst [vmem:[#allocation2 + $0xe0] sm:$0xff] %v759
        %792 = vst [vmem:[#allocation2 + $0xe8] sm:$0xff] %v760
        %793 = vst [vmem:[#allocation2 + $0xf0] sm:$0xff] %v761
        %794 = vst [vmem:[#allocation2 + $0xf8] sm:$0xff] %v762
        // Predicated region
        $region79: #{_lambda_.11} parent=69 // pred_check
          %p795 = pneg %p390
        $region80: #{_lambda_.11} parent=69 // pred_check_branch
          %797 = sbr.rel (%p795) target = $region82
        $region81: #{_lambda_.11} parent=69 // pred_region
          %v798 = vld [vmem:[#allocation2] sm:$0xff]
          %v799 = vld [vmem:[#allocation2 + $0x8] sm:$0xff]
          %v800 = vld [vmem:[#allocation2 + $0x10] sm:$0xff]
          %v801 = vld [vmem:[#allocation2 + $0x18] sm:$0xff]
          %v802 = vld [vmem:[#allocation2 + $0x20] sm:$0xff]
          %v803 = vld [vmem:[#allocation2 + $0x28] sm:$0xff]
          %v804 = vld [vmem:[#allocation2 + $0x30] sm:$0xff]
          %v805 = vld [vmem:[#allocation2 + $0x38] sm:$0xff]
          %v806 = vld [vmem:[#allocation2 + $0x40] sm:$0xff]
          %v807 = vld [vmem:[#allocation2 + $0x48] sm:$0xff]
          %v808 = vld [vmem:[#allocation2 + $0x50] sm:$0xff]
          %v809 = vld [vmem:[#allocation2 + $0x58] sm:$0xff]
          %v810 = vld [vmem:[#allocation2 + $0x60] sm:$0xff]
          %v811 = vld [vmem:[#allocation2 + $0x68] sm:$0xff]
          %v812 = vld [vmem:[#allocation2 + $0x70] sm:$0xff]
          %v813 = vld [vmem:[#allocation2 + $0x78] sm:$0xff]
          %v814 = vld [vmem:[#allocation2 + $0x80] sm:$0xff]
          %v815 = vld [vmem:[#allocation2 + $0x88] sm:$0xff]
          %v816 = vld [vmem:[#allocation2 + $0x90] sm:$0xff]
          %v817 = vld [vmem:[#allocation2 + $0x98] sm:$0xff]
          %v818 = vld [vmem:[#allocation2 + $0xa0] sm:$0xff]
          %v819 = vld [vmem:[#allocation2 + $0xa8] sm:$0xff]
          %v820 = vld [vmem:[#allocation2 + $0xb0] sm:$0xff]
          %v821 = vld [vmem:[#allocation2 + $0xb8] sm:$0xff]
          %v822 = vld [vmem:[#allocation2 + $0xc0] sm:$0xff]
          %v823 = vld [vmem:[#allocation2 + $0xc8] sm:$0xff]
          %v824 = vld [vmem:[#allocation2 + $0xd0] sm:$0xff]
          %v825 = vld [vmem:[#allocation2 + $0xd8] sm:$0xff]
          %v826 = vld [vmem:[#allocation2 + $0xe0] sm:$0xff]
          %v827 = vld [vmem:[#allocation2 + $0xe8] sm:$0xff]
          %v828 = vld [vmem:[#allocation2 + $0xf0] sm:$0xff]
          %v829 = vld [vmem:[#allocation2 + $0xf8] sm:$0xff]
          %v830 = vld [vmem:[%s380] sm:$0x3]
          %v832 = vlaneseq
          %v833 = vshrl.u32 %v832, 7
          %v834 = vsub.s32 0, %v833
          %v835 = vrot.slane %v830, %v834
          %v836 = vlaneseq
          %v837 = vshrl.u32 %v836, 7
          %v838 = vsub.s32 1, %v837
          %v839 = vrot.slane %v830, %v838
          %v842 = vmul.f32 %v798, %v835
          %v843 = vmul.f32 %v799, %v839
          %v844 = vmul.f32 %v800, %v835
          %v845 = vmul.f32 %v801, %v839
          %v846 = vmul.f32 %v802, %v835
          %v847 = vmul.f32 %v803, %v839
          %v848 = vmul.f32 %v804, %v835
          %v849 = vmul.f32 %v805, %v839
          %v850 = vmul.f32 %v806, %v835
          %v851 = vmul.f32 %v807, %v839
          %v852 = vmul.f32 %v808, %v835
          %v853 = vmul.f32 %v809, %v839
          %v854 = vmul.f32 %v810, %v835
          %v855 = vmul.f32 %v811, %v839
          %v856 = vmul.f32 %v812, %v835
          %v857 = vmul.f32 %v813, %v839
          %v858 = vmul.f32 %v814, %v835
          %v859 = vmul.f32 %v815, %v839
          %v860 = vmul.f32 %v816, %v835
          %v861 = vmul.f32 %v817, %v839
          %v862 = vmul.f32 %v818, %v835
          %v863 = vmul.f32 %v819, %v839
          %v864 = vmul.f32 %v820, %v835
          %v865 = vmul.f32 %v821, %v839
          %v866 = vmul.f32 %v822, %v835
          %v867 = vmul.f32 %v823, %v839
          %v868 = vmul.f32 %v824, %v835
          %v869 = vmul.f32 %v825, %v839
          %v870 = vmul.f32 %v826, %v835
          %v871 = vmul.f32 %v827, %v839
          %v872 = vmul.f32 %v828, %v835
          %v873 = vmul.f32 %v829, %v839
          %v874 = vld [vmem:[%s385] sm:$0x3]
          %v876 = vlaneseq
          %v877 = vshrl.u32 %v876, 7
          %v878 = vsub.s32 0, %v877
          %v879 = vrot.slane %v874, %v878
          %v880 = vlaneseq
          %v881 = vshrl.u32 %v880, 7
          %v882 = vsub.s32 1, %v881
          %v883 = vrot.slane %v874, %v882
          %v886 = vadd.f32 %v842, %v879
          %v887 = vadd.f32 %v843, %v883
          %v888 = vadd.f32 %v844, %v879
          %v889 = vadd.f32 %v845, %v883
          %v890 = vadd.f32 %v846, %v879
          %v891 = vadd.f32 %v847, %v883
          %v892 = vadd.f32 %v848, %v879
          %v893 = vadd.f32 %v849, %v883
          %v894 = vadd.f32 %v850, %v879
          %v895 = vadd.f32 %v851, %v883
          %v896 = vadd.f32 %v852, %v879
          %v897 = vadd.f32 %v853, %v883
          %v898 = vadd.f32 %v854, %v879
          %v899 = vadd.f32 %v855, %v883
          %v900 = vadd.f32 %v856, %v879
          %v901 = vadd.f32 %v857, %v883
          %v902 = vadd.f32 %v858, %v879
          %v903 = vadd.f32 %v859, %v883
          %v904 = vadd.f32 %v860, %v879
          %v905 = vadd.f32 %v861, %v883
          %v906 = vadd.f32 %v862, %v879
          %v907 = vadd.f32 %v863, %v883
          %v908 = vadd.f32 %v864, %v879
          %v909 = vadd.f32 %v865, %v883
          %v910 = vadd.f32 %v866, %v879
          %v911 = vadd.f32 %v867, %v883
          %v912 = vadd.f32 %v868, %v879
          %v913 = vadd.f32 %v869, %v883
          %v914 = vadd.f32 %v870, %v879
          %v915 = vadd.f32 %v871, %v883
          %v916 = vadd.f32 %v872, %v879
          %v917 = vadd.f32 %v873, %v883
          %v918 = vpack.c.bf16 %v888, %v886
          %v919 = vpack.c.bf16 %v889, %v887
          %v920 = vpack.c.bf16 %v892, %v890
          %v921 = vpack.c.bf16 %v893, %v891
          %v922 = vpack.c.bf16 %v896, %v894
          %v923 = vpack.c.bf16 %v897, %v895
          %v924 = vpack.c.bf16 %v900, %v898
          %v925 = vpack.c.bf16 %v901, %v899
          %v926 = vpack.c.bf16 %v904, %v902
          %v927 = vpack.c.bf16 %v905, %v903
          %v928 = vpack.c.bf16 %v908, %v906
          %v929 = vpack.c.bf16 %v909, %v907
          %v930 = vpack.c.bf16 %v912, %v910
          %v931 = vpack.c.bf16 %v913, %v911
          %v932 = vpack.c.bf16 %v916, %v914
          %v933 = vpack.c.bf16 %v917, %v915
          %v950 = vunpack.c.l.b16 %v918
          %v951 = vunpack.c.l.b16 %v919
          %v952 = vunpack.c.h.b16 %v918
          %v953 = vunpack.c.h.b16 %v919
          %v954 = vunpack.c.l.b16 %v920
          %v955 = vunpack.c.l.b16 %v921
          %v956 = vunpack.c.h.b16 %v920
          %v957 = vunpack.c.h.b16 %v921
          %v958 = vunpack.c.l.b16 %v922
          %v959 = vunpack.c.l.b16 %v923
          %v960 = vunpack.c.h.b16 %v922
          %v961 = vunpack.c.h.b16 %v923
          %v962 = vunpack.c.l.b16 %v924
          %v963 = vunpack.c.l.b16 %v925
          %v964 = vunpack.c.h.b16 %v924
          %v965 = vunpack.c.h.b16 %v925
          %v966 = vunpack.c.l.b16 %v926
          %v967 = vunpack.c.l.b16 %v927
          %v968 = vunpack.c.h.b16 %v926
          %v969 = vunpack.c.h.b16 %v927
          %v970 = vunpack.c.l.b16 %v928
          %v971 = vunpack.c.l.b16 %v929
          %v972 = vunpack.c.h.b16 %v928
          %v973 = vunpack.c.h.b16 %v929
          %v974 = vunpack.c.l.b16 %v930
          %v975 = vunpack.c.l.b16 %v931
          %v976 = vunpack.c.h.b16 %v930
          %v977 = vunpack.c.h.b16 %v931
          %v978 = vunpack.c.l.b16 %v932
          %v979 = vunpack.c.l.b16 %v933
          %v980 = vunpack.c.h.b16 %v932
          %v981 = vunpack.c.h.b16 %v933
          %v982 = vpack.c.b16 %v951, %v950
          %v983 = vpack.c.b16 %v953, %v952
          %v984 = vpack.c.b16 %v955, %v954
          %v985 = vpack.c.b16 %v957, %v956
          %v986 = vpack.c.b16 %v959, %v958
          %v987 = vpack.c.b16 %v961, %v960
          %v988 = vpack.c.b16 %v963, %v962
          %v989 = vpack.c.b16 %v965, %v964
          %v990 = vpack.c.b16 %v967, %v966
          %v991 = vpack.c.b16 %v969, %v968
          %v992 = vpack.c.b16 %v971, %v970
          %v993 = vpack.c.b16 %v973, %v972
          %v994 = vpack.c.b16 %v975, %v974
          %v995 = vpack.c.b16 %v977, %v976
          %v996 = vpack.c.b16 %v979, %v978
          %v997 = vpack.c.b16 %v981, %v980
          %1014 = vst [vmem:[%s365] sm:$0xff] %v982
          %1015 = vst [vmem:[%s365 + $0x8] sm:$0xff] %v983
          %1016 = vst [vmem:[%s365 + $0x10] sm:$0xff] %v984
          %1017 = vst [vmem:[%s365 + $0x18] sm:$0xff] %v985
          %1018 = vst [vmem:[%s365 + $0x20] sm:$0xff] %v986
          %1019 = vst [vmem:[%s365 + $0x28] sm:$0xff] %v987
          %1020 = vst [vmem:[%s365 + $0x30] sm:$0xff] %v988
          %1021 = vst [vmem:[%s365 + $0x38] sm:$0xff] %v989
          %1022 = vst [vmem:[%s365 + $0x40] sm:$0xff] %v990
          %1023 = vst [vmem:[%s365 + $0x48] sm:$0xff] %v991
          %1024 = vst [vmem:[%s365 + $0x50] sm:$0xff] %v992
          %1025 = vst [vmem:[%s365 + $0x58] sm:$0xff] %v993
          %1026 = vst [vmem:[%s365 + $0x60] sm:$0xff] %v994
          %1027 = vst [vmem:[%s365 + $0x68] sm:$0xff] %v995
          %1028 = vst [vmem:[%s365 + $0x70] sm:$0xff] %v996
          %1029 = vst [vmem:[%s365 + $0x78] sm:$0xff] %v997
        $region82: #{_lambda_.11} parent=69 // pred_fallthru
          _
        %s1030 = sand.u32 %s152, 1
        %s1031 = sand.u32 %s152, 1
        %s1032 = smul.addr %s1031, 128
        %s1033 = scalar_lea.vmem [#allocation4], %s1032
        // Predicated region
        $region83: #{_lambda_.11} parent=69 // pred_check
          %p1034 = pneg %p162
        $region84: #{_lambda_.11} parent=69 // pred_check_branch
          %1036 = sbr.rel (%p1034) target = $region86
        $region85: #{_lambda_.11} parent=69 // pred_region
          %s1037 = smul.u32 16, %s20
          %s1038 = smul.u32 2, %s21
          %s1039 = smul.addr %s1037, 4
          %s1040 = sadd.s32 %s1038, %s1039
          %s1041 = smul.addr %s1040, 4
          %s1042 = scalar_lea.vmem %s4, %s1041
          // Predicated region
          $region87: #{_lambda_.11} parent=85 // pred_check
            _
          $region88: #{_lambda_.11} parent=85 // pred_check_branch
            %1044 = sbr.rel (0) target = $region90
          $region89: #{_lambda_.11} parent=85 // pred_region
            // Predicated region
            $region91: #{_lambda_.11} parent=89 // pred_check
              _
            $region92: #{_lambda_.11} parent=89 // pred_check_branch
              %1046 = sbr.rel (0) target = $region94
            $region93: #{_lambda_.11} parent=89 // pred_region
              // Predicated region
              $region106: #{_lambda_.11} parent=93 // pred_check
                _
              $region107: #{_lambda_.11} parent=93 // pred_check_branch
                %1092 = sbr.rel (0) target = $region109
              $region108: #{_lambda_.11} parent=93 // pred_region
                loop: start=0, step=1, limit=1
                $region110: #{_lambda_.11} parent=108 // loop_pre_header
                  _
                $region111: #{_lambda_.11} parent=108 // loop_header
                  %s1094 = sphi 0, %s1098
                  %p1095 = scmp.ge.s32.totalorder %s1094, 1
                  %s1099 = sphi %s1033, %s1033
                  %s1100 = sphi %s1042, %s1042
                $region112: #{_lambda_.11} parent=108 // loop_header_branch
                  %1097 = sbr.rel (%p1095) target = $region116
                $region113: #{_lambda_.11} parent=108 // loop_body
                  %v1101 = vld [vmem:[%s1099] sm:$0xff]
                  %1102 = vst [vmem:[%s1100] sm:$0xff] %v1101
                  %v1103 = vld [vmem:[%s1099 + $0x8] sm:$0xff]
                  %1104 = vst [vmem:[%s1100 + $0x10] sm:$0xff] %v1103
                  %v1105 = vld [vmem:[%s1099 + $0x10] sm:$0xff]
                  %1106 = vst [vmem:[%s1100 + $0x20] sm:$0xff] %v1105
                  %v1107 = vld [vmem:[%s1099 + $0x18] sm:$0xff]
                  %1108 = vst [vmem:[%s1100 + $0x30] sm:$0xff] %v1107
                  %v1109 = vld [vmem:[%s1099 + $0x20] sm:$0xff]
                  %1110 = vst [vmem:[%s1100 + $0x40] sm:$0xff] %v1109
                  %v1111 = vld [vmem:[%s1099 + $0x28] sm:$0xff]
                  %1112 = vst [vmem:[%s1100 + $0x50] sm:$0xff] %v1111
                  %v1113 = vld [vmem:[%s1099 + $0x30] sm:$0xff]
                  %1114 = vst [vmem:[%s1100 + $0x60] sm:$0xff] %v1113
                  %v1115 = vld [vmem:[%s1099 + $0x38] sm:$0xff]
                  %1116 = vst [vmem:[%s1100 + $0x70] sm:$0xff] %v1115
                  %v1117 = vld [vmem:[%s1099 + $0x40] sm:$0xff]
                  %1118 = vst [vmem:[%s1100 + $0x80] sm:$0xff] %v1117
                  %v1119 = vld [vmem:[%s1099 + $0x48] sm:$0xff]
                  %1120 = vst [vmem:[%s1100 + $0x90] sm:$0xff] %v1119
                  %v1121 = vld [vmem:[%s1099 + $0x50] sm:$0xff]
                  %1122 = vst [vmem:[%s1100 + $0xa0] sm:$0xff] %v1121
                  %v1123 = vld [vmem:[%s1099 + $0x58] sm:$0xff]
                  %1124 = vst [vmem:[%s1100 + $0xb0] sm:$0xff] %v1123
                  %v1125 = vld [vmem:[%s1099 + $0x60] sm:$0xff]
                  %1126 = vst [vmem:[%s1100 + $0xc0] sm:$0xff] %v1125
                  %v1127 = vld [vmem:[%s1099 + $0x68] sm:$0xff]
                  %1128 = vst [vmem:[%s1100 + $0xd0] sm:$0xff] %v1127
                  %v1129 = vld [vmem:[%s1099 + $0x70] sm:$0xff]
                  %1130 = vst [vmem:[%s1100 + $0xe0] sm:$0xff] %v1129
                  %v1131 = vld [vmem:[%s1099 + $0x78] sm:$0xff]
                  %1132 = vst [vmem:[%s1100 + $0xf0] sm:$0xff] %v1131
                $region114: #{_lambda_.11} parent=108 // loop_footer
                  %s1098 = sadd.s32 1, %s1094
                $region115: #{_lambda_.11} parent=108 // loop_footer_branch
                  %1093 = sbr.rel target = $region111
                $region116: #{_lambda_.11} parent=108 // loop_exit
                  _
              $region109: #{_lambda_.11} parent=93 // pred_fallthru
                _
              // Predicated region
              $region117: #{_lambda_.11} parent=93 // pred_check
                _
              $region118: #{_lambda_.11} parent=93 // pred_check_branch
                %1134 = sbr.rel target = $region120
              $region119: #{_lambda_.11} parent=93 // pred_region
                _
              $region120: #{_lambda_.11} parent=93 // pred_fallthru
                _
            $region94: #{_lambda_.11} parent=89 // pred_fallthru
              _
            // Predicated region
            $region95: #{_lambda_.11} parent=89 // pred_check
              _
            $region96: #{_lambda_.11} parent=89 // pred_check_branch
              %1048 = sbr.rel target = $region98
            $region97: #{_lambda_.11} parent=89 // pred_region
              %s1050 = ssub.s32 256, 1
              loop: start=0, step=1, limit=1
              $region99: #{_lambda_.11} parent=97 // loop_pre_header
                _
              $region100: #{_lambda_.11} parent=97 // loop_header
                %s1052 = sphi 0, %s1056
                %p1053 = scmp.ge.s32.totalorder %s1052, 1
                %s1057 = sphi %s1033, %s1033
                %s1058 = sphi %s1042, %s1042
              $region101: #{_lambda_.11} parent=97 // loop_header_branch
                %1055 = sbr.rel (%p1053) target = $region105
              $region102: #{_lambda_.11} parent=97 // loop_body
                %v1059 = vld [vmem:[%s1057] sm:%s1050]
                %1060 = vst [vmem:[%s1058] sm:%s1050] %v1059
                %v1061 = vld [vmem:[%s1057 + $0x8] sm:%s1050]
                %1062 = vst [vmem:[%s1058 + $0x10] sm:%s1050] %v1061
                %v1063 = vld [vmem:[%s1057 + $0x10] sm:%s1050]
                %1064 = vst [vmem:[%s1058 + $0x20] sm:%s1050] %v1063
                %v1065 = vld [vmem:[%s1057 + $0x18] sm:%s1050]
                %1066 = vst [vmem:[%s1058 + $0x30] sm:%s1050] %v1065
                %v1067 = vld [vmem:[%s1057 + $0x20] sm:%s1050]
                %1068 = vst [vmem:[%s1058 + $0x40] sm:%s1050] %v1067
                %v1069 = vld [vmem:[%s1057 + $0x28] sm:%s1050]
                %1070 = vst [vmem:[%s1058 + $0x50] sm:%s1050] %v1069
                %v1071 = vld [vmem:[%s1057 + $0x30] sm:%s1050]
                %1072 = vst [vmem:[%s1058 + $0x60] sm:%s1050] %v1071
                %v1073 = vld [vmem:[%s1057 + $0x38] sm:%s1050]
                %1074 = vst [vmem:[%s1058 + $0x70] sm:%s1050] %v1073
                %v1075 = vld [vmem:[%s1057 + $0x40] sm:%s1050]
                %1076 = vst [vmem:[%s1058 + $0x80] sm:%s1050] %v1075
                %v1077 = vld [vmem:[%s1057 + $0x48] sm:%s1050]
                %1078 = vst [vmem:[%s1058 + $0x90] sm:%s1050] %v1077
                %v1079 = vld [vmem:[%s1057 + $0x50] sm:%s1050]
                %1080 = vst [vmem:[%s1058 + $0xa0] sm:%s1050] %v1079
                %v1081 = vld [vmem:[%s1057 + $0x58] sm:%s1050]
                %1082 = vst [vmem:[%s1058 + $0xb0] sm:%s1050] %v1081
                %v1083 = vld [vmem:[%s1057 + $0x60] sm:%s1050]
                %1084 = vst [vmem:[%s1058 + $0xc0] sm:%s1050] %v1083
                %v1085 = vld [vmem:[%s1057 + $0x68] sm:%s1050]
                %1086 = vst [vmem:[%s1058 + $0xd0] sm:%s1050] %v1085
                %v1087 = vld [vmem:[%s1057 + $0x70] sm:%s1050]
                %1088 = vst [vmem:[%s1058 + $0xe0] sm:%s1050] %v1087
                %v1089 = vld [vmem:[%s1057 + $0x78] sm:%s1050]
                %1090 = vst [vmem:[%s1058 + $0xf0] sm:%s1050] %v1089
              $region103: #{_lambda_.11} parent=97 // loop_footer
                %s1056 = sadd.s32 1, %s1052
              $region104: #{_lambda_.11} parent=97 // loop_footer_branch
                %1051 = sbr.rel target = $region100
              $region105: #{_lambda_.11} parent=97 // loop_exit
                _
            $region98: #{_lambda_.11} parent=89 // pred_fallthru
              _
          $region90: #{_lambda_.11} parent=85 // pred_fallthru
            _
          %1135 = vnop
        $region86: #{_lambda_.11} parent=69 // pred_fallthru
          _
      $region70: #{_lambda_.11} parent=5 // pred_fallthru
        _
      %p1136 = scmp.le.s32.totalorder 2, %s10
      // Predicated region
      $region121: #{_lambda_.11} parent=5 // pred_check
        %p1137 = pneg %p1136
      $region122: #{_lambda_.11} parent=5 // pred_check_branch
        %1139 = sbr.rel (%p1137) target = $region124
      $region123: #{_lambda_.11} parent=5 // pred_region
        %s1140 = ssub.s32 %s10, 2
        // Predicated region
        $region125: #{_lambda_.11} parent=123 // pred_check
          %p1141 = pneg %p168
        $region126: #{_lambda_.11} parent=123 // pred_check_branch
          %1143 = sbr.rel (%p1141) target = $region128
        $region127: #{_lambda_.11} parent=123 // pred_region
          %s1144 = sand.u32 %s153, 1
          %s1145 = sand.u32 %s153, 1
          %s1146 = smul.addr %s1145, 128
          %s1147 = scalar_lea.vmem [#allocation4], %s1146
        $region128: #{_lambda_.11} parent=123 // pred_fallthru
          _
      $region124: #{_lambda_.11} parent=5 // pred_fallthru
        _
    $region6: #{_lambda_.11} parent=1 // loop_footer
      %s14 = sadd.s32 1, %s10
    $region7: #{_lambda_.11} parent=1 // loop_footer_branch
      %9 = sbr.rel target = $region3
    $region8: #{_lambda_.11} parent=1 // loop_exit
      _

</llo_original>
